<compile_context>
chip_gen: v5e
topology: v5e:2x2
jax: 0.10.0
libtpu: 0.0.40
codegen_flags: <defaults>
</compile_context>

<pallas_src>
import functools

import jax
import jax.numpy as jnp
from jax import lax
from jax.experimental import pallas as pl
from jax.experimental.pallas import tpu as pltpu


def _round_up(x, m):
    return ((x + m - 1) // m) * m


def _vmem_capacity_bytes():
    """Physical VMEM per TensorCore; conservative fallback = 64 MiB (v7x)."""
    try:
        return int(pltpu.get_tpu_info().vmem_capacity_bytes)
    except Exception:
        return 64 * 1024 * 1024


def _choose_tm(K, M, vmem_cap):
    """Lane-dense M-tile width, sized from the VMEM budget; >= 2 tiles if possible."""
    if M <= 128:
        return M  # single full-extent block
    budget = max(vmem_cap // 3, 12 * 1024 * 1024)   # double-buffered patch budget
    tm = (budget // (4 * K)) // 128 * 128           # 2 B (bf16) * 2 buffers per column
    tm = max(128, min(4096, tm))
    tm = min(tm, _round_up(M, 128))
    if M >= 256 and pl.cdiv(M, tm) < 2:
        tm = _round_up(pl.cdiv(M, 2), 128)          # keep both v7x TCs busy
    return tm


# ----------------------------------------------------------------------------
# Kernels.
# ----------------------------------------------------------------------------
def _conv_mm_kernel(w_ref, p_ref, b_ref, o_ref, *, apply_tanh):
    acc = jnp.dot(w_ref[...], p_ref[...], preferred_element_type=jnp.float32)
    acc = acc + b_ref[...]                    # (Cout, 1) broadcasts across lanes
    if apply_tanh:
        acc = jnp.tanh(acc)
    o_ref[...] = acc.astype(o_ref.dtype)


def _conv_mm_cls_kernel(w_ref, p_ref, b_ref, wc_ref, bc_ref, o_ref):
    # conv3 matmul + bias + tanh, then the fused 1x1x1 classifier matmul.
    h = jnp.dot(w_ref[...], p_ref[...], preferred_element_type=jnp.float32)
    h = jnp.tanh(h + b_ref[...])                              # (64, tm) f32
    o = jnp.dot(wc_ref[...], h, preferred_element_type=jnp.float32) + bc_ref[...]
    o_ref[...] = o.astype(o_ref.dtype)


# ----------------------------------------------------------------------------
# One fused matmul layer: act(W @ P + b) [@ Wc + bc].
# ----------------------------------------------------------------------------
def _conv_matmul(wmat, patches, bias, *, apply_tanh, out_dtype,
                 cls_w=None, cls_b=None):
    Cout, K = wmat.shape
    K2, M = patches.shape
    assert K == K2

    wmat = wmat.astype(jnp.bfloat16)
    patches = patches.astype(jnp.bfloat16)
    bias2d = bias.reshape(Cout, 1).astype(jnp.float32)

    # Only an entirely-sub-128-column layer gets a (tiny) lane pad; big layers
    # rely on cdiv grid + boundary masking for the ragged final tile.
    m_pad = 128 - M if M < 128 else 0
    if m_pad:
        patches = jnp.pad(patches, ((0, 0), (0, m_pad)))
    Mp = M + m_pad

    vmem_cap = _vmem_capacity_bytes()
    tm = _choose_tm(K, Mp, vmem_cap)
    grid = (pl.cdiv(Mp, tm),)

    in_specs = [
        pl.BlockSpec((Cout, K), lambda i: (0, 0)),   # resident weights
        pl.BlockSpec((K, tm), lambda i: (0, i)),     # lane-dense patch tile
        pl.BlockSpec((Cout, 1), lambda i: (0, 0)),   # bias
    ]
    args = [wmat, patches, bias2d]

    if cls_w is None:
        kernel = functools.partial(_conv_mm_kernel, apply_tanh=apply_tanh)
        out_rows = Cout
        cls_bytes = 0
    else:
        Ccls = cls_w.shape[0]
        in_specs += [
            pl.BlockSpec((Ccls, Cout), lambda i: (0, 0)),   # classifier weights
            pl.BlockSpec((Ccls, 1), lambda i: (0, 0)),      # classifier bias
        ]
        args += [cls_w.astype(jnp.float32),
                 cls_b.reshape(Ccls, 1).astype(jnp.float32)]
        kernel = _conv_mm_cls_kernel
        out_rows = Ccls
        cls_bytes = 2 * (Ccls * Cout + Ccls) * 4

    out_itemsize = jnp.dtype(out_dtype).itemsize
    needed = (4 * K * tm                      # bf16 patch tile, double-buffered
              + 4 * Cout * K                  # bf16 weights, double-buffered
              + 2 * out_rows * tm * out_itemsize
              + 2 * Cout * 4 + cls_bytes + (1 << 20))
    vmem_limit = int(min(max(needed * 3 // 2, 32 * 1024 * 1024),
                         vmem_cap * 3 // 4))

    out = pl.pallas_call(
        kernel,
        out_shape=jax.ShapeDtypeStruct((out_rows, Mp), out_dtype),
        grid_spec=pltpu.PrefetchScalarGridSpec(
            num_scalar_prefetch=0,
            grid=grid,
            in_specs=in_specs,
            out_specs=pl.BlockSpec((out_rows, tm), lambda i: (0, i)),
        ),
        compiler_params=pltpu.CompilerParams(
            dimension_semantics=("parallel",),
            vmem_limit_bytes=vmem_limit,
        ),
    )(*args)
    return out[:, :M] if m_pad else out


# ----------------------------------------------------------------------------
# Conv3d (VALID padding, cubic stride) via im2col + one fused Pallas matmul.
# ----------------------------------------------------------------------------
def _conv3d_chunk(x_cndhw, w, b, stride, apply_tanh, out_dtype, cls_w, cls_b):
    Cin, N, D, H, W = x_cndhw.shape
    Cout, Cin2, kD, kH, kW = w.shape
    assert Cin == Cin2
    Do = (D - kD) // stride + 1
    Ho = (H - kH) // stride + 1
    Wo = (W - kW) // stride + 1

    # Single fused patch extraction; K ordered (cin, kd, kh, kw) which matches
    # w.reshape(Cout, -1) directly.
    patches = lax.conv_general_dilated_patches(
        x_cndhw,
        filter_shape=(kD, kH, kW),
        window_strides=(stride, stride, stride),
        padding="VALID",
        dimension_numbers=("CNDHW", "OIDHW", "CNDHW"),
    )  # -> (K, N, Do, Ho, Wo)

    K = Cin * kD * kH * kW
    M = N * Do * Ho * Wo
    out = _conv_matmul(w.reshape(Cout, K), patches.reshape(K, M), b,
                       apply_tanh=apply_tanh, out_dtype=out_dtype,
                       cls_w=cls_w, cls_b=cls_b)
    rows = Cout if cls_w is None else cls_w.shape[0]
    return out.reshape(rows, N, Do, Ho, Wo)


def conv3d_pallas(x_cndhw, w, b, stride, apply_tanh, out_dtype,
                  cls_w=None, cls_b=None, max_patch_bytes=1 << 30):
    """x: (Cin, N, D, H, W), w: (Cout, Cin, kD, kH, kW).  Returns (rows, N, Do, Ho, Wo).

    The materialized im2col slab is bounded to ~max_patch_bytes by chunking the
    batch, which keeps peak HBM footprint safe on 16 GiB (v5e) at production
    shapes.
    """
    Cin, N, D, H, W = x_cndhw.shape
    _, _, kD, kH, kW = w.shape
    Do = (D - kD) // stride + 1
    Ho = (H - kH) // stride + 1
    Wo = (W - kW) // stride + 1
    per_n = 2 * Cin * kD * kH * kW * Do * Ho * Wo      # bf16 patch bytes / batch elem
    n_chunk = int(max(1, min(N, max_patch_bytes // max(per_n, 1))))

    outs = []
    for n0 in range(0, N, n_chunk):
        xs = lax.slice_in_dim(x_cndhw, n0, min(n0 + n_chunk, N), axis=1)
        outs.append(_conv3d_chunk(xs, w, b, stride, apply_tanh, out_dtype,
                                  cls_w, cls_b))
    return outs[0] if len(outs) == 1 else jnp.concatenate(outs, axis=1)


# ----------------------------------------------------------------------------
# fMRICNN forward:
#   conv1(5->16,k7,s2)+tanh -> conv2(16->32,k5,s2)+tanh
#   -> [conv3(32->64,k3,s2)+tanh -> classifier(64->10,k1,s2)]  (fused kernel)
# ----------------------------------------------------------------------------
def fmri_cnn_forward(x_ncdhw, params):
    # Activations flow as (C, N, D, H, W) between layers (no per-layer
    # transposes); bf16 activations halve the next layer's im2col traffic.
    x = jnp.transpose(x_ncdhw, (1, 0, 2, 3, 4)).astype(jnp.bfloat16)
    x = conv3d_pallas(x, params["w1"], params["b1"], 2, True, jnp.bfloat16)
    x = conv3d_pallas(x, params["w2"], params["b2"], 2, True, jnp.bfloat16)
    # Fused conv3 + tanh + classifier: the k=1, stride=2 classifier only reads
    # conv3's outputs at even (d,h,w), so conv3 is evaluated at stride 4 and
    # the classifier matmul runs in the same kernel epilogue (exact match to
    # conv3(s=2) -> classifier(s=2)).
    x = conv3d_pallas(x, params["w3"], params["b3"], 4, True, jnp.float32,
                      cls_w=params["w4"].reshape(10, 64), cls_b=params["b4"])
    return jnp.transpose(x, (1, 0, 2, 3, 4))  # (C,N,...) -> NCDHW


def ref_forward(x, params):
    """Pure-JAX (XLA conv, f32) reference for correctness checking."""

    def conv(x, w, b, s):
        y = lax.conv_general_dilated(
            x, w, (s, s, s), "VALID", dimension_numbers=("NCDHW", "OIDHW", "NCDHW")
        )
        return y + b.reshape(1, -1, 1, 1, 1)

    x = jnp.tanh(conv(x, params["w1"], params["b1"], 2))
    x = jnp.tanh(conv(x, params["w2"], params["b2"], 2))
    x = jnp.tanh(conv(x, params["w3"], params["b3"], 2))
    return conv(x, params["w4"], params["b4"], 2)


def init_params(key):
    ks = jax.random.split(key, 8)
    s = 0.05
    return {
        "w1": s * jax.random.normal(ks[0], (16, 5, 7, 7, 7), jnp.float32),
        "b1": s * jax.random.normal(ks[1], (16,), jnp.float32),
        "w2": s * jax.random.normal(ks[2], (32, 16, 5, 5, 5), jnp.float32),
        "b2": s * jax.random.normal(ks[3], (32,), jnp.float32),
        "w3": s * jax.random.normal(ks[4], (64, 32, 3, 3, 3), jnp.float32),
        "b3": s * jax.random.normal(ks[5], (64,), jnp.float32),
        "w4": s * jax.random.normal(ks[6], (10, 64, 1, 1, 1), jnp.float32),
        "b4": s * jax.random.normal(ks[7], (10,), jnp.float32),
    }


if __name__ == "__main__":
    key = jax.random.PRNGKey(0)
    kx, kp = jax.random.split(key)

    # Small version of x = torch.randn(35, 5, 91, 109, 91): batch=2, C=5, D=H=W=25.
    # Shape flow: (2,5,25,25,25) -> (2,16,10,10,10) -> (2,32,3,3,3)
    #             -> fused conv3+classifier -> (2,10,1,1,1)
    x = jax.random.normal(kx, (2, 5, 25, 25, 25), jnp.float32)
    params = init_params(kp)

    fwd = jax.jit(fmri_cnn_forward)
    out = jax.block_until_ready(fwd(x, params))
    assert out.shape == (2, 10, 1, 1, 1), out.shape

    ref = jax.block_until_ready(ref_forward(x, params))
    max_err = float(jnp.max(jnp.abs(out - ref)))
    assert jnp.allclose(out, ref, atol=5e-2, rtol=5e-2), max_err

    print("KERNEL_OK")
</pallas_src>

<mosaic_0001>
module attributes {stable_mosaic.version = 11 : i64} {
  func.func @_conv_mm_kernel(%arg0: i32, %arg1: memref<16x1715xbf16, #tpu.memory_space<vmem>>, %arg2: memref<1715x1024xbf16, #tpu.memory_space<vmem>>, %arg3: memref<16x1xf32, #tpu.memory_space<vmem>>, %arg4: memref<16x1024xbf16, #tpu.memory_space<vmem>>) attributes {dimension_semantics = [#tpu.dimension_semantics<parallel>], iteration_bounds = array<i64: 2>, scalar_prefetch = 0 : i64, scratch_operands = 0 : i64, tpu.core_type = #tpu.core_type<tc>, window_params = [{pipeline_mode = #tpu.pipeline_mode<synchronous>, transform_indices = @transform_0, window_bounds = array<i64: 16, 1715>}, {transform_indices = @transform_1, window_bounds = array<i64: 1715, 1024>}, {pipeline_mode = #tpu.pipeline_mode<synchronous>, transform_indices = @transform_2, window_bounds = array<i64: 16, 1>}, {transform_indices = @transform_3, window_bounds = array<i64: 16, 1024>}]} {
    %c0 = arith.constant 0 : index
    %c0_0 = arith.constant 0 : index
    %0 = vector.load %arg1[%c0, %c0_0] : memref<16x1715xbf16, #tpu.memory_space<vmem>>, vector<16x1715xbf16>
    %c0_1 = arith.constant 0 : index
    %c0_2 = arith.constant 0 : index
    %1 = vector.load %arg2[%c0_1, %c0_2] : memref<1715x1024xbf16, #tpu.memory_space<vmem>>, vector<1715x1024xbf16>
    %cst = arith.constant dense<0.000000e+00> : vector<16x1024xf32>
    %2 = tpu.matmul %0, %1, %cst {dimension_numbers = #tpu.dot_dimension_numbers<[1], [0], [0], [1], [0, 0, 1, 1], [], []>} : vector<16x1715xbf16>, vector<1715x1024xbf16>, vector<16x1024xf32> -> vector<16x1024xf32>
    %c0_3 = arith.constant 0 : index
    %c0_4 = arith.constant 0 : index
    %3 = vector.load %arg3[%c0_3, %c0_4] : memref<16x1xf32, #tpu.memory_space<vmem>>, vector<16x1xf32>
    %4 = vector.broadcast %3 : vector<16x1xf32> to vector<16x1024xf32>
    %5 = arith.addf %2, %4 : vector<16x1024xf32>
    %6 = math.tanh %5 : vector<16x1024xf32>
    %7 = arith.truncf %6 : vector<16x1024xf32> to vector<16x1024xbf16>
    %c0_5 = arith.constant 0 : index
    %c0_6 = arith.constant 0 : index
    %8 = vector.load %arg4[%c0_5, %c0_6] : memref<16x1024xbf16, #tpu.memory_space<vmem>>, vector<16x1024xbf16>
    tpu.vector_store %arg4[%c0_5, %c0_6], %7 {strides = array<i32>} : memref<16x1024xbf16, #tpu.memory_space<vmem>>, vector<16x1024xbf16>,
    return
  }
  func.func @transform_0(%arg0: i32) -> (i32, i32) {
    %c0_i32 = arith.constant 0 : i32
    %c0_i32_0 = arith.constant 0 : i32
    %c0_i32_1 = arith.constant 0 : i32
    return %c0_i32, %c0_i32_0 : i32, i32
  }
  func.func @transform_1(%arg0: i32) -> (i32, i32) {
    %c0_i32 = arith.constant 0 : i32
    %c0_i32_0 = arith.constant 0 : i32
    return %c0_i32, %arg0 : i32, i32
  }
  func.func @transform_2(%arg0: i32) -> (i32, i32) {
    %c0_i32 = arith.constant 0 : i32
    %c0_i32_0 = arith.constant 0 : i32
    %c0_i32_1 = arith.constant 0 : i32
    return %c0_i32, %c0_i32_0 : i32, i32
  }
  func.func @transform_3(%arg0: i32) -> (i32, i32) {
    %c0_i32 = arith.constant 0 : i32
    %c0_i32_0 = arith.constant 0 : i32
    return %c0_i32, %arg0 : i32, i32
  }
}

module attributes {stable_mosaic.version = 11 : i64} {
  func.func @_conv_mm_kernel(%arg0: i32, %arg1: memref<32x2000xbf16, #tpu.memory_space<vmem>>, %arg2: memref<2000x128xbf16, #tpu.memory_space<vmem>>, %arg3: memref<32x1xf32, #tpu.memory_space<vmem>>, %arg4: memref<32x128xbf16, #tpu.memory_space<vmem>>) attributes {dimension_semantics = [#tpu.dimension_semantics<parallel>], iteration_bounds = array<i64: 1>, scalar_prefetch = 0 : i64, scratch_operands = 0 : i64, tpu.core_type = #tpu.core_type<tc>, window_params = [{pipeline_mode = #tpu.pipeline_mode<synchronous>, transform_indices = @transform_0, window_bounds = array<i64: 32, 2000>}, {transform_indices = @transform_1, window_bounds = array<i64: 2000, 128>}, {pipeline_mode = #tpu.pipeline_mode<synchronous>, transform_indices = @transform_2, window_bounds = array<i64: 32, 1>}, {transform_indices = @transform_3, window_bounds = array<i64: 32, 128>}]} {
    %c0 = arith.constant 0 : index
    %c0_0 = arith.constant 0 : index
    %0 = vector.load %arg1[%c0, %c0_0] : memref<32x2000xbf16, #tpu.memory_space<vmem>>, vector<32x2000xbf16>
    %c0_1 = arith.constant 0 : index
    %c0_2 = arith.constant 0 : index
    %1 = vector.load %arg2[%c0_1, %c0_2] : memref<2000x128xbf16, #tpu.memory_space<vmem>>, vector<2000x128xbf16>
    %cst = arith.constant dense<0.000000e+00> : vector<32x128xf32>
    %2 = tpu.matmul %0, %1, %cst {dimension_numbers = #tpu.dot_dimension_numbers<[1], [0], [0], [1], [0, 0, 1, 1], [], []>} : vector<32x2000xbf16>, vector<2000x128xbf16>, vector<32x128xf32> -> vector<32x128xf32>
    %c0_3 = arith.constant 0 : index
    %c0_4 = arith.constant 0 : index
    %3 = vector.load %arg3[%c0_3, %c0_4] : memref<32x1xf32, #tpu.memory_space<vmem>>, vector<32x1xf32>
    %4 = vector.broadcast %3 : vector<32x1xf32> to vector<32x128xf32>
    %5 = arith.addf %2, %4 : vector<32x128xf32>
    %6 = math.tanh %5 : vector<32x128xf32>
    %7 = arith.truncf %6 : vector<32x128xf32> to vector<32x128xbf16>
    %c0_5 = arith.constant 0 : index
    %c0_6 = arith.constant 0 : index
    %8 = vector.load %arg4[%c0_5, %c0_6] : memref<32x128xbf16, #tpu.memory_space<vmem>>, vector<32x128xbf16>
    tpu.vector_store %arg4[%c0_5, %c0_6], %7 {strides = array<i32>} : memref<32x128xbf16, #tpu.memory_space<vmem>>, vector<32x128xbf16>,
    return
  }
  func.func @transform_0(%arg0: i32) -> (i32, i32) {
    %c0_i32 = arith.constant 0 : i32
    %c0_i32_0 = arith.constant 0 : i32
    %c0_i32_1 = arith.constant 0 : i32
    return %c0_i32, %c0_i32_0 : i32, i32
  }
  func.func @transform_1(%arg0: i32) -> (i32, i32) {
    %c0_i32 = arith.constant 0 : i32
    %c0_i32_0 = arith.constant 0 : i32
    return %c0_i32, %arg0 : i32, i32
  }
  func.func @transform_2(%arg0: i32) -> (i32, i32) {
    %c0_i32 = arith.constant 0 : i32
    %c0_i32_0 = arith.constant 0 : i32
    %c0_i32_1 = arith.constant 0 : i32
    return %c0_i32, %c0_i32_0 : i32, i32
  }
  func.func @transform_3(%arg0: i32) -> (i32, i32) {
    %c0_i32 = arith.constant 0 : i32
    %c0_i32_0 = arith.constant 0 : i32
    return %c0_i32, %arg0 : i32, i32
  }
}

module attributes {stable_mosaic.version = 11 : i64} {
  func.func @_conv_mm_cls_kernel(%arg0: i32, %arg1: memref<64x864xbf16, #tpu.memory_space<vmem>>, %arg2: memref<864x128xbf16, #tpu.memory_space<vmem>>, %arg3: memref<64x1xf32, #tpu.memory_space<vmem>>, %arg4: memref<10x64xf32, #tpu.memory_space<vmem>>, %arg5: memref<10x1xf32, #tpu.memory_space<vmem>>, %arg6: memref<10x128xf32, #tpu.memory_space<vmem>>) attributes {dimension_semantics = [#tpu.dimension_semantics<parallel>], iteration_bounds = array<i64: 1>, scalar_prefetch = 0 : i64, scratch_operands = 0 : i64, tpu.core_type = #tpu.core_type<tc>, window_params = [{pipeline_mode = #tpu.pipeline_mode<synchronous>, transform_indices = @transform_0, window_bounds = array<i64: 64, 864>}, {transform_indices = @transform_1, window_bounds = array<i64: 864, 128>}, {pipeline_mode = #tpu.pipeline_mode<synchronous>, transform_indices = @transform_2, window_bounds = array<i64: 64, 1>}, {pipeline_mode = #tpu.pipeline_mode<synchronous>, transform_indices = @transform_3, window_bounds = array<i64: 10, 64>}, {pipeline_mode = #tpu.pipeline_mode<synchronous>, transform_indices = @transform_4, window_bounds = array<i64: 10, 1>}, {transform_indices = @transform_5, window_bounds = array<i64: 10, 128>}]} {
    %c0 = arith.constant 0 : index
    %c0_0 = arith.constant 0 : index
    %0 = vector.load %arg1[%c0, %c0_0] : memref<64x864xbf16, #tpu.memory_space<vmem>>, vector<64x864xbf16>
    %c0_1 = arith.constant 0 : index
    %c0_2 = arith.constant 0 : index
    %1 = vector.load %arg2[%c0_1, %c0_2] : memref<864x128xbf16, #tpu.memory_space<vmem>>, vector<864x128xbf16>
    %cst = arith.constant dense<0.000000e+00> : vector<64x128xf32>
    %2 = tpu.matmul %0, %1, %cst {dimension_numbers = #tpu.dot_dimension_numbers<[1], [0], [0], [1], [0, 0, 1, 1], [], []>} : vector<64x864xbf16>, vector<864x128xbf16>, vector<64x128xf32> -> vector<64x128xf32>
    %c0_3 = arith.constant 0 : index
    %c0_4 = arith.constant 0 : index
    %3 = vector.load %arg3[%c0_3, %c0_4] : memref<64x1xf32, #tpu.memory_space<vmem>>, vector<64x1xf32>
    %4 = vector.broadcast %3 : vector<64x1xf32> to vector<64x128xf32>
    %5 = arith.addf %2, %4 : vector<64x128xf32>
    %6 = math.tanh %5 : vector<64x128xf32>
    %c0_5 = arith.constant 0 : index
    %c0_6 = arith.constant 0 : index
    %7 = vector.load %arg4[%c0_5, %c0_6] : memref<10x64xf32, #tpu.memory_space<vmem>>, vector<10x64xf32>
    %cst_7 = arith.constant dense<0.000000e+00> : vector<10x128xf32>
    %8 = tpu.matmul %7, %6, %cst_7 {dimension_numbers = #tpu.dot_dimension_numbers<[1], [0], [0], [1], [0, 0, 1, 1], [], []>} : vector<10x64xf32>, vector<64x128xf32>, vector<10x128xf32> -> vector<10x128xf32>
    %c0_8 = arith.constant 0 : index
    %c0_9 = arith.constant 0 : index
    %9 = vector.load %arg5[%c0_8, %c0_9] : memref<10x1xf32, #tpu.memory_space<vmem>>, vector<10x1xf32>
    %10 = vector.broadcast %9 : vector<10x1xf32> to vector<10x128xf32>
    %11 = arith.addf %8, %10 : vector<10x128xf32>
    %c0_10 = arith.constant 0 : index
    %c0_11 = arith.constant 0 : index
    %12 = vector.load %arg6[%c0_10, %c0_11] : memref<10x128xf32, #tpu.memory_space<vmem>>, vector<10x128xf32>
    tpu.vector_store %arg6[%c0_10, %c0_11], %11 {strides = array<i32>} : memref<10x128xf32, #tpu.memory_space<vmem>>, vector<10x128xf32>,
    return
  }
  func.func @transform_0(%arg0: i32) -> (i32, i32) {
    %c0_i32 = arith.constant 0 : i32
    %c0_i32_0 = arith.constant 0 : i32
    %c0_i32_1 = arith.constant 0 : i32
    return %c0_i32, %c0_i32_0 : i32, i32
  }
  func.func @transform_1(%arg0: i32) -> (i32, i32) {
    %c0_i32 = arith.constant 0 : i32
    %c0_i32_0 = arith.constant 0 : i32
    return %c0_i32, %arg0 : i32, i32
  }
  func.func @transform_2(%arg0: i32) -> (i32, i32) {
    %c0_i32 = arith.constant 0 : i32
    %c0_i32_0 = arith.constant 0 : i32
    %c0_i32_1 = arith.constant 0 : i32
    return %c0_i32, %c0_i32_0 : i32, i32
  }
  func.func @transform_3(%arg0: i32) -> (i32, i32) {
    %c0_i32 = arith.constant 0 : i32
    %c0_i32_0 = arith.constant 0 : i32
    %c0_i32_1 = arith.constant 0 : i32
    return %c0_i32, %c0_i32_0 : i32, i32
  }
  func.func @transform_4(%arg0: i32) -> (i32, i32) {
    %c0_i32 = arith.constant 0 : i32
    %c0_i32_0 = arith.constant 0 : i32
    %c0_i32_1 = arith.constant 0 : i32
    return %c0_i32, %c0_i32_0 : i32, i32
  }
  func.func @transform_5(%arg0: i32) -> (i32, i32) {
    %c0_i32 = arith.constant 0 : i32
    %c0_i32_0 = arith.constant 0 : i32
    return %c0_i32, %arg0 : i32, i32
  }
}

</mosaic_0001>

<llo_original>
// kernel: fmri_cnn_forward.3
$region0: #{fmri_cnn_forward.3}
  #allocation0 [shape = 'u32[]', space=smem, size = 0x4, offset = 0x4, fixed_abs, tag = 'smem constant byte address 0x4 - core index']
  #allocation1 [shape = 'u32[72,128]{1,0:T(1,128)}', space=vmem, size = 0x9000, scoped, tag = 'internal scratch']
  %s0 = inlined_call_operand.vmem [shape: bf16[16,1715], index: 0, kind: input, shape index: {}]
  %s1 = inlined_call_operand.vmem [shape: bf16[1715,2000], index: 1, kind: input, shape index: {}]
  %s2 = inlined_call_operand.vmem [shape: f32[16,1], index: 2, kind: input, shape index: {}]
  %s3 = inlined_call_operand.vmem [shape: bf16[16,2000], index: 3, kind: output, shape index: {}]
  %s4 = sld [smem:[#allocation0]]
  $region87: #{fmri_cnn_forward.3} parent=0
    _
  %s6 = ssub.s32 1, %s4
  %s7 = scalar_select 0, %s6, %s4
  $region1: #{fmri_cnn_forward.3} parent=0
    #allocation2 [shape = 'u8[7045120]{0}', space=vmem, size = 0x6b8000, scoped, tag = 'input window, operand 1']
    #allocation3 [shape = 'u8[65536]{0}', space=vmem, size = 0x10000, scoped, tag = 'output window, operand 0']
    loop: start=0, step=1, limit=4
    $region2: #{fmri_cnn_forward.3} parent=1 // loop_pre_header
      _
    $region3: #{fmri_cnn_forward.3} parent=1 // loop_header
      %s9 = sphi 0, %s13
      %p10 = scmp.ge.s32.totalorder %s9, 4
      %s17 = sphi 0, %s17
      %s19 = sphi 0, %s17
      %s20 = sphi 0, %s19
      %s34 = sphi 0, %s20
      %s40 = sphi 0, %s42
      %s43 = sphi 0, %s40
      %s44 = sphi 0, %s43
      %s60 = sphi 0, %s44
      %s64 = sphi 0, %s64
      %s66 = sphi 0, %s64
      %s67 = sphi 0, %s66
      %s81 = sphi 0, %s67
      %s87 = sphi 0, %s89
      %s90 = sphi 0, %s87
      %s91 = sphi 0, %s90
      %s107 = sphi 0, %s91
    $region4: #{fmri_cnn_forward.3} parent=1 // loop_header_branch
      %12 = sbr.rel (%p10) target = $region8
    $region5: #{fmri_cnn_forward.3} parent=1 // loop_body
      %s14 = ssub.s32 %s9, 1
      %s15 = ssub.s32 %s9, 2
      %s16 = sadd.s32 %s9, 1
      %s18 = sadd.s32 %s17, 1
      %p21 = scmp.eq.s32.totalorder %s9, 1
      %p22 = scmp.ne.s32.totalorder %s17, %s19
      %p23 = scmp.eq.s32.totalorder %s9, 0
      %p24 = por %p22, %p23
      %p25 = scmp.ne.s32.totalorder %s17, %s19
      %p26 = scmp.eq.s32.totalorder %s14, 1
      %p27 = por %p25, %p26
      %p28 = scmp.ne.s32.totalorder %s19, %s20
      %p29 = scmp.eq.s32.totalorder %s14, 0
      %p30 = por %p28, %p29
      %p31 = scmp.ne.s32.totalorder %s19, %s20
      %p32 = scmp.eq.s32.totalorder %s15, 1
      %p33 = por %p31, %p32
      %p35 = scmp.ne.s32.totalorder %s20, %s34
      %p36 = scmp.eq.s32.totalorder %s15, 0
      %p37 = por %p35, %p36
      %s38 = ssub.s32 %s9, %s16
      %p39 = scmp.eq.s32.totalorder %s38, 0
      %s41 = sadd.s32 %s40, 1
      %s42 = scalar_select %p39, %s40, %s41
      %p45 = pneg %p39
      %p46 = scmp.eq.s32.totalorder %s9, 1
      %p47 = por %p45, %p46
      %p48 = scmp.ne.s32.totalorder %s40, %s43
      %p49 = scmp.eq.s32.totalorder %s9, 0
      %p50 = por %p48, %p49
      %p51 = scmp.ne.s32.totalorder %s40, %s43
      %p52 = scmp.eq.s32.totalorder %s14, 1
      %p53 = por %p51, %p52
      %p54 = scmp.ne.s32.totalorder %s43, %s44
      %p55 = scmp.eq.s32.totalorder %s14, 0
      %p56 = por %p54, %p55
      %p57 = scmp.ne.s32.totalorder %s43, %s44
      %p58 = scmp.eq.s32.totalorder %s15, 1
      %p59 = por %p57, %p58
      %p61 = scmp.ne.s32.totalorder %s44, %s60
      %p62 = scmp.eq.s32.totalorder %s15, 0
      %p63 = por %p61, %p62
      %s65 = sadd.s32 %s64, 1
      %p68 = scmp.eq.s32.totalorder %s9, 1
      %p69 = scmp.ne.s32.totalorder %s64, %s66
      %p70 = scmp.eq.s32.totalorder %s9, 0
      %p71 = por %p69, %p70
      %p72 = scmp.ne.s32.totalorder %s64, %s66
      %p73 = scmp.eq.s32.totalorder %s14, 1
      %p74 = por %p72, %p73
      %p75 = scmp.ne.s32.totalorder %s66, %s67
      %p76 = scmp.eq.s32.totalorder %s14, 0
      %p77 = por %p75, %p76
      %p78 = scmp.ne.s32.totalorder %s66, %s67
      %p79 = scmp.eq.s32.totalorder %s15, 1
      %p80 = por %p78, %p79
      %p82 = scmp.ne.s32.totalorder %s67, %s81
      %p83 = scmp.eq.s32.totalorder %s15, 0
      %p84 = por %p82, %p83
      %s85 = ssub.s32 %s9, %s16
      %p86 = scmp.eq.s32.totalorder %s85, 0
      %s88 = sadd.s32 %s87, 1
      %s89 = scalar_select %p86, %s87, %s88
      %p92 = pneg %p86
      %p93 = scmp.eq.s32.totalorder %s9, 1
      %p94 = por %p92, %p93
      %p95 = scmp.ne.s32.totalorder %s87, %s90
      %p96 = scmp.eq.s32.totalorder %s9, 0
      %p97 = por %p95, %p96
      %p98 = scmp.ne.s32.totalorder %s87, %s90
      %p99 = scmp.eq.s32.totalorder %s14, 1
      %p100 = por %p98, %p99
      %p101 = scmp.ne.s32.totalorder %s90, %s91
      %p102 = scmp.eq.s32.totalorder %s14, 0
      %p103 = por %p101, %p102
      %p104 = scmp.ne.s32.totalorder %s90, %s91
      %p105 = scmp.eq.s32.totalorder %s15, 1
      %p106 = por %p104, %p105
      %p108 = scmp.ne.s32.totalorder %s91, %s107
      %p109 = scmp.eq.s32.totalorder %s15, 0
      %p110 = por %p108, %p109
      %p111 = scmp.le.s32.totalorder 1, %s9
      %p112 = scmp.lt.s32.totalorder %s9, 3
      %p113 = pnand %p111, %p112
      %p114 = pneg %p113
      // Predicated region
      $region9: #{fmri_cnn_forward.3} parent=5 // pred_check
        _
      $region10: #{fmri_cnn_forward.3} parent=5 // pred_check_branch
        %116 = sbr.rel (%p113) target = $region12
      $region11: #{fmri_cnn_forward.3} parent=5 // pred_region
        %s117 = ssub.s32 %s9, 1
        // Predicated region
        $region13: #{fmri_cnn_forward.3} parent=11 // pred_check
          %p118 = pneg %p30
        $region14: #{fmri_cnn_forward.3} parent=11 // pred_check_branch
          %120 = sbr.rel (%p118) target = $region16
        $region15: #{fmri_cnn_forward.3} parent=11 // pred_region
          _
        $region16: #{fmri_cnn_forward.3} parent=11 // pred_fallthru
          _
        // Predicated region
        $region17: #{fmri_cnn_forward.3} parent=11 // pred_check
          %p121 = pneg %p77
        $region18: #{fmri_cnn_forward.3} parent=11 // pred_check_branch
          %123 = sbr.rel (%p121) target = $region20
        $region19: #{fmri_cnn_forward.3} parent=11 // pred_region
          _
        $region20: #{fmri_cnn_forward.3} parent=11 // pred_fallthru
          _
      $region12: #{fmri_cnn_forward.3} parent=5 // pred_fallthru
        _
      %p124 = scmp.lt.s32.totalorder %s9, 2
      // Predicated region
      $region21: #{fmri_cnn_forward.3} parent=5 // pred_check
        %p125 = pneg %p124
      $region22: #{fmri_cnn_forward.3} parent=5 // pred_check_branch
        %127 = sbr.rel (%p125) target = $region24
      $region23: #{fmri_cnn_forward.3} parent=5 // pred_region
        // Predicated region
        $region25: #{fmri_cnn_forward.3} parent=23 // pred_check
          %p128 = pneg %p50
        $region26: #{fmri_cnn_forward.3} parent=23 // pred_check_branch
          %130 = sbr.rel (%p128) target = $region28
        $region27: #{fmri_cnn_forward.3} parent=23 // pred_region
          %s131 = sand.u32 %s40, 1
          %s132 = sand.u32 %s40, 1
          %s133 = smul.addr %s132, 6880
          %s134 = scalar_lea.vmem [#allocation2], %s133
          %s135 = smul.u32 8, %s9
          %s136 = smul.addr %s135, 4
          %s137 = scalar_lea.vmem %s1, %s136
          // Predicated region
          $region29: #{fmri_cnn_forward.3} parent=27 // pred_check
            _
          $region30: #{fmri_cnn_forward.3} parent=27 // pred_check_branch
            %139 = sbr.rel (0) target = $region32
          $region31: #{fmri_cnn_forward.3} parent=27 // pred_region
            // Predicated region
            $region33: #{fmri_cnn_forward.3} parent=31 // pred_check
              _
            $region34: #{fmri_cnn_forward.3} parent=31 // pred_check_branch
              %141 = sbr.rel (0) target = $region36
            $region35: #{fmri_cnn_forward.3} parent=31 // pred_region
              loop: start=0, step=1, limit=1
              $region37: #{fmri_cnn_forward.3} parent=35 // loop_pre_header
                _
              $region38: #{fmri_cnn_forward.3} parent=35 // loop_header
                %s143 = sphi 0, %s147
                %p144 = scmp.ge.s32.totalorder %s143, 1
                %s148 = sphi %s137, %s137
                %s149 = sphi %s134, %s134
              $region39: #{fmri_cnn_forward.3} parent=35 // loop_header_branch
                %146 = sbr.rel (%p144) target = $region43
              $region40: #{fmri_cnn_forward.3} parent=35 // loop_body
                %v150 = vld [vmem:[%s148] sm:$0xff]
                %151 = vst [vmem:[%s149] sm:$0xff] %v150
                %v152 = vld [vmem:[%s148 + $0x8] sm:$0xff]
                %153 = vst [vmem:[%s149 + $0x8] sm:$0xff] %v152
                %v154 = vld [vmem:[%s148 + $0x10] sm:$0xff]
                %155 = vst [vmem:[%s149 + $0x10] sm:$0xff] %v154
                %v156 = vld [vmem:[%s148 + $0x18] sm:$0xff]
                %157 = vst [vmem:[%s149 + $0x18] sm:$0xff] %v156
                %v158 = vld [vmem:[%s148 + $0x40] sm:$0xff]
                %159 = vst [vmem:[%s149 + $0x20] sm:$0xff] %v158
                %v160 = vld [vmem:[%s148 + $0x48] sm:$0xff]
                %161 = vst [vmem:[%s149 + $0x28] sm:$0xff] %v160
                %v162 = vld [vmem:[%s148 + $0x50] sm:$0xff]
                %163 = vst [vmem:[%s149 + $0x30] sm:$0xff] %v162
                %v164 = vld [vmem:[%s148 + $0x58] sm:$0xff]
                %165 = vst [vmem:[%s149 + $0x38] sm:$0xff] %v164
                %v166 = vld [vmem:[%s148 + $0x80] sm:$0xff]
                %167 = vst [vmem:[%s149 + $0x40] sm:$0xff] %v166
                %v168 = vld [vmem:[%s148 + $0x88] sm:$0xff]
                %169 = vst [vmem:[%s149 + $0x48] sm:$0xff] %v168
                %v170 = vld [vmem:[%s148 + $0x90] sm:$0xff]
                %171 = vst [vmem:[%s149 + $0x50] sm:$0xff] %v170
                %v172 = vld [vmem:[%s148 + $0x98] sm:$0xff]
                %173 = vst [vmem:[%s149 + $0x58] sm:$0xff] %v172
                %v174 = vld [vmem:[%s148 + $0xc0] sm:$0xff]
                %175 = vst [vmem:[%s149 + $0x60] sm:$0xff] %v174
                %v176 = vld [vmem:[%s148 + $0xc8] sm:$0xff]
                %177 = vst [vmem:[%s149 + $0x68] sm:$0xff] %v176
                %v178 = vld [vmem:[%s148 + $0xd0] sm:$0xff]
                %179 = vst [vmem:[%s149 + $0x70] sm:$0xff] %v178
                %v180 = vld [vmem:[%s148 + $0xd8] sm:$0xff]
                %181 = vst [vmem:[%s149 + $0x78] sm:$0xff] %v180
                %v182 = vld [vmem:[%s148 + $0x100] sm:$0xff]
                %183 = vst [vmem:[%s149 + $0x80] sm:$0xff] %v182
                %v184 = vld [vmem:[%s148 + $0x108] sm:$0xff]
                %185 = vst [vmem:[%s149 + $0x88] sm:$0xff] %v184
                %v186 = vld [vmem:[%s148 + $0x110] sm:$0xff]
                %187 = vst [vmem:[%s149 + $0x90] sm:$0xff] %v186
                %v188 = vld [vmem:[%s148 + $0x118] sm:$0xff]
                %189 = vst [vmem:[%s149 + $0x98] sm:$0xff] %v188
                %v190 = vld [vmem:[%s148 + $0x140] sm:$0xff]
                %191 = vst [vmem:[%s149 + $0xa0] sm:$0xff] %v190
                %v192 = vld [vmem:[%s148 + $0x148] sm:$0xff]
                %193 = vst [vmem:[%s149 + $0xa8] sm:$0xff] %v192
                %v194 = vld [vmem:[%s148 + $0x150] sm:$0xff]
                %195 = vst [vmem:[%s149 + $0xb0] sm:$0xff] %v194
                %v196 = vld [vmem:[%s148 + $0x158] sm:$0xff]
                %197 = vst [vmem:[%s149 + $0xb8] sm:$0xff] %v196
                %v198 = vld [vmem:[%s148 + $0x180] sm:$0xff]
                %199 = vst [vmem:[%s149 + $0xc0] sm:$0xff] %v198
                %v200 = vld [vmem:[%s148 + $0x188] sm:$0xff]
                %201 = vst [vmem:[%s149 + $0xc8] sm:$0xff] %v200
                %v202 = vld [vmem:[%s148 + $0x190] sm:$0xff]
                %203 = vst [vmem:[%s149 + $0xd0] sm:$0xff] %v202
                %v204 = vld [vmem:[%s148 + $0x198] sm:$0xff]
                %205 = vst [vmem:[%s149 + $0xd8] sm:$0xff] %v204
                %v206 = vld [vmem:[%s148 + $0x1c0] sm:$0xff]
                %207 = vst [vmem:[%s149 + $0xe0] sm:$0xff] %v206
                %v208 = vld [vmem:[%s148 + $0x1c8] sm:$0xff]
                %209 = vst [vmem:[%s149 + $0xe8] sm:$0xff] %v208
                %v210 = vld [vmem:[%s148 + $0x1d0] sm:$0xff]
                %211 = vst [vmem:[%s149 + $0xf0] sm:$0xff] %v210
                %v212 = vld [vmem:[%s148 + $0x1d8] sm:$0xff]
                %213 = vst [vmem:[%s149 + $0xf8] sm:$0xff] %v212
                %v214 = vld [vmem:[%s148 + $0x200] sm:$0xff]
                %215 = vst [vmem:[%s149 + $0x100] sm:$0xff] %v214
                %v216 = vld [vmem:[%s148 + $0x208] sm:$0xff]
                %217 = vst [vmem:[%s149 + $0x108] sm:$0xff] %v216
                %v218 = vld [vmem:[%s148 + $0x210] sm:$0xff]
                %219 = vst [vmem:[%s149 + $0x110] sm:$0xff] %v218
                %v220 = vld [vmem:[%s148 + $0x218] sm:$0xff]
                %221 = vst [vmem:[%s149 + $0x118] sm:$0xff] %v220
                %v222 = vld [vmem:[%s148 + $0x240] sm:$0xff]
                %223 = vst [vmem:[%s149 + $0x120] sm:$0xff] %v222
                %v224 = vld [vmem:[%s148 + $0x248] sm:$0xff]
                %225 = vst [vmem:[%s149 + $0x128] sm:$0xff] %v224
                %v226 = vld [vmem:[%s148 + $0x250] sm:$0xff]
                %227 = vst [vmem:[%s149 + $0x130] sm:$0xff] %v226
                %v228 = vld [vmem:[%s148 + $0x258] sm:$0xff]
                %229 = vst [vmem:[%s149 + $0x138] sm:$0xff] %v228
                %v230 = vld [vmem:[%s148 + $0x280] sm:$0xff]
                %231 = vst [vmem:[%s149 + $0x140] sm:$0xff] %v230
                %v232 = vld [vmem:[%s148 + $0x288] sm:$0xff]
                %233 = vst [vmem:[%s149 + $0x148] sm:$0xff] %v232
                %v234 = vld [vmem:[%s148 + $0x290] sm:$0xff]
                %235 = vst [vmem:[%s149 + $0x150] sm:$0xff] %v234
                %v236 = vld [vmem:[%s148 + $0x298] sm:$0xff]
                %237 = vst [vmem:[%s149 + $0x158] sm:$0xff] %v236
                %v238 = vld [vmem:[%s148 + $0x2c0] sm:$0xff]
                %239 = vst [vmem:[%s149 + $0x160] sm:$0xff] %v238
                %v240 = vld [vmem:[%s148 + $0x2c8] sm:$0xff]
                %241 = vst [vmem:[%s149 + $0x168] sm:$0xff] %v240
                %v242 = vld [vmem:[%s148 + $0x2d0] sm:$0xff]
                %243 = vst [vmem:[%s149 + $0x170] sm:$0xff] %v242
                %v244 = vld [vmem:[%s148 + $0x2d8] sm:$0xff]
                %245 = vst [vmem:[%s149 + $0x178] sm:$0xff] %v244
                %v246 = vld [vmem:[%s148 + $0x300] sm:$0xff]
                %247 = vst [vmem:[%s149 + $0x180] sm:$0xff] %v246
                %v248 = vld [vmem:[%s148 + $0x308] sm:$0xff]
                %249 = vst [vmem:[%s149 + $0x188] sm:$0xff] %v248
                %v250 = vld [vmem:[%s148 + $0x310] sm:$0xff]
                %251 = vst [vmem:[%s149 + $0x190] sm:$0xff] %v250
                %v252 = vld [vmem:[%s148 + $0x318] sm:$0xff]
                %253 = vst [vmem:[%s149 + $0x198] sm:$0xff] %v252
                %v254 = vld [vmem:[%s148 + $0x340] sm:$0xff]
                %255 = vst [vmem:[%s149 + $0x1a0] sm:$0xff] %v254
                %v256 = vld [vmem:[%s148 + $0x348] sm:$0xff]
                %257 = vst [vmem:[%s149 + $0x1a8] sm:$0xff] %v256
                %v258 = vld [vmem:[%s148 + $0x350] sm:$0xff]
                %259 = vst [vmem:[%s149 + $0x1b0] sm:$0xff] %v258
                %v260 = vld [vmem:[%s148 + $0x358] sm:$0xff]
                %261 = vst [vmem:[%s149 + $0x1b8] sm:$0xff] %v260
                %v262 = vld [vmem:[%s148 + $0x380] sm:$0xff]
                %263 = vst [vmem:[%s149 + $0x1c0] sm:$0xff] %v262
                %v264 = vld [vmem:[%s148 + $0x388] sm:$0xff]
                %265 = vst [vmem:[%s149 + $0x1c8] sm:$0xff] %v264
                %v266 = vld [vmem:[%s148 + $0x390] sm:$0xff]
                %267 = vst [vmem:[%s149 + $0x1d0] sm:$0xff] %v266
                %v268 = vld [vmem:[%s148 + $0x398] sm:$0xff]
                %269 = vst [vmem:[%s149 + $0x1d8] sm:$0xff] %v268
                %v270 = vld [vmem:[%s148 + $0x3c0] sm:$0xff]
                %271 = vst [vmem:[%s149 + $0x1e0] sm:$0xff] %v270
                %v272 = vld [vmem:[%s148 + $0x3c8] sm:$0xff]
                %273 = vst [vmem:[%s149 + $0x1e8] sm:$0xff] %v272
                %v274 = vld [vmem:[%s148 + $0x3d0] sm:$0xff]
                %275 = vst [vmem:[%s149 + $0x1f0] sm:$0xff] %v274
                %v276 = vld [vmem:[%s148 + $0x3d8] sm:$0xff]
                %277 = vst [vmem:[%s149 + $0x1f8] sm:$0xff] %v276
                %v278 = vld [vmem:[%s148 + $0x400] sm:$0xff]
                %279 = vst [vmem:[%s149 + $0x200] sm:$0xff] %v278
                %v280 = vld [vmem:[%s148 + $0x408] sm:$0xff]
                %281 = vst [vmem:[%s149 + $0x208] sm:$0xff] %v280
                %v282 = vld [vmem:[%s148 + $0x410] sm:$0xff]
                %283 = vst [vmem:[%s149 + $0x210] sm:$0xff] %v282
                %v284 = vld [vmem:[%s148 + $0x418] sm:$0xff]
                %285 = vst [vmem:[%s149 + $0x218] sm:$0xff] %v284
                %v286 = vld [vmem:[%s148 + $0x440] sm:$0xff]
                %287 = vst [vmem:[%s149 + $0x220] sm:$0xff] %v286
                %v288 = vld [vmem:[%s148 + $0x448] sm:$0xff]
                %289 = vst [vmem:[%s149 + $0x228] sm:$0xff] %v288
                %v290 = vld [vmem:[%s148 + $0x450] sm:$0xff]
                %291 = vst [vmem:[%s149 + $0x230] sm:$0xff] %v290
                %v292 = vld [vmem:[%s148 + $0x458] sm:$0xff]
                %293 = vst [vmem:[%s149 + $0x238] sm:$0xff] %v292
                %v294 = vld [vmem:[%s148 + $0x480] sm:$0xff]
                %295 = vst [vmem:[%s149 + $0x240] sm:$0xff] %v294
                %v296 = vld [vmem:[%s148 + $0x488] sm:$0xff]
                %297 = vst [vmem:[%s149 + $0x248] sm:$0xff] %v296
                %v298 = vld [vmem:[%s148 + $0x490] sm:$0xff]
                %299 = vst [vmem:[%s149 + $0x250] sm:$0xff] %v298
                %v300 = vld [vmem:[%s148 + $0x498] sm:$0xff]
                %301 = vst [vmem:[%s149 + $0x258] sm:$0xff] %v300
                %v302 = vld [vmem:[%s148 + $0x4c0] sm:$0xff]
                %303 = vst [vmem:[%s149 + $0x260] sm:$0xff] %v302
                %v304 = vld [vmem:[%s148 + $0x4c8] sm:$0xff]
                %305 = vst [vmem:[%s149 + $0x268] sm:$0xff] %v304
                %v306 = vld [vmem:[%s148 + $0x4d0] sm:$0xff]
                %307 = vst [vmem:[%s149 + $0x270] sm:$0xff] %v306
                %v308 = vld [vmem:[%s148 + $0x4d8] sm:$0xff]
                %309 = vst [vmem:[%s149 + $0x278] sm:$0xff] %v308
                %v310 = vld [vmem:[%s148 + $0x500] sm:$0xff]
                %311 = vst [vmem:[%s149 + $0x280] sm:$0xff] %v310
                %v312 = vld [vmem:[%s148 + $0x508] sm:$0xff]
                %313 = vst [vmem:[%s149 + $0x288] sm:$0xff] %v312
                %v314 = vld [vmem:[%s148 + $0x510] sm:$0xff]
                %315 = vst [vmem:[%s149 + $0x290] sm:$0xff] %v314
                %v316 = vld [vmem:[%s148 + $0x518] sm:$0xff]
                %317 = vst [vmem:[%s149 + $0x298] sm:$0xff] %v316
                %v318 = vld [vmem:[%s148 + $0x540] sm:$0xff]
                %319 = vst [vmem:[%s149 + $0x2a0] sm:$0xff] %v318
                %v320 = vld [vmem:[%s148 + $0x548] sm:$0xff]
                %321 = vst [vmem:[%s149 + $0x2a8] sm:$0xff] %v320
                %v322 = vld [vmem:[%s148 + $0x550] sm:$0xff]
                %323 = vst [vmem:[%s149 + $0x2b0] sm:$0xff] %v322
                %v324 = vld [vmem:[%s148 + $0x558] sm:$0xff]
                %325 = vst [vmem:[%s149 + $0x2b8] sm:$0xff] %v324
                %v326 = vld [vmem:[%s148 + $0x580] sm:$0xff]
                %327 = vst [vmem:[%s149 + $0x2c0] sm:$0xff] %v326
                %v328 = vld [vmem:[%s148 + $0x588] sm:$0xff]
                %329 = vst [vmem:[%s149 + $0x2c8] sm:$0xff] %v328
                %v330 = vld [vmem:[%s148 + $0x590] sm:$0xff]
                %331 = vst [vmem:[%s149 + $0x2d0] sm:$0xff] %v330
                %v332 = vld [vmem:[%s148 + $0x598] sm:$0xff]
                %333 = vst [vmem:[%s149 + $0x2d8] sm:$0xff] %v332
                %v334 = vld [vmem:[%s148 + $0x5c0] sm:$0xff]
                %335 = vst [vmem:[%s149 + $0x2e0] sm:$0xff] %v334
                %v336 = vld [vmem:[%s148 + $0x5c8] sm:$0xff]
                %337 = vst [vmem:[%s149 + $0x2e8] sm:$0xff] %v336
                %v338 = vld [vmem:[%s148 + $0x5d0] sm:$0xff]
                %339 = vst [vmem:[%s149 + $0x2f0] sm:$0xff] %v338
                %v340 = vld [vmem:[%s148 + $0x5d8] sm:$0xff]
                %341 = vst [vmem:[%s149 + $0x2f8] sm:$0xff] %v340
                %v342 = vld [vmem:[%s148 + $0x600] sm:$0xff]
                %343 = vst [vmem:[%s149 + $0x300] sm:$0xff] %v342
                %v344 = vld [vmem:[%s148 + $0x608] sm:$0xff]
                %345 = vst [vmem:[%s149 + $0x308] sm:$0xff] %v344
                %v346 = vld [vmem:[%s148 + $0x610] sm:$0xff]
                %347 = vst [vmem:[%s149 + $0x310] sm:$0xff] %v346
                %v348 = vld [vmem:[%s148 + $0x618] sm:$0xff]
                %349 = vst [vmem:[%s149 + $0x318] sm:$0xff] %v348
                %v350 = vld [vmem:[%s148 + $0x640] sm:$0xff]
                %351 = vst [vmem:[%s149 + $0x320] sm:$0xff] %v350
                %v352 = vld [vmem:[%s148 + $0x648] sm:$0xff]
                %353 = vst [vmem:[%s149 + $0x328] sm:$0xff] %v352
                %v354 = vld [vmem:[%s148 + $0x650] sm:$0xff]
                %355 = vst [vmem:[%s149 + $0x330] sm:$0xff] %v354
                %v356 = vld [vmem:[%s148 + $0x658] sm:$0xff]
                %357 = vst [vmem:[%s149 + $0x338] sm:$0xff] %v356
                %v358 = vld [vmem:[%s148 + $0x680] sm:$0xff]
                %359 = vst [vmem:[%s149 + $0x340] sm:$0xff] %v358
                %v360 = vld [vmem:[%s148 + $0x688] sm:$0xff]
                %361 = vst [vmem:[%s149 + $0x348] sm:$0xff] %v360
                %v362 = vld [vmem:[%s148 + $0x690] sm:$0xff]
                %363 = vst [vmem:[%s149 + $0x350] sm:$0xff] %v362
                %v364 = vld [vmem:[%s148 + $0x698] sm:$0xff]
                %365 = vst [vmem:[%s149 + $0x358] sm:$0xff] %v364
                %v366 = vld [vmem:[%s148 + $0x6c0] sm:$0xff]
                %367 = vst [vmem:[%s149 + $0x360] sm:$0xff] %v366
                %v368 = vld [vmem:[%s148 + $0x6c8] sm:$0xff]
                %369 = vst [vmem:[%s149 + $0x368] sm:$0xff] %v368
                %v370 = vld [vmem:[%s148 + $0x6d0] sm:$0xff]
                %371 = vst [vmem:[%s149 + $0x370] sm:$0xff] %v370
                %v372 = vld [vmem:[%s148 + $0x6d8] sm:$0xff]
                %373 = vst [vmem:[%s149 + $0x378] sm:$0xff] %v372
                %v374 = vld [vmem:[%s148 + $0x700] sm:$0xff]
                %375 = vst [vmem:[%s149 + $0x380] sm:$0xff] %v374
                %v376 = vld [vmem:[%s148 + $0x708] sm:$0xff]
                %377 = vst [vmem:[%s149 + $0x388] sm:$0xff] %v376
                %v378 = vld [vmem:[%s148 + $0x710] sm:$0xff]
                %379 = vst [vmem:[%s149 + $0x390] sm:$0xff] %v378
                %v380 = vld [vmem:[%s148 + $0x718] sm:$0xff]
                %381 = vst [vmem:[%s149 + $0x398] sm:$0xff] %v380
                %v382 = vld [vmem:[%s148 + $0x740] sm:$0xff]
                %383 = vst [vmem:[%s149 + $0x3a0] sm:$0xff] %v382
                %v384 = vld [vmem:[%s148 + $0x748] sm:$0xff]
                %385 = vst [vmem:[%s149 + $0x3a8] sm:$0xff] %v384
                %v386 = vld [vmem:[%s148 + $0x750] sm:$0xff]
                %387 = vst [vmem:[%s149 + $0x3b0] sm:$0xff] %v386
                %v388 = vld [vmem:[%s148 + $0x758] sm:$0xff]
                %389 = vst [vmem:[%s149 + $0x3b8] sm:$0xff] %v388
                %v390 = vld [vmem:[%s148 + $0x780] sm:$0xff]
                %391 = vst [vmem:[%s149 + $0x3c0] sm:$0xff] %v390
                %v392 = vld [vmem:[%s148 + $0x788] sm:$0xff]
                %393 = vst [vmem:[%s149 + $0x3c8] sm:$0xff] %v392
                %v394 = vld [vmem:[%s148 + $0x790] sm:$0xff]
                %395 = vst [vmem:[%s149 + $0x3d0] sm:$0xff] %v394
                %v396 = vld [vmem:[%s148 + $0x798] sm:$0xff]
                %397 = vst [vmem:[%s149 + $0x3d8] sm:$0xff] %v396
                %v398 = vld [vmem:[%s148 + $0x7c0] sm:$0xff]
                %399 = vst [vmem:[%s149 + $0x3e0] sm:$0xff] %v398
                %v400 = vld [vmem:[%s148 + $0x7c8] sm:$0xff]
                %401 = vst [vmem:[%s149 + $0x3e8] sm:$0xff] %v400
                %v402 = vld [vmem:[%s148 + $0x7d0] sm:$0xff]
                %403 = vst [vmem:[%s149 + $0x3f0] sm:$0xff] %v402
                %v404 = vld [vmem:[%s148 + $0x7d8] sm:$0xff]
                %405 = vst [vmem:[%s149 + $0x3f8] sm:$0xff] %v404
                %v406 = vld [vmem:[%s148 + $0x800] sm:$0xff]
                %407 = vst [vmem:[%s149 + $0x400] sm:$0xff] %v406
                %v408 = vld [vmem:[%s148 + $0x808] sm:$0xff]
                %409 = vst [vmem:[%s149 + $0x408] sm:$0xff] %v408
                %v410 = vld [vmem:[%s148 + $0x810] sm:$0xff]
                %411 = vst [vmem:[%s149 + $0x410] sm:$0xff] %v410
                %v412 = vld [vmem:[%s148 + $0x818] sm:$0xff]
                %413 = vst [vmem:[%s149 + $0x418] sm:$0xff] %v412
                %v414 = vld [vmem:[%s148 + $0x840] sm:$0xff]
                %415 = vst [vmem:[%s149 + $0x420] sm:$0xff] %v414
                %v416 = vld [vmem:[%s148 + $0x848] sm:$0xff]
                %417 = vst [vmem:[%s149 + $0x428] sm:$0xff] %v416
                %v418 = vld [vmem:[%s148 + $0x850] sm:$0xff]
                %419 = vst [vmem:[%s149 + $0x430] sm:$0xff] %v418
                %v420 = vld [vmem:[%s148 + $0x858] sm:$0xff]
                %421 = vst [vmem:[%s149 + $0x438] sm:$0xff] %v420
                %v422 = vld [vmem:[%s148 + $0x880] sm:$0xff]
                %423 = vst [vmem:[%s149 + $0x440] sm:$0xff] %v422
                %v424 = vld [vmem:[%s148 + $0x888] sm:$0xff]
                %425 = vst [vmem:[%s149 + $0x448] sm:$0xff] %v424
                %v426 = vld [vmem:[%s148 + $0x890] sm:$0xff]
                %427 = vst [vmem:[%s149 + $0x450] sm:$0xff] %v426
                %v428 = vld [vmem:[%s148 + $0x898] sm:$0xff]
                %429 = vst [vmem:[%s149 + $0x458] sm:$0xff] %v428
                %v430 = vld [vmem:[%s148 + $0x8c0] sm:$0xff]
                %431 = vst [vmem:[%s149 + $0x460] sm:$0xff] %v430
                %v432 = vld [vmem:[%s148 + $0x8c8] sm:$0xff]
                %433 = vst [vmem:[%s149 + $0x468] sm:$0xff] %v432
                %v434 = vld [vmem:[%s148 + $0x8d0] sm:$0xff]
                %435 = vst [vmem:[%s149 + $0x470] sm:$0xff] %v434
                %v436 = vld [vmem:[%s148 + $0x8d8] sm:$0xff]
                %437 = vst [vmem:[%s149 + $0x478] sm:$0xff] %v436
                %v438 = vld [vmem:[%s148 + $0x900] sm:$0xff]
                %439 = vst [vmem:[%s149 + $0x480] sm:$0xff] %v438
                %v440 = vld [vmem:[%s148 + $0x908] sm:$0xff]
                %441 = vst [vmem:[%s149 + $0x488] sm:$0xff] %v440
                %v442 = vld [vmem:[%s148 + $0x910] sm:$0xff]
                %443 = vst [vmem:[%s149 + $0x490] sm:$0xff] %v442
                %v444 = vld [vmem:[%s148 + $0x918] sm:$0xff]
                %445 = vst [vmem:[%s149 + $0x498] sm:$0xff] %v444
                %v446 = vld [vmem:[%s148 + $0x940] sm:$0xff]
                %447 = vst [vmem:[%s149 + $0x4a0] sm:$0xff] %v446
                %v448 = vld [vmem:[%s148 + $0x948] sm:$0xff]
                %449 = vst [vmem:[%s149 + $0x4a8] sm:$0xff] %v448
                %v450 = vld [vmem:[%s148 + $0x950] sm:$0xff]
                %451 = vst [vmem:[%s149 + $0x4b0] sm:$0xff] %v450
                %v452 = vld [vmem:[%s148 + $0x958] sm:$0xff]
                %453 = vst [vmem:[%s149 + $0x4b8] sm:$0xff] %v452
                %v454 = vld [vmem:[%s148 + $0x980] sm:$0xff]
                %455 = vst [vmem:[%s149 + $0x4c0] sm:$0xff] %v454
                %v456 = vld [vmem:[%s148 + $0x988] sm:$0xff]
                %457 = vst [vmem:[%s149 + $0x4c8] sm:$0xff] %v456
                %v458 = vld [vmem:[%s148 + $0x990] sm:$0xff]
                %459 = vst [vmem:[%s149 + $0x4d0] sm:$0xff] %v458
                %v460 = vld [vmem:[%s148 + $0x998] sm:$0xff]
                %461 = vst [vmem:[%s149 + $0x4d8] sm:$0xff] %v460
                %v462 = vld [vmem:[%s148 + $0x9c0] sm:$0xff]
                %463 = vst [vmem:[%s149 + $0x4e0] sm:$0xff] %v462
                %v464 = vld [vmem:[%s148 + $0x9c8] sm:$0xff]
                %465 = vst [vmem:[%s149 + $0x4e8] sm:$0xff] %v464
                %v466 = vld [vmem:[%s148 + $0x9d0] sm:$0xff]
                %467 = vst [vmem:[%s149 + $0x4f0] sm:$0xff] %v466
                %v468 = vld [vmem:[%s148 + $0x9d8] sm:$0xff]
                %469 = vst [vmem:[%s149 + $0x4f8] sm:$0xff] %v468
                %v470 = vld [vmem:[%s148 + $0xa00] sm:$0xff]
                %471 = vst [vmem:[%s149 + $0x500] sm:$0xff] %v470
                %v472 = vld [vmem:[%s148 + $0xa08] sm:$0xff]
                %473 = vst [vmem:[%s149 + $0x508] sm:$0xff] %v472
                %v474 = vld [vmem:[%s148 + $0xa10] sm:$0xff]
                %475 = vst [vmem:[%s149 + $0x510] sm:$0xff] %v474
                %v476 = vld [vmem:[%s148 + $0xa18] sm:$0xff]
                %477 = vst [vmem:[%s149 + $0x518] sm:$0xff] %v476
                %v478 = vld [vmem:[%s148 + $0xa40] sm:$0xff]
                %479 = vst [vmem:[%s149 + $0x520] sm:$0xff] %v478
                %v480 = vld [vmem:[%s148 + $0xa48] sm:$0xff]
                %481 = vst [vmem:[%s149 + $0x528] sm:$0xff] %v480
                %v482 = vld [vmem:[%s148 + $0xa50] sm:$0xff]
                %483 = vst [vmem:[%s149 + $0x530] sm:$0xff] %v482
                %v484 = vld [vmem:[%s148 + $0xa58] sm:$0xff]
                %485 = vst [vmem:[%s149 + $0x538] sm:$0xff] %v484
                %v486 = vld [vmem:[%s148 + $0xa80] sm:$0xff]
                %487 = vst [vmem:[%s149 + $0x540] sm:$0xff] %v486
                %v488 = vld [vmem:[%s148 + $0xa88] sm:$0xff]
                %489 = vst [vmem:[%s149 + $0x548] sm:$0xff] %v488
                %v490 = vld [vmem:[%s148 + $0xa90] sm:$0xff]
                %491 = vst [vmem:[%s149 + $0x550] sm:$0xff] %v490
                %v492 = vld [vmem:[%s148 + $0xa98] sm:$0xff]
                %493 = vst [vmem:[%s149 + $0x558] sm:$0xff] %v492
                %v494 = vld [vmem:[%s148 + $0xac0] sm:$0xff]
                %495 = vst [vmem:[%s149 + $0x560] sm:$0xff] %v494
                %v496 = vld [vmem:[%s148 + $0xac8] sm:$0xff]
                %497 = vst [vmem:[%s149 + $0x568] sm:$0xff] %v496
                %v498 = vld [vmem:[%s148 + $0xad0] sm:$0xff]
                %499 = vst [vmem:[%s149 + $0x570] sm:$0xff] %v498
                %v500 = vld [vmem:[%s148 + $0xad8] sm:$0xff]
                %501 = vst [vmem:[%s149 + $0x578] sm:$0xff] %v500
                %v502 = vld [vmem:[%s148 + $0xb00] sm:$0xff]
                %503 = vst [vmem:[%s149 + $0x580] sm:$0xff] %v502
                %v504 = vld [vmem:[%s148 + $0xb08] sm:$0xff]
                %505 = vst [vmem:[%s149 + $0x588] sm:$0xff] %v504
                %v506 = vld [vmem:[%s148 + $0xb10] sm:$0xff]
                %507 = vst [vmem:[%s149 + $0x590] sm:$0xff] %v506
                %v508 = vld [vmem:[%s148 + $0xb18] sm:$0xff]
                %509 = vst [vmem:[%s149 + $0x598] sm:$0xff] %v508
                %v510 = vld [vmem:[%s148 + $0xb40] sm:$0xff]
                %511 = vst [vmem:[%s149 + $0x5a0] sm:$0xff] %v510
                %v512 = vld [vmem:[%s148 + $0xb48] sm:$0xff]
                %513 = vst [vmem:[%s149 + $0x5a8] sm:$0xff] %v512
                %v514 = vld [vmem:[%s148 + $0xb50] sm:$0xff]
                %515 = vst [vmem:[%s149 + $0x5b0] sm:$0xff] %v514
                %v516 = vld [vmem:[%s148 + $0xb58] sm:$0xff]
                %517 = vst [vmem:[%s149 + $0x5b8] sm:$0xff] %v516
                %v518 = vld [vmem:[%s148 + $0xb80] sm:$0xff]
                %519 = vst [vmem:[%s149 + $0x5c0] sm:$0xff] %v518
                %v520 = vld [vmem:[%s148 + $0xb88] sm:$0xff]
                %521 = vst [vmem:[%s149 + $0x5c8] sm:$0xff] %v520
                %v522 = vld [vmem:[%s148 + $0xb90] sm:$0xff]
                %523 = vst [vmem:[%s149 + $0x5d0] sm:$0xff] %v522
                %v524 = vld [vmem:[%s148 + $0xb98] sm:$0xff]
                %525 = vst [vmem:[%s149 + $0x5d8] sm:$0xff] %v524
                %v526 = vld [vmem:[%s148 + $0xbc0] sm:$0xff]
                %527 = vst [vmem:[%s149 + $0x5e0] sm:$0xff] %v526
                %v528 = vld [vmem:[%s148 + $0xbc8] sm:$0xff]
                %529 = vst [vmem:[%s149 + $0x5e8] sm:$0xff] %v528
                %v530 = vld [vmem:[%s148 + $0xbd0] sm:$0xff]
                %531 = vst [vmem:[%s149 + $0x5f0] sm:$0xff] %v530
                %v532 = vld [vmem:[%s148 + $0xbd8] sm:$0xff]
                %533 = vst [vmem:[%s149 + $0x5f8] sm:$0xff] %v532
                %v534 = vld [vmem:[%s148 + $0xc00] sm:$0xff]
                %535 = vst [vmem:[%s149 + $0x600] sm:$0xff] %v534
                %v536 = vld [vmem:[%s148 + $0xc08] sm:$0xff]
                %537 = vst [vmem:[%s149 + $0x608] sm:$0xff] %v536
                %v538 = vld [vmem:[%s148 + $0xc10] sm:$0xff]
                %539 = vst [vmem:[%s149 + $0x610] sm:$0xff] %v538
                %v540 = vld [vmem:[%s148 + $0xc18] sm:$0xff]
                %541 = vst [vmem:[%s149 + $0x618] sm:$0xff] %v540
                %v542 = vld [vmem:[%s148 + $0xc40] sm:$0xff]
                %543 = vst [vmem:[%s149 + $0x620] sm:$0xff] %v542
                %v544 = vld [vmem:[%s148 + $0xc48] sm:$0xff]
                %545 = vst [vmem:[%s149 + $0x628] sm:$0xff] %v544
                %v546 = vld [vmem:[%s148 + $0xc50] sm:$0xff]
                %547 = vst [vmem:[%s149 + $0x630] sm:$0xff] %v546
                %v548 = vld [vmem:[%s148 + $0xc58] sm:$0xff]
                %549 = vst [vmem:[%s149 + $0x638] sm:$0xff] %v548
                %v550 = vld [vmem:[%s148 + $0xc80] sm:$0xff]
                %551 = vst [vmem:[%s149 + $0x640] sm:$0xff] %v550
                %v552 = vld [vmem:[%s148 + $0xc88] sm:$0xff]
                %553 = vst [vmem:[%s149 + $0x648] sm:$0xff] %v552
                %v554 = vld [vmem:[%s148 + $0xc90] sm:$0xff]
                %555 = vst [vmem:[%s149 + $0x650] sm:$0xff] %v554
                %v556 = vld [vmem:[%s148 + $0xc98] sm:$0xff]
                %557 = vst [vmem:[%s149 + $0x658] sm:$0xff] %v556
                %v558 = vld [vmem:[%s148 + $0xcc0] sm:$0xff]
                %559 = vst [vmem:[%s149 + $0x660] sm:$0xff] %v558
                %v560 = vld [vmem:[%s148 + $0xcc8] sm:$0xff]
                %561 = vst [vmem:[%s149 + $0x668] sm:$0xff] %v560
                %v562 = vld [vmem:[%s148 + $0xcd0] sm:$0xff]
                %563 = vst [vmem:[%s149 + $0x670] sm:$0xff] %v562
                %v564 = vld [vmem:[%s148 + $0xcd8] sm:$0xff]
                %565 = vst [vmem:[%s149 + $0x678] sm:$0xff] %v564
                %v566 = vld [vmem:[%s148 + $0xd00] sm:$0xff]
                %567 = vst [vmem:[%s149 + $0x680] sm:$0xff] %v566
                %v568 = vld [vmem:[%s148 + $0xd08] sm:$0xff]
                %569 = vst [vmem:[%s149 + $0x688] sm:$0xff] %v568
                %v570 = vld [vmem:[%s148 + $0xd10] sm:$0xff]
                %571 = vst [vmem:[%s149 + $0x690] sm:$0xff] %v570
                %v572 = vld [vmem:[%s148 + $0xd18] sm:$0xff]
                %573 = vst [vmem:[%s149 + $0x698] sm:$0xff] %v572
                %v574 = vld [vmem:[%s148 + $0xd40] sm:$0xff]
                %575 = vst [vmem:[%s149 + $0x6a0] sm:$0xff] %v574
                %v576 = vld [vmem:[%s148 + $0xd48] sm:$0xff]
                %577 = vst [vmem:[%s149 + $0x6a8] sm:$0xff] %v576
                %v578 = vld [vmem:[%s148 + $0xd50] sm:$0xff]
                %579 = vst [vmem:[%s149 + $0x6b0] sm:$0xff] %v578
                %v580 = vld [vmem:[%s148 + $0xd58] sm:$0xff]
                %581 = vst [vmem:[%s149 + $0x6b8] sm:$0xff] %v580
                %v582 = vld [vmem:[%s148 + $0xd80] sm:$0xff]
                %583 = vst [vmem:[%s149 + $0x6c0] sm:$0xff] %v582
                %v584 = vld [vmem:[%s148 + $0xd88] sm:$0xff]
                %585 = vst [vmem:[%s149 + $0x6c8] sm:$0xff] %v584
                %v586 = vld [vmem:[%s148 + $0xd90] sm:$0xff]
                %587 = vst [vmem:[%s149 + $0x6d0] sm:$0xff] %v586
                %v588 = vld [vmem:[%s148 + $0xd98] sm:$0xff]
                %589 = vst [vmem:[%s149 + $0x6d8] sm:$0xff] %v588
                %v590 = vld [vmem:[%s148 + $0xdc0] sm:$0xff]
                %591 = vst [vmem:[%s149 + $0x6e0] sm:$0xff] %v590
                %v592 = vld [vmem:[%s148 + $0xdc8] sm:$0xff]
                %593 = vst [vmem:[%s149 + $0x6e8] sm:$0xff] %v592
                %v594 = vld [vmem:[%s148 + $0xdd0] sm:$0xff]
                %595 = vst [vmem:[%s149 + $0x6f0] sm:$0xff] %v594
                %v596 = vld [vmem:[%s148 + $0xdd8] sm:$0xff]
                %597 = vst [vmem:[%s149 + $0x6f8] sm:$0xff] %v596
                %v598 = vld [vmem:[%s148 + $0xe00] sm:$0xff]
                %599 = vst [vmem:[%s149 + $0x700] sm:$0xff] %v598
                %v600 = vld [vmem:[%s148 + $0xe08] sm:$0xff]
                %601 = vst [vmem:[%s149 + $0x708] sm:$0xff] %v600
                %v602 = vld [vmem:[%s148 + $0xe10] sm:$0xff]
                %603 = vst [vmem:[%s149 + $0x710] sm:$0xff] %v602
                %v604 = vld [vmem:[%s148 + $0xe18] sm:$0xff]
                %605 = vst [vmem:[%s149 + $0x718] sm:$0xff] %v604
                %v606 = vld [vmem:[%s148 + $0xe40] sm:$0xff]
                %607 = vst [vmem:[%s149 + $0x720] sm:$0xff] %v606
                %v608 = vld [vmem:[%s148 + $0xe48] sm:$0xff]
                %609 = vst [vmem:[%s149 + $0x728] sm:$0xff] %v608
                %v610 = vld [vmem:[%s148 + $0xe50] sm:$0xff]
                %611 = vst [vmem:[%s149 + $0x730] sm:$0xff] %v610
                %v612 = vld [vmem:[%s148 + $0xe58] sm:$0xff]
                %613 = vst [vmem:[%s149 + $0x738] sm:$0xff] %v612
                %v614 = vld [vmem:[%s148 + $0xe80] sm:$0xff]
                %615 = vst [vmem:[%s149 + $0x740] sm:$0xff] %v614
                %v616 = vld [vmem:[%s148 + $0xe88] sm:$0xff]
                %617 = vst [vmem:[%s149 + $0x748] sm:$0xff] %v616
                %v618 = vld [vmem:[%s148 + $0xe90] sm:$0xff]
                %619 = vst [vmem:[%s149 + $0x750] sm:$0xff] %v618
                %v620 = vld [vmem:[%s148 + $0xe98] sm:$0xff]
                %621 = vst [vmem:[%s149 + $0x758] sm:$0xff] %v620
                %v622 = vld [vmem:[%s148 + $0xec0] sm:$0xff]
                %623 = vst [vmem:[%s149 + $0x760] sm:$0xff] %v622
                %v624 = vld [vmem:[%s148 + $0xec8] sm:$0xff]
                %625 = vst [vmem:[%s149 + $0x768] sm:$0xff] %v624
                %v626 = vld [vmem:[%s148 + $0xed0] sm:$0xff]
                %627 = vst [vmem:[%s149 + $0x770] sm:$0xff] %v626
                %v628 = vld [vmem:[%s148 + $0xed8] sm:$0xff]
                %629 = vst [vmem:[%s149 + $0x778] sm:$0xff] %v628
                %v630 = vld [vmem:[%s148 + $0xf00] sm:$0xff]
                %631 = vst [vmem:[%s149 + $0x780] sm:$0xff] %v630
                %v632 = vld [vmem:[%s148 + $0xf08] sm:$0xff]
                %633 = vst [vmem:[%s149 + $0x788] sm:$0xff] %v632
                %v634 = vld [vmem:[%s148 + $0xf10] sm:$0xff]
                %635 = vst [vmem:[%s149 + $0x790] sm:$0xff] %v634
                %v636 = vld [vmem:[%s148 + $0xf18] sm:$0xff]
                %637 = vst [vmem:[%s149 + $0x798] sm:$0xff] %v636
                %v638 = vld [vmem:[%s148 + $0xf40] sm:$0xff]
                %639 = vst [vmem:[%s149 + $0x7a0] sm:$0xff] %v638
                %v640 = vld [vmem:[%s148 + $0xf48] sm:$0xff]
                %641 = vst [vmem:[%s149 + $0x7a8] sm:$0xff] %v640
                %v642 = vld [vmem:[%s148 + $0xf50] sm:$0xff]
                %643 = vst [vmem:[%s149 + $0x7b0] sm:$0xff] %v642
                %v644 = vld [vmem:[%s148 + $0xf58] sm:$0xff]
                %645 = vst [vmem:[%s149 + $0x7b8] sm:$0xff] %v644
                %v646 = vld [vmem:[%s148 + $0xf80] sm:$0xff]
                %647 = vst [vmem:[%s149 + $0x7c0] sm:$0xff] %v646
                %v648 = vld [vmem:[%s148 + $0xf88] sm:$0xff]
                %649 = vst [vmem:[%s149 + $0x7c8] sm:$0xff] %v648
                %v650 = vld [vmem:[%s148 + $0xf90] sm:$0xff]
                %651 = vst [vmem:[%s149 + $0x7d0] sm:$0xff] %v650
                %v652 = vld [vmem:[%s148 + $0xf98] sm:$0xff]
                %653 = vst [vmem:[%s149 + $0x7d8] sm:$0xff] %v652
                %v654 = vld [vmem:[%s148 + $0xfc0] sm:$0xff]
                %655 = vst [vmem:[%s149 + $0x7e0] sm:$0xff] %v654
                %v656 = vld [vmem:[%s148 + $0xfc8] sm:$0xff]
                %657 = vst [vmem:[%s149 + $0x7e8] sm:$0xff] %v656
                %v658 = vld [vmem:[%s148 + $0xfd0] sm:$0xff]
                %659 = vst [vmem:[%s149 + $0x7f0] sm:$0xff] %v658
                %v660 = vld [vmem:[%s148 + $0xfd8] sm:$0xff]
                %661 = vst [vmem:[%s149 + $0x7f8] sm:$0xff] %v660
                %v662 = vld [vmem:[%s148 + $0x1000] sm:$0xff]
                %663 = vst [vmem:[%s149 + $0x800] sm:$0xff] %v662
                %v664 = vld [vmem:[%s148 + $0x1008] sm:$0xff]
                %665 = vst [vmem:[%s149 + $0x808] sm:$0xff] %v664
                %v666 = vld [vmem:[%s148 + $0x1010] sm:$0xff]
                %667 = vst [vmem:[%s149 + $0x810] sm:$0xff] %v666
                %v668 = vld [vmem:[%s148 + $0x1018] sm:$0xff]
                %669 = vst [vmem:[%s149 + $0x818] sm:$0xff] %v668
                %v670 = vld [vmem:[%s148 + $0x1040] sm:$0xff]
                %671 = vst [vmem:[%s149 + $0x820] sm:$0xff] %v670
                %v672 = vld [vmem:[%s148 + $0x1048] sm:$0xff]
                %673 = vst [vmem:[%s149 + $0x828] sm:$0xff] %v672
                %v674 = vld [vmem:[%s148 + $0x1050] sm:$0xff]
                %675 = vst [vmem:[%s149 + $0x830] sm:$0xff] %v674
                %v676 = vld [vmem:[%s148 + $0x1058] sm:$0xff]
                %677 = vst [vmem:[%s149 + $0x838] sm:$0xff] %v676
                %v678 = vld [vmem:[%s148 + $0x1080] sm:$0xff]
                %679 = vst [vmem:[%s149 + $0x840] sm:$0xff] %v678
                %v680 = vld [vmem:[%s148 + $0x1088] sm:$0xff]
                %681 = vst [vmem:[%s149 + $0x848] sm:$0xff] %v680
                %v682 = vld [vmem:[%s148 + $0x1090] sm:$0xff]
                %683 = vst [vmem:[%s149 + $0x850] sm:$0xff] %v682
                %v684 = vld [vmem:[%s148 + $0x1098] sm:$0xff]
                %685 = vst [vmem:[%s149 + $0x858] sm:$0xff] %v684
                %v686 = vld [vmem:[%s148 + $0x10c0] sm:$0xff]
                %687 = vst [vmem:[%s149 + $0x860] sm:$0xff] %v686
                %v688 = vld [vmem:[%s148 + $0x10c8] sm:$0xff]
                %689 = vst [vmem:[%s149 + $0x868] sm:$0xff] %v688
                %v690 = vld [vmem:[%s148 + $0x10d0] sm:$0xff]
                %691 = vst [vmem:[%s149 + $0x870] sm:$0xff] %v690
                %v692 = vld [vmem:[%s148 + $0x10d8] sm:$0xff]
                %693 = vst [vmem:[%s149 + $0x878] sm:$0xff] %v692
                %v694 = vld [vmem:[%s148 + $0x1100] sm:$0xff]
                %695 = vst [vmem:[%s149 + $0x880] sm:$0xff] %v694
                %v696 = vld [vmem:[%s148 + $0x1108] sm:$0xff]
                %697 = vst [vmem:[%s149 + $0x888] sm:$0xff] %v696
                %v698 = vld [vmem:[%s148 + $0x1110] sm:$0xff]
                %699 = vst [vmem:[%s149 + $0x890] sm:$0xff] %v698
                %v700 = vld [vmem:[%s148 + $0x1118] sm:$0xff]
                %701 = vst [vmem:[%s149 + $0x898] sm:$0xff] %v700
                %v702 = vld [vmem:[%s148 + $0x1140] sm:$0xff]
                %703 = vst [vmem:[%s149 + $0x8a0] sm:$0xff] %v702
                %v704 = vld [vmem:[%s148 + $0x1148] sm:$0xff]
                %705 = vst [vmem:[%s149 + $0x8a8] sm:$0xff] %v704
                %v706 = vld [vmem:[%s148 + $0x1150] sm:$0xff]
                %707 = vst [vmem:[%s149 + $0x8b0] sm:$0xff] %v706
                %v708 = vld [vmem:[%s148 + $0x1158] sm:$0xff]
                %709 = vst [vmem:[%s149 + $0x8b8] sm:$0xff] %v708
                %v710 = vld [vmem:[%s148 + $0x1180] sm:$0xff]
                %711 = vst [vmem:[%s149 + $0x8c0] sm:$0xff] %v710
                %v712 = vld [vmem:[%s148 + $0x1188] sm:$0xff]
                %713 = vst [vmem:[%s149 + $0x8c8] sm:$0xff] %v712
                %v714 = vld [vmem:[%s148 + $0x1190] sm:$0xff]
                %715 = vst [vmem:[%s149 + $0x8d0] sm:$0xff] %v714
                %v716 = vld [vmem:[%s148 + $0x1198] sm:$0xff]
                %717 = vst [vmem:[%s149 + $0x8d8] sm:$0xff] %v716
                %v718 = vld [vmem:[%s148 + $0x11c0] sm:$0xff]
                %719 = vst [vmem:[%s149 + $0x8e0] sm:$0xff] %v718
                %v720 = vld [vmem:[%s148 + $0x11c8] sm:$0xff]
                %721 = vst [vmem:[%s149 + $0x8e8] sm:$0xff] %v720
                %v722 = vld [vmem:[%s148 + $0x11d0] sm:$0xff]
                %723 = vst [vmem:[%s149 + $0x8f0] sm:$0xff] %v722
                %v724 = vld [vmem:[%s148 + $0x11d8] sm:$0xff]
                %725 = vst [vmem:[%s149 + $0x8f8] sm:$0xff] %v724
                %v726 = vld [vmem:[%s148 + $0x1200] sm:$0xff]
                %727 = vst [vmem:[%s149 + $0x900] sm:$0xff] %v726
                %v728 = vld [vmem:[%s148 + $0x1208] sm:$0xff]
                %729 = vst [vmem:[%s149 + $0x908] sm:$0xff] %v728
                %v730 = vld [vmem:[%s148 + $0x1210] sm:$0xff]
                %731 = vst [vmem:[%s149 + $0x910] sm:$0xff] %v730
                %v732 = vld [vmem:[%s148 + $0x1218] sm:$0xff]
                %733 = vst [vmem:[%s149 + $0x918] sm:$0xff] %v732
                %v734 = vld [vmem:[%s148 + $0x1240] sm:$0xff]
                %735 = vst [vmem:[%s149 + $0x920] sm:$0xff] %v734
                %v736 = vld [vmem:[%s148 + $0x1248] sm:$0xff]
                %737 = vst [vmem:[%s149 + $0x928] sm:$0xff] %v736
                %v738 = vld [vmem:[%s148 + $0x1250] sm:$0xff]
                %739 = vst [vmem:[%s149 + $0x930] sm:$0xff] %v738
                %v740 = vld [vmem:[%s148 + $0x1258] sm:$0xff]
                %741 = vst [vmem:[%s149 + $0x938] sm:$0xff] %v740
                %v742 = vld [vmem:[%s148 + $0x1280] sm:$0xff]
                %743 = vst [vmem:[%s149 + $0x940] sm:$0xff] %v742
                %v744 = vld [vmem:[%s148 + $0x1288] sm:$0xff]
                %745 = vst [vmem:[%s149 + $0x948] sm:$0xff] %v744
                %v746 = vld [vmem:[%s148 + $0x1290] sm:$0xff]
                %747 = vst [vmem:[%s149 + $0x950] sm:$0xff] %v746
                %v748 = vld [vmem:[%s148 + $0x1298] sm:$0xff]
                %749 = vst [vmem:[%s149 + $0x958] sm:$0xff] %v748
                %v750 = vld [vmem:[%s148 + $0x12c0] sm:$0xff]
                %751 = vst [vmem:[%s149 + $0x960] sm:$0xff] %v750
                %v752 = vld [vmem:[%s148 + $0x12c8] sm:$0xff]
                %753 = vst [vmem:[%s149 + $0x968] sm:$0xff] %v752
                %v754 = vld [vmem:[%s148 + $0x12d0] sm:$0xff]
                %755 = vst [vmem:[%s149 + $0x970] sm:$0xff] %v754
                %v756 = vld [vmem:[%s148 + $0x12d8] sm:$0xff]
                %757 = vst [vmem:[%s149 + $0x978] sm:$0xff] %v756
                %v758 = vld [vmem:[%s148 + $0x1300] sm:$0xff]
                %759 = vst [vmem:[%s149 + $0x980] sm:$0xff] %v758
                %v760 = vld [vmem:[%s148 + $0x1308] sm:$0xff]
                %761 = vst [vmem:[%s149 + $0x988] sm:$0xff] %v760
                %v762 = vld [vmem:[%s148 + $0x1310] sm:$0xff]
                %763 = vst [vmem:[%s149 + $0x990] sm:$0xff] %v762
                %v764 = vld [vmem:[%s148 + $0x1318] sm:$0xff]
                %765 = vst [vmem:[%s149 + $0x998] sm:$0xff] %v764
                %v766 = vld [vmem:[%s148 + $0x1340] sm:$0xff]
                %767 = vst [vmem:[%s149 + $0x9a0] sm:$0xff] %v766
                %v768 = vld [vmem:[%s148 + $0x1348] sm:$0xff]
                %769 = vst [vmem:[%s149 + $0x9a8] sm:$0xff] %v768
                %v770 = vld [vmem:[%s148 + $0x1350] sm:$0xff]
                %771 = vst [vmem:[%s149 + $0x9b0] sm:$0xff] %v770
                %v772 = vld [vmem:[%s148 + $0x1358] sm:$0xff]
                %773 = vst [vmem:[%s149 + $0x9b8] sm:$0xff] %v772
                %v774 = vld [vmem:[%s148 + $0x1380] sm:$0xff]
                %775 = vst [vmem:[%s149 + $0x9c0] sm:$0xff] %v774
                %v776 = vld [vmem:[%s148 + $0x1388] sm:$0xff]
                %777 = vst [vmem:[%s149 + $0x9c8] sm:$0xff] %v776
                %v778 = vld [vmem:[%s148 + $0x1390] sm:$0xff]
                %779 = vst [vmem:[%s149 + $0x9d0] sm:$0xff] %v778
                %v780 = vld [vmem:[%s148 + $0x1398] sm:$0xff]
                %781 = vst [vmem:[%s149 + $0x9d8] sm:$0xff] %v780
                %v782 = vld [vmem:[%s148 + $0x13c0] sm:$0xff]
                %783 = vst [vmem:[%s149 + $0x9e0] sm:$0xff] %v782
                %v784 = vld [vmem:[%s148 + $0x13c8] sm:$0xff]
                %785 = vst [vmem:[%s149 + $0x9e8] sm:$0xff] %v784
                %v786 = vld [vmem:[%s148 + $0x13d0] sm:$0xff]
                %787 = vst [vmem:[%s149 + $0x9f0] sm:$0xff] %v786
                %v788 = vld [vmem:[%s148 + $0x13d8] sm:$0xff]
                %789 = vst [vmem:[%s149 + $0x9f8] sm:$0xff] %v788
                %v790 = vld [vmem:[%s148 + $0x1400] sm:$0xff]
                %791 = vst [vmem:[%s149 + $0xa00] sm:$0xff] %v790
                %v792 = vld [vmem:[%s148 + $0x1408] sm:$0xff]
                %793 = vst [vmem:[%s149 + $0xa08] sm:$0xff] %v792
                %v794 = vld [vmem:[%s148 + $0x1410] sm:$0xff]
                %795 = vst [vmem:[%s149 + $0xa10] sm:$0xff] %v794
                %v796 = vld [vmem:[%s148 + $0x1418] sm:$0xff]
                %797 = vst [vmem:[%s149 + $0xa18] sm:$0xff] %v796
                %v798 = vld [vmem:[%s148 + $0x1440] sm:$0xff]
                %799 = vst [vmem:[%s149 + $0xa20] sm:$0xff] %v798
                %v800 = vld [vmem:[%s148 + $0x1448] sm:$0xff]
                %801 = vst [vmem:[%s149 + $0xa28] sm:$0xff] %v800
                %v802 = vld [vmem:[%s148 + $0x1450] sm:$0xff]
                %803 = vst [vmem:[%s149 + $0xa30] sm:$0xff] %v802
                %v804 = vld [vmem:[%s148 + $0x1458] sm:$0xff]
                %805 = vst [vmem:[%s149 + $0xa38] sm:$0xff] %v804
                %v806 = vld [vmem:[%s148 + $0x1480] sm:$0xff]
                %807 = vst [vmem:[%s149 + $0xa40] sm:$0xff] %v806
                %v808 = vld [vmem:[%s148 + $0x1488] sm:$0xff]
                %809 = vst [vmem:[%s149 + $0xa48] sm:$0xff] %v808
                %v810 = vld [vmem:[%s148 + $0x1490] sm:$0xff]
                %811 = vst [vmem:[%s149 + $0xa50] sm:$0xff] %v810
                %v812 = vld [vmem:[%s148 + $0x1498] sm:$0xff]
                %813 = vst [vmem:[%s149 + $0xa58] sm:$0xff] %v812
                %v814 = vld [vmem:[%s148 + $0x14c0] sm:$0xff]
                %815 = vst [vmem:[%s149 + $0xa60] sm:$0xff] %v814
                %v816 = vld [vmem:[%s148 + $0x14c8] sm:$0xff]
                %817 = vst [vmem:[%s149 + $0xa68] sm:$0xff] %v816
                %v818 = vld [vmem:[%s148 + $0x14d0] sm:$0xff]
                %819 = vst [vmem:[%s149 + $0xa70] sm:$0xff] %v818
                %v820 = vld [vmem:[%s148 + $0x14d8] sm:$0xff]
                %821 = vst [vmem:[%s149 + $0xa78] sm:$0xff] %v820
                %v822 = vld [vmem:[%s148 + $0x1500] sm:$0xff]
                %823 = vst [vmem:[%s149 + $0xa80] sm:$0xff] %v822
                %v824 = vld [vmem:[%s148 + $0x1508] sm:$0xff]
                %825 = vst [vmem:[%s149 + $0xa88] sm:$0xff] %v824
                %v826 = vld [vmem:[%s148 + $0x1510] sm:$0xff]
                %827 = vst [vmem:[%s149 + $0xa90] sm:$0xff] %v826
                %v828 = vld [vmem:[%s148 + $0x1518] sm:$0xff]
                %829 = vst [vmem:[%s149 + $0xa98] sm:$0xff] %v828
                %v830 = vld [vmem:[%s148 + $0x1540] sm:$0xff]
                %831 = vst [vmem:[%s149 + $0xaa0] sm:$0xff] %v830
                %v832 = vld [vmem:[%s148 + $0x1548] sm:$0xff]
                %833 = vst [vmem:[%s149 + $0xaa8] sm:$0xff] %v832
                %v834 = vld [vmem:[%s148 + $0x1550] sm:$0xff]
                %835 = vst [vmem:[%s149 + $0xab0] sm:$0xff] %v834
                %v836 = vld [vmem:[%s148 + $0x1558] sm:$0xff]
                %837 = vst [vmem:[%s149 + $0xab8] sm:$0xff] %v836
                %v838 = vld [vmem:[%s148 + $0x1580] sm:$0xff]
                %839 = vst [vmem:[%s149 + $0xac0] sm:$0xff] %v838
                %v840 = vld [vmem:[%s148 + $0x1588] sm:$0xff]
                %841 = vst [vmem:[%s149 + $0xac8] sm:$0xff] %v840
                %v842 = vld [vmem:[%s148 + $0x1590] sm:$0xff]
                %843 = vst [vmem:[%s149 + $0xad0] sm:$0xff] %v842
                %v844 = vld [vmem:[%s148 + $0x1598] sm:$0xff]
                %845 = vst [vmem:[%s149 + $0xad8] sm:$0xff] %v844
                %v846 = vld [vmem:[%s148 + $0x15c0] sm:$0xff]
                %847 = vst [vmem:[%s149 + $0xae0] sm:$0xff] %v846
                %v848 = vld [vmem:[%s148 + $0x15c8] sm:$0xff]
                %849 = vst [vmem:[%s149 + $0xae8] sm:$0xff] %v848
                %v850 = vld [vmem:[%s148 + $0x15d0] sm:$0xff]
                %851 = vst [vmem:[%s149 + $0xaf0] sm:$0xff] %v850
                %v852 = vld [vmem:[%s148 + $0x15d8] sm:$0xff]
                %853 = vst [vmem:[%s149 + $0xaf8] sm:$0xff] %v852
                %v854 = vld [vmem:[%s148 + $0x1600] sm:$0xff]
                %855 = vst [vmem:[%s149 + $0xb00] sm:$0xff] %v854
                %v856 = vld [vmem:[%s148 + $0x1608] sm:$0xff]
                %857 = vst [vmem:[%s149 + $0xb08] sm:$0xff] %v856
                %v858 = vld [vmem:[%s148 + $0x1610] sm:$0xff]
                %859 = vst [vmem:[%s149 + $0xb10] sm:$0xff] %v858
                %v860 = vld [vmem:[%s148 + $0x1618] sm:$0xff]
                %861 = vst [vmem:[%s149 + $0xb18] sm:$0xff] %v860
                %v862 = vld [vmem:[%s148 + $0x1640] sm:$0xff]
                %863 = vst [vmem:[%s149 + $0xb20] sm:$0xff] %v862
                %v864 = vld [vmem:[%s148 + $0x1648] sm:$0xff]
                %865 = vst [vmem:[%s149 + $0xb28] sm:$0xff] %v864
                %v866 = vld [vmem:[%s148 + $0x1650] sm:$0xff]
                %867 = vst [vmem:[%s149 + $0xb30] sm:$0xff] %v866
                %v868 = vld [vmem:[%s148 + $0x1658] sm:$0xff]
                %869 = vst [vmem:[%s149 + $0xb38] sm:$0xff] %v868
                %v870 = vld [vmem:[%s148 + $0x1680] sm:$0xff]
                %871 = vst [vmem:[%s149 + $0xb40] sm:$0xff] %v870
                %v872 = vld [vmem:[%s148 + $0x1688] sm:$0xff]
                %873 = vst [vmem:[%s149 + $0xb48] sm:$0xff] %v872
                %v874 = vld [vmem:[%s148 + $0x1690] sm:$0xff]
                %875 = vst [vmem:[%s149 + $0xb50] sm:$0xff] %v874
                %v876 = vld [vmem:[%s148 + $0x1698] sm:$0xff]
                %877 = vst [vmem:[%s149 + $0xb58] sm:$0xff] %v876
                %v878 = vld [vmem:[%s148 + $0x16c0] sm:$0xff]
                %879 = vst [vmem:[%s149 + $0xb60] sm:$0xff] %v878
                %v880 = vld [vmem:[%s148 + $0x16c8] sm:$0xff]
                %881 = vst [vmem:[%s149 + $0xb68] sm:$0xff] %v880
                %v882 = vld [vmem:[%s148 + $0x16d0] sm:$0xff]
                %883 = vst [vmem:[%s149 + $0xb70] sm:$0xff] %v882
                %v884 = vld [vmem:[%s148 + $0x16d8] sm:$0xff]
                %885 = vst [vmem:[%s149 + $0xb78] sm:$0xff] %v884
                %v886 = vld [vmem:[%s148 + $0x1700] sm:$0xff]
                %887 = vst [vmem:[%s149 + $0xb80] sm:$0xff] %v886
                %v888 = vld [vmem:[%s148 + $0x1708] sm:$0xff]
                %889 = vst [vmem:[%s149 + $0xb88] sm:$0xff] %v888
                %v890 = vld [vmem:[%s148 + $0x1710] sm:$0xff]
                %891 = vst [vmem:[%s149 + $0xb90] sm:$0xff] %v890
                %v892 = vld [vmem:[%s148 + $0x1718] sm:$0xff]
                %893 = vst [vmem:[%s149 + $0xb98] sm:$0xff] %v892
                %v894 = vld [vmem:[%s148 + $0x1740] sm:$0xff]
                %895 = vst [vmem:[%s149 + $0xba0] sm:$0xff] %v894
                %v896 = vld [vmem:[%s148 + $0x1748] sm:$0xff]
                %897 = vst [vmem:[%s149 + $0xba8] sm:$0xff] %v896
                %v898 = vld [vmem:[%s148 + $0x1750] sm:$0xff]
                %899 = vst [vmem:[%s149 + $0xbb0] sm:$0xff] %v898
                %v900 = vld [vmem:[%s148 + $0x1758] sm:$0xff]
                %901 = vst [vmem:[%s149 + $0xbb8] sm:$0xff] %v900
                %v902 = vld [vmem:[%s148 + $0x1780] sm:$0xff]
                %903 = vst [vmem:[%s149 + $0xbc0] sm:$0xff] %v902
                %v904 = vld [vmem:[%s148 + $0x1788] sm:$0xff]
                %905 = vst [vmem:[%s149 + $0xbc8] sm:$0xff] %v904
                %v906 = vld [vmem:[%s148 + $0x1790] sm:$0xff]
                %907 = vst [vmem:[%s149 + $0xbd0] sm:$0xff] %v906
                %v908 = vld [vmem:[%s148 + $0x1798] sm:$0xff]
                %909 = vst [vmem:[%s149 + $0xbd8] sm:$0xff] %v908
                %v910 = vld [vmem:[%s148 + $0x17c0] sm:$0xff]
                %911 = vst [vmem:[%s149 + $0xbe0] sm:$0xff] %v910
                %v912 = vld [vmem:[%s148 + $0x17c8] sm:$0xff]
                %913 = vst [vmem:[%s149 + $0xbe8] sm:$0xff] %v912
                %v914 = vld [vmem:[%s148 + $0x17d0] sm:$0xff]
                %915 = vst [vmem:[%s149 + $0xbf0] sm:$0xff] %v914
                %v916 = vld [vmem:[%s148 + $0x17d8] sm:$0xff]
                %917 = vst [vmem:[%s149 + $0xbf8] sm:$0xff] %v916
                %v918 = vld [vmem:[%s148 + $0x1800] sm:$0xff]
                %919 = vst [vmem:[%s149 + $0xc00] sm:$0xff] %v918
                %v920 = vld [vmem:[%s148 + $0x1808] sm:$0xff]
                %921 = vst [vmem:[%s149 + $0xc08] sm:$0xff] %v920
                %v922 = vld [vmem:[%s148 + $0x1810] sm:$0xff]
                %923 = vst [vmem:[%s149 + $0xc10] sm:$0xff] %v922
                %v924 = vld [vmem:[%s148 + $0x1818] sm:$0xff]
                %925 = vst [vmem:[%s149 + $0xc18] sm:$0xff] %v924
                %v926 = vld [vmem:[%s148 + $0x1840] sm:$0xff]
                %927 = vst [vmem:[%s149 + $0xc20] sm:$0xff] %v926
                %v928 = vld [vmem:[%s148 + $0x1848] sm:$0xff]
                %929 = vst [vmem:[%s149 + $0xc28] sm:$0xff] %v928
                %v930 = vld [vmem:[%s148 + $0x1850] sm:$0xff]
                %931 = vst [vmem:[%s149 + $0xc30] sm:$0xff] %v930
                %v932 = vld [vmem:[%s148 + $0x1858] sm:$0xff]
                %933 = vst [vmem:[%s149 + $0xc38] sm:$0xff] %v932
                %v934 = vld [vmem:[%s148 + $0x1880] sm:$0xff]
                %935 = vst [vmem:[%s149 + $0xc40] sm:$0xff] %v934
                %v936 = vld [vmem:[%s148 + $0x1888] sm:$0xff]
                %937 = vst [vmem:[%s149 + $0xc48] sm:$0xff] %v936
                %v938 = vld [vmem:[%s148 + $0x1890] sm:$0xff]
                %939 = vst [vmem:[%s149 + $0xc50] sm:$0xff] %v938
                %v940 = vld [vmem:[%s148 + $0x1898] sm:$0xff]
                %941 = vst [vmem:[%s149 + $0xc58] sm:$0xff] %v940
                %v942 = vld [vmem:[%s148 + $0x18c0] sm:$0xff]
                %943 = vst [vmem:[%s149 + $0xc60] sm:$0xff] %v942
                %v944 = vld [vmem:[%s148 + $0x18c8] sm:$0xff]
                %945 = vst [vmem:[%s149 + $0xc68] sm:$0xff] %v944
                %v946 = vld [vmem:[%s148 + $0x18d0] sm:$0xff]
                %947 = vst [vmem:[%s149 + $0xc70] sm:$0xff] %v946
                %v948 = vld [vmem:[%s148 + $0x18d8] sm:$0xff]
                %949 = vst [vmem:[%s149 + $0xc78] sm:$0xff] %v948
                %v950 = vld [vmem:[%s148 + $0x1900] sm:$0xff]
                %951 = vst [vmem:[%s149 + $0xc80] sm:$0xff] %v950
                %v952 = vld [vmem:[%s148 + $0x1908] sm:$0xff]
                %953 = vst [vmem:[%s149 + $0xc88] sm:$0xff] %v952
                %v954 = vld [vmem:[%s148 + $0x1910] sm:$0xff]
                %955 = vst [vmem:[%s149 + $0xc90] sm:$0xff] %v954
                %v956 = vld [vmem:[%s148 + $0x1918] sm:$0xff]
                %957 = vst [vmem:[%s149 + $0xc98] sm:$0xff] %v956
                %v958 = vld [vmem:[%s148 + $0x1940] sm:$0xff]
                %959 = vst [vmem:[%s149 + $0xca0] sm:$0xff] %v958
                %v960 = vld [vmem:[%s148 + $0x1948] sm:$0xff]
                %961 = vst [vmem:[%s149 + $0xca8] sm:$0xff] %v960
                %v962 = vld [vmem:[%s148 + $0x1950] sm:$0xff]
                %963 = vst [vmem:[%s149 + $0xcb0] sm:$0xff] %v962
                %v964 = vld [vmem:[%s148 + $0x1958] sm:$0xff]
                %965 = vst [vmem:[%s149 + $0xcb8] sm:$0xff] %v964
                %v966 = vld [vmem:[%s148 + $0x1980] sm:$0xff]
                %967 = vst [vmem:[%s149 + $0xcc0] sm:$0xff] %v966
                %v968 = vld [vmem:[%s148 + $0x1988] sm:$0xff]
                %969 = vst [vmem:[%s149 + $0xcc8] sm:$0xff] %v968
                %v970 = vld [vmem:[%s148 + $0x1990] sm:$0xff]
                %971 = vst [vmem:[%s149 + $0xcd0] sm:$0xff] %v970
                %v972 = vld [vmem:[%s148 + $0x1998] sm:$0xff]
                %973 = vst [vmem:[%s149 + $0xcd8] sm:$0xff] %v972
                %v974 = vld [vmem:[%s148 + $0x19c0] sm:$0xff]
                %975 = vst [vmem:[%s149 + $0xce0] sm:$0xff] %v974
                %v976 = vld [vmem:[%s148 + $0x19c8] sm:$0xff]
                %977 = vst [vmem:[%s149 + $0xce8] sm:$0xff] %v976
                %v978 = vld [vmem:[%s148 + $0x19d0] sm:$0xff]
                %979 = vst [vmem:[%s149 + $0xcf0] sm:$0xff] %v978
                %v980 = vld [vmem:[%s148 + $0x19d8] sm:$0xff]
                %981 = vst [vmem:[%s149 + $0xcf8] sm:$0xff] %v980
                %v982 = vld [vmem:[%s148 + $0x1a00] sm:$0xff]
                %983 = vst [vmem:[%s149 + $0xd00] sm:$0xff] %v982
                %v984 = vld [vmem:[%s148 + $0x1a08] sm:$0xff]
                %985 = vst [vmem:[%s149 + $0xd08] sm:$0xff] %v984
                %v986 = vld [vmem:[%s148 + $0x1a10] sm:$0xff]
                %987 = vst [vmem:[%s149 + $0xd10] sm:$0xff] %v986
                %v988 = vld [vmem:[%s148 + $0x1a18] sm:$0xff]
                %989 = vst [vmem:[%s149 + $0xd18] sm:$0xff] %v988
                %v990 = vld [vmem:[%s148 + $0x1a40] sm:$0xff]
                %991 = vst [vmem:[%s149 + $0xd20] sm:$0xff] %v990
                %v992 = vld [vmem:[%s148 + $0x1a48] sm:$0xff]
                %993 = vst [vmem:[%s149 + $0xd28] sm:$0xff] %v992
                %v994 = vld [vmem:[%s148 + $0x1a50] sm:$0xff]
                %995 = vst [vmem:[%s149 + $0xd30] sm:$0xff] %v994
                %v996 = vld [vmem:[%s148 + $0x1a58] sm:$0xff]
                %997 = vst [vmem:[%s149 + $0xd38] sm:$0xff] %v996
                %v998 = vld [vmem:[%s148 + $0x1a80] sm:$0xff]
                %999 = vst [vmem:[%s149 + $0xd40] sm:$0xff] %v998
                %v1000 = vld [vmem:[%s148 + $0x1a88] sm:$0xff]
                %1001 = vst [vmem:[%s149 + $0xd48] sm:$0xff] %v1000
                %v1002 = vld [vmem:[%s148 + $0x1a90] sm:$0xff]
                %1003 = vst [vmem:[%s149 + $0xd50] sm:$0xff] %v1002
                %v1004 = vld [vmem:[%s148 + $0x1a98] sm:$0xff]
                %1005 = vst [vmem:[%s149 + $0xd58] sm:$0xff] %v1004
                %v1006 = vld [vmem:[%s148 + $0x1ac0] sm:$0xff]
                %1007 = vst [vmem:[%s149 + $0xd60] sm:$0xff] %v1006
                %v1008 = vld [vmem:[%s148 + $0x1ac8] sm:$0xff]
                %1009 = vst [vmem:[%s149 + $0xd68] sm:$0xff] %v1008
                %v1010 = vld [vmem:[%s148 + $0x1ad0] sm:$0xff]
                %1011 = vst [vmem:[%s149 + $0xd70] sm:$0xff] %v1010
                %v1012 = vld [vmem:[%s148 + $0x1ad8] sm:$0xff]
                %1013 = vst [vmem:[%s149 + $0xd78] sm:$0xff] %v1012
                %v1014 = vld [vmem:[%s148 + $0x1b00] sm:$0xff]
                %1015 = vst [vmem:[%s149 + $0xd80] sm:$0xff] %v1014
                %v1016 = vld [vmem:[%s148 + $0x1b08] sm:$0xff]
                %1017 = vst [vmem:[%s149 + $0xd88] sm:$0xff] %v1016
                %v1018 = vld [vmem:[%s148 + $0x1b10] sm:$0xff]
                %1019 = vst [vmem:[%s149 + $0xd90] sm:$0xff] %v1018
                %v1020 = vld [vmem:[%s148 + $0x1b18] sm:$0xff]
                %1021 = vst [vmem:[%s149 + $0xd98] sm:$0xff] %v1020
                %v1022 = vld [vmem:[%s148 + $0x1b40] sm:$0xff]
                %1023 = vst [vmem:[%s149 + $0xda0] sm:$0xff] %v1022
                %v1024 = vld [vmem:[%s148 + $0x1b48] sm:$0xff]
                %1025 = vst [vmem:[%s149 + $0xda8] sm:$0xff] %v1024
                %v1026 = vld [vmem:[%s148 + $0x1b50] sm:$0xff]
                %1027 = vst [vmem:[%s149 + $0xdb0] sm:$0xff] %v1026
                %v1028 = vld [vmem:[%s148 + $0x1b58] sm:$0xff]
                %1029 = vst [vmem:[%s149 + $0xdb8] sm:$0xff] %v1028
                %v1030 = vld [vmem:[%s148 + $0x1b80] sm:$0xff]
                %1031 = vst [vmem:[%s149 + $0xdc0] sm:$0xff] %v1030
                %v1032 = vld [vmem:[%s148 + $0x1b88] sm:$0xff]
                %1033 = vst [vmem:[%s149 + $0xdc8] sm:$0xff] %v1032
                %v1034 = vld [vmem:[%s148 + $0x1b90] sm:$0xff]
                %1035 = vst [vmem:[%s149 + $0xdd0] sm:$0xff] %v1034
                %v1036 = vld [vmem:[%s148 + $0x1b98] sm:$0xff]
                %1037 = vst [vmem:[%s149 + $0xdd8] sm:$0xff] %v1036
                %v1038 = vld [vmem:[%s148 + $0x1bc0] sm:$0xff]
                %1039 = vst [vmem:[%s149 + $0xde0] sm:$0xff] %v1038
                %v1040 = vld [vmem:[%s148 + $0x1bc8] sm:$0xff]
                %1041 = vst [vmem:[%s149 + $0xde8] sm:$0xff] %v1040
                %v1042 = vld [vmem:[%s148 + $0x1bd0] sm:$0xff]
                %1043 = vst [vmem:[%s149 + $0xdf0] sm:$0xff] %v1042
                %v1044 = vld [vmem:[%s148 + $0x1bd8] sm:$0xff]
                %1045 = vst [vmem:[%s149 + $0xdf8] sm:$0xff] %v1044
                %v1046 = vld [vmem:[%s148 + $0x1c00] sm:$0xff]
                %1047 = vst [vmem:[%s149 + $0xe00] sm:$0xff] %v1046
                %v1048 = vld [vmem:[%s148 + $0x1c08] sm:$0xff]
                %1049 = vst [vmem:[%s149 + $0xe08] sm:$0xff] %v1048
                %v1050 = vld [vmem:[%s148 + $0x1c10] sm:$0xff]
                %1051 = vst [vmem:[%s149 + $0xe10] sm:$0xff] %v1050
                %v1052 = vld [vmem:[%s148 + $0x1c18] sm:$0xff]
                %1053 = vst [vmem:[%s149 + $0xe18] sm:$0xff] %v1052
                %v1054 = vld [vmem:[%s148 + $0x1c40] sm:$0xff]
                %1055 = vst [vmem:[%s149 + $0xe20] sm:$0xff] %v1054
                %v1056 = vld [vmem:[%s148 + $0x1c48] sm:$0xff]
                %1057 = vst [vmem:[%s149 + $0xe28] sm:$0xff] %v1056
                %v1058 = vld [vmem:[%s148 + $0x1c50] sm:$0xff]
                %1059 = vst [vmem:[%s149 + $0xe30] sm:$0xff] %v1058
                %v1060 = vld [vmem:[%s148 + $0x1c58] sm:$0xff]
                %1061 = vst [vmem:[%s149 + $0xe38] sm:$0xff] %v1060
                %v1062 = vld [vmem:[%s148 + $0x1c80] sm:$0xff]
                %1063 = vst [vmem:[%s149 + $0xe40] sm:$0xff] %v1062
                %v1064 = vld [vmem:[%s148 + $0x1c88] sm:$0xff]
                %1065 = vst [vmem:[%s149 + $0xe48] sm:$0xff] %v1064
                %v1066 = vld [vmem:[%s148 + $0x1c90] sm:$0xff]
                %1067 = vst [vmem:[%s149 + $0xe50] sm:$0xff] %v1066
                %v1068 = vld [vmem:[%s148 + $0x1c98] sm:$0xff]
                %1069 = vst [vmem:[%s149 + $0xe58] sm:$0xff] %v1068
                %v1070 = vld [vmem:[%s148 + $0x1cc0] sm:$0xff]
                %1071 = vst [vmem:[%s149 + $0xe60] sm:$0xff] %v1070
                %v1072 = vld [vmem:[%s148 + $0x1cc8] sm:$0xff]
                %1073 = vst [vmem:[%s149 + $0xe68] sm:$0xff] %v1072
                %v1074 = vld [vmem:[%s148 + $0x1cd0] sm:$0xff]
                %1075 = vst [vmem:[%s149 + $0xe70] sm:$0xff] %v1074
                %v1076 = vld [vmem:[%s148 + $0x1cd8] sm:$0xff]
                %1077 = vst [vmem:[%s149 + $0xe78] sm:$0xff] %v1076
                %v1078 = vld [vmem:[%s148 + $0x1d00] sm:$0xff]
                %1079 = vst [vmem:[%s149 + $0xe80] sm:$0xff] %v1078
                %v1080 = vld [vmem:[%s148 + $0x1d08] sm:$0xff]
                %1081 = vst [vmem:[%s149 + $0xe88] sm:$0xff] %v1080
                %v1082 = vld [vmem:[%s148 + $0x1d10] sm:$0xff]
                %1083 = vst [vmem:[%s149 + $0xe90] sm:$0xff] %v1082
                %v1084 = vld [vmem:[%s148 + $0x1d18] sm:$0xff]
                %1085 = vst [vmem:[%s149 + $0xe98] sm:$0xff] %v1084
                %v1086 = vld [vmem:[%s148 + $0x1d40] sm:$0xff]
                %1087 = vst [vmem:[%s149 + $0xea0] sm:$0xff] %v1086
                %v1088 = vld [vmem:[%s148 + $0x1d48] sm:$0xff]
                %1089 = vst [vmem:[%s149 + $0xea8] sm:$0xff] %v1088
                %v1090 = vld [vmem:[%s148 + $0x1d50] sm:$0xff]
                %1091 = vst [vmem:[%s149 + $0xeb0] sm:$0xff] %v1090
                %v1092 = vld [vmem:[%s148 + $0x1d58] sm:$0xff]
                %1093 = vst [vmem:[%s149 + $0xeb8] sm:$0xff] %v1092
                %v1094 = vld [vmem:[%s148 + $0x1d80] sm:$0xff]
                %1095 = vst [vmem:[%s149 + $0xec0] sm:$0xff] %v1094
                %v1096 = vld [vmem:[%s148 + $0x1d88] sm:$0xff]
                %1097 = vst [vmem:[%s149 + $0xec8] sm:$0xff] %v1096
                %v1098 = vld [vmem:[%s148 + $0x1d90] sm:$0xff]
                %1099 = vst [vmem:[%s149 + $0xed0] sm:$0xff] %v1098
                %v1100 = vld [vmem:[%s148 + $0x1d98] sm:$0xff]
                %1101 = vst [vmem:[%s149 + $0xed8] sm:$0xff] %v1100
                %v1102 = vld [vmem:[%s148 + $0x1dc0] sm:$0xff]
                %1103 = vst [vmem:[%s149 + $0xee0] sm:$0xff] %v1102
                %v1104 = vld [vmem:[%s148 + $0x1dc8] sm:$0xff]
                %1105 = vst [vmem:[%s149 + $0xee8] sm:$0xff] %v1104
                %v1106 = vld [vmem:[%s148 + $0x1dd0] sm:$0xff]
                %1107 = vst [vmem:[%s149 + $0xef0] sm:$0xff] %v1106
                %v1108 = vld [vmem:[%s148 + $0x1dd8] sm:$0xff]
                %1109 = vst [vmem:[%s149 + $0xef8] sm:$0xff] %v1108
                %v1110 = vld [vmem:[%s148 + $0x1e00] sm:$0xff]
                %1111 = vst [vmem:[%s149 + $0xf00] sm:$0xff] %v1110
                %v1112 = vld [vmem:[%s148 + $0x1e08] sm:$0xff]
                %1113 = vst [vmem:[%s149 + $0xf08] sm:$0xff] %v1112
                %v1114 = vld [vmem:[%s148 + $0x1e10] sm:$0xff]
                %1115 = vst [vmem:[%s149 + $0xf10] sm:$0xff] %v1114
                %v1116 = vld [vmem:[%s148 + $0x1e18] sm:$0xff]
                %1117 = vst [vmem:[%s149 + $0xf18] sm:$0xff] %v1116
                %v1118 = vld [vmem:[%s148 + $0x1e40] sm:$0xff]
                %1119 = vst [vmem:[%s149 + $0xf20] sm:$0xff] %v1118
                %v1120 = vld [vmem:[%s148 + $0x1e48] sm:$0xff]
                %1121 = vst [vmem:[%s149 + $0xf28] sm:$0xff] %v1120
                %v1122 = vld [vmem:[%s148 + $0x1e50] sm:$0xff]
                %1123 = vst [vmem:[%s149 + $0xf30] sm:$0xff] %v1122
                %v1124 = vld [vmem:[%s148 + $0x1e58] sm:$0xff]
                %1125 = vst [vmem:[%s149 + $0xf38] sm:$0xff] %v1124
                %v1126 = vld [vmem:[%s148 + $0x1e80] sm:$0xff]
                %1127 = vst [vmem:[%s149 + $0xf40] sm:$0xff] %v1126
                %v1128 = vld [vmem:[%s148 + $0x1e88] sm:$0xff]
                %1129 = vst [vmem:[%s149 + $0xf48] sm:$0xff] %v1128
                %v1130 = vld [vmem:[%s148 + $0x1e90] sm:$0xff]
                %1131 = vst [vmem:[%s149 + $0xf50] sm:$0xff] %v1130
                %v1132 = vld [vmem:[%s148 + $0x1e98] sm:$0xff]
                %1133 = vst [vmem:[%s149 + $0xf58] sm:$0xff] %v1132
                %v1134 = vld [vmem:[%s148 + $0x1ec0] sm:$0xff]
                %1135 = vst [vmem:[%s149 + $0xf60] sm:$0xff] %v1134
                %v1136 = vld [vmem:[%s148 + $0x1ec8] sm:$0xff]
                %1137 = vst [vmem:[%s149 + $0xf68] sm:$0xff] %v1136
                %v1138 = vld [vmem:[%s148 + $0x1ed0] sm:$0xff]
                %1139 = vst [vmem:[%s149 + $0xf70] sm:$0xff] %v1138
                %v1140 = vld [vmem:[%s148 + $0x1ed8] sm:$0xff]
                %1141 = vst [vmem:[%s149 + $0xf78] sm:$0xff] %v1140
                %v1142 = vld [vmem:[%s148 + $0x1f00] sm:$0xff]
                %1143 = vst [vmem:[%s149 + $0xf80] sm:$0xff] %v1142
                %v1144 = vld [vmem:[%s148 + $0x1f08] sm:$0xff]
                %1145 = vst [vmem:[%s149 + $0xf88] sm:$0xff] %v1144
                %v1146 = vld [vmem:[%s148 + $0x1f10] sm:$0xff]
                %1147 = vst [vmem:[%s149 + $0xf90] sm:$0xff] %v1146
                %v1148 = vld [vmem:[%s148 + $0x1f18] sm:$0xff]
                %1149 = vst [vmem:[%s149 + $0xf98] sm:$0xff] %v1148
                %v1150 = vld [vmem:[%s148 + $0x1f40] sm:$0xff]
                %1151 = vst [vmem:[%s149 + $0xfa0] sm:$0xff] %v1150
                %v1152 = vld [vmem:[%s148 + $0x1f48] sm:$0xff]
                %1153 = vst [vmem:[%s149 + $0xfa8] sm:$0xff] %v1152
                %v1154 = vld [vmem:[%s148 + $0x1f50] sm:$0xff]
                %1155 = vst [vmem:[%s149 + $0xfb0] sm:$0xff] %v1154
                %v1156 = vld [vmem:[%s148 + $0x1f58] sm:$0xff]
                %1157 = vst [vmem:[%s149 + $0xfb8] sm:$0xff] %v1156
                %v1158 = vld [vmem:[%s148 + $0x1f80] sm:$0xff]
                %1159 = vst [vmem:[%s149 + $0xfc0] sm:$0xff] %v1158
                %v1160 = vld [vmem:[%s148 + $0x1f88] sm:$0xff]
                %1161 = vst [vmem:[%s149 + $0xfc8] sm:$0xff] %v1160
                %v1162 = vld [vmem:[%s148 + $0x1f90] sm:$0xff]
                %1163 = vst [vmem:[%s149 + $0xfd0] sm:$0xff] %v1162
                %v1164 = vld [vmem:[%s148 + $0x1f98] sm:$0xff]
                %1165 = vst [vmem:[%s149 + $0xfd8] sm:$0xff] %v1164
                %v1166 = vld [vmem:[%s148 + $0x1fc0] sm:$0xff]
                %1167 = vst [vmem:[%s149 + $0xfe0] sm:$0xff] %v1166
                %v1168 = vld [vmem:[%s148 + $0x1fc8] sm:$0xff]
                %1169 = vst [vmem:[%s149 + $0xfe8] sm:$0xff] %v1168
                %v1170 = vld [vmem:[%s148 + $0x1fd0] sm:$0xff]
                %1171 = vst [vmem:[%s149 + $0xff0] sm:$0xff] %v1170
                %v1172 = vld [vmem:[%s148 + $0x1fd8] sm:$0xff]
                %1173 = vst [vmem:[%s149 + $0xff8] sm:$0xff] %v1172
                %v1174 = vld [vmem:[%s148 + $0x2000] sm:$0xff]
                %1175 = vst [vmem:[%s149 + $0x1000] sm:$0xff] %v1174
                %v1176 = vld [vmem:[%s148 + $0x2008] sm:$0xff]
                %1177 = vst [vmem:[%s149 + $0x1008] sm:$0xff] %v1176
                %v1178 = vld [vmem:[%s148 + $0x2010] sm:$0xff]
                %1179 = vst [vmem:[%s149 + $0x1010] sm:$0xff] %v1178
                %v1180 = vld [vmem:[%s148 + $0x2018] sm:$0xff]
                %1181 = vst [vmem:[%s149 + $0x1018] sm:$0xff] %v1180
                %v1182 = vld [vmem:[%s148 + $0x2040] sm:$0xff]
                %1183 = vst [vmem:[%s149 + $0x1020] sm:$0xff] %v1182
                %v1184 = vld [vmem:[%s148 + $0x2048] sm:$0xff]
                %1185 = vst [vmem:[%s149 + $0x1028] sm:$0xff] %v1184
                %v1186 = vld [vmem:[%s148 + $0x2050] sm:$0xff]
                %1187 = vst [vmem:[%s149 + $0x1030] sm:$0xff] %v1186
                %v1188 = vld [vmem:[%s148 + $0x2058] sm:$0xff]
                %1189 = vst [vmem:[%s149 + $0x1038] sm:$0xff] %v1188
                %v1190 = vld [vmem:[%s148 + $0x2080] sm:$0xff]
                %1191 = vst [vmem:[%s149 + $0x1040] sm:$0xff] %v1190
                %v1192 = vld [vmem:[%s148 + $0x2088] sm:$0xff]
                %1193 = vst [vmem:[%s149 + $0x1048] sm:$0xff] %v1192
                %v1194 = vld [vmem:[%s148 + $0x2090] sm:$0xff]
                %1195 = vst [vmem:[%s149 + $0x1050] sm:$0xff] %v1194
                %v1196 = vld [vmem:[%s148 + $0x2098] sm:$0xff]
                %1197 = vst [vmem:[%s149 + $0x1058] sm:$0xff] %v1196
                %v1198 = vld [vmem:[%s148 + $0x20c0] sm:$0xff]
                %1199 = vst [vmem:[%s149 + $0x1060] sm:$0xff] %v1198
                %v1200 = vld [vmem:[%s148 + $0x20c8] sm:$0xff]
                %1201 = vst [vmem:[%s149 + $0x1068] sm:$0xff] %v1200
                %v1202 = vld [vmem:[%s148 + $0x20d0] sm:$0xff]
                %1203 = vst [vmem:[%s149 + $0x1070] sm:$0xff] %v1202
                %v1204 = vld [vmem:[%s148 + $0x20d8] sm:$0xff]
                %1205 = vst [vmem:[%s149 + $0x1078] sm:$0xff] %v1204
                %v1206 = vld [vmem:[%s148 + $0x2100] sm:$0xff]
                %1207 = vst [vmem:[%s149 + $0x1080] sm:$0xff] %v1206
                %v1208 = vld [vmem:[%s148 + $0x2108] sm:$0xff]
                %1209 = vst [vmem:[%s149 + $0x1088] sm:$0xff] %v1208
                %v1210 = vld [vmem:[%s148 + $0x2110] sm:$0xff]
                %1211 = vst [vmem:[%s149 + $0x1090] sm:$0xff] %v1210
                %v1212 = vld [vmem:[%s148 + $0x2118] sm:$0xff]
                %1213 = vst [vmem:[%s149 + $0x1098] sm:$0xff] %v1212
                %v1214 = vld [vmem:[%s148 + $0x2140] sm:$0xff]
                %1215 = vst [vmem:[%s149 + $0x10a0] sm:$0xff] %v1214
                %v1216 = vld [vmem:[%s148 + $0x2148] sm:$0xff]
                %1217 = vst [vmem:[%s149 + $0x10a8] sm:$0xff] %v1216
                %v1218 = vld [vmem:[%s148 + $0x2150] sm:$0xff]
                %1219 = vst [vmem:[%s149 + $0x10b0] sm:$0xff] %v1218
                %v1220 = vld [vmem:[%s148 + $0x2158] sm:$0xff]
                %1221 = vst [vmem:[%s149 + $0x10b8] sm:$0xff] %v1220
                %v1222 = vld [vmem:[%s148 + $0x2180] sm:$0xff]
                %1223 = vst [vmem:[%s149 + $0x10c0] sm:$0xff] %v1222
                %v1224 = vld [vmem:[%s148 + $0x2188] sm:$0xff]
                %1225 = vst [vmem:[%s149 + $0x10c8] sm:$0xff] %v1224
                %v1226 = vld [vmem:[%s148 + $0x2190] sm:$0xff]
                %1227 = vst [vmem:[%s149 + $0x10d0] sm:$0xff] %v1226
                %v1228 = vld [vmem:[%s148 + $0x2198] sm:$0xff]
                %1229 = vst [vmem:[%s149 + $0x10d8] sm:$0xff] %v1228
                %v1230 = vld [vmem:[%s148 + $0x21c0] sm:$0xff]
                %1231 = vst [vmem:[%s149 + $0x10e0] sm:$0xff] %v1230
                %v1232 = vld [vmem:[%s148 + $0x21c8] sm:$0xff]
                %1233 = vst [vmem:[%s149 + $0x10e8] sm:$0xff] %v1232
                %v1234 = vld [vmem:[%s148 + $0x21d0] sm:$0xff]
                %1235 = vst [vmem:[%s149 + $0x10f0] sm:$0xff] %v1234
                %v1236 = vld [vmem:[%s148 + $0x21d8] sm:$0xff]
                %1237 = vst [vmem:[%s149 + $0x10f8] sm:$0xff] %v1236
                %v1238 = vld [vmem:[%s148 + $0x2200] sm:$0xff]
                %1239 = vst [vmem:[%s149 + $0x1100] sm:$0xff] %v1238
                %v1240 = vld [vmem:[%s148 + $0x2208] sm:$0xff]
                %1241 = vst [vmem:[%s149 + $0x1108] sm:$0xff] %v1240
                %v1242 = vld [vmem:[%s148 + $0x2210] sm:$0xff]
                %1243 = vst [vmem:[%s149 + $0x1110] sm:$0xff] %v1242
                %v1244 = vld [vmem:[%s148 + $0x2218] sm:$0xff]
                %1245 = vst [vmem:[%s149 + $0x1118] sm:$0xff] %v1244
                %v1246 = vld [vmem:[%s148 + $0x2240] sm:$0xff]
                %1247 = vst [vmem:[%s149 + $0x1120] sm:$0xff] %v1246
                %v1248 = vld [vmem:[%s148 + $0x2248] sm:$0xff]
                %1249 = vst [vmem:[%s149 + $0x1128] sm:$0xff] %v1248
                %v1250 = vld [vmem:[%s148 + $0x2250] sm:$0xff]
                %1251 = vst [vmem:[%s149 + $0x1130] sm:$0xff] %v1250
                %v1252 = vld [vmem:[%s148 + $0x2258] sm:$0xff]
                %1253 = vst [vmem:[%s149 + $0x1138] sm:$0xff] %v1252
                %v1254 = vld [vmem:[%s148 + $0x2280] sm:$0xff]
                %1255 = vst [vmem:[%s149 + $0x1140] sm:$0xff] %v1254
                %v1256 = vld [vmem:[%s148 + $0x2288] sm:$0xff]
                %1257 = vst [vmem:[%s149 + $0x1148] sm:$0xff] %v1256
                %v1258 = vld [vmem:[%s148 + $0x2290] sm:$0xff]
                %1259 = vst [vmem:[%s149 + $0x1150] sm:$0xff] %v1258
                %v1260 = vld [vmem:[%s148 + $0x2298] sm:$0xff]
                %1261 = vst [vmem:[%s149 + $0x1158] sm:$0xff] %v1260
                %v1262 = vld [vmem:[%s148 + $0x22c0] sm:$0xff]
                %1263 = vst [vmem:[%s149 + $0x1160] sm:$0xff] %v1262
                %v1264 = vld [vmem:[%s148 + $0x22c8] sm:$0xff]
                %1265 = vst [vmem:[%s149 + $0x1168] sm:$0xff] %v1264
                %v1266 = vld [vmem:[%s148 + $0x22d0] sm:$0xff]
                %1267 = vst [vmem:[%s149 + $0x1170] sm:$0xff] %v1266
                %v1268 = vld [vmem:[%s148 + $0x22d8] sm:$0xff]
                %1269 = vst [vmem:[%s149 + $0x1178] sm:$0xff] %v1268
                %v1270 = vld [vmem:[%s148 + $0x2300] sm:$0xff]
                %1271 = vst [vmem:[%s149 + $0x1180] sm:$0xff] %v1270
                %v1272 = vld [vmem:[%s148 + $0x2308] sm:$0xff]
                %1273 = vst [vmem:[%s149 + $0x1188] sm:$0xff] %v1272
                %v1274 = vld [vmem:[%s148 + $0x2310] sm:$0xff]
                %1275 = vst [vmem:[%s149 + $0x1190] sm:$0xff] %v1274
                %v1276 = vld [vmem:[%s148 + $0x2318] sm:$0xff]
                %1277 = vst [vmem:[%s149 + $0x1198] sm:$0xff] %v1276
                %v1278 = vld [vmem:[%s148 + $0x2340] sm:$0xff]
                %1279 = vst [vmem:[%s149 + $0x11a0] sm:$0xff] %v1278
                %v1280 = vld [vmem:[%s148 + $0x2348] sm:$0xff]
                %1281 = vst [vmem:[%s149 + $0x11a8] sm:$0xff] %v1280
                %v1282 = vld [vmem:[%s148 + $0x2350] sm:$0xff]
                %1283 = vst [vmem:[%s149 + $0x11b0] sm:$0xff] %v1282
                %v1284 = vld [vmem:[%s148 + $0x2358] sm:$0xff]
                %1285 = vst [vmem:[%s149 + $0x11b8] sm:$0xff] %v1284
                %v1286 = vld [vmem:[%s148 + $0x2380] sm:$0xff]
                %1287 = vst [vmem:[%s149 + $0x11c0] sm:$0xff] %v1286
                %v1288 = vld [vmem:[%s148 + $0x2388] sm:$0xff]
                %1289 = vst [vmem:[%s149 + $0x11c8] sm:$0xff] %v1288
                %v1290 = vld [vmem:[%s148 + $0x2390] sm:$0xff]
                %1291 = vst [vmem:[%s149 + $0x11d0] sm:$0xff] %v1290
                %v1292 = vld [vmem:[%s148 + $0x2398] sm:$0xff]
                %1293 = vst [vmem:[%s149 + $0x11d8] sm:$0xff] %v1292
                %v1294 = vld [vmem:[%s148 + $0x23c0] sm:$0xff]
                %1295 = vst [vmem:[%s149 + $0x11e0] sm:$0xff] %v1294
                %v1296 = vld [vmem:[%s148 + $0x23c8] sm:$0xff]
                %1297 = vst [vmem:[%s149 + $0x11e8] sm:$0xff] %v1296
                %v1298 = vld [vmem:[%s148 + $0x23d0] sm:$0xff]
                %1299 = vst [vmem:[%s149 + $0x11f0] sm:$0xff] %v1298
                %v1300 = vld [vmem:[%s148 + $0x23d8] sm:$0xff]
                %1301 = vst [vmem:[%s149 + $0x11f8] sm:$0xff] %v1300
                %v1302 = vld [vmem:[%s148 + $0x2400] sm:$0xff]
                %1303 = vst [vmem:[%s149 + $0x1200] sm:$0xff] %v1302
                %v1304 = vld [vmem:[%s148 + $0x2408] sm:$0xff]
                %1305 = vst [vmem:[%s149 + $0x1208] sm:$0xff] %v1304
                %v1306 = vld [vmem:[%s148 + $0x2410] sm:$0xff]
                %1307 = vst [vmem:[%s149 + $0x1210] sm:$0xff] %v1306
                %v1308 = vld [vmem:[%s148 + $0x2418] sm:$0xff]
                %1309 = vst [vmem:[%s149 + $0x1218] sm:$0xff] %v1308
                %v1310 = vld [vmem:[%s148 + $0x2440] sm:$0xff]
                %1311 = vst [vmem:[%s149 + $0x1220] sm:$0xff] %v1310
                %v1312 = vld [vmem:[%s148 + $0x2448] sm:$0xff]
                %1313 = vst [vmem:[%s149 + $0x1228] sm:$0xff] %v1312
                %v1314 = vld [vmem:[%s148 + $0x2450] sm:$0xff]
                %1315 = vst [vmem:[%s149 + $0x1230] sm:$0xff] %v1314
                %v1316 = vld [vmem:[%s148 + $0x2458] sm:$0xff]
                %1317 = vst [vmem:[%s149 + $0x1238] sm:$0xff] %v1316
                %v1318 = vld [vmem:[%s148 + $0x2480] sm:$0xff]
                %1319 = vst [vmem:[%s149 + $0x1240] sm:$0xff] %v1318
                %v1320 = vld [vmem:[%s148 + $0x2488] sm:$0xff]
                %1321 = vst [vmem:[%s149 + $0x1248] sm:$0xff] %v1320
                %v1322 = vld [vmem:[%s148 + $0x2490] sm:$0xff]
                %1323 = vst [vmem:[%s149 + $0x1250] sm:$0xff] %v1322
                %v1324 = vld [vmem:[%s148 + $0x2498] sm:$0xff]
                %1325 = vst [vmem:[%s149 + $0x1258] sm:$0xff] %v1324
                %v1326 = vld [vmem:[%s148 + $0x24c0] sm:$0xff]
                %1327 = vst [vmem:[%s149 + $0x1260] sm:$0xff] %v1326
                %v1328 = vld [vmem:[%s148 + $0x24c8] sm:$0xff]
                %1329 = vst [vmem:[%s149 + $0x1268] sm:$0xff] %v1328
                %v1330 = vld [vmem:[%s148 + $0x24d0] sm:$0xff]
                %1331 = vst [vmem:[%s149 + $0x1270] sm:$0xff] %v1330
                %v1332 = vld [vmem:[%s148 + $0x24d8] sm:$0xff]
                %1333 = vst [vmem:[%s149 + $0x1278] sm:$0xff] %v1332
                %v1334 = vld [vmem:[%s148 + $0x2500] sm:$0xff]
                %1335 = vst [vmem:[%s149 + $0x1280] sm:$0xff] %v1334
                %v1336 = vld [vmem:[%s148 + $0x2508] sm:$0xff]
                %1337 = vst [vmem:[%s149 + $0x1288] sm:$0xff] %v1336
                %v1338 = vld [vmem:[%s148 + $0x2510] sm:$0xff]
                %1339 = vst [vmem:[%s149 + $0x1290] sm:$0xff] %v1338
                %v1340 = vld [vmem:[%s148 + $0x2518] sm:$0xff]
                %1341 = vst [vmem:[%s149 + $0x1298] sm:$0xff] %v1340
                %v1342 = vld [vmem:[%s148 + $0x2540] sm:$0xff]
                %1343 = vst [vmem:[%s149 + $0x12a0] sm:$0xff] %v1342
                %v1344 = vld [vmem:[%s148 + $0x2548] sm:$0xff]
                %1345 = vst [vmem:[%s149 + $0x12a8] sm:$0xff] %v1344
                %v1346 = vld [vmem:[%s148 + $0x2550] sm:$0xff]
                %1347 = vst [vmem:[%s149 + $0x12b0] sm:$0xff] %v1346
                %v1348 = vld [vmem:[%s148 + $0x2558] sm:$0xff]
                %1349 = vst [vmem:[%s149 + $0x12b8] sm:$0xff] %v1348
                %v1350 = vld [vmem:[%s148 + $0x2580] sm:$0xff]
                %1351 = vst [vmem:[%s149 + $0x12c0] sm:$0xff] %v1350
                %v1352 = vld [vmem:[%s148 + $0x2588] sm:$0xff]
                %1353 = vst [vmem:[%s149 + $0x12c8] sm:$0xff] %v1352
                %v1354 = vld [vmem:[%s148 + $0x2590] sm:$0xff]
                %1355 = vst [vmem:[%s149 + $0x12d0] sm:$0xff] %v1354
                %v1356 = vld [vmem:[%s148 + $0x2598] sm:$0xff]
                %1357 = vst [vmem:[%s149 + $0x12d8] sm:$0xff] %v1356
                %v1358 = vld [vmem:[%s148 + $0x25c0] sm:$0xff]
                %1359 = vst [vmem:[%s149 + $0x12e0] sm:$0xff] %v1358
                %v1360 = vld [vmem:[%s148 + $0x25c8] sm:$0xff]
                %1361 = vst [vmem:[%s149 + $0x12e8] sm:$0xff] %v1360
                %v1362 = vld [vmem:[%s148 + $0x25d0] sm:$0xff]
                %1363 = vst [vmem:[%s149 + $0x12f0] sm:$0xff] %v1362
                %v1364 = vld [vmem:[%s148 + $0x25d8] sm:$0xff]
                %1365 = vst [vmem:[%s149 + $0x12f8] sm:$0xff] %v1364
                %v1366 = vld [vmem:[%s148 + $0x2600] sm:$0xff]
                %1367 = vst [vmem:[%s149 + $0x1300] sm:$0xff] %v1366
                %v1368 = vld [vmem:[%s148 + $0x2608] sm:$0xff]
                %1369 = vst [vmem:[%s149 + $0x1308] sm:$0xff] %v1368
                %v1370 = vld [vmem:[%s148 + $0x2610] sm:$0xff]
                %1371 = vst [vmem:[%s149 + $0x1310] sm:$0xff] %v1370
                %v1372 = vld [vmem:[%s148 + $0x2618] sm:$0xff]
                %1373 = vst [vmem:[%s149 + $0x1318] sm:$0xff] %v1372
                %v1374 = vld [vmem:[%s148 + $0x2640] sm:$0xff]
                %1375 = vst [vmem:[%s149 + $0x1320] sm:$0xff] %v1374
                %v1376 = vld [vmem:[%s148 + $0x2648] sm:$0xff]
                %1377 = vst [vmem:[%s149 + $0x1328] sm:$0xff] %v1376
                %v1378 = vld [vmem:[%s148 + $0x2650] sm:$0xff]
                %1379 = vst [vmem:[%s149 + $0x1330] sm:$0xff] %v1378
                %v1380 = vld [vmem:[%s148 + $0x2658] sm:$0xff]
                %1381 = vst [vmem:[%s149 + $0x1338] sm:$0xff] %v1380
                %v1382 = vld [vmem:[%s148 + $0x2680] sm:$0xff]
                %1383 = vst [vmem:[%s149 + $0x1340] sm:$0xff] %v1382
                %v1384 = vld [vmem:[%s148 + $0x2688] sm:$0xff]
                %1385 = vst [vmem:[%s149 + $0x1348] sm:$0xff] %v1384
                %v1386 = vld [vmem:[%s148 + $0x2690] sm:$0xff]
                %1387 = vst [vmem:[%s149 + $0x1350] sm:$0xff] %v1386
                %v1388 = vld [vmem:[%s148 + $0x2698] sm:$0xff]
                %1389 = vst [vmem:[%s149 + $0x1358] sm:$0xff] %v1388
                %v1390 = vld [vmem:[%s148 + $0x26c0] sm:$0xff]
                %1391 = vst [vmem:[%s149 + $0x1360] sm:$0xff] %v1390
                %v1392 = vld [vmem:[%s148 + $0x26c8] sm:$0xff]
                %1393 = vst [vmem:[%s149 + $0x1368] sm:$0xff] %v1392
                %v1394 = vld [vmem:[%s148 + $0x26d0] sm:$0xff]
                %1395 = vst [vmem:[%s149 + $0x1370] sm:$0xff] %v1394
                %v1396 = vld [vmem:[%s148 + $0x26d8] sm:$0xff]
                %1397 = vst [vmem:[%s149 + $0x1378] sm:$0xff] %v1396
                %v1398 = vld [vmem:[%s148 + $0x2700] sm:$0xff]
                %1399 = vst [vmem:[%s149 + $0x1380] sm:$0xff] %v1398
                %v1400 = vld [vmem:[%s148 + $0x2708] sm:$0xff]
                %1401 = vst [vmem:[%s149 + $0x1388] sm:$0xff] %v1400
                %v1402 = vld [vmem:[%s148 + $0x2710] sm:$0xff]
                %1403 = vst [vmem:[%s149 + $0x1390] sm:$0xff] %v1402
                %v1404 = vld [vmem:[%s148 + $0x2718] sm:$0xff]
                %1405 = vst [vmem:[%s149 + $0x1398] sm:$0xff] %v1404
                %v1406 = vld [vmem:[%s148 + $0x2740] sm:$0xff]
                %1407 = vst [vmem:[%s149 + $0x13a0] sm:$0xff] %v1406
                %v1408 = vld [vmem:[%s148 + $0x2748] sm:$0xff]
                %1409 = vst [vmem:[%s149 + $0x13a8] sm:$0xff] %v1408
                %v1410 = vld [vmem:[%s148 + $0x2750] sm:$0xff]
                %1411 = vst [vmem:[%s149 + $0x13b0] sm:$0xff] %v1410
                %v1412 = vld [vmem:[%s148 + $0x2758] sm:$0xff]
                %1413 = vst [vmem:[%s149 + $0x13b8] sm:$0xff] %v1412
                %v1414 = vld [vmem:[%s148 + $0x2780] sm:$0xff]
                %1415 = vst [vmem:[%s149 + $0x13c0] sm:$0xff] %v1414
                %v1416 = vld [vmem:[%s148 + $0x2788] sm:$0xff]
                %1417 = vst [vmem:[%s149 + $0x13c8] sm:$0xff] %v1416
                %v1418 = vld [vmem:[%s148 + $0x2790] sm:$0xff]
                %1419 = vst [vmem:[%s149 + $0x13d0] sm:$0xff] %v1418
                %v1420 = vld [vmem:[%s148 + $0x2798] sm:$0xff]
                %1421 = vst [vmem:[%s149 + $0x13d8] sm:$0xff] %v1420
                %v1422 = vld [vmem:[%s148 + $0x27c0] sm:$0xff]
                %1423 = vst [vmem:[%s149 + $0x13e0] sm:$0xff] %v1422
                %v1424 = vld [vmem:[%s148 + $0x27c8] sm:$0xff]
                %1425 = vst [vmem:[%s149 + $0x13e8] sm:$0xff] %v1424
                %v1426 = vld [vmem:[%s148 + $0x27d0] sm:$0xff]
                %1427 = vst [vmem:[%s149 + $0x13f0] sm:$0xff] %v1426
                %v1428 = vld [vmem:[%s148 + $0x27d8] sm:$0xff]
                %1429 = vst [vmem:[%s149 + $0x13f8] sm:$0xff] %v1428
                %v1430 = vld [vmem:[%s148 + $0x2800] sm:$0xff]
                %1431 = vst [vmem:[%s149 + $0x1400] sm:$0xff] %v1430
                %v1432 = vld [vmem:[%s148 + $0x2808] sm:$0xff]
                %1433 = vst [vmem:[%s149 + $0x1408] sm:$0xff] %v1432
                %v1434 = vld [vmem:[%s148 + $0x2810] sm:$0xff]
                %1435 = vst [vmem:[%s149 + $0x1410] sm:$0xff] %v1434
                %v1436 = vld [vmem:[%s148 + $0x2818] sm:$0xff]
                %1437 = vst [vmem:[%s149 + $0x1418] sm:$0xff] %v1436
                %v1438 = vld [vmem:[%s148 + $0x2840] sm:$0xff]
                %1439 = vst [vmem:[%s149 + $0x1420] sm:$0xff] %v1438
                %v1440 = vld [vmem:[%s148 + $0x2848] sm:$0xff]
                %1441 = vst [vmem:[%s149 + $0x1428] sm:$0xff] %v1440
                %v1442 = vld [vmem:[%s148 + $0x2850] sm:$0xff]
                %1443 = vst [vmem:[%s149 + $0x1430] sm:$0xff] %v1442
                %v1444 = vld [vmem:[%s148 + $0x2858] sm:$0xff]
                %1445 = vst [vmem:[%s149 + $0x1438] sm:$0xff] %v1444
                %v1446 = vld [vmem:[%s148 + $0x2880] sm:$0xff]
                %1447 = vst [vmem:[%s149 + $0x1440] sm:$0xff] %v1446
                %v1448 = vld [vmem:[%s148 + $0x2888] sm:$0xff]
                %1449 = vst [vmem:[%s149 + $0x1448] sm:$0xff] %v1448
                %v1450 = vld [vmem:[%s148 + $0x2890] sm:$0xff]
                %1451 = vst [vmem:[%s149 + $0x1450] sm:$0xff] %v1450
                %v1452 = vld [vmem:[%s148 + $0x2898] sm:$0xff]
                %1453 = vst [vmem:[%s149 + $0x1458] sm:$0xff] %v1452
                %v1454 = vld [vmem:[%s148 + $0x28c0] sm:$0xff]
                %1455 = vst [vmem:[%s149 + $0x1460] sm:$0xff] %v1454
                %v1456 = vld [vmem:[%s148 + $0x28c8] sm:$0xff]
                %1457 = vst [vmem:[%s149 + $0x1468] sm:$0xff] %v1456
                %v1458 = vld [vmem:[%s148 + $0x28d0] sm:$0xff]
                %1459 = vst [vmem:[%s149 + $0x1470] sm:$0xff] %v1458
                %v1460 = vld [vmem:[%s148 + $0x28d8] sm:$0xff]
                %1461 = vst [vmem:[%s149 + $0x1478] sm:$0xff] %v1460
                %v1462 = vld [vmem:[%s148 + $0x2900] sm:$0xff]
                %1463 = vst [vmem:[%s149 + $0x1480] sm:$0xff] %v1462
                %v1464 = vld [vmem:[%s148 + $0x2908] sm:$0xff]
                %1465 = vst [vmem:[%s149 + $0x1488] sm:$0xff] %v1464
                %v1466 = vld [vmem:[%s148 + $0x2910] sm:$0xff]
                %1467 = vst [vmem:[%s149 + $0x1490] sm:$0xff] %v1466
                %v1468 = vld [vmem:[%s148 + $0x2918] sm:$0xff]
                %1469 = vst [vmem:[%s149 + $0x1498] sm:$0xff] %v1468
                %v1470 = vld [vmem:[%s148 + $0x2940] sm:$0xff]
                %1471 = vst [vmem:[%s149 + $0x14a0] sm:$0xff] %v1470
                %v1472 = vld [vmem:[%s148 + $0x2948] sm:$0xff]
                %1473 = vst [vmem:[%s149 + $0x14a8] sm:$0xff] %v1472
                %v1474 = vld [vmem:[%s148 + $0x2950] sm:$0xff]
                %1475 = vst [vmem:[%s149 + $0x14b0] sm:$0xff] %v1474
                %v1476 = vld [vmem:[%s148 + $0x2958] sm:$0xff]
                %1477 = vst [vmem:[%s149 + $0x14b8] sm:$0xff] %v1476
                %v1478 = vld [vmem:[%s148 + $0x2980] sm:$0xff]
                %1479 = vst [vmem:[%s149 + $0x14c0] sm:$0xff] %v1478
                %v1480 = vld [vmem:[%s148 + $0x2988] sm:$0xff]
                %1481 = vst [vmem:[%s149 + $0x14c8] sm:$0xff] %v1480
                %v1482 = vld [vmem:[%s148 + $0x2990] sm:$0xff]
                %1483 = vst [vmem:[%s149 + $0x14d0] sm:$0xff] %v1482
                %v1484 = vld [vmem:[%s148 + $0x2998] sm:$0xff]
                %1485 = vst [vmem:[%s149 + $0x14d8] sm:$0xff] %v1484
                %v1486 = vld [vmem:[%s148 + $0x29c0] sm:$0xff]
                %1487 = vst [vmem:[%s149 + $0x14e0] sm:$0xff] %v1486
                %v1488 = vld [vmem:[%s148 + $0x29c8] sm:$0xff]
                %1489 = vst [vmem:[%s149 + $0x14e8] sm:$0xff] %v1488
                %v1490 = vld [vmem:[%s148 + $0x29d0] sm:$0xff]
                %1491 = vst [vmem:[%s149 + $0x14f0] sm:$0xff] %v1490
                %v1492 = vld [vmem:[%s148 + $0x29d8] sm:$0xff]
                %1493 = vst [vmem:[%s149 + $0x14f8] sm:$0xff] %v1492
                %v1494 = vld [vmem:[%s148 + $0x2a00] sm:$0xff]
                %1495 = vst [vmem:[%s149 + $0x1500] sm:$0xff] %v1494
                %v1496 = vld [vmem:[%s148 + $0x2a08] sm:$0xff]
                %1497 = vst [vmem:[%s149 + $0x1508] sm:$0xff] %v1496
                %v1498 = vld [vmem:[%s148 + $0x2a10] sm:$0xff]
                %1499 = vst [vmem:[%s149 + $0x1510] sm:$0xff] %v1498
                %v1500 = vld [vmem:[%s148 + $0x2a18] sm:$0xff]
                %1501 = vst [vmem:[%s149 + $0x1518] sm:$0xff] %v1500
                %v1502 = vld [vmem:[%s148 + $0x2a40] sm:$0xff]
                %1503 = vst [vmem:[%s149 + $0x1520] sm:$0xff] %v1502
                %v1504 = vld [vmem:[%s148 + $0x2a48] sm:$0xff]
                %1505 = vst [vmem:[%s149 + $0x1528] sm:$0xff] %v1504
                %v1506 = vld [vmem:[%s148 + $0x2a50] sm:$0xff]
                %1507 = vst [vmem:[%s149 + $0x1530] sm:$0xff] %v1506
                %v1508 = vld [vmem:[%s148 + $0x2a58] sm:$0xff]
                %1509 = vst [vmem:[%s149 + $0x1538] sm:$0xff] %v1508
                %v1510 = vld [vmem:[%s148 + $0x2a80] sm:$0xff]
                %1511 = vst [vmem:[%s149 + $0x1540] sm:$0xff] %v1510
                %v1512 = vld [vmem:[%s148 + $0x2a88] sm:$0xff]
                %1513 = vst [vmem:[%s149 + $0x1548] sm:$0xff] %v1512
                %v1514 = vld [vmem:[%s148 + $0x2a90] sm:$0xff]
                %1515 = vst [vmem:[%s149 + $0x1550] sm:$0xff] %v1514
                %v1516 = vld [vmem:[%s148 + $0x2a98] sm:$0xff]
                %1517 = vst [vmem:[%s149 + $0x1558] sm:$0xff] %v1516
                %v1518 = vld [vmem:[%s148 + $0x2ac0] sm:$0xff]
                %1519 = vst [vmem:[%s149 + $0x1560] sm:$0xff] %v1518
                %v1520 = vld [vmem:[%s148 + $0x2ac8] sm:$0xff]
                %1521 = vst [vmem:[%s149 + $0x1568] sm:$0xff] %v1520
                %v1522 = vld [vmem:[%s148 + $0x2ad0] sm:$0xff]
                %1523 = vst [vmem:[%s149 + $0x1570] sm:$0xff] %v1522
                %v1524 = vld [vmem:[%s148 + $0x2ad8] sm:$0xff]
                %1525 = vst [vmem:[%s149 + $0x1578] sm:$0xff] %v1524
                %v1526 = vld [vmem:[%s148 + $0x2b00] sm:$0xff]
                %1527 = vst [vmem:[%s149 + $0x1580] sm:$0xff] %v1526
                %v1528 = vld [vmem:[%s148 + $0x2b08] sm:$0xff]
                %1529 = vst [vmem:[%s149 + $0x1588] sm:$0xff] %v1528
                %v1530 = vld [vmem:[%s148 + $0x2b10] sm:$0xff]
                %1531 = vst [vmem:[%s149 + $0x1590] sm:$0xff] %v1530
                %v1532 = vld [vmem:[%s148 + $0x2b18] sm:$0xff]
                %1533 = vst [vmem:[%s149 + $0x1598] sm:$0xff] %v1532
                %v1534 = vld [vmem:[%s148 + $0x2b40] sm:$0xff]
                %1535 = vst [vmem:[%s149 + $0x15a0] sm:$0xff] %v1534
                %v1536 = vld [vmem:[%s148 + $0x2b48] sm:$0xff]
                %1537 = vst [vmem:[%s149 + $0x15a8] sm:$0xff] %v1536
                %v1538 = vld [vmem:[%s148 + $0x2b50] sm:$0xff]
                %1539 = vst [vmem:[%s149 + $0x15b0] sm:$0xff] %v1538
                %v1540 = vld [vmem:[%s148 + $0x2b58] sm:$0xff]
                %1541 = vst [vmem:[%s149 + $0x15b8] sm:$0xff] %v1540
                %v1542 = vld [vmem:[%s148 + $0x2b80] sm:$0xff]
                %1543 = vst [vmem:[%s149 + $0x15c0] sm:$0xff] %v1542
                %v1544 = vld [vmem:[%s148 + $0x2b88] sm:$0xff]
                %1545 = vst [vmem:[%s149 + $0x15c8] sm:$0xff] %v1544
                %v1546 = vld [vmem:[%s148 + $0x2b90] sm:$0xff]
                %1547 = vst [vmem:[%s149 + $0x15d0] sm:$0xff] %v1546
                %v1548 = vld [vmem:[%s148 + $0x2b98] sm:$0xff]
                %1549 = vst [vmem:[%s149 + $0x15d8] sm:$0xff] %v1548
                %v1550 = vld [vmem:[%s148 + $0x2bc0] sm:$0xff]
                %1551 = vst [vmem:[%s149 + $0x15e0] sm:$0xff] %v1550
                %v1552 = vld [vmem:[%s148 + $0x2bc8] sm:$0xff]
                %1553 = vst [vmem:[%s149 + $0x15e8] sm:$0xff] %v1552
                %v1554 = vld [vmem:[%s148 + $0x2bd0] sm:$0xff]
                %1555 = vst [vmem:[%s149 + $0x15f0] sm:$0xff] %v1554
                %v1556 = vld [vmem:[%s148 + $0x2bd8] sm:$0xff]
                %1557 = vst [vmem:[%s149 + $0x15f8] sm:$0xff] %v1556
                %v1558 = vld [vmem:[%s148 + $0x2c00] sm:$0xff]
                %1559 = vst [vmem:[%s149 + $0x1600] sm:$0xff] %v1558
                %v1560 = vld [vmem:[%s148 + $0x2c08] sm:$0xff]
                %1561 = vst [vmem:[%s149 + $0x1608] sm:$0xff] %v1560
                %v1562 = vld [vmem:[%s148 + $0x2c10] sm:$0xff]
                %1563 = vst [vmem:[%s149 + $0x1610] sm:$0xff] %v1562
                %v1564 = vld [vmem:[%s148 + $0x2c18] sm:$0xff]
                %1565 = vst [vmem:[%s149 + $0x1618] sm:$0xff] %v1564
                %v1566 = vld [vmem:[%s148 + $0x2c40] sm:$0xff]
                %1567 = vst [vmem:[%s149 + $0x1620] sm:$0xff] %v1566
                %v1568 = vld [vmem:[%s148 + $0x2c48] sm:$0xff]
                %1569 = vst [vmem:[%s149 + $0x1628] sm:$0xff] %v1568
                %v1570 = vld [vmem:[%s148 + $0x2c50] sm:$0xff]
                %1571 = vst [vmem:[%s149 + $0x1630] sm:$0xff] %v1570
                %v1572 = vld [vmem:[%s148 + $0x2c58] sm:$0xff]
                %1573 = vst [vmem:[%s149 + $0x1638] sm:$0xff] %v1572
                %v1574 = vld [vmem:[%s148 + $0x2c80] sm:$0xff]
                %1575 = vst [vmem:[%s149 + $0x1640] sm:$0xff] %v1574
                %v1576 = vld [vmem:[%s148 + $0x2c88] sm:$0xff]
                %1577 = vst [vmem:[%s149 + $0x1648] sm:$0xff] %v1576
                %v1578 = vld [vmem:[%s148 + $0x2c90] sm:$0xff]
                %1579 = vst [vmem:[%s149 + $0x1650] sm:$0xff] %v1578
                %v1580 = vld [vmem:[%s148 + $0x2c98] sm:$0xff]
                %1581 = vst [vmem:[%s149 + $0x1658] sm:$0xff] %v1580
                %v1582 = vld [vmem:[%s148 + $0x2cc0] sm:$0xff]
                %1583 = vst [vmem:[%s149 + $0x1660] sm:$0xff] %v1582
                %v1584 = vld [vmem:[%s148 + $0x2cc8] sm:$0xff]
                %1585 = vst [vmem:[%s149 + $0x1668] sm:$0xff] %v1584
                %v1586 = vld [vmem:[%s148 + $0x2cd0] sm:$0xff]
                %1587 = vst [vmem:[%s149 + $0x1670] sm:$0xff] %v1586
                %v1588 = vld [vmem:[%s148 + $0x2cd8] sm:$0xff]
                %1589 = vst [vmem:[%s149 + $0x1678] sm:$0xff] %v1588
                %v1590 = vld [vmem:[%s148 + $0x2d00] sm:$0xff]
                %1591 = vst [vmem:[%s149 + $0x1680] sm:$0xff] %v1590
                %v1592 = vld [vmem:[%s148 + $0x2d08] sm:$0xff]
                %1593 = vst [vmem:[%s149 + $0x1688] sm:$0xff] %v1592
                %v1594 = vld [vmem:[%s148 + $0x2d10] sm:$0xff]
                %1595 = vst [vmem:[%s149 + $0x1690] sm:$0xff] %v1594
                %v1596 = vld [vmem:[%s148 + $0x2d18] sm:$0xff]
                %1597 = vst [vmem:[%s149 + $0x1698] sm:$0xff] %v1596
                %v1598 = vld [vmem:[%s148 + $0x2d40] sm:$0xff]
                %1599 = vst [vmem:[%s149 + $0x16a0] sm:$0xff] %v1598
                %v1600 = vld [vmem:[%s148 + $0x2d48] sm:$0xff]
                %1601 = vst [vmem:[%s149 + $0x16a8] sm:$0xff] %v1600
                %v1602 = vld [vmem:[%s148 + $0x2d50] sm:$0xff]
                %1603 = vst [vmem:[%s149 + $0x16b0] sm:$0xff] %v1602
                %v1604 = vld [vmem:[%s148 + $0x2d58] sm:$0xff]
                %1605 = vst [vmem:[%s149 + $0x16b8] sm:$0xff] %v1604
                %v1606 = vld [vmem:[%s148 + $0x2d80] sm:$0xff]
                %1607 = vst [vmem:[%s149 + $0x16c0] sm:$0xff] %v1606
                %v1608 = vld [vmem:[%s148 + $0x2d88] sm:$0xff]
                %1609 = vst [vmem:[%s149 + $0x16c8] sm:$0xff] %v1608
                %v1610 = vld [vmem:[%s148 + $0x2d90] sm:$0xff]
                %1611 = vst [vmem:[%s149 + $0x16d0] sm:$0xff] %v1610
                %v1612 = vld [vmem:[%s148 + $0x2d98] sm:$0xff]
                %1613 = vst [vmem:[%s149 + $0x16d8] sm:$0xff] %v1612
                %v1614 = vld [vmem:[%s148 + $0x2dc0] sm:$0xff]
                %1615 = vst [vmem:[%s149 + $0x16e0] sm:$0xff] %v1614
                %v1616 = vld [vmem:[%s148 + $0x2dc8] sm:$0xff]
                %1617 = vst [vmem:[%s149 + $0x16e8] sm:$0xff] %v1616
                %v1618 = vld [vmem:[%s148 + $0x2dd0] sm:$0xff]
                %1619 = vst [vmem:[%s149 + $0x16f0] sm:$0xff] %v1618
                %v1620 = vld [vmem:[%s148 + $0x2dd8] sm:$0xff]
                %1621 = vst [vmem:[%s149 + $0x16f8] sm:$0xff] %v1620
                %v1622 = vld [vmem:[%s148 + $0x2e00] sm:$0xff]
                %1623 = vst [vmem:[%s149 + $0x1700] sm:$0xff] %v1622
                %v1624 = vld [vmem:[%s148 + $0x2e08] sm:$0xff]
                %1625 = vst [vmem:[%s149 + $0x1708] sm:$0xff] %v1624
                %v1626 = vld [vmem:[%s148 + $0x2e10] sm:$0xff]
                %1627 = vst [vmem:[%s149 + $0x1710] sm:$0xff] %v1626
                %v1628 = vld [vmem:[%s148 + $0x2e18] sm:$0xff]
                %1629 = vst [vmem:[%s149 + $0x1718] sm:$0xff] %v1628
                %v1630 = vld [vmem:[%s148 + $0x2e40] sm:$0xff]
                %1631 = vst [vmem:[%s149 + $0x1720] sm:$0xff] %v1630
                %v1632 = vld [vmem:[%s148 + $0x2e48] sm:$0xff]
                %1633 = vst [vmem:[%s149 + $0x1728] sm:$0xff] %v1632
                %v1634 = vld [vmem:[%s148 + $0x2e50] sm:$0xff]
                %1635 = vst [vmem:[%s149 + $0x1730] sm:$0xff] %v1634
                %v1636 = vld [vmem:[%s148 + $0x2e58] sm:$0xff]
                %1637 = vst [vmem:[%s149 + $0x1738] sm:$0xff] %v1636
                %v1638 = vld [vmem:[%s148 + $0x2e80] sm:$0xff]
                %1639 = vst [vmem:[%s149 + $0x1740] sm:$0xff] %v1638
                %v1640 = vld [vmem:[%s148 + $0x2e88] sm:$0xff]
                %1641 = vst [vmem:[%s149 + $0x1748] sm:$0xff] %v1640
                %v1642 = vld [vmem:[%s148 + $0x2e90] sm:$0xff]
                %1643 = vst [vmem:[%s149 + $0x1750] sm:$0xff] %v1642
                %v1644 = vld [vmem:[%s148 + $0x2e98] sm:$0xff]
                %1645 = vst [vmem:[%s149 + $0x1758] sm:$0xff] %v1644
                %v1646 = vld [vmem:[%s148 + $0x2ec0] sm:$0xff]
                %1647 = vst [vmem:[%s149 + $0x1760] sm:$0xff] %v1646
                %v1648 = vld [vmem:[%s148 + $0x2ec8] sm:$0xff]
                %1649 = vst [vmem:[%s149 + $0x1768] sm:$0xff] %v1648
                %v1650 = vld [vmem:[%s148 + $0x2ed0] sm:$0xff]
                %1651 = vst [vmem:[%s149 + $0x1770] sm:$0xff] %v1650
                %v1652 = vld [vmem:[%s148 + $0x2ed8] sm:$0xff]
                %1653 = vst [vmem:[%s149 + $0x1778] sm:$0xff] %v1652
                %v1654 = vld [vmem:[%s148 + $0x2f00] sm:$0xff]
                %1655 = vst [vmem:[%s149 + $0x1780] sm:$0xff] %v1654
                %v1656 = vld [vmem:[%s148 + $0x2f08] sm:$0xff]
                %1657 = vst [vmem:[%s149 + $0x1788] sm:$0xff] %v1656
                %v1658 = vld [vmem:[%s148 + $0x2f10] sm:$0xff]
                %1659 = vst [vmem:[%s149 + $0x1790] sm:$0xff] %v1658
                %v1660 = vld [vmem:[%s148 + $0x2f18] sm:$0xff]
                %1661 = vst [vmem:[%s149 + $0x1798] sm:$0xff] %v1660
                %v1662 = vld [vmem:[%s148 + $0x2f40] sm:$0xff]
                %1663 = vst [vmem:[%s149 + $0x17a0] sm:$0xff] %v1662
                %v1664 = vld [vmem:[%s148 + $0x2f48] sm:$0xff]
                %1665 = vst [vmem:[%s149 + $0x17a8] sm:$0xff] %v1664
                %v1666 = vld [vmem:[%s148 + $0x2f50] sm:$0xff]
                %1667 = vst [vmem:[%s149 + $0x17b0] sm:$0xff] %v1666
                %v1668 = vld [vmem:[%s148 + $0x2f58] sm:$0xff]
                %1669 = vst [vmem:[%s149 + $0x17b8] sm:$0xff] %v1668
                %v1670 = vld [vmem:[%s148 + $0x2f80] sm:$0xff]
                %1671 = vst [vmem:[%s149 + $0x17c0] sm:$0xff] %v1670
                %v1672 = vld [vmem:[%s148 + $0x2f88] sm:$0xff]
                %1673 = vst [vmem:[%s149 + $0x17c8] sm:$0xff] %v1672
                %v1674 = vld [vmem:[%s148 + $0x2f90] sm:$0xff]
                %1675 = vst [vmem:[%s149 + $0x17d0] sm:$0xff] %v1674
                %v1676 = vld [vmem:[%s148 + $0x2f98] sm:$0xff]
                %1677 = vst [vmem:[%s149 + $0x17d8] sm:$0xff] %v1676
                %v1678 = vld [vmem:[%s148 + $0x2fc0] sm:$0xff]
                %1679 = vst [vmem:[%s149 + $0x17e0] sm:$0xff] %v1678
                %v1680 = vld [vmem:[%s148 + $0x2fc8] sm:$0xff]
                %1681 = vst [vmem:[%s149 + $0x17e8] sm:$0xff] %v1680
                %v1682 = vld [vmem:[%s148 + $0x2fd0] sm:$0xff]
                %1683 = vst [vmem:[%s149 + $0x17f0] sm:$0xff] %v1682
                %v1684 = vld [vmem:[%s148 + $0x2fd8] sm:$0xff]
                %1685 = vst [vmem:[%s149 + $0x17f8] sm:$0xff] %v1684
                %v1686 = vld [vmem:[%s148 + $0x3000] sm:$0xff]
                %1687 = vst [vmem:[%s149 + $0x1800] sm:$0xff] %v1686
                %v1688 = vld [vmem:[%s148 + $0x3008] sm:$0xff]
                %1689 = vst [vmem:[%s149 + $0x1808] sm:$0xff] %v1688
                %v1690 = vld [vmem:[%s148 + $0x3010] sm:$0xff]
                %1691 = vst [vmem:[%s149 + $0x1810] sm:$0xff] %v1690
                %v1692 = vld [vmem:[%s148 + $0x3018] sm:$0xff]
                %1693 = vst [vmem:[%s149 + $0x1818] sm:$0xff] %v1692
                %v1694 = vld [vmem:[%s148 + $0x3040] sm:$0xff]
                %1695 = vst [vmem:[%s149 + $0x1820] sm:$0xff] %v1694
                %v1696 = vld [vmem:[%s148 + $0x3048] sm:$0xff]
                %1697 = vst [vmem:[%s149 + $0x1828] sm:$0xff] %v1696
                %v1698 = vld [vmem:[%s148 + $0x3050] sm:$0xff]
                %1699 = vst [vmem:[%s149 + $0x1830] sm:$0xff] %v1698
                %v1700 = vld [vmem:[%s148 + $0x3058] sm:$0xff]
                %1701 = vst [vmem:[%s149 + $0x1838] sm:$0xff] %v1700
                %v1702 = vld [vmem:[%s148 + $0x3080] sm:$0xff]
                %1703 = vst [vmem:[%s149 + $0x1840] sm:$0xff] %v1702
                %v1704 = vld [vmem:[%s148 + $0x3088] sm:$0xff]
                %1705 = vst [vmem:[%s149 + $0x1848] sm:$0xff] %v1704
                %v1706 = vld [vmem:[%s148 + $0x3090] sm:$0xff]
                %1707 = vst [vmem:[%s149 + $0x1850] sm:$0xff] %v1706
                %v1708 = vld [vmem:[%s148 + $0x3098] sm:$0xff]
                %1709 = vst [vmem:[%s149 + $0x1858] sm:$0xff] %v1708
                %v1710 = vld [vmem:[%s148 + $0x30c0] sm:$0xff]
                %1711 = vst [vmem:[%s149 + $0x1860] sm:$0xff] %v1710
                %v1712 = vld [vmem:[%s148 + $0x30c8] sm:$0xff]
                %1713 = vst [vmem:[%s149 + $0x1868] sm:$0xff] %v1712
                %v1714 = vld [vmem:[%s148 + $0x30d0] sm:$0xff]
                %1715 = vst [vmem:[%s149 + $0x1870] sm:$0xff] %v1714
                %v1716 = vld [vmem:[%s148 + $0x30d8] sm:$0xff]
                %1717 = vst [vmem:[%s149 + $0x1878] sm:$0xff] %v1716
                %v1718 = vld [vmem:[%s148 + $0x3100] sm:$0xff]
                %1719 = vst [vmem:[%s149 + $0x1880] sm:$0xff] %v1718
                %v1720 = vld [vmem:[%s148 + $0x3108] sm:$0xff]
                %1721 = vst [vmem:[%s149 + $0x1888] sm:$0xff] %v1720
                %v1722 = vld [vmem:[%s148 + $0x3110] sm:$0xff]
                %1723 = vst [vmem:[%s149 + $0x1890] sm:$0xff] %v1722
                %v1724 = vld [vmem:[%s148 + $0x3118] sm:$0xff]
                %1725 = vst [vmem:[%s149 + $0x1898] sm:$0xff] %v1724
                %v1726 = vld [vmem:[%s148 + $0x3140] sm:$0xff]
                %1727 = vst [vmem:[%s149 + $0x18a0] sm:$0xff] %v1726
                %v1728 = vld [vmem:[%s148 + $0x3148] sm:$0xff]
                %1729 = vst [vmem:[%s149 + $0x18a8] sm:$0xff] %v1728
                %v1730 = vld [vmem:[%s148 + $0x3150] sm:$0xff]
                %1731 = vst [vmem:[%s149 + $0x18b0] sm:$0xff] %v1730
                %v1732 = vld [vmem:[%s148 + $0x3158] sm:$0xff]
                %1733 = vst [vmem:[%s149 + $0x18b8] sm:$0xff] %v1732
                %v1734 = vld [vmem:[%s148 + $0x3180] sm:$0xff]
                %1735 = vst [vmem:[%s149 + $0x18c0] sm:$0xff] %v1734
                %v1736 = vld [vmem:[%s148 + $0x3188] sm:$0xff]
                %1737 = vst [vmem:[%s149 + $0x18c8] sm:$0xff] %v1736
                %v1738 = vld [vmem:[%s148 + $0x3190] sm:$0xff]
                %1739 = vst [vmem:[%s149 + $0x18d0] sm:$0xff] %v1738
                %v1740 = vld [vmem:[%s148 + $0x3198] sm:$0xff]
                %1741 = vst [vmem:[%s149 + $0x18d8] sm:$0xff] %v1740
                %v1742 = vld [vmem:[%s148 + $0x31c0] sm:$0xff]
                %1743 = vst [vmem:[%s149 + $0x18e0] sm:$0xff] %v1742
                %v1744 = vld [vmem:[%s148 + $0x31c8] sm:$0xff]
                %1745 = vst [vmem:[%s149 + $0x18e8] sm:$0xff] %v1744
                %v1746 = vld [vmem:[%s148 + $0x31d0] sm:$0xff]
                %1747 = vst [vmem:[%s149 + $0x18f0] sm:$0xff] %v1746
                %v1748 = vld [vmem:[%s148 + $0x31d8] sm:$0xff]
                %1749 = vst [vmem:[%s149 + $0x18f8] sm:$0xff] %v1748
                %v1750 = vld [vmem:[%s148 + $0x3200] sm:$0xff]
                %1751 = vst [vmem:[%s149 + $0x1900] sm:$0xff] %v1750
                %v1752 = vld [vmem:[%s148 + $0x3208] sm:$0xff]
                %1753 = vst [vmem:[%s149 + $0x1908] sm:$0xff] %v1752
                %v1754 = vld [vmem:[%s148 + $0x3210] sm:$0xff]
                %1755 = vst [vmem:[%s149 + $0x1910] sm:$0xff] %v1754
                %v1756 = vld [vmem:[%s148 + $0x3218] sm:$0xff]
                %1757 = vst [vmem:[%s149 + $0x1918] sm:$0xff] %v1756
                %v1758 = vld [vmem:[%s148 + $0x3240] sm:$0xff]
                %1759 = vst [vmem:[%s149 + $0x1920] sm:$0xff] %v1758
                %v1760 = vld [vmem:[%s148 + $0x3248] sm:$0xff]
                %1761 = vst [vmem:[%s149 + $0x1928] sm:$0xff] %v1760
                %v1762 = vld [vmem:[%s148 + $0x3250] sm:$0xff]
                %1763 = vst [vmem:[%s149 + $0x1930] sm:$0xff] %v1762
                %v1764 = vld [vmem:[%s148 + $0x3258] sm:$0xff]
                %1765 = vst [vmem:[%s149 + $0x1938] sm:$0xff] %v1764
                %v1766 = vld [vmem:[%s148 + $0x3280] sm:$0xff]
                %1767 = vst [vmem:[%s149 + $0x1940] sm:$0xff] %v1766
                %v1768 = vld [vmem:[%s148 + $0x3288] sm:$0xff]
                %1769 = vst [vmem:[%s149 + $0x1948] sm:$0xff] %v1768
                %v1770 = vld [vmem:[%s148 + $0x3290] sm:$0xff]
                %1771 = vst [vmem:[%s149 + $0x1950] sm:$0xff] %v1770
                %v1772 = vld [vmem:[%s148 + $0x3298] sm:$0xff]
                %1773 = vst [vmem:[%s149 + $0x1958] sm:$0xff] %v1772
                %v1774 = vld [vmem:[%s148 + $0x32c0] sm:$0xff]
                %1775 = vst [vmem:[%s149 + $0x1960] sm:$0xff] %v1774
                %v1776 = vld [vmem:[%s148 + $0x32c8] sm:$0xff]
                %1777 = vst [vmem:[%s149 + $0x1968] sm:$0xff] %v1776
                %v1778 = vld [vmem:[%s148 + $0x32d0] sm:$0xff]
                %1779 = vst [vmem:[%s149 + $0x1970] sm:$0xff] %v1778
                %v1780 = vld [vmem:[%s148 + $0x32d8] sm:$0xff]
                %1781 = vst [vmem:[%s149 + $0x1978] sm:$0xff] %v1780
                %v1782 = vld [vmem:[%s148 + $0x3300] sm:$0xff]
                %1783 = vst [vmem:[%s149 + $0x1980] sm:$0xff] %v1782
                %v1784 = vld [vmem:[%s148 + $0x3308] sm:$0xff]
                %1785 = vst [vmem:[%s149 + $0x1988] sm:$0xff] %v1784
                %v1786 = vld [vmem:[%s148 + $0x3310] sm:$0xff]
                %1787 = vst [vmem:[%s149 + $0x1990] sm:$0xff] %v1786
                %v1788 = vld [vmem:[%s148 + $0x3318] sm:$0xff]
                %1789 = vst [vmem:[%s149 + $0x1998] sm:$0xff] %v1788
                %v1790 = vld [vmem:[%s148 + $0x3340] sm:$0xff]
                %1791 = vst [vmem:[%s149 + $0x19a0] sm:$0xff] %v1790
                %v1792 = vld [vmem:[%s148 + $0x3348] sm:$0xff]
                %1793 = vst [vmem:[%s149 + $0x19a8] sm:$0xff] %v1792
                %v1794 = vld [vmem:[%s148 + $0x3350] sm:$0xff]
                %1795 = vst [vmem:[%s149 + $0x19b0] sm:$0xff] %v1794
                %v1796 = vld [vmem:[%s148 + $0x3358] sm:$0xff]
                %1797 = vst [vmem:[%s149 + $0x19b8] sm:$0xff] %v1796
                %v1798 = vld [vmem:[%s148 + $0x3380] sm:$0xff]
                %1799 = vst [vmem:[%s149 + $0x19c0] sm:$0xff] %v1798
                %v1800 = vld [vmem:[%s148 + $0x3388] sm:$0xff]
                %1801 = vst [vmem:[%s149 + $0x19c8] sm:$0xff] %v1800
                %v1802 = vld [vmem:[%s148 + $0x3390] sm:$0xff]
                %1803 = vst [vmem:[%s149 + $0x19d0] sm:$0xff] %v1802
                %v1804 = vld [vmem:[%s148 + $0x3398] sm:$0xff]
                %1805 = vst [vmem:[%s149 + $0x19d8] sm:$0xff] %v1804
                %v1806 = vld [vmem:[%s148 + $0x33c0] sm:$0xff]
                %1807 = vst [vmem:[%s149 + $0x19e0] sm:$0xff] %v1806
                %v1808 = vld [vmem:[%s148 + $0x33c8] sm:$0xff]
                %1809 = vst [vmem:[%s149 + $0x19e8] sm:$0xff] %v1808
                %v1810 = vld [vmem:[%s148 + $0x33d0] sm:$0xff]
                %1811 = vst [vmem:[%s149 + $0x19f0] sm:$0xff] %v1810
                %v1812 = vld [vmem:[%s148 + $0x33d8] sm:$0xff]
                %1813 = vst [vmem:[%s149 + $0x19f8] sm:$0xff] %v1812
                %v1814 = vld [vmem:[%s148 + $0x3400] sm:$0xff]
                %1815 = vst [vmem:[%s149 + $0x1a00] sm:$0xff] %v1814
                %v1816 = vld [vmem:[%s148 + $0x3408] sm:$0xff]
                %1817 = vst [vmem:[%s149 + $0x1a08] sm:$0xff] %v1816
                %v1818 = vld [vmem:[%s148 + $0x3410] sm:$0xff]
                %1819 = vst [vmem:[%s149 + $0x1a10] sm:$0xff] %v1818
                %v1820 = vld [vmem:[%s148 + $0x3418] sm:$0xff]
                %1821 = vst [vmem:[%s149 + $0x1a18] sm:$0xff] %v1820
                %v1822 = vld [vmem:[%s148 + $0x3440] sm:$0xff]
                %1823 = vst [vmem:[%s149 + $0x1a20] sm:$0xff] %v1822
                %v1824 = vld [vmem:[%s148 + $0x3448] sm:$0xff]
                %1825 = vst [vmem:[%s149 + $0x1a28] sm:$0xff] %v1824
                %v1826 = vld [vmem:[%s148 + $0x3450] sm:$0xff]
                %1827 = vst [vmem:[%s149 + $0x1a30] sm:$0xff] %v1826
                %v1828 = vld [vmem:[%s148 + $0x3458] sm:$0xff]
                %1829 = vst [vmem:[%s149 + $0x1a38] sm:$0xff] %v1828
                %v1830 = vld [vmem:[%s148 + $0x3480] sm:$0xff]
                %1831 = vst [vmem:[%s149 + $0x1a40] sm:$0xff] %v1830
                %v1832 = vld [vmem:[%s148 + $0x3488] sm:$0xff]
                %1833 = vst [vmem:[%s149 + $0x1a48] sm:$0xff] %v1832
                %v1834 = vld [vmem:[%s148 + $0x3490] sm:$0xff]
                %1835 = vst [vmem:[%s149 + $0x1a50] sm:$0xff] %v1834
                %v1836 = vld [vmem:[%s148 + $0x3498] sm:$0xff]
                %1837 = vst [vmem:[%s149 + $0x1a58] sm:$0xff] %v1836
                %v1838 = vld [vmem:[%s148 + $0x34c0] sm:$0xff]
                %1839 = vst [vmem:[%s149 + $0x1a60] sm:$0xff] %v1838
                %v1840 = vld [vmem:[%s148 + $0x34c8] sm:$0xff]
                %1841 = vst [vmem:[%s149 + $0x1a68] sm:$0xff] %v1840
                %v1842 = vld [vmem:[%s148 + $0x34d0] sm:$0xff]
                %1843 = vst [vmem:[%s149 + $0x1a70] sm:$0xff] %v1842
                %v1844 = vld [vmem:[%s148 + $0x34d8] sm:$0xff]
                %1845 = vst [vmem:[%s149 + $0x1a78] sm:$0xff] %v1844
                %v1846 = vld [vmem:[%s148 + $0x3500] sm:$0xff]
                %1847 = vst [vmem:[%s149 + $0x1a80] sm:$0xff] %v1846
                %v1848 = vld [vmem:[%s148 + $0x3508] sm:$0xff]
                %1849 = vst [vmem:[%s149 + $0x1a88] sm:$0xff] %v1848
                %v1850 = vld [vmem:[%s148 + $0x3510] sm:$0xff]
                %1851 = vst [vmem:[%s149 + $0x1a90] sm:$0xff] %v1850
                %v1852 = vld [vmem:[%s148 + $0x3518] sm:$0xff]
                %1853 = vst [vmem:[%s149 + $0x1a98] sm:$0xff] %v1852
                %v1854 = vld [vmem:[%s148 + $0x3540] sm:$0xff]
                %1855 = vst [vmem:[%s149 + $0x1aa0] sm:$0xff] %v1854
                %v1856 = vld [vmem:[%s148 + $0x3548] sm:$0xff]
                %1857 = vst [vmem:[%s149 + $0x1aa8] sm:$0xff] %v1856
                %v1858 = vld [vmem:[%s148 + $0x3550] sm:$0xff]
                %1859 = vst [vmem:[%s149 + $0x1ab0] sm:$0xff] %v1858
                %v1860 = vld [vmem:[%s148 + $0x3558] sm:$0xff]
                %1861 = vst [vmem:[%s149 + $0x1ab8] sm:$0xff] %v1860
                %v1862 = vld [vmem:[%s148 + $0x3580] sm:$0xff]
                %1863 = vst [vmem:[%s149 + $0x1ac0] sm:$0xff] %v1862
                %v1864 = vld [vmem:[%s148 + $0x3588] sm:$0xff]
                %1865 = vst [vmem:[%s149 + $0x1ac8] sm:$0xff] %v1864
                %v1866 = vld [vmem:[%s148 + $0x3590] sm:$0xff]
                %1867 = vst [vmem:[%s149 + $0x1ad0] sm:$0xff] %v1866
                %v1868 = vld [vmem:[%s148 + $0x3598] sm:$0xff]
                %1869 = vst [vmem:[%s149 + $0x1ad8] sm:$0xff] %v1868
              $region41: #{fmri_cnn_forward.3} parent=35 // loop_footer
                %s147 = sadd.s32 1, %s143
              $region42: #{fmri_cnn_forward.3} parent=35 // loop_footer_branch
                %142 = sbr.rel target = $region38
              $region43: #{fmri_cnn_forward.3} parent=35 // loop_exit
                _
            $region36: #{fmri_cnn_forward.3} parent=31 // pred_fallthru
              _
            // Predicated region
            $region44: #{fmri_cnn_forward.3} parent=31 // pred_check
              _
            $region45: #{fmri_cnn_forward.3} parent=31 // pred_check_branch
              %1871 = sbr.rel target = $region47
            $region46: #{fmri_cnn_forward.3} parent=31 // pred_region
              _
            $region47: #{fmri_cnn_forward.3} parent=31 // pred_fallthru
              _
          $region32: #{fmri_cnn_forward.3} parent=27 // pred_fallthru
            _
          %1872 = vnop
        $region28: #{fmri_cnn_forward.3} parent=23 // pred_fallthru
          _
      $region24: #{fmri_cnn_forward.3} parent=5 // pred_fallthru
        _
      %p1873 = scmp.le.s32.totalorder 1, %s9
      %p1874 = scmp.lt.s32.totalorder %s9, 3
      %p1875 = pnand %p1873, %p1874
      %p1876 = pneg %p1875
      // Predicated region
      $region48: #{fmri_cnn_forward.3} parent=5 // pred_check
        _
      $region49: #{fmri_cnn_forward.3} parent=5 // pred_check_branch
        %1878 = sbr.rel (%p1875) target = $region51
      $region50: #{fmri_cnn_forward.3} parent=5 // pred_region
        %s1879 = ssub.s32 %s9, 1
        %s1880 = sand.u32 %s43, 1
        %s1881 = sand.u32 %s43, 1
        %s1882 = smul.addr %s1881, 6880
        %s1883 = scalar_lea.vmem [#allocation2], %s1882
        // Predicated region
        $region52: #{fmri_cnn_forward.3} parent=50 // pred_check
          %p1884 = pneg %p56
        $region53: #{fmri_cnn_forward.3} parent=50 // pred_check_branch
          %1886 = sbr.rel (%p1884) target = $region55
        $region54: #{fmri_cnn_forward.3} parent=50 // pred_region
          _
        $region55: #{fmri_cnn_forward.3} parent=50 // pred_fallthru
          _
        %p1887 = pneg %p30
        %p1888 = pneg %p27
        %s1889 = sand.u32 %s43, 1
        %s1890 = sand.u32 %s43, 1
        %s1891 = smul.addr %s1890, 6880
        %s1892 = scalar_lea.vmem [#allocation2], %s1891
        %p1893 = pneg %p56
        %p1894 = pneg %p53
        %p1895 = pneg %p77
        %p1896 = pneg %p74
        %p1897 = pneg %p103
        %p1898 = pneg %p100
        %s1899 = sand.u32 %s90, 1
        %s1900 = sand.u32 %s90, 1
        %s1901 = smul.addr %s1900, 64
        %s1902 = scalar_lea.vmem [#allocation3], %s1901
        %s1903 = smul.u32 8, %s14
        %s1904 = smul.u32 8, %s14
        %v1906 = vld [vmem:[%s0] sm:$0xff]
        %v1907 = vld [vmem:[%s0 + $0x8] sm:$0xff]
        %v1908 = vld [vmem:[%s0 + $0x10] sm:$0xff]
        %v1909 = vld [vmem:[%s0 + $0x18] sm:$0xff]
        %v1910 = vld [vmem:[%s0 + $0x20] sm:$0xff]
        %v1911 = vld [vmem:[%s0 + $0x28] sm:$0xff]
        %v1912 = vld [vmem:[%s0 + $0x30] sm:$0xff]
        %v1913 = vld [vmem:[%s0 + $0x38] sm:$0xff]
        %v1914 = vld [vmem:[%s0 + $0x40] sm:$0xff]
        %v1915 = vld [vmem:[%s0 + $0x48] sm:$0xff]
        %v1916 = vld [vmem:[%s0 + $0x50] sm:$0xff]
        %v1917 = vld [vmem:[%s0 + $0x58] sm:$0xff]
        %v1918 = vld [vmem:[%s0 + $0x60] sm:$0xff]
        %v1919 = vld [vmem:[%s0 + $0x68] sm:$0xff]
        %v1920 = vld [vmem:[%s1883] sm:$0xff]
        %v1921 = vld [vmem:[%s1883 + $0x8] sm:$0xff]
        %v1922 = vld [vmem:[%s1883 + $0x10] sm:$0xff]
        %v1923 = vld [vmem:[%s1883 + $0x18] sm:$0xff]
        %v1924 = vld [vmem:[%s1883 + $0x20] sm:$0xff]
        %v1925 = vld [vmem:[%s1883 + $0x28] sm:$0xff]
        %v1926 = vld [vmem:[%s1883 + $0x30] sm:$0xff]
        %v1927 = vld [vmem:[%s1883 + $0x38] sm:$0xff]
        %v1928 = vld [vmem:[%s1883 + $0x40] sm:$0xff]
        %v1929 = vld [vmem:[%s1883 + $0x48] sm:$0xff]
        %v1930 = vld [vmem:[%s1883 + $0x50] sm:$0xff]
        %v1931 = vld [vmem:[%s1883 + $0x58] sm:$0xff]
        %v1932 = vld [vmem:[%s1883 + $0x60] sm:$0xff]
        %v1933 = vld [vmem:[%s1883 + $0x68] sm:$0xff]
        %v1934 = vld [vmem:[%s1883 + $0x70] sm:$0xff]
        %v1935 = vld [vmem:[%s1883 + $0x78] sm:$0xff]
        %v1936 = vld [vmem:[%s1883 + $0x80] sm:$0xff]
        %v1937 = vld [vmem:[%s1883 + $0x88] sm:$0xff]
        %v1938 = vld [vmem:[%s1883 + $0x90] sm:$0xff]
        %v1939 = vld [vmem:[%s1883 + $0x98] sm:$0xff]
        %v1940 = vld [vmem:[%s1883 + $0xa0] sm:$0xff]
        %v1941 = vld [vmem:[%s1883 + $0xa8] sm:$0xff]
        %v1942 = vld [vmem:[%s1883 + $0xb0] sm:$0xff]
        %v1943 = vld [vmem:[%s1883 + $0xb8] sm:$0xff]
        %v1944 = vld [vmem:[%s1883 + $0xc0] sm:$0xff]
        %v1945 = vld [vmem:[%s1883 + $0xc8] sm:$0xff]
        %v1946 = vld [vmem:[%s1883 + $0xd0] sm:$0xff]
        %v1947 = vld [vmem:[%s1883 + $0xd8] sm:$0xff]
        %v1948 = vld [vmem:[%s1883 + $0xe0] sm:$0xff]
        %v1949 = vld [vmem:[%s1883 + $0xe8] sm:$0xff]
        %v1950 = vld [vmem:[%s1883 + $0xf0] sm:$0xff]
        %v1951 = vld [vmem:[%s1883 + $0xf8] sm:$0xff]
        %v1952 = vld [vmem:[%s1883 + $0x100] sm:$0xff]
        %v1953 = vld [vmem:[%s1883 + $0x108] sm:$0xff]
        %v1954 = vld [vmem:[%s1883 + $0x110] sm:$0xff]
        %v1955 = vld [vmem:[%s1883 + $0x118] sm:$0xff]
        %v1956 = vld [vmem:[%s1883 + $0x120] sm:$0xff]
        %v1957 = vld [vmem:[%s1883 + $0x128] sm:$0xff]
        %v1958 = vld [vmem:[%s1883 + $0x130] sm:$0xff]
        %v1959 = vld [vmem:[%s1883 + $0x138] sm:$0xff]
        %v1960 = vld [vmem:[%s1883 + $0x140] sm:$0xff]
        %v1961 = vld [vmem:[%s1883 + $0x148] sm:$0xff]
        %v1962 = vld [vmem:[%s1883 + $0x150] sm:$0xff]
        %v1963 = vld [vmem:[%s1883 + $0x158] sm:$0xff]
        %v1964 = vld [vmem:[%s1883 + $0x160] sm:$0xff]
        %v1965 = vld [vmem:[%s1883 + $0x168] sm:$0xff]
        %v1966 = vld [vmem:[%s1883 + $0x170] sm:$0xff]
        %v1967 = vld [vmem:[%s1883 + $0x178] sm:$0xff]
        %v1968 = vld [vmem:[%s1883 + $0x180] sm:$0xff]
        %v1969 = vld [vmem:[%s1883 + $0x188] sm:$0xff]
        %v1970 = vld [vmem:[%s1883 + $0x190] sm:$0xff]
        %v1971 = vld [vmem:[%s1883 + $0x198] sm:$0xff]
        %v1972 = vld [vmem:[%s1883 + $0x1a0] sm:$0xff]
        %v1973 = vld [vmem:[%s1883 + $0x1a8] sm:$0xff]
        %v1974 = vld [vmem:[%s1883 + $0x1b0] sm:$0xff]
        %v1975 = vld [vmem:[%s1883 + $0x1b8] sm:$0xff]
        %v1976 = vld [vmem:[%s1883 + $0x1c0] sm:$0xff]
        %v1977 = vld [vmem:[%s1883 + $0x1c8] sm:$0xff]
        %v1978 = vld [vmem:[%s1883 + $0x1d0] sm:$0xff]
        %v1979 = vld [vmem:[%s1883 + $0x1d8] sm:$0xff]
        %v1980 = vld [vmem:[%s1883 + $0x1e0] sm:$0xff]
        %v1981 = vld [vmem:[%s1883 + $0x1e8] sm:$0xff]
        %v1982 = vld [vmem:[%s1883 + $0x1f0] sm:$0xff]
        %v1983 = vld [vmem:[%s1883 + $0x1f8] sm:$0xff]
        %v1984 = vld [vmem:[%s1883 + $0x200] sm:$0xff]
        %v1985 = vld [vmem:[%s1883 + $0x208] sm:$0xff]
        %v1986 = vld [vmem:[%s1883 + $0x210] sm:$0xff]
        %v1987 = vld [vmem:[%s1883 + $0x218] sm:$0xff]
        %v1988 = vld [vmem:[%s1883 + $0x220] sm:$0xff]
        %v1989 = vld [vmem:[%s1883 + $0x228] sm:$0xff]
        %v1990 = vld [vmem:[%s1883 + $0x230] sm:$0xff]
        %v1991 = vld [vmem:[%s1883 + $0x238] sm:$0xff]
        %v1992 = vld [vmem:[%s1883 + $0x240] sm:$0xff]
        %v1993 = vld [vmem:[%s1883 + $0x248] sm:$0xff]
        %v1994 = vld [vmem:[%s1883 + $0x250] sm:$0xff]
        %v1995 = vld [vmem:[%s1883 + $0x258] sm:$0xff]
        %v1996 = vld [vmem:[%s1883 + $0x260] sm:$0xff]
        %v1997 = vld [vmem:[%s1883 + $0x268] sm:$0xff]
        %v1998 = vld [vmem:[%s1883 + $0x270] sm:$0xff]
        %v1999 = vld [vmem:[%s1883 + $0x278] sm:$0xff]
        %v2000 = vld [vmem:[%s1883 + $0x280] sm:$0xff]
        %v2001 = vld [vmem:[%s1883 + $0x288] sm:$0xff]
        %v2002 = vld [vmem:[%s1883 + $0x290] sm:$0xff]
        %v2003 = vld [vmem:[%s1883 + $0x298] sm:$0xff]
        %v2004 = vld [vmem:[%s1883 + $0x2a0] sm:$0xff]
        %v2005 = vld [vmem:[%s1883 + $0x2a8] sm:$0xff]
        %v2006 = vld [vmem:[%s1883 + $0x2b0] sm:$0xff]
        %v2007 = vld [vmem:[%s1883 + $0x2b8] sm:$0xff]
        %v2008 = vld [vmem:[%s1883 + $0x2c0] sm:$0xff]
        %v2009 = vld [vmem:[%s1883 + $0x2c8] sm:$0xff]
        %v2010 = vld [vmem:[%s1883 + $0x2d0] sm:$0xff]
        %v2011 = vld [vmem:[%s1883 + $0x2d8] sm:$0xff]
        %v2012 = vld [vmem:[%s1883 + $0x2e0] sm:$0xff]
        %v2013 = vld [vmem:[%s1883 + $0x2e8] sm:$0xff]
        %v2014 = vld [vmem:[%s1883 + $0x2f0] sm:$0xff]
        %v2015 = vld [vmem:[%s1883 + $0x2f8] sm:$0xff]
        %v2016 = vld [vmem:[%s1883 + $0x300] sm:$0xff]
        %v2017 = vld [vmem:[%s1883 + $0x308] sm:$0xff]
        %v2018 = vld [vmem:[%s1883 + $0x310] sm:$0xff]
        %v2019 = vld [vmem:[%s1883 + $0x318] sm:$0xff]
        %v2020 = vld [vmem:[%s1883 + $0x320] sm:$0xff]
        %v2021 = vld [vmem:[%s1883 + $0x328] sm:$0xff]
        %v2022 = vld [vmem:[%s1883 + $0x330] sm:$0xff]
        %v2023 = vld [vmem:[%s1883 + $0x338] sm:$0xff]
        %v2024 = vld [vmem:[%s1883 + $0x340] sm:$0xff]
        %v2025 = vld [vmem:[%s1883 + $0x348] sm:$0xff]
        %v2026 = vld [vmem:[%s1883 + $0x350] sm:$0xff]
        %v2027 = vld [vmem:[%s1883 + $0x358] sm:$0xff]
        %v2028 = vld [vmem:[%s1883 + $0x360] sm:$0xff]
        %v2029 = vld [vmem:[%s1883 + $0x368] sm:$0xff]
        %v2030 = vld [vmem:[%s1883 + $0x370] sm:$0xff]
        %v2031 = vld [vmem:[%s1883 + $0x378] sm:$0xff]
        %v2032 = vld [vmem:[%s1883 + $0x380] sm:$0xff]
        %v2033 = vld [vmem:[%s1883 + $0x388] sm:$0xff]
        %v2034 = vld [vmem:[%s1883 + $0x390] sm:$0xff]
        %v2035 = vld [vmem:[%s1883 + $0x398] sm:$0xff]
        %v2036 = vld [vmem:[%s1883 + $0x3a0] sm:$0xff]
        %v2037 = vld [vmem:[%s1883 + $0x3a8] sm:$0xff]
        %v2038 = vld [vmem:[%s1883 + $0x3b0] sm:$0xff]
        %v2039 = vld [vmem:[%s1883 + $0x3b8] sm:$0xff]
        %v2040 = vld [vmem:[%s1883 + $0x3c0] sm:$0xff]
        %v2041 = vld [vmem:[%s1883 + $0x3c8] sm:$0xff]
        %v2042 = vld [vmem:[%s1883 + $0x3d0] sm:$0xff]
        %v2043 = vld [vmem:[%s1883 + $0x3d8] sm:$0xff]
        %v2044 = vld [vmem:[%s1883 + $0x3e0] sm:$0xff]
        %v2045 = vld [vmem:[%s1883 + $0x3e8] sm:$0xff]
        %v2046 = vld [vmem:[%s1883 + $0x3f0] sm:$0xff]
        %v2047 = vld [vmem:[%s1883 + $0x3f8] sm:$0xff]
        %v2048 = vld [vmem:[%s1883 + $0x400] sm:$0xff]
        %v2049 = vld [vmem:[%s1883 + $0x408] sm:$0xff]
        %v2050 = vld [vmem:[%s1883 + $0x410] sm:$0xff]
        %v2051 = vld [vmem:[%s1883 + $0x418] sm:$0xff]
        %v2052 = vld [vmem:[%s1883 + $0x420] sm:$0xff]
        %v2053 = vld [vmem:[%s1883 + $0x428] sm:$0xff]
        %v2054 = vld [vmem:[%s1883 + $0x430] sm:$0xff]
        %v2055 = vld [vmem:[%s1883 + $0x438] sm:$0xff]
        %v2056 = vld [vmem:[%s1883 + $0x440] sm:$0xff]
        %v2057 = vld [vmem:[%s1883 + $0x448] sm:$0xff]
        %v2058 = vld [vmem:[%s1883 + $0x450] sm:$0xff]
        %v2059 = vld [vmem:[%s1883 + $0x458] sm:$0xff]
        %v2060 = vld [vmem:[%s1883 + $0x460] sm:$0xff]
        %v2061 = vld [vmem:[%s1883 + $0x468] sm:$0xff]
        %v2062 = vld [vmem:[%s1883 + $0x470] sm:$0xff]
        %v2063 = vld [vmem:[%s1883 + $0x478] sm:$0xff]
        %v2064 = vld [vmem:[%s1883 + $0x480] sm:$0xff]
        %v2065 = vld [vmem:[%s1883 + $0x488] sm:$0xff]
        %v2066 = vld [vmem:[%s1883 + $0x490] sm:$0xff]
        %v2067 = vld [vmem:[%s1883 + $0x498] sm:$0xff]
        %v2068 = vld [vmem:[%s1883 + $0x4a0] sm:$0xff]
        %v2069 = vld [vmem:[%s1883 + $0x4a8] sm:$0xff]
        %v2070 = vld [vmem:[%s1883 + $0x4b0] sm:$0xff]
        %v2071 = vld [vmem:[%s1883 + $0x4b8] sm:$0xff]
        %v2072 = vld [vmem:[%s1883 + $0x4c0] sm:$0xff]
        %v2073 = vld [vmem:[%s1883 + $0x4c8] sm:$0xff]
        %v2074 = vld [vmem:[%s1883 + $0x4d0] sm:$0xff]
        %v2075 = vld [vmem:[%s1883 + $0x4d8] sm:$0xff]
        %v2076 = vld [vmem:[%s1883 + $0x4e0] sm:$0xff]
        %v2077 = vld [vmem:[%s1883 + $0x4e8] sm:$0xff]
        %v2078 = vld [vmem:[%s1883 + $0x4f0] sm:$0xff]
        %v2079 = vld [vmem:[%s1883 + $0x4f8] sm:$0xff]
        %v2080 = vld [vmem:[%s1883 + $0x500] sm:$0xff]
        %v2081 = vld [vmem:[%s1883 + $0x508] sm:$0xff]
        %v2082 = vld [vmem:[%s1883 + $0x510] sm:$0xff]
        %v2083 = vld [vmem:[%s1883 + $0x518] sm:$0xff]
        %v2084 = vld [vmem:[%s1883 + $0x520] sm:$0xff]
        %v2085 = vld [vmem:[%s1883 + $0x528] sm:$0xff]
        %v2086 = vld [vmem:[%s1883 + $0x530] sm:$0xff]
        %v2087 = vld [vmem:[%s1883 + $0x538] sm:$0xff]
        %v2088 = vld [vmem:[%s1883 + $0x540] sm:$0xff]
        %v2089 = vld [vmem:[%s1883 + $0x548] sm:$0xff]
        %v2090 = vld [vmem:[%s1883 + $0x550] sm:$0xff]
        %v2091 = vld [vmem:[%s1883 + $0x558] sm:$0xff]
        %v2092 = vld [vmem:[%s1883 + $0x560] sm:$0xff]
        %v2093 = vld [vmem:[%s1883 + $0x568] sm:$0xff]
        %v2094 = vld [vmem:[%s1883 + $0x570] sm:$0xff]
        %v2095 = vld [vmem:[%s1883 + $0x578] sm:$0xff]
        %v2096 = vld [vmem:[%s1883 + $0x580] sm:$0xff]
        %v2097 = vld [vmem:[%s1883 + $0x588] sm:$0xff]
        %v2098 = vld [vmem:[%s1883 + $0x590] sm:$0xff]
        %v2099 = vld [vmem:[%s1883 + $0x598] sm:$0xff]
        %v2100 = vld [vmem:[%s1883 + $0x5a0] sm:$0xff]
        %v2101 = vld [vmem:[%s1883 + $0x5a8] sm:$0xff]
        %v2102 = vld [vmem:[%s1883 + $0x5b0] sm:$0xff]
        %v2103 = vld [vmem:[%s1883 + $0x5b8] sm:$0xff]
        %v2104 = vld [vmem:[%s1883 + $0x5c0] sm:$0xff]
        %v2105 = vld [vmem:[%s1883 + $0x5c8] sm:$0xff]
        %v2106 = vld [vmem:[%s1883 + $0x5d0] sm:$0xff]
        %v2107 = vld [vmem:[%s1883 + $0x5d8] sm:$0xff]
        %v2108 = vld [vmem:[%s1883 + $0x5e0] sm:$0xff]
        %v2109 = vld [vmem:[%s1883 + $0x5e8] sm:$0xff]
        %v2110 = vld [vmem:[%s1883 + $0x5f0] sm:$0xff]
        %v2111 = vld [vmem:[%s1883 + $0x5f8] sm:$0xff]
        %v2112 = vld [vmem:[%s1883 + $0x600] sm:$0xff]
        %v2113 = vld [vmem:[%s1883 + $0x608] sm:$0xff]
        %v2114 = vld [vmem:[%s1883 + $0x610] sm:$0xff]
        %v2115 = vld [vmem:[%s1883 + $0x618] sm:$0xff]
        %v2116 = vld [vmem:[%s1883 + $0x620] sm:$0xff]
        %v2117 = vld [vmem:[%s1883 + $0x628] sm:$0xff]
        %v2118 = vld [vmem:[%s1883 + $0x630] sm:$0xff]
        %v2119 = vld [vmem:[%s1883 + $0x638] sm:$0xff]
        %v2120 = vld [vmem:[%s1883 + $0x640] sm:$0xff]
        %v2121 = vld [vmem:[%s1883 + $0x648] sm:$0xff]
        %v2122 = vld [vmem:[%s1883 + $0x650] sm:$0xff]
        %v2123 = vld [vmem:[%s1883 + $0x658] sm:$0xff]
        %v2124 = vld [vmem:[%s1883 + $0x660] sm:$0xff]
        %v2125 = vld [vmem:[%s1883 + $0x668] sm:$0xff]
        %v2126 = vld [vmem:[%s1883 + $0x670] sm:$0xff]
        %v2127 = vld [vmem:[%s1883 + $0x678] sm:$0xff]
        %v2128 = vld [vmem:[%s1883 + $0x680] sm:$0xff]
        %v2129 = vld [vmem:[%s1883 + $0x688] sm:$0xff]
        %v2130 = vld [vmem:[%s1883 + $0x690] sm:$0xff]
        %v2131 = vld [vmem:[%s1883 + $0x698] sm:$0xff]
        %v2132 = vld [vmem:[%s1883 + $0x6a0] sm:$0xff]
        %v2133 = vld [vmem:[%s1883 + $0x6a8] sm:$0xff]
        %v2134 = vld [vmem:[%s1883 + $0x6b0] sm:$0xff]
        %v2135 = vld [vmem:[%s1883 + $0x6b8] sm:$0xff]
        %v2136 = vld [vmem:[%s1883 + $0x6c0] sm:$0xff]
        %v2137 = vld [vmem:[%s1883 + $0x6c8] sm:$0xff]
        %v2138 = vld [vmem:[%s1883 + $0x6d0] sm:$0xff]
        %v2139 = vld [vmem:[%s1883 + $0x6d8] sm:$0xff]
        %v2140 = vld [vmem:[%s1883 + $0x6e0] sm:$0xff]
        %v2141 = vld [vmem:[%s1883 + $0x6e8] sm:$0xff]
        %v2142 = vld [vmem:[%s1883 + $0x6f0] sm:$0xff]
        %v2143 = vld [vmem:[%s1883 + $0x6f8] sm:$0xff]
        %v2144 = vld [vmem:[%s1883 + $0x700] sm:$0xff]
        %v2145 = vld [vmem:[%s1883 + $0x708] sm:$0xff]
        %v2146 = vld [vmem:[%s1883 + $0x710] sm:$0xff]
        %v2147 = vld [vmem:[%s1883 + $0x718] sm:$0xff]
        %v2148 = vld [vmem:[%s1883 + $0x720] sm:$0xff]
        %v2149 = vld [vmem:[%s1883 + $0x728] sm:$0xff]
        %v2150 = vld [vmem:[%s1883 + $0x730] sm:$0xff]
        %v2151 = vld [vmem:[%s1883 + $0x738] sm:$0xff]
        %v2152 = vld [vmem:[%s1883 + $0x740] sm:$0xff]
        %v2153 = vld [vmem:[%s1883 + $0x748] sm:$0xff]
        %v2154 = vld [vmem:[%s1883 + $0x750] sm:$0xff]
        %v2155 = vld [vmem:[%s1883 + $0x758] sm:$0xff]
        %v2156 = vld [vmem:[%s1883 + $0x760] sm:$0xff]
        %v2157 = vld [vmem:[%s1883 + $0x768] sm:$0xff]
        %v2158 = vld [vmem:[%s1883 + $0x770] sm:$0xff]
        %v2159 = vld [vmem:[%s1883 + $0x778] sm:$0xff]
        %v2160 = vld [vmem:[%s1883 + $0x780] sm:$0xff]
        %v2161 = vld [vmem:[%s1883 + $0x788] sm:$0xff]
        %v2162 = vld [vmem:[%s1883 + $0x790] sm:$0xff]
        %v2163 = vld [vmem:[%s1883 + $0x798] sm:$0xff]
        %v2164 = vld [vmem:[%s1883 + $0x7a0] sm:$0xff]
        %v2165 = vld [vmem:[%s1883 + $0x7a8] sm:$0xff]
        %v2166 = vld [vmem:[%s1883 + $0x7b0] sm:$0xff]
        %v2167 = vld [vmem:[%s1883 + $0x7b8] sm:$0xff]
        %v2168 = vld [vmem:[%s1883 + $0x7c0] sm:$0xff]
        %v2169 = vld [vmem:[%s1883 + $0x7c8] sm:$0xff]
        %v2170 = vld [vmem:[%s1883 + $0x7d0] sm:$0xff]
        %v2171 = vld [vmem:[%s1883 + $0x7d8] sm:$0xff]
        %v2172 = vld [vmem:[%s1883 + $0x7e0] sm:$0xff]
        %v2173 = vld [vmem:[%s1883 + $0x7e8] sm:$0xff]
        %v2174 = vld [vmem:[%s1883 + $0x7f0] sm:$0xff]
        %v2175 = vld [vmem:[%s1883 + $0x7f8] sm:$0xff]
        %v2176 = vld [vmem:[%s1883 + $0x800] sm:$0xff]
        %v2177 = vld [vmem:[%s1883 + $0x808] sm:$0xff]
        %v2178 = vld [vmem:[%s1883 + $0x810] sm:$0xff]
        %v2179 = vld [vmem:[%s1883 + $0x818] sm:$0xff]
        %v2180 = vld [vmem:[%s1883 + $0x820] sm:$0xff]
        %v2181 = vld [vmem:[%s1883 + $0x828] sm:$0xff]
        %v2182 = vld [vmem:[%s1883 + $0x830] sm:$0xff]
        %v2183 = vld [vmem:[%s1883 + $0x838] sm:$0xff]
        %v2184 = vld [vmem:[%s1883 + $0x840] sm:$0xff]
        %v2185 = vld [vmem:[%s1883 + $0x848] sm:$0xff]
        %v2186 = vld [vmem:[%s1883 + $0x850] sm:$0xff]
        %v2187 = vld [vmem:[%s1883 + $0x858] sm:$0xff]
        %v2188 = vld [vmem:[%s1883 + $0x860] sm:$0xff]
        %v2189 = vld [vmem:[%s1883 + $0x868] sm:$0xff]
        %v2190 = vld [vmem:[%s1883 + $0x870] sm:$0xff]
        %v2191 = vld [vmem:[%s1883 + $0x878] sm:$0xff]
        %v2192 = vld [vmem:[%s1883 + $0x880] sm:$0xff]
        %v2193 = vld [vmem:[%s1883 + $0x888] sm:$0xff]
        %v2194 = vld [vmem:[%s1883 + $0x890] sm:$0xff]
        %v2195 = vld [vmem:[%s1883 + $0x898] sm:$0xff]
        %v2196 = vld [vmem:[%s1883 + $0x8a0] sm:$0xff]
        %v2197 = vld [vmem:[%s1883 + $0x8a8] sm:$0xff]
        %v2198 = vld [vmem:[%s1883 + $0x8b0] sm:$0xff]
        %v2199 = vld [vmem:[%s1883 + $0x8b8] sm:$0xff]
        %v2200 = vld [vmem:[%s1883 + $0x8c0] sm:$0xff]
        %v2201 = vld [vmem:[%s1883 + $0x8c8] sm:$0xff]
        %v2202 = vld [vmem:[%s1883 + $0x8d0] sm:$0xff]
        %v2203 = vld [vmem:[%s1883 + $0x8d8] sm:$0xff]
        %v2204 = vld [vmem:[%s1883 + $0x8e0] sm:$0xff]
        %v2205 = vld [vmem:[%s1883 + $0x8e8] sm:$0xff]
        %v2206 = vld [vmem:[%s1883 + $0x8f0] sm:$0xff]
        %v2207 = vld [vmem:[%s1883 + $0x8f8] sm:$0xff]
        %v2208 = vld [vmem:[%s1883 + $0x900] sm:$0xff]
        %v2209 = vld [vmem:[%s1883 + $0x908] sm:$0xff]
        %v2210 = vld [vmem:[%s1883 + $0x910] sm:$0xff]
        %v2211 = vld [vmem:[%s1883 + $0x918] sm:$0xff]
        %v2212 = vld [vmem:[%s1883 + $0x920] sm:$0xff]
        %v2213 = vld [vmem:[%s1883 + $0x928] sm:$0xff]
        %v2214 = vld [vmem:[%s1883 + $0x930] sm:$0xff]
        %v2215 = vld [vmem:[%s1883 + $0x938] sm:$0xff]
        %v2216 = vld [vmem:[%s1883 + $0x940] sm:$0xff]
        %v2217 = vld [vmem:[%s1883 + $0x948] sm:$0xff]
        %v2218 = vld [vmem:[%s1883 + $0x950] sm:$0xff]
        %v2219 = vld [vmem:[%s1883 + $0x958] sm:$0xff]
        %v2220 = vld [vmem:[%s1883 + $0x960] sm:$0xff]
        %v2221 = vld [vmem:[%s1883 + $0x968] sm:$0xff]
        %v2222 = vld [vmem:[%s1883 + $0x970] sm:$0xff]
        %v2223 = vld [vmem:[%s1883 + $0x978] sm:$0xff]
        %v2224 = vld [vmem:[%s1883 + $0x980] sm:$0xff]
        %v2225 = vld [vmem:[%s1883 + $0x988] sm:$0xff]
        %v2226 = vld [vmem:[%s1883 + $0x990] sm:$0xff]
        %v2227 = vld [vmem:[%s1883 + $0x998] sm:$0xff]
        %v2228 = vld [vmem:[%s1883 + $0x9a0] sm:$0xff]
        %v2229 = vld [vmem:[%s1883 + $0x9a8] sm:$0xff]
        %v2230 = vld [vmem:[%s1883 + $0x9b0] sm:$0xff]
        %v2231 = vld [vmem:[%s1883 + $0x9b8] sm:$0xff]
        %v2232 = vld [vmem:[%s1883 + $0x9c0] sm:$0xff]
        %v2233 = vld [vmem:[%s1883 + $0x9c8] sm:$0xff]
        %v2234 = vld [vmem:[%s1883 + $0x9d0] sm:$0xff]
        %v2235 = vld [vmem:[%s1883 + $0x9d8] sm:$0xff]
        %v2236 = vld [vmem:[%s1883 + $0x9e0] sm:$0xff]
        %v2237 = vld [vmem:[%s1883 + $0x9e8] sm:$0xff]
        %v2238 = vld [vmem:[%s1883 + $0x9f0] sm:$0xff]
        %v2239 = vld [vmem:[%s1883 + $0x9f8] sm:$0xff]
        %v2240 = vld [vmem:[%s1883 + $0xa00] sm:$0xff]
        %v2241 = vld [vmem:[%s1883 + $0xa08] sm:$0xff]
        %v2242 = vld [vmem:[%s1883 + $0xa10] sm:$0xff]
        %v2243 = vld [vmem:[%s1883 + $0xa18] sm:$0xff]
        %v2244 = vld [vmem:[%s1883 + $0xa20] sm:$0xff]
        %v2245 = vld [vmem:[%s1883 + $0xa28] sm:$0xff]
        %v2246 = vld [vmem:[%s1883 + $0xa30] sm:$0xff]
        %v2247 = vld [vmem:[%s1883 + $0xa38] sm:$0xff]
        %v2248 = vld [vmem:[%s1883 + $0xa40] sm:$0xff]
        %v2249 = vld [vmem:[%s1883 + $0xa48] sm:$0xff]
        %v2250 = vld [vmem:[%s1883 + $0xa50] sm:$0xff]
        %v2251 = vld [vmem:[%s1883 + $0xa58] sm:$0xff]
        %v2252 = vld [vmem:[%s1883 + $0xa60] sm:$0xff]
        %v2253 = vld [vmem:[%s1883 + $0xa68] sm:$0xff]
        %v2254 = vld [vmem:[%s1883 + $0xa70] sm:$0xff]
        %v2255 = vld [vmem:[%s1883 + $0xa78] sm:$0xff]
        %v2256 = vld [vmem:[%s1883 + $0xa80] sm:$0xff]
        %v2257 = vld [vmem:[%s1883 + $0xa88] sm:$0xff]
        %v2258 = vld [vmem:[%s1883 + $0xa90] sm:$0xff]
        %v2259 = vld [vmem:[%s1883 + $0xa98] sm:$0xff]
        %v2260 = vld [vmem:[%s1883 + $0xaa0] sm:$0xff]
        %v2261 = vld [vmem:[%s1883 + $0xaa8] sm:$0xff]
        %v2262 = vld [vmem:[%s1883 + $0xab0] sm:$0xff]
        %v2263 = vld [vmem:[%s1883 + $0xab8] sm:$0xff]
        %v2264 = vld [vmem:[%s1883 + $0xac0] sm:$0xff]
        %v2265 = vld [vmem:[%s1883 + $0xac8] sm:$0xff]
        %v2266 = vld [vmem:[%s1883 + $0xad0] sm:$0xff]
        %v2267 = vld [vmem:[%s1883 + $0xad8] sm:$0xff]
        %v2268 = vld [vmem:[%s1883 + $0xae0] sm:$0xff]
        %v2269 = vld [vmem:[%s1883 + $0xae8] sm:$0xff]
        %v2270 = vld [vmem:[%s1883 + $0xaf0] sm:$0xff]
        %v2271 = vld [vmem:[%s1883 + $0xaf8] sm:$0xff]
        %v2272 = vld [vmem:[%s1883 + $0xb00] sm:$0xff]
        %v2273 = vld [vmem:[%s1883 + $0xb08] sm:$0xff]
        %v2274 = vld [vmem:[%s1883 + $0xb10] sm:$0xff]
        %v2275 = vld [vmem:[%s1883 + $0xb18] sm:$0xff]
        %v2276 = vld [vmem:[%s1883 + $0xb20] sm:$0xff]
        %v2277 = vld [vmem:[%s1883 + $0xb28] sm:$0xff]
        %v2278 = vld [vmem:[%s1883 + $0xb30] sm:$0xff]
        %v2279 = vld [vmem:[%s1883 + $0xb38] sm:$0xff]
        %v2280 = vld [vmem:[%s1883 + $0xb40] sm:$0xff]
        %v2281 = vld [vmem:[%s1883 + $0xb48] sm:$0xff]
        %v2282 = vld [vmem:[%s1883 + $0xb50] sm:$0xff]
        %v2283 = vld [vmem:[%s1883 + $0xb58] sm:$0xff]
        %v2284 = vld [vmem:[%s1883 + $0xb60] sm:$0xff]
        %v2285 = vld [vmem:[%s1883 + $0xb68] sm:$0xff]
        %v2286 = vld [vmem:[%s1883 + $0xb70] sm:$0xff]
        %v2287 = vld [vmem:[%s1883 + $0xb78] sm:$0xff]
        %v2288 = vld [vmem:[%s1883 + $0xb80] sm:$0xff]
        %v2289 = vld [vmem:[%s1883 + $0xb88] sm:$0xff]
        %v2290 = vld [vmem:[%s1883 + $0xb90] sm:$0xff]
        %v2291 = vld [vmem:[%s1883 + $0xb98] sm:$0xff]
        %v2292 = vld [vmem:[%s1883 + $0xba0] sm:$0xff]
        %v2293 = vld [vmem:[%s1883 + $0xba8] sm:$0xff]
        %v2294 = vld [vmem:[%s1883 + $0xbb0] sm:$0xff]
        %v2295 = vld [vmem:[%s1883 + $0xbb8] sm:$0xff]
        %v2296 = vld [vmem:[%s1883 + $0xbc0] sm:$0xff]
        %v2297 = vld [vmem:[%s1883 + $0xbc8] sm:$0xff]
        %v2298 = vld [vmem:[%s1883 + $0xbd0] sm:$0xff]
        %v2299 = vld [vmem:[%s1883 + $0xbd8] sm:$0xff]
        %v2300 = vld [vmem:[%s1883 + $0xbe0] sm:$0xff]
        %v2301 = vld [vmem:[%s1883 + $0xbe8] sm:$0xff]
        %v2302 = vld [vmem:[%s1883 + $0xbf0] sm:$0xff]
        %v2303 = vld [vmem:[%s1883 + $0xbf8] sm:$0xff]
        %v2304 = vld [vmem:[%s1883 + $0xc00] sm:$0xff]
        %v2305 = vld [vmem:[%s1883 + $0xc08] sm:$0xff]
        %v2306 = vld [vmem:[%s1883 + $0xc10] sm:$0xff]
        %v2307 = vld [vmem:[%s1883 + $0xc18] sm:$0xff]
        %v2308 = vld [vmem:[%s1883 + $0xc20] sm:$0xff]
        %v2309 = vld [vmem:[%s1883 + $0xc28] sm:$0xff]
        %v2310 = vld [vmem:[%s1883 + $0xc30] sm:$0xff]
        %v2311 = vld [vmem:[%s1883 + $0xc38] sm:$0xff]
        %v2312 = vld [vmem:[%s1883 + $0xc40] sm:$0xff]
        %v2313 = vld [vmem:[%s1883 + $0xc48] sm:$0xff]
        %v2314 = vld [vmem:[%s1883 + $0xc50] sm:$0xff]
        %v2315 = vld [vmem:[%s1883 + $0xc58] sm:$0xff]
        %v2316 = vld [vmem:[%s1883 + $0xc60] sm:$0xff]
        %v2317 = vld [vmem:[%s1883 + $0xc68] sm:$0xff]
        %v2318 = vld [vmem:[%s1883 + $0xc70] sm:$0xff]
        %v2319 = vld [vmem:[%s1883 + $0xc78] sm:$0xff]
        %v2320 = vld [vmem:[%s1883 + $0xc80] sm:$0xff]
        %v2321 = vld [vmem:[%s1883 + $0xc88] sm:$0xff]
        %v2322 = vld [vmem:[%s1883 + $0xc90] sm:$0xff]
        %v2323 = vld [vmem:[%s1883 + $0xc98] sm:$0xff]
        %v2324 = vld [vmem:[%s1883 + $0xca0] sm:$0xff]
        %v2325 = vld [vmem:[%s1883 + $0xca8] sm:$0xff]
        %v2326 = vld [vmem:[%s1883 + $0xcb0] sm:$0xff]
        %v2327 = vld [vmem:[%s1883 + $0xcb8] sm:$0xff]
        %v2328 = vld [vmem:[%s1883 + $0xcc0] sm:$0xff]
        %v2329 = vld [vmem:[%s1883 + $0xcc8] sm:$0xff]
        %v2330 = vld [vmem:[%s1883 + $0xcd0] sm:$0xff]
        %v2331 = vld [vmem:[%s1883 + $0xcd8] sm:$0xff]
        %v2332 = vld [vmem:[%s1883 + $0xce0] sm:$0xff]
        %v2333 = vld [vmem:[%s1883 + $0xce8] sm:$0xff]
        %v2334 = vld [vmem:[%s1883 + $0xcf0] sm:$0xff]
        %v2335 = vld [vmem:[%s1883 + $0xcf8] sm:$0xff]
        %v2336 = vld [vmem:[%s1883 + $0xd00] sm:$0xff]
        %v2337 = vld [vmem:[%s1883 + $0xd08] sm:$0xff]
        %v2338 = vld [vmem:[%s1883 + $0xd10] sm:$0xff]
        %v2339 = vld [vmem:[%s1883 + $0xd18] sm:$0xff]
        %v2340 = vld [vmem:[%s1883 + $0xd20] sm:$0xff]
        %v2341 = vld [vmem:[%s1883 + $0xd28] sm:$0xff]
        %v2342 = vld [vmem:[%s1883 + $0xd30] sm:$0xff]
        %v2343 = vld [vmem:[%s1883 + $0xd38] sm:$0xff]
        %v2344 = vld [vmem:[%s1883 + $0xd40] sm:$0xff]
        %v2345 = vld [vmem:[%s1883 + $0xd48] sm:$0xff]
        %v2346 = vld [vmem:[%s1883 + $0xd50] sm:$0xff]
        %v2347 = vld [vmem:[%s1883 + $0xd58] sm:$0xff]
        %v2348 = vld [vmem:[%s1883 + $0xd60] sm:$0xff]
        %v2349 = vld [vmem:[%s1883 + $0xd68] sm:$0xff]
        %v2350 = vld [vmem:[%s1883 + $0xd70] sm:$0xff]
        %v2351 = vld [vmem:[%s1883 + $0xd78] sm:$0xff]
        %v2352 = vld [vmem:[%s1883 + $0xd80] sm:$0xff]
        %v2353 = vld [vmem:[%s1883 + $0xd88] sm:$0xff]
        %v2354 = vld [vmem:[%s1883 + $0xd90] sm:$0xff]
        %v2355 = vld [vmem:[%s1883 + $0xd98] sm:$0xff]
        %v2356 = vld [vmem:[%s1883 + $0xda0] sm:$0xff]
        %v2357 = vld [vmem:[%s1883 + $0xda8] sm:$0xff]
        %v2358 = vld [vmem:[%s1883 + $0xdb0] sm:$0xff]
        %v2359 = vld [vmem:[%s1883 + $0xdb8] sm:$0xff]
        %v2360 = vld [vmem:[%s1883 + $0xdc0] sm:$0xff]
        %v2361 = vld [vmem:[%s1883 + $0xdc8] sm:$0xff]
        %v2362 = vld [vmem:[%s1883 + $0xdd0] sm:$0xff]
        %v2363 = vld [vmem:[%s1883 + $0xdd8] sm:$0xff]
        %v2364 = vld [vmem:[%s1883 + $0xde0] sm:$0xff]
        %v2365 = vld [vmem:[%s1883 + $0xde8] sm:$0xff]
        %v2366 = vld [vmem:[%s1883 + $0xdf0] sm:$0xff]
        %v2367 = vld [vmem:[%s1883 + $0xdf8] sm:$0xff]
        %v2368 = vld [vmem:[%s1883 + $0xe00] sm:$0xff]
        %v2369 = vld [vmem:[%s1883 + $0xe08] sm:$0xff]
        %v2370 = vld [vmem:[%s1883 + $0xe10] sm:$0xff]
        %v2371 = vld [vmem:[%s1883 + $0xe18] sm:$0xff]
        %v2372 = vld [vmem:[%s1883 + $0xe20] sm:$0xff]
        %v2373 = vld [vmem:[%s1883 + $0xe28] sm:$0xff]
        %v2374 = vld [vmem:[%s1883 + $0xe30] sm:$0xff]
        %v2375 = vld [vmem:[%s1883 + $0xe38] sm:$0xff]
        %v2376 = vld [vmem:[%s1883 + $0xe40] sm:$0xff]
        %v2377 = vld [vmem:[%s1883 + $0xe48] sm:$0xff]
        %v2378 = vld [vmem:[%s1883 + $0xe50] sm:$0xff]
        %v2379 = vld [vmem:[%s1883 + $0xe58] sm:$0xff]
        %v2380 = vld [vmem:[%s1883 + $0xe60] sm:$0xff]
        %v2381 = vld [vmem:[%s1883 + $0xe68] sm:$0xff]
        %v2382 = vld [vmem:[%s1883 + $0xe70] sm:$0xff]
        %v2383 = vld [vmem:[%s1883 + $0xe78] sm:$0xff]
        %v2384 = vld [vmem:[%s1883 + $0xe80] sm:$0xff]
        %v2385 = vld [vmem:[%s1883 + $0xe88] sm:$0xff]
        %v2386 = vld [vmem:[%s1883 + $0xe90] sm:$0xff]
        %v2387 = vld [vmem:[%s1883 + $0xe98] sm:$0xff]
        %v2388 = vld [vmem:[%s1883 + $0xea0] sm:$0xff]
        %v2389 = vld [vmem:[%s1883 + $0xea8] sm:$0xff]
        %v2390 = vld [vmem:[%s1883 + $0xeb0] sm:$0xff]
        %v2391 = vld [vmem:[%s1883 + $0xeb8] sm:$0xff]
        %v2392 = vld [vmem:[%s1883 + $0xec0] sm:$0xff]
        %v2393 = vld [vmem:[%s1883 + $0xec8] sm:$0xff]
        %v2394 = vld [vmem:[%s1883 + $0xed0] sm:$0xff]
        %v2395 = vld [vmem:[%s1883 + $0xed8] sm:$0xff]
        %v2396 = vld [vmem:[%s1883 + $0xee0] sm:$0xff]
        %v2397 = vld [vmem:[%s1883 + $0xee8] sm:$0xff]
        %v2398 = vld [vmem:[%s1883 + $0xef0] sm:$0xff]
        %v2399 = vld [vmem:[%s1883 + $0xef8] sm:$0xff]
        %v2400 = vld [vmem:[%s1883 + $0xf00] sm:$0xff]
        %v2401 = vld [vmem:[%s1883 + $0xf08] sm:$0xff]
        %v2402 = vld [vmem:[%s1883 + $0xf10] sm:$0xff]
        %v2403 = vld [vmem:[%s1883 + $0xf18] sm:$0xff]
        %v2404 = vld [vmem:[%s1883 + $0xf20] sm:$0xff]
        %v2405 = vld [vmem:[%s1883 + $0xf28] sm:$0xff]
        %v2406 = vld [vmem:[%s1883 + $0xf30] sm:$0xff]
        %v2407 = vld [vmem:[%s1883 + $0xf38] sm:$0xff]
        %v2408 = vld [vmem:[%s1883 + $0xf40] sm:$0xff]
        %v2409 = vld [vmem:[%s1883 + $0xf48] sm:$0xff]
        %v2410 = vld [vmem:[%s1883 + $0xf50] sm:$0xff]
        %v2411 = vld [vmem:[%s1883 + $0xf58] sm:$0xff]
        %v2412 = vld [vmem:[%s1883 + $0xf60] sm:$0xff]
        %v2413 = vld [vmem:[%s1883 + $0xf68] sm:$0xff]
        %v2414 = vld [vmem:[%s1883 + $0xf70] sm:$0xff]
        %v2415 = vld [vmem:[%s1883 + $0xf78] sm:$0xff]
        %v2416 = vld [vmem:[%s1883 + $0xf80] sm:$0xff]
        %v2417 = vld [vmem:[%s1883 + $0xf88] sm:$0xff]
        %v2418 = vld [vmem:[%s1883 + $0xf90] sm:$0xff]
        %v2419 = vld [vmem:[%s1883 + $0xf98] sm:$0xff]
        %v2420 = vld [vmem:[%s1883 + $0xfa0] sm:$0xff]
        %v2421 = vld [vmem:[%s1883 + $0xfa8] sm:$0xff]
        %v2422 = vld [vmem:[%s1883 + $0xfb0] sm:$0xff]
        %v2423 = vld [vmem:[%s1883 + $0xfb8] sm:$0xff]
        %v2424 = vld [vmem:[%s1883 + $0xfc0] sm:$0xff]
        %v2425 = vld [vmem:[%s1883 + $0xfc8] sm:$0xff]
        %v2426 = vld [vmem:[%s1883 + $0xfd0] sm:$0xff]
        %v2427 = vld [vmem:[%s1883 + $0xfd8] sm:$0xff]
        %v2428 = vld [vmem:[%s1883 + $0xfe0] sm:$0xff]
        %v2429 = vld [vmem:[%s1883 + $0xfe8] sm:$0xff]
        %v2430 = vld [vmem:[%s1883 + $0xff0] sm:$0xff]
        %v2431 = vld [vmem:[%s1883 + $0xff8] sm:$0xff]
        %v2432 = vld [vmem:[%s1883 + $0x1000] sm:$0xff]
        %v2433 = vld [vmem:[%s1883 + $0x1008] sm:$0xff]
        %v2434 = vld [vmem:[%s1883 + $0x1010] sm:$0xff]
        %v2435 = vld [vmem:[%s1883 + $0x1018] sm:$0xff]
        %v2436 = vld [vmem:[%s1883 + $0x1020] sm:$0xff]
        %v2437 = vld [vmem:[%s1883 + $0x1028] sm:$0xff]
        %v2438 = vld [vmem:[%s1883 + $0x1030] sm:$0xff]
        %v2439 = vld [vmem:[%s1883 + $0x1038] sm:$0xff]
        %v2440 = vld [vmem:[%s1883 + $0x1040] sm:$0xff]
        %v2441 = vld [vmem:[%s1883 + $0x1048] sm:$0xff]
        %v2442 = vld [vmem:[%s1883 + $0x1050] sm:$0xff]
        %v2443 = vld [vmem:[%s1883 + $0x1058] sm:$0xff]
        %v2444 = vld [vmem:[%s1883 + $0x1060] sm:$0xff]
        %v2445 = vld [vmem:[%s1883 + $0x1068] sm:$0xff]
        %v2446 = vld [vmem:[%s1883 + $0x1070] sm:$0xff]
        %v2447 = vld [vmem:[%s1883 + $0x1078] sm:$0xff]
        %v2448 = vld [vmem:[%s1883 + $0x1080] sm:$0xff]
        %v2449 = vld [vmem:[%s1883 + $0x1088] sm:$0xff]
        %v2450 = vld [vmem:[%s1883 + $0x1090] sm:$0xff]
        %v2451 = vld [vmem:[%s1883 + $0x1098] sm:$0xff]
        %v2452 = vld [vmem:[%s1883 + $0x10a0] sm:$0xff]
        %v2453 = vld [vmem:[%s1883 + $0x10a8] sm:$0xff]
        %v2454 = vld [vmem:[%s1883 + $0x10b0] sm:$0xff]
        %v2455 = vld [vmem:[%s1883 + $0x10b8] sm:$0xff]
        %v2456 = vld [vmem:[%s1883 + $0x10c0] sm:$0xff]
        %v2457 = vld [vmem:[%s1883 + $0x10c8] sm:$0xff]
        %v2458 = vld [vmem:[%s1883 + $0x10d0] sm:$0xff]
        %v2459 = vld [vmem:[%s1883 + $0x10d8] sm:$0xff]
        %v2460 = vld [vmem:[%s1883 + $0x10e0] sm:$0xff]
        %v2461 = vld [vmem:[%s1883 + $0x10e8] sm:$0xff]
        %v2462 = vld [vmem:[%s1883 + $0x10f0] sm:$0xff]
        %v2463 = vld [vmem:[%s1883 + $0x10f8] sm:$0xff]
        %v2464 = vld [vmem:[%s1883 + $0x1100] sm:$0xff]
        %v2465 = vld [vmem:[%s1883 + $0x1108] sm:$0xff]
        %v2466 = vld [vmem:[%s1883 + $0x1110] sm:$0xff]
        %v2467 = vld [vmem:[%s1883 + $0x1118] sm:$0xff]
        %v2468 = vld [vmem:[%s1883 + $0x1120] sm:$0xff]
        %v2469 = vld [vmem:[%s1883 + $0x1128] sm:$0xff]
        %v2470 = vld [vmem:[%s1883 + $0x1130] sm:$0xff]
        %v2471 = vld [vmem:[%s1883 + $0x1138] sm:$0xff]
        %v2472 = vld [vmem:[%s1883 + $0x1140] sm:$0xff]
        %v2473 = vld [vmem:[%s1883 + $0x1148] sm:$0xff]
        %v2474 = vld [vmem:[%s1883 + $0x1150] sm:$0xff]
        %v2475 = vld [vmem:[%s1883 + $0x1158] sm:$0xff]
        %v2476 = vld [vmem:[%s1883 + $0x1160] sm:$0xff]
        %v2477 = vld [vmem:[%s1883 + $0x1168] sm:$0xff]
        %v2478 = vld [vmem:[%s1883 + $0x1170] sm:$0xff]
        %v2479 = vld [vmem:[%s1883 + $0x1178] sm:$0xff]
        %v2480 = vld [vmem:[%s1883 + $0x1180] sm:$0xff]
        %v2481 = vld [vmem:[%s1883 + $0x1188] sm:$0xff]
        %v2482 = vld [vmem:[%s1883 + $0x1190] sm:$0xff]
        %v2483 = vld [vmem:[%s1883 + $0x1198] sm:$0xff]
        %v2484 = vld [vmem:[%s1883 + $0x11a0] sm:$0xff]
        %v2485 = vld [vmem:[%s1883 + $0x11a8] sm:$0xff]
        %v2486 = vld [vmem:[%s1883 + $0x11b0] sm:$0xff]
        %v2487 = vld [vmem:[%s1883 + $0x11b8] sm:$0xff]
        %v2488 = vld [vmem:[%s1883 + $0x11c0] sm:$0xff]
        %v2489 = vld [vmem:[%s1883 + $0x11c8] sm:$0xff]
        %v2490 = vld [vmem:[%s1883 + $0x11d0] sm:$0xff]
        %v2491 = vld [vmem:[%s1883 + $0x11d8] sm:$0xff]
        %v2492 = vld [vmem:[%s1883 + $0x11e0] sm:$0xff]
        %v2493 = vld [vmem:[%s1883 + $0x11e8] sm:$0xff]
        %v2494 = vld [vmem:[%s1883 + $0x11f0] sm:$0xff]
        %v2495 = vld [vmem:[%s1883 + $0x11f8] sm:$0xff]
        %v2496 = vld [vmem:[%s1883 + $0x1200] sm:$0xff]
        %v2497 = vld [vmem:[%s1883 + $0x1208] sm:$0xff]
        %v2498 = vld [vmem:[%s1883 + $0x1210] sm:$0xff]
        %v2499 = vld [vmem:[%s1883 + $0x1218] sm:$0xff]
        %v2500 = vld [vmem:[%s1883 + $0x1220] sm:$0xff]
        %v2501 = vld [vmem:[%s1883 + $0x1228] sm:$0xff]
        %v2502 = vld [vmem:[%s1883 + $0x1230] sm:$0xff]
        %v2503 = vld [vmem:[%s1883 + $0x1238] sm:$0xff]
        %v2504 = vld [vmem:[%s1883 + $0x1240] sm:$0xff]
        %v2505 = vld [vmem:[%s1883 + $0x1248] sm:$0xff]
        %v2506 = vld [vmem:[%s1883 + $0x1250] sm:$0xff]
        %v2507 = vld [vmem:[%s1883 + $0x1258] sm:$0xff]
        %v2508 = vld [vmem:[%s1883 + $0x1260] sm:$0xff]
        %v2509 = vld [vmem:[%s1883 + $0x1268] sm:$0xff]
        %v2510 = vld [vmem:[%s1883 + $0x1270] sm:$0xff]
        %v2511 = vld [vmem:[%s1883 + $0x1278] sm:$0xff]
        %v2512 = vld [vmem:[%s1883 + $0x1280] sm:$0xff]
        %v2513 = vld [vmem:[%s1883 + $0x1288] sm:$0xff]
        %v2514 = vld [vmem:[%s1883 + $0x1290] sm:$0xff]
        %v2515 = vld [vmem:[%s1883 + $0x1298] sm:$0xff]
        %v2516 = vld [vmem:[%s1883 + $0x12a0] sm:$0xff]
        %v2517 = vld [vmem:[%s1883 + $0x12a8] sm:$0xff]
        %v2518 = vld [vmem:[%s1883 + $0x12b0] sm:$0xff]
        %v2519 = vld [vmem:[%s1883 + $0x12b8] sm:$0xff]
        %v2520 = vld [vmem:[%s1883 + $0x12c0] sm:$0xff]
        %v2521 = vld [vmem:[%s1883 + $0x12c8] sm:$0xff]
        %v2522 = vld [vmem:[%s1883 + $0x12d0] sm:$0xff]
        %v2523 = vld [vmem:[%s1883 + $0x12d8] sm:$0xff]
        %v2524 = vld [vmem:[%s1883 + $0x12e0] sm:$0xff]
        %v2525 = vld [vmem:[%s1883 + $0x12e8] sm:$0xff]
        %v2526 = vld [vmem:[%s1883 + $0x12f0] sm:$0xff]
        %v2527 = vld [vmem:[%s1883 + $0x12f8] sm:$0xff]
        %v2528 = vld [vmem:[%s1883 + $0x1300] sm:$0xff]
        %v2529 = vld [vmem:[%s1883 + $0x1308] sm:$0xff]
        %v2530 = vld [vmem:[%s1883 + $0x1310] sm:$0xff]
        %v2531 = vld [vmem:[%s1883 + $0x1318] sm:$0xff]
        %v2532 = vld [vmem:[%s1883 + $0x1320] sm:$0xff]
        %v2533 = vld [vmem:[%s1883 + $0x1328] sm:$0xff]
        %v2534 = vld [vmem:[%s1883 + $0x1330] sm:$0xff]
        %v2535 = vld [vmem:[%s1883 + $0x1338] sm:$0xff]
        %v2536 = vld [vmem:[%s1883 + $0x1340] sm:$0xff]
        %v2537 = vld [vmem:[%s1883 + $0x1348] sm:$0xff]
        %v2538 = vld [vmem:[%s1883 + $0x1350] sm:$0xff]
        %v2539 = vld [vmem:[%s1883 + $0x1358] sm:$0xff]
        %v2540 = vld [vmem:[%s1883 + $0x1360] sm:$0xff]
        %v2541 = vld [vmem:[%s1883 + $0x1368] sm:$0xff]
        %v2542 = vld [vmem:[%s1883 + $0x1370] sm:$0xff]
        %v2543 = vld [vmem:[%s1883 + $0x1378] sm:$0xff]
        %v2544 = vld [vmem:[%s1883 + $0x1380] sm:$0xff]
        %v2545 = vld [vmem:[%s1883 + $0x1388] sm:$0xff]
        %v2546 = vld [vmem:[%s1883 + $0x1390] sm:$0xff]
        %v2547 = vld [vmem:[%s1883 + $0x1398] sm:$0xff]
        %v2548 = vld [vmem:[%s1883 + $0x13a0] sm:$0xff]
        %v2549 = vld [vmem:[%s1883 + $0x13a8] sm:$0xff]
        %v2550 = vld [vmem:[%s1883 + $0x13b0] sm:$0xff]
        %v2551 = vld [vmem:[%s1883 + $0x13b8] sm:$0xff]
        %v2552 = vld [vmem:[%s1883 + $0x13c0] sm:$0xff]
        %v2553 = vld [vmem:[%s1883 + $0x13c8] sm:$0xff]
        %v2554 = vld [vmem:[%s1883 + $0x13d0] sm:$0xff]
        %v2555 = vld [vmem:[%s1883 + $0x13d8] sm:$0xff]
        %v2556 = vld [vmem:[%s1883 + $0x13e0] sm:$0xff]
        %v2557 = vld [vmem:[%s1883 + $0x13e8] sm:$0xff]
        %v2558 = vld [vmem:[%s1883 + $0x13f0] sm:$0xff]
        %v2559 = vld [vmem:[%s1883 + $0x13f8] sm:$0xff]
        %v2560 = vld [vmem:[%s1883 + $0x1400] sm:$0xff]
        %v2561 = vld [vmem:[%s1883 + $0x1408] sm:$0xff]
        %v2562 = vld [vmem:[%s1883 + $0x1410] sm:$0xff]
        %v2563 = vld [vmem:[%s1883 + $0x1418] sm:$0xff]
        %v2564 = vld [vmem:[%s1883 + $0x1420] sm:$0xff]
        %v2565 = vld [vmem:[%s1883 + $0x1428] sm:$0xff]
        %v2566 = vld [vmem:[%s1883 + $0x1430] sm:$0xff]
        %v2567 = vld [vmem:[%s1883 + $0x1438] sm:$0xff]
        %v2568 = vld [vmem:[%s1883 + $0x1440] sm:$0xff]
        %v2569 = vld [vmem:[%s1883 + $0x1448] sm:$0xff]
        %v2570 = vld [vmem:[%s1883 + $0x1450] sm:$0xff]
        %v2571 = vld [vmem:[%s1883 + $0x1458] sm:$0xff]
        %v2572 = vld [vmem:[%s1883 + $0x1460] sm:$0xff]
        %v2573 = vld [vmem:[%s1883 + $0x1468] sm:$0xff]
        %v2574 = vld [vmem:[%s1883 + $0x1470] sm:$0xff]
        %v2575 = vld [vmem:[%s1883 + $0x1478] sm:$0xff]
        %v2576 = vld [vmem:[%s1883 + $0x1480] sm:$0xff]
        %v2577 = vld [vmem:[%s1883 + $0x1488] sm:$0xff]
        %v2578 = vld [vmem:[%s1883 + $0x1490] sm:$0xff]
        %v2579 = vld [vmem:[%s1883 + $0x1498] sm:$0xff]
        %v2580 = vld [vmem:[%s1883 + $0x14a0] sm:$0xff]
        %v2581 = vld [vmem:[%s1883 + $0x14a8] sm:$0xff]
        %v2582 = vld [vmem:[%s1883 + $0x14b0] sm:$0xff]
        %v2583 = vld [vmem:[%s1883 + $0x14b8] sm:$0xff]
        %v2584 = vld [vmem:[%s1883 + $0x14c0] sm:$0xff]
        %v2585 = vld [vmem:[%s1883 + $0x14c8] sm:$0xff]
        %v2586 = vld [vmem:[%s1883 + $0x14d0] sm:$0xff]
        %v2587 = vld [vmem:[%s1883 + $0x14d8] sm:$0xff]
        %v2588 = vld [vmem:[%s1883 + $0x14e0] sm:$0xff]
        %v2589 = vld [vmem:[%s1883 + $0x14e8] sm:$0xff]
        %v2590 = vld [vmem:[%s1883 + $0x14f0] sm:$0xff]
        %v2591 = vld [vmem:[%s1883 + $0x14f8] sm:$0xff]
        %v2592 = vld [vmem:[%s1883 + $0x1500] sm:$0xff]
        %v2593 = vld [vmem:[%s1883 + $0x1508] sm:$0xff]
        %v2594 = vld [vmem:[%s1883 + $0x1510] sm:$0xff]
        %v2595 = vld [vmem:[%s1883 + $0x1518] sm:$0xff]
        %v2596 = vld [vmem:[%s1883 + $0x1520] sm:$0xff]
        %v2597 = vld [vmem:[%s1883 + $0x1528] sm:$0xff]
        %v2598 = vld [vmem:[%s1883 + $0x1530] sm:$0xff]
        %v2599 = vld [vmem:[%s1883 + $0x1538] sm:$0xff]
        %v2600 = vld [vmem:[%s1883 + $0x1540] sm:$0xff]
        %v2601 = vld [vmem:[%s1883 + $0x1548] sm:$0xff]
        %v2602 = vld [vmem:[%s1883 + $0x1550] sm:$0xff]
        %v2603 = vld [vmem:[%s1883 + $0x1558] sm:$0xff]
        %v2604 = vld [vmem:[%s1883 + $0x1560] sm:$0xff]
        %v2605 = vld [vmem:[%s1883 + $0x1568] sm:$0xff]
        %v2606 = vld [vmem:[%s1883 + $0x1570] sm:$0xff]
        %v2607 = vld [vmem:[%s1883 + $0x1578] sm:$0xff]
        %v2608 = vld [vmem:[%s1883 + $0x1580] sm:$0xff]
        %v2609 = vld [vmem:[%s1883 + $0x1588] sm:$0xff]
        %v2610 = vld [vmem:[%s1883 + $0x1590] sm:$0xff]
        %v2611 = vld [vmem:[%s1883 + $0x1598] sm:$0xff]
        %v2612 = vld [vmem:[%s1883 + $0x15a0] sm:$0xff]
        %v2613 = vld [vmem:[%s1883 + $0x15a8] sm:$0xff]
        %v2614 = vld [vmem:[%s1883 + $0x15b0] sm:$0xff]
        %v2615 = vld [vmem:[%s1883 + $0x15b8] sm:$0xff]
        %v2616 = vld [vmem:[%s1883 + $0x15c0] sm:$0xff]
        %v2617 = vld [vmem:[%s1883 + $0x15c8] sm:$0xff]
        %v2618 = vld [vmem:[%s1883 + $0x15d0] sm:$0xff]
        %v2619 = vld [vmem:[%s1883 + $0x15d8] sm:$0xff]
        %v2620 = vld [vmem:[%s1883 + $0x15e0] sm:$0xff]
        %v2621 = vld [vmem:[%s1883 + $0x15e8] sm:$0xff]
        %v2622 = vld [vmem:[%s1883 + $0x15f0] sm:$0xff]
        %v2623 = vld [vmem:[%s1883 + $0x15f8] sm:$0xff]
        %v2624 = vld [vmem:[%s1883 + $0x1600] sm:$0xff]
        %v2625 = vld [vmem:[%s1883 + $0x1608] sm:$0xff]
        %v2626 = vld [vmem:[%s1883 + $0x1610] sm:$0xff]
        %v2627 = vld [vmem:[%s1883 + $0x1618] sm:$0xff]
        %v2628 = vld [vmem:[%s1883 + $0x1620] sm:$0xff]
        %v2629 = vld [vmem:[%s1883 + $0x1628] sm:$0xff]
        %v2630 = vld [vmem:[%s1883 + $0x1630] sm:$0xff]
        %v2631 = vld [vmem:[%s1883 + $0x1638] sm:$0xff]
        %v2632 = vld [vmem:[%s1883 + $0x1640] sm:$0xff]
        %v2633 = vld [vmem:[%s1883 + $0x1648] sm:$0xff]
        %v2634 = vld [vmem:[%s1883 + $0x1650] sm:$0xff]
        %v2635 = vld [vmem:[%s1883 + $0x1658] sm:$0xff]
        %v2636 = vld [vmem:[%s1883 + $0x1660] sm:$0xff]
        %v2637 = vld [vmem:[%s1883 + $0x1668] sm:$0xff]
        %v2638 = vld [vmem:[%s1883 + $0x1670] sm:$0xff]
        %v2639 = vld [vmem:[%s1883 + $0x1678] sm:$0xff]
        %v2640 = vld [vmem:[%s1883 + $0x1680] sm:$0xff]
        %v2641 = vld [vmem:[%s1883 + $0x1688] sm:$0xff]
        %v2642 = vld [vmem:[%s1883 + $0x1690] sm:$0xff]
        %v2643 = vld [vmem:[%s1883 + $0x1698] sm:$0xff]
        %v2644 = vld [vmem:[%s1883 + $0x16a0] sm:$0xff]
        %v2645 = vld [vmem:[%s1883 + $0x16a8] sm:$0xff]
        %v2646 = vld [vmem:[%s1883 + $0x16b0] sm:$0xff]
        %v2647 = vld [vmem:[%s1883 + $0x16b8] sm:$0xff]
        %v2648 = vld [vmem:[%s1883 + $0x16c0] sm:$0xff]
        %v2649 = vld [vmem:[%s1883 + $0x16c8] sm:$0xff]
        %v2650 = vld [vmem:[%s1883 + $0x16d0] sm:$0xff]
        %v2651 = vld [vmem:[%s1883 + $0x16d8] sm:$0xff]
        %v2652 = vld [vmem:[%s1883 + $0x16e0] sm:$0xff]
        %v2653 = vld [vmem:[%s1883 + $0x16e8] sm:$0xff]
        %v2654 = vld [vmem:[%s1883 + $0x16f0] sm:$0xff]
        %v2655 = vld [vmem:[%s1883 + $0x16f8] sm:$0xff]
        %v2656 = vld [vmem:[%s1883 + $0x1700] sm:$0xff]
        %v2657 = vld [vmem:[%s1883 + $0x1708] sm:$0xff]
        %v2658 = vld [vmem:[%s1883 + $0x1710] sm:$0xff]
        %v2659 = vld [vmem:[%s1883 + $0x1718] sm:$0xff]
        %v2660 = vld [vmem:[%s1883 + $0x1720] sm:$0xff]
        %v2661 = vld [vmem:[%s1883 + $0x1728] sm:$0xff]
        %v2662 = vld [vmem:[%s1883 + $0x1730] sm:$0xff]
        %v2663 = vld [vmem:[%s1883 + $0x1738] sm:$0xff]
        %v2664 = vld [vmem:[%s1883 + $0x1740] sm:$0xff]
        %v2665 = vld [vmem:[%s1883 + $0x1748] sm:$0xff]
        %v2666 = vld [vmem:[%s1883 + $0x1750] sm:$0xff]
        %v2667 = vld [vmem:[%s1883 + $0x1758] sm:$0xff]
        %v2668 = vld [vmem:[%s1883 + $0x1760] sm:$0xff]
        %v2669 = vld [vmem:[%s1883 + $0x1768] sm:$0xff]
        %v2670 = vld [vmem:[%s1883 + $0x1770] sm:$0xff]
        %v2671 = vld [vmem:[%s1883 + $0x1778] sm:$0xff]
        %v2672 = vld [vmem:[%s1883 + $0x1780] sm:$0xff]
        %v2673 = vld [vmem:[%s1883 + $0x1788] sm:$0xff]
        %v2674 = vld [vmem:[%s1883 + $0x1790] sm:$0xff]
        %v2675 = vld [vmem:[%s1883 + $0x1798] sm:$0xff]
        %v2676 = vld [vmem:[%s1883 + $0x17a0] sm:$0xff]
        %v2677 = vld [vmem:[%s1883 + $0x17a8] sm:$0xff]
        %v2678 = vld [vmem:[%s1883 + $0x17b0] sm:$0xff]
        %v2679 = vld [vmem:[%s1883 + $0x17b8] sm:$0xff]
        %v2680 = vld [vmem:[%s1883 + $0x17c0] sm:$0xff]
        %v2681 = vld [vmem:[%s1883 + $0x17c8] sm:$0xff]
        %v2682 = vld [vmem:[%s1883 + $0x17d0] sm:$0xff]
        %v2683 = vld [vmem:[%s1883 + $0x17d8] sm:$0xff]
        %v2684 = vld [vmem:[%s1883 + $0x17e0] sm:$0xff]
        %v2685 = vld [vmem:[%s1883 + $0x17e8] sm:$0xff]
        %v2686 = vld [vmem:[%s1883 + $0x17f0] sm:$0xff]
        %v2687 = vld [vmem:[%s1883 + $0x17f8] sm:$0xff]
        %v2688 = vld [vmem:[%s1883 + $0x1800] sm:$0xff]
        %v2689 = vld [vmem:[%s1883 + $0x1808] sm:$0xff]
        %v2690 = vld [vmem:[%s1883 + $0x1810] sm:$0xff]
        %v2691 = vld [vmem:[%s1883 + $0x1818] sm:$0xff]
        %v2692 = vld [vmem:[%s1883 + $0x1820] sm:$0xff]
        %v2693 = vld [vmem:[%s1883 + $0x1828] sm:$0xff]
        %v2694 = vld [vmem:[%s1883 + $0x1830] sm:$0xff]
        %v2695 = vld [vmem:[%s1883 + $0x1838] sm:$0xff]
        %v2696 = vld [vmem:[%s1883 + $0x1840] sm:$0xff]
        %v2697 = vld [vmem:[%s1883 + $0x1848] sm:$0xff]
        %v2698 = vld [vmem:[%s1883 + $0x1850] sm:$0xff]
        %v2699 = vld [vmem:[%s1883 + $0x1858] sm:$0xff]
        %v2700 = vld [vmem:[%s1883 + $0x1860] sm:$0xff]
        %v2701 = vld [vmem:[%s1883 + $0x1868] sm:$0xff]
        %v2702 = vld [vmem:[%s1883 + $0x1870] sm:$0xff]
        %v2703 = vld [vmem:[%s1883 + $0x1878] sm:$0xff]
        %v2704 = vld [vmem:[%s1883 + $0x1880] sm:$0xff]
        %v2705 = vld [vmem:[%s1883 + $0x1888] sm:$0xff]
        %v2706 = vld [vmem:[%s1883 + $0x1890] sm:$0xff]
        %v2707 = vld [vmem:[%s1883 + $0x1898] sm:$0xff]
        %v2708 = vld [vmem:[%s1883 + $0x18a0] sm:$0xff]
        %v2709 = vld [vmem:[%s1883 + $0x18a8] sm:$0xff]
        %v2710 = vld [vmem:[%s1883 + $0x18b0] sm:$0xff]
        %v2711 = vld [vmem:[%s1883 + $0x18b8] sm:$0xff]
        %v2712 = vld [vmem:[%s1883 + $0x18c0] sm:$0xff]
        %v2713 = vld [vmem:[%s1883 + $0x18c8] sm:$0xff]
        %v2714 = vld [vmem:[%s1883 + $0x18d0] sm:$0xff]
        %v2715 = vld [vmem:[%s1883 + $0x18d8] sm:$0xff]
        %v2716 = vld [vmem:[%s1883 + $0x18e0] sm:$0xff]
        %v2717 = vld [vmem:[%s1883 + $0x18e8] sm:$0xff]
        %v2718 = vld [vmem:[%s1883 + $0x18f0] sm:$0xff]
        %v2719 = vld [vmem:[%s1883 + $0x18f8] sm:$0xff]
        %v2720 = vld [vmem:[%s1883 + $0x1900] sm:$0xff]
        %v2721 = vld [vmem:[%s1883 + $0x1908] sm:$0xff]
        %v2722 = vld [vmem:[%s1883 + $0x1910] sm:$0xff]
        %v2723 = vld [vmem:[%s1883 + $0x1918] sm:$0xff]
        %v2724 = vld [vmem:[%s1883 + $0x1920] sm:$0xff]
        %v2725 = vld [vmem:[%s1883 + $0x1928] sm:$0xff]
        %v2726 = vld [vmem:[%s1883 + $0x1930] sm:$0xff]
        %v2727 = vld [vmem:[%s1883 + $0x1938] sm:$0xff]
        %v2728 = vld [vmem:[%s1883 + $0x1940] sm:$0xff]
        %v2729 = vld [vmem:[%s1883 + $0x1948] sm:$0xff]
        %v2730 = vld [vmem:[%s1883 + $0x1950] sm:$0xff]
        %v2731 = vld [vmem:[%s1883 + $0x1958] sm:$0xff]
        %v2732 = vld [vmem:[%s1883 + $0x1960] sm:$0xff]
        %v2733 = vld [vmem:[%s1883 + $0x1968] sm:$0xff]
        %v2734 = vld [vmem:[%s1883 + $0x1970] sm:$0xff]
        %v2735 = vld [vmem:[%s1883 + $0x1978] sm:$0xff]
        %v2736 = vld [vmem:[%s1883 + $0x1980] sm:$0xff]
        %v2737 = vld [vmem:[%s1883 + $0x1988] sm:$0xff]
        %v2738 = vld [vmem:[%s1883 + $0x1990] sm:$0xff]
        %v2739 = vld [vmem:[%s1883 + $0x1998] sm:$0xff]
        %v2740 = vld [vmem:[%s1883 + $0x19a0] sm:$0xff]
        %v2741 = vld [vmem:[%s1883 + $0x19a8] sm:$0xff]
        %v2742 = vld [vmem:[%s1883 + $0x19b0] sm:$0xff]
        %v2743 = vld [vmem:[%s1883 + $0x19b8] sm:$0xff]
        %v2744 = vld [vmem:[%s1883 + $0x19c0] sm:$0xff]
        %v2745 = vld [vmem:[%s1883 + $0x19c8] sm:$0xff]
        %v2746 = vld [vmem:[%s1883 + $0x19d0] sm:$0xff]
        %v2747 = vld [vmem:[%s1883 + $0x19d8] sm:$0xff]
        %v2748 = vld [vmem:[%s1883 + $0x19e0] sm:$0xff]
        %v2749 = vld [vmem:[%s1883 + $0x19e8] sm:$0xff]
        %v2750 = vld [vmem:[%s1883 + $0x19f0] sm:$0xff]
        %v2751 = vld [vmem:[%s1883 + $0x19f8] sm:$0xff]
        %v2752 = vld [vmem:[%s1883 + $0x1a00] sm:$0xff]
        %v2753 = vld [vmem:[%s1883 + $0x1a08] sm:$0xff]
        %v2754 = vld [vmem:[%s1883 + $0x1a10] sm:$0xff]
        %v2755 = vld [vmem:[%s1883 + $0x1a18] sm:$0xff]
        %v2756 = vld [vmem:[%s1883 + $0x1a20] sm:$0xff]
        %v2757 = vld [vmem:[%s1883 + $0x1a28] sm:$0xff]
        %v2758 = vld [vmem:[%s1883 + $0x1a30] sm:$0xff]
        %v2759 = vld [vmem:[%s1883 + $0x1a38] sm:$0xff]
        %v2760 = vld [vmem:[%s1883 + $0x1a40] sm:$0xff]
        %v2761 = vld [vmem:[%s1883 + $0x1a48] sm:$0xff]
        %v2762 = vld [vmem:[%s1883 + $0x1a50] sm:$0xff]
        %v2763 = vld [vmem:[%s1883 + $0x1a58] sm:$0xff]
        %v2764 = vld [vmem:[%s1883 + $0x1a60] sm:$0xff]
        %v2765 = vld [vmem:[%s1883 + $0x1a68] sm:$0xff]
        %v2766 = vld [vmem:[%s1883 + $0x1a70] sm:$0xff]
        %v2767 = vld [vmem:[%s1883 + $0x1a78] sm:$0xff]
        %v2768 = vld [vmem:[%s1883 + $0x1a80] sm:$0xff]
        %v2769 = vld [vmem:[%s1883 + $0x1a88] sm:$0xff]
        %v2770 = vld [vmem:[%s1883 + $0x1a90] sm:$0xff]
        %v2771 = vld [vmem:[%s1883 + $0x1a98] sm:$0xff]
        %v2772 = vld [vmem:[%s1883 + $0x1aa0] sm:$0xff]
        %v2773 = vld [vmem:[%s1883 + $0x1aa8] sm:$0xff]
        %v2774 = vld [vmem:[%s1883 + $0x1ab0] sm:$0xff]
        %v2775 = vld [vmem:[%s1883 + $0x1ab8] sm:$0xff]
        %v2776 = vld [vmem:[%s1883 + $0x1ac0] sm:$0x33]
        %v2777 = vld [vmem:[%s1883 + $0x1ac8] sm:$0x33]
        %v2778 = vld [vmem:[%s1883 + $0x1ad0] sm:$0x33]
        %v2779 = vld [vmem:[%s1883 + $0x1ad8] sm:$0x33]
        %v2780 = vld [vmem:[%s2] sm:$0xff]
        %v2781 = vld [vmem:[%s2 + $0x8] sm:$0xff]
        %2783 = vset.pattern.permute.xlu0 0
        %2784 = vperm.xlu0 %2783, %v2780
        %v2785 = vpop.permute.xlu0 %2784
        %2788 = vset.pattern.permute.xlu0 0
        %2789 = vperm.xlu0 %2788, %v2781
        %v2790 = vpop.permute.xlu0 %2789
        %v2806 = vunpack.c.l.b16 %v1906
        %v2807 = vunpack.c.h.b16 %v1906
        %v2808 = vunpack.c.l.b16 %v1907
        %v2809 = vunpack.c.h.b16 %v1907
        %v2810 = vunpack.c.l.b16 %v1908
        %v2811 = vunpack.c.h.b16 %v1908
        %v2812 = vunpack.c.l.b16 %v1909
        %v2813 = vunpack.c.h.b16 %v1909
        %v2814 = vunpack.c.l.b16 %v1910
        %v2815 = vunpack.c.h.b16 %v1910
        %v2816 = vunpack.c.l.b16 %v1911
        %v2817 = vunpack.c.h.b16 %v1911
        %v2818 = vunpack.c.l.b16 %v1912
        %v2819 = vunpack.c.h.b16 %v1912
        %v2820 = vunpack.c.l.b16 %v1913
        %v2821 = vunpack.c.h.b16 %v1913
        %v2822 = vunpack.c.l.b16 %v1914
        %v2823 = vunpack.c.h.b16 %v1914
        %v2824 = vunpack.c.l.b16 %v1915
        %v2825 = vunpack.c.h.b16 %v1915
        %v2826 = vunpack.c.l.b16 %v1916
        %v2827 = vunpack.c.h.b16 %v1916
        %v2828 = vunpack.c.l.b16 %v1917
        %v2829 = vunpack.c.h.b16 %v1917
        %v2830 = vunpack.c.l.b16 %v1918
        %v2831 = vunpack.c.h.b16 %v1918
        %v2832 = vunpack.c.l.b16 %v1919
        %v2833 = vunpack.c.h.b16 %v1919
        %v2834 = vpack.c.b16 %v2820, %v2806
        %v2835 = vpack.c.b16 %v2821, %v2807
        %v2836 = vpack.c.b16 %v2822, %v2808
        %v2837 = vpack.c.b16 %v2823, %v2809
        %v2838 = vpack.c.b16 %v2824, %v2810
        %v2839 = vpack.c.b16 %v2825, %v2811
        %v2840 = vpack.c.b16 %v2826, %v2812
        %v2841 = vpack.c.b16 %v2827, %v2813
        %v2842 = vpack.c.b16 %v2828, %v2814
        %v2843 = vpack.c.b16 %v2829, %v2815
        %v2844 = vpack.c.b16 %v2830, %v2816
        %v2845 = vpack.c.b16 %v2831, %v2817
        %v2846 = vpack.c.b16 %v2832, %v2818
        %v2847 = vpack.c.b16 %v2833, %v2819
        %v3721 = vunpack.c.l.b16 %v1920
        %v3722 = vunpack.c.h.b16 %v1920
        %v3723 = vunpack.c.l.b16 %v1921
        %v3724 = vunpack.c.h.b16 %v1921
        %v3725 = vunpack.c.l.b16 %v1922
        %v3726 = vunpack.c.h.b16 %v1922
        %v3727 = vunpack.c.l.b16 %v1923
        %v3728 = vunpack.c.h.b16 %v1923
        %v3729 = vunpack.c.l.b16 %v1924
        %v3730 = vunpack.c.h.b16 %v1924
        %v3731 = vunpack.c.l.b16 %v1925
        %v3732 = vunpack.c.h.b16 %v1925
        %v3733 = vunpack.c.l.b16 %v1926
        %v3734 = vunpack.c.h.b16 %v1926
        %v3735 = vunpack.c.l.b16 %v1927
        %v3736 = vunpack.c.h.b16 %v1927
        %v3737 = vunpack.c.l.b16 %v1928
        %v3738 = vunpack.c.h.b16 %v1928
        %v3739 = vunpack.c.l.b16 %v1929
        %v3740 = vunpack.c.h.b16 %v1929
        %v3741 = vunpack.c.l.b16 %v1930
        %v3742 = vunpack.c.h.b16 %v1930
        %v3743 = vunpack.c.l.b16 %v1931
        %v3744 = vunpack.c.h.b16 %v1931
        %v3745 = vunpack.c.l.b16 %v1932
        %v3746 = vunpack.c.h.b16 %v1932
        %v3747 = vunpack.c.l.b16 %v1933
        %v3748 = vunpack.c.h.b16 %v1933
        %v3749 = vunpack.c.l.b16 %v1934
        %v3750 = vunpack.c.h.b16 %v1934
        %v3751 = vunpack.c.l.b16 %v1935
        %v3752 = vunpack.c.h.b16 %v1935
        %v3753 = vunpack.c.l.b16 %v1936
        %v3754 = vunpack.c.h.b16 %v1936
        %v3755 = vunpack.c.l.b16 %v1937
        %v3756 = vunpack.c.h.b16 %v1937
        %v3757 = vunpack.c.l.b16 %v1938
        %v3758 = vunpack.c.h.b16 %v1938
        %v3759 = vunpack.c.l.b16 %v1939
        %v3760 = vunpack.c.h.b16 %v1939
        %v3761 = vunpack.c.l.b16 %v1940
        %v3762 = vunpack.c.h.b16 %v1940
        %v3763 = vunpack.c.l.b16 %v1941
        %v3764 = vunpack.c.h.b16 %v1941
        %v3765 = vunpack.c.l.b16 %v1942
        %v3766 = vunpack.c.h.b16 %v1942
        %v3767 = vunpack.c.l.b16 %v1943
        %v3768 = vunpack.c.h.b16 %v1943
        %v3769 = vunpack.c.l.b16 %v1944
        %v3770 = vunpack.c.h.b16 %v1944
        %v3771 = vunpack.c.l.b16 %v1945
        %v3772 = vunpack.c.h.b16 %v1945
        %v3773 = vunpack.c.l.b16 %v1946
        %v3774 = vunpack.c.h.b16 %v1946
        %v3775 = vunpack.c.l.b16 %v1947
        %v3776 = vunpack.c.h.b16 %v1947
        %v3777 = vunpack.c.l.b16 %v1948
        %v3778 = vunpack.c.h.b16 %v1948
        %v3779 = vunpack.c.l.b16 %v1949
        %v3780 = vunpack.c.h.b16 %v1949
        %v3781 = vunpack.c.l.b16 %v1950
        %v3782 = vunpack.c.h.b16 %v1950
        %v3783 = vunpack.c.l.b16 %v1951
        %v3784 = vunpack.c.h.b16 %v1951
        %v3785 = vunpack.c.l.b16 %v1952
        %v3786 = vunpack.c.h.b16 %v1952
        %v3787 = vunpack.c.l.b16 %v1953
        %v3788 = vunpack.c.h.b16 %v1953
        %v3789 = vunpack.c.l.b16 %v1954
        %v3790 = vunpack.c.h.b16 %v1954
        %v3791 = vunpack.c.l.b16 %v1955
        %v3792 = vunpack.c.h.b16 %v1955
        %v3793 = vunpack.c.l.b16 %v1956
        %v3794 = vunpack.c.h.b16 %v1956
        %v3795 = vunpack.c.l.b16 %v1957
        %v3796 = vunpack.c.h.b16 %v1957
        %v3797 = vunpack.c.l.b16 %v1958
        %v3798 = vunpack.c.h.b16 %v1958
        %v3799 = vunpack.c.l.b16 %v1959
        %v3800 = vunpack.c.h.b16 %v1959
        %v3801 = vunpack.c.l.b16 %v1960
        %v3802 = vunpack.c.h.b16 %v1960
        %v3803 = vunpack.c.l.b16 %v1961
        %v3804 = vunpack.c.h.b16 %v1961
        %v3805 = vunpack.c.l.b16 %v1962
        %v3806 = vunpack.c.h.b16 %v1962
        %v3807 = vunpack.c.l.b16 %v1963
        %v3808 = vunpack.c.h.b16 %v1963
        %v3809 = vunpack.c.l.b16 %v1964
        %v3810 = vunpack.c.h.b16 %v1964
        %v3811 = vunpack.c.l.b16 %v1965
        %v3812 = vunpack.c.h.b16 %v1965
        %v3813 = vunpack.c.l.b16 %v1966
        %v3814 = vunpack.c.h.b16 %v1966
        %v3815 = vunpack.c.l.b16 %v1967
        %v3816 = vunpack.c.h.b16 %v1967
        %v3817 = vunpack.c.l.b16 %v1968
        %v3818 = vunpack.c.h.b16 %v1968
        %v3819 = vunpack.c.l.b16 %v1969
        %v3820 = vunpack.c.h.b16 %v1969
        %v3821 = vunpack.c.l.b16 %v1970
        %v3822 = vunpack.c.h.b16 %v1970
        %v3823 = vunpack.c.l.b16 %v1971
        %v3824 = vunpack.c.h.b16 %v1971
        %v3825 = vunpack.c.l.b16 %v1972
        %v3826 = vunpack.c.h.b16 %v1972
        %v3827 = vunpack.c.l.b16 %v1973
        %v3828 = vunpack.c.h.b16 %v1973
        %v3829 = vunpack.c.l.b16 %v1974
        %v3830 = vunpack.c.h.b16 %v1974
        %v3831 = vunpack.c.l.b16 %v1975
        %v3832 = vunpack.c.h.b16 %v1975
        %v3833 = vunpack.c.l.b16 %v1976
        %v3834 = vunpack.c.h.b16 %v1976
        %v3835 = vunpack.c.l.b16 %v1977
        %v3836 = vunpack.c.h.b16 %v1977
        %v3837 = vunpack.c.l.b16 %v1978
        %v3838 = vunpack.c.h.b16 %v1978
        %v3839 = vunpack.c.l.b16 %v1979
        %v3840 = vunpack.c.h.b16 %v1979
        %v3841 = vunpack.c.l.b16 %v1980
        %v3842 = vunpack.c.h.b16 %v1980
        %v3843 = vunpack.c.l.b16 %v1981
        %v3844 = vunpack.c.h.b16 %v1981
        %v3845 = vunpack.c.l.b16 %v1982
        %v3846 = vunpack.c.h.b16 %v1982
        %v3847 = vunpack.c.l.b16 %v1983
        %v3848 = vunpack.c.h.b16 %v1983
        %v3849 = vunpack.c.l.b16 %v1984
        %v3850 = vunpack.c.h.b16 %v1984
        %v3851 = vunpack.c.l.b16 %v1985
        %v3852 = vunpack.c.h.b16 %v1985
        %v3853 = vunpack.c.l.b16 %v1986
        %v3854 = vunpack.c.h.b16 %v1986
        %v3855 = vunpack.c.l.b16 %v1987
        %v3856 = vunpack.c.h.b16 %v1987
        %v3857 = vunpack.c.l.b16 %v1988
        %v3858 = vunpack.c.h.b16 %v1988
        %v3859 = vunpack.c.l.b16 %v1989
        %v3860 = vunpack.c.h.b16 %v1989
        %v3861 = vunpack.c.l.b16 %v1990
        %v3862 = vunpack.c.h.b16 %v1990
        %v3863 = vunpack.c.l.b16 %v1991
        %v3864 = vunpack.c.h.b16 %v1991
        %v3865 = vunpack.c.l.b16 %v1992
        %v3866 = vunpack.c.h.b16 %v1992
        %v3867 = vunpack.c.l.b16 %v1993
        %v3868 = vunpack.c.h.b16 %v1993
        %v3869 = vunpack.c.l.b16 %v1994
        %v3870 = vunpack.c.h.b16 %v1994
        %v3871 = vunpack.c.l.b16 %v1995
        %v3872 = vunpack.c.h.b16 %v1995
        %v3873 = vunpack.c.l.b16 %v1996
        %v3874 = vunpack.c.h.b16 %v1996
        %v3875 = vunpack.c.l.b16 %v1997
        %v3876 = vunpack.c.h.b16 %v1997
        %v3877 = vunpack.c.l.b16 %v1998
        %v3878 = vunpack.c.h.b16 %v1998
        %v3879 = vunpack.c.l.b16 %v1999
        %v3880 = vunpack.c.h.b16 %v1999
        %v3881 = vunpack.c.l.b16 %v2000
        %v3882 = vunpack.c.h.b16 %v2000
        %v3883 = vunpack.c.l.b16 %v2001
        %v3884 = vunpack.c.h.b16 %v2001
        %v3885 = vunpack.c.l.b16 %v2002
        %v3886 = vunpack.c.h.b16 %v2002
        %v3887 = vunpack.c.l.b16 %v2003
        %v3888 = vunpack.c.h.b16 %v2003
        %v3889 = vunpack.c.l.b16 %v2004
        %v3890 = vunpack.c.h.b16 %v2004
        %v3891 = vunpack.c.l.b16 %v2005
        %v3892 = vunpack.c.h.b16 %v2005
        %v3893 = vunpack.c.l.b16 %v2006
        %v3894 = vunpack.c.h.b16 %v2006
        %v3895 = vunpack.c.l.b16 %v2007
        %v3896 = vunpack.c.h.b16 %v2007
        %v3897 = vunpack.c.l.b16 %v2008
        %v3898 = vunpack.c.h.b16 %v2008
        %v3899 = vunpack.c.l.b16 %v2009
        %v3900 = vunpack.c.h.b16 %v2009
        %v3901 = vunpack.c.l.b16 %v2010
        %v3902 = vunpack.c.h.b16 %v2010
        %v3903 = vunpack.c.l.b16 %v2011
        %v3904 = vunpack.c.h.b16 %v2011
        %v3905 = vunpack.c.l.b16 %v2012
        %v3906 = vunpack.c.h.b16 %v2012
        %v3907 = vunpack.c.l.b16 %v2013
        %v3908 = vunpack.c.h.b16 %v2013
        %v3909 = vunpack.c.l.b16 %v2014
        %v3910 = vunpack.c.h.b16 %v2014
        %v3911 = vunpack.c.l.b16 %v2015
        %v3912 = vunpack.c.h.b16 %v2015
        %v3913 = vunpack.c.l.b16 %v2016
        %v3914 = vunpack.c.h.b16 %v2016
        %v3915 = vunpack.c.l.b16 %v2017
        %v3916 = vunpack.c.h.b16 %v2017
        %v3917 = vunpack.c.l.b16 %v2018
        %v3918 = vunpack.c.h.b16 %v2018
        %v3919 = vunpack.c.l.b16 %v2019
        %v3920 = vunpack.c.h.b16 %v2019
        %v3921 = vunpack.c.l.b16 %v2020
        %v3922 = vunpack.c.h.b16 %v2020
        %v3923 = vunpack.c.l.b16 %v2021
        %v3924 = vunpack.c.h.b16 %v2021
        %v3925 = vunpack.c.l.b16 %v2022
        %v3926 = vunpack.c.h.b16 %v2022
        %v3927 = vunpack.c.l.b16 %v2023
        %v3928 = vunpack.c.h.b16 %v2023
        %v3929 = vunpack.c.l.b16 %v2024
        %v3930 = vunpack.c.h.b16 %v2024
        %v3931 = vunpack.c.l.b16 %v2025
        %v3932 = vunpack.c.h.b16 %v2025
        %v3933 = vunpack.c.l.b16 %v2026
        %v3934 = vunpack.c.h.b16 %v2026
        %v3935 = vunpack.c.l.b16 %v2027
        %v3936 = vunpack.c.h.b16 %v2027
        %v3937 = vunpack.c.l.b16 %v2028
        %v3938 = vunpack.c.h.b16 %v2028
        %v3939 = vunpack.c.l.b16 %v2029
        %v3940 = vunpack.c.h.b16 %v2029
        %v3941 = vunpack.c.l.b16 %v2030
        %v3942 = vunpack.c.h.b16 %v2030
        %v3943 = vunpack.c.l.b16 %v2031
        %v3944 = vunpack.c.h.b16 %v2031
        %v3945 = vunpack.c.l.b16 %v2032
        %v3946 = vunpack.c.h.b16 %v2032
        %v3947 = vunpack.c.l.b16 %v2033
        %v3948 = vunpack.c.h.b16 %v2033
        %v3949 = vunpack.c.l.b16 %v2034
        %v3950 = vunpack.c.h.b16 %v2034
        %v3951 = vunpack.c.l.b16 %v2035
        %v3952 = vunpack.c.h.b16 %v2035
        %v3953 = vunpack.c.l.b16 %v2036
        %v3954 = vunpack.c.h.b16 %v2036
        %v3955 = vunpack.c.l.b16 %v2037
        %v3956 = vunpack.c.h.b16 %v2037
        %v3957 = vunpack.c.l.b16 %v2038
        %v3958 = vunpack.c.h.b16 %v2038
        %v3959 = vunpack.c.l.b16 %v2039
        %v3960 = vunpack.c.h.b16 %v2039
        %v3961 = vunpack.c.l.b16 %v2040
        %v3962 = vunpack.c.h.b16 %v2040
        %v3963 = vunpack.c.l.b16 %v2041
        %v3964 = vunpack.c.h.b16 %v2041
        %v3965 = vunpack.c.l.b16 %v2042
        %v3966 = vunpack.c.h.b16 %v2042
        %v3967 = vunpack.c.l.b16 %v2043
        %v3968 = vunpack.c.h.b16 %v2043
        %v3969 = vunpack.c.l.b16 %v2044
        %v3970 = vunpack.c.h.b16 %v2044
        %v3971 = vunpack.c.l.b16 %v2045
        %v3972 = vunpack.c.h.b16 %v2045
        %v3973 = vunpack.c.l.b16 %v2046
        %v3974 = vunpack.c.h.b16 %v2046
        %v3975 = vunpack.c.l.b16 %v2047
        %v3976 = vunpack.c.h.b16 %v2047
        %v3977 = vunpack.c.l.b16 %v2048
        %v3978 = vunpack.c.h.b16 %v2048
        %v3979 = vunpack.c.l.b16 %v2049
        %v3980 = vunpack.c.h.b16 %v2049
        %v3981 = vunpack.c.l.b16 %v2050
        %v3982 = vunpack.c.h.b16 %v2050
        %v3983 = vunpack.c.l.b16 %v2051
        %v3984 = vunpack.c.h.b16 %v2051
        %v3985 = vunpack.c.l.b16 %v2052
        %v3986 = vunpack.c.h.b16 %v2052
        %v3987 = vunpack.c.l.b16 %v2053
        %v3988 = vunpack.c.h.b16 %v2053
        %v3989 = vunpack.c.l.b16 %v2054
        %v3990 = vunpack.c.h.b16 %v2054
        %v3991 = vunpack.c.l.b16 %v2055
        %v3992 = vunpack.c.h.b16 %v2055
        %v3993 = vunpack.c.l.b16 %v2056
        %v3994 = vunpack.c.h.b16 %v2056
        %v3995 = vunpack.c.l.b16 %v2057
        %v3996 = vunpack.c.h.b16 %v2057
        %v3997 = vunpack.c.l.b16 %v2058
        %v3998 = vunpack.c.h.b16 %v2058
        %v3999 = vunpack.c.l.b16 %v2059
        %v4000 = vunpack.c.h.b16 %v2059
        %v4001 = vunpack.c.l.b16 %v2060
        %v4002 = vunpack.c.h.b16 %v2060
        %v4003 = vunpack.c.l.b16 %v2061
        %v4004 = vunpack.c.h.b16 %v2061
        %v4005 = vunpack.c.l.b16 %v2062
        %v4006 = vunpack.c.h.b16 %v2062
        %v4007 = vunpack.c.l.b16 %v2063
        %v4008 = vunpack.c.h.b16 %v2063
        %v4009 = vunpack.c.l.b16 %v2064
        %v4010 = vunpack.c.h.b16 %v2064
        %v4011 = vunpack.c.l.b16 %v2065
        %v4012 = vunpack.c.h.b16 %v2065
        %v4013 = vunpack.c.l.b16 %v2066
        %v4014 = vunpack.c.h.b16 %v2066
        %v4015 = vunpack.c.l.b16 %v2067
        %v4016 = vunpack.c.h.b16 %v2067
        %v4017 = vunpack.c.l.b16 %v2068
        %v4018 = vunpack.c.h.b16 %v2068
        %v4019 = vunpack.c.l.b16 %v2069
        %v4020 = vunpack.c.h.b16 %v2069
        %v4021 = vunpack.c.l.b16 %v2070
        %v4022 = vunpack.c.h.b16 %v2070
        %v4023 = vunpack.c.l.b16 %v2071
        %v4024 = vunpack.c.h.b16 %v2071
        %v4025 = vunpack.c.l.b16 %v2072
        %v4026 = vunpack.c.h.b16 %v2072
        %v4027 = vunpack.c.l.b16 %v2073
        %v4028 = vunpack.c.h.b16 %v2073
        %v4029 = vunpack.c.l.b16 %v2074
        %v4030 = vunpack.c.h.b16 %v2074
        %v4031 = vunpack.c.l.b16 %v2075
        %v4032 = vunpack.c.h.b16 %v2075
        %v4033 = vunpack.c.l.b16 %v2076
        %v4034 = vunpack.c.h.b16 %v2076
        %v4035 = vunpack.c.l.b16 %v2077
        %v4036 = vunpack.c.h.b16 %v2077
        %v4037 = vunpack.c.l.b16 %v2078
        %v4038 = vunpack.c.h.b16 %v2078
        %v4039 = vunpack.c.l.b16 %v2079
        %v4040 = vunpack.c.h.b16 %v2079
        %v4041 = vunpack.c.l.b16 %v2080
        %v4042 = vunpack.c.h.b16 %v2080
        %v4043 = vunpack.c.l.b16 %v2081
        %v4044 = vunpack.c.h.b16 %v2081
        %v4045 = vunpack.c.l.b16 %v2082
        %v4046 = vunpack.c.h.b16 %v2082
        %v4047 = vunpack.c.l.b16 %v2083
        %v4048 = vunpack.c.h.b16 %v2083
        %v4049 = vunpack.c.l.b16 %v2084
        %v4050 = vunpack.c.h.b16 %v2084
        %v4051 = vunpack.c.l.b16 %v2085
        %v4052 = vunpack.c.h.b16 %v2085
        %v4053 = vunpack.c.l.b16 %v2086
        %v4054 = vunpack.c.h.b16 %v2086
        %v4055 = vunpack.c.l.b16 %v2087
        %v4056 = vunpack.c.h.b16 %v2087
        %v4057 = vunpack.c.l.b16 %v2088
        %v4058 = vunpack.c.h.b16 %v2088
        %v4059 = vunpack.c.l.b16 %v2089
        %v4060 = vunpack.c.h.b16 %v2089
        %v4061 = vunpack.c.l.b16 %v2090
        %v4062 = vunpack.c.h.b16 %v2090
        %v4063 = vunpack.c.l.b16 %v2091
        %v4064 = vunpack.c.h.b16 %v2091
        %v4065 = vunpack.c.l.b16 %v2092
        %v4066 = vunpack.c.h.b16 %v2092
        %v4067 = vunpack.c.l.b16 %v2093
        %v4068 = vunpack.c.h.b16 %v2093
        %v4069 = vunpack.c.l.b16 %v2094
        %v4070 = vunpack.c.h.b16 %v2094
        %v4071 = vunpack.c.l.b16 %v2095
        %v4072 = vunpack.c.h.b16 %v2095
        %v4073 = vunpack.c.l.b16 %v2096
        %v4074 = vunpack.c.h.b16 %v2096
        %v4075 = vunpack.c.l.b16 %v2097
        %v4076 = vunpack.c.h.b16 %v2097
        %v4077 = vunpack.c.l.b16 %v2098
        %v4078 = vunpack.c.h.b16 %v2098
        %v4079 = vunpack.c.l.b16 %v2099
        %v4080 = vunpack.c.h.b16 %v2099
        %v4081 = vunpack.c.l.b16 %v2100
        %v4082 = vunpack.c.h.b16 %v2100
        %v4083 = vunpack.c.l.b16 %v2101
        %v4084 = vunpack.c.h.b16 %v2101
        %v4085 = vunpack.c.l.b16 %v2102
        %v4086 = vunpack.c.h.b16 %v2102
        %v4087 = vunpack.c.l.b16 %v2103
        %v4088 = vunpack.c.h.b16 %v2103
        %v4089 = vunpack.c.l.b16 %v2104
        %v4090 = vunpack.c.h.b16 %v2104
        %v4091 = vunpack.c.l.b16 %v2105
        %v4092 = vunpack.c.h.b16 %v2105
        %v4093 = vunpack.c.l.b16 %v2106
        %v4094 = vunpack.c.h.b16 %v2106
        %v4095 = vunpack.c.l.b16 %v2107
        %v4096 = vunpack.c.h.b16 %v2107
        %v4097 = vunpack.c.l.b16 %v2108
        %v4098 = vunpack.c.h.b16 %v2108
        %v4099 = vunpack.c.l.b16 %v2109
        %v4100 = vunpack.c.h.b16 %v2109
        %v4101 = vunpack.c.l.b16 %v2110
        %v4102 = vunpack.c.h.b16 %v2110
        %v4103 = vunpack.c.l.b16 %v2111
        %v4104 = vunpack.c.h.b16 %v2111
        %v4105 = vunpack.c.l.b16 %v2112
        %v4106 = vunpack.c.h.b16 %v2112
        %v4107 = vunpack.c.l.b16 %v2113
        %v4108 = vunpack.c.h.b16 %v2113
        %v4109 = vunpack.c.l.b16 %v2114
        %v4110 = vunpack.c.h.b16 %v2114
        %v4111 = vunpack.c.l.b16 %v2115
        %v4112 = vunpack.c.h.b16 %v2115
        %v4113 = vunpack.c.l.b16 %v2116
        %v4114 = vunpack.c.h.b16 %v2116
        %v4115 = vunpack.c.l.b16 %v2117
        %v4116 = vunpack.c.h.b16 %v2117
        %v4117 = vunpack.c.l.b16 %v2118
        %v4118 = vunpack.c.h.b16 %v2118
        %v4119 = vunpack.c.l.b16 %v2119
        %v4120 = vunpack.c.h.b16 %v2119
        %v4121 = vunpack.c.l.b16 %v2120
        %v4122 = vunpack.c.h.b16 %v2120
        %v4123 = vunpack.c.l.b16 %v2121
        %v4124 = vunpack.c.h.b16 %v2121
        %v4125 = vunpack.c.l.b16 %v2122
        %v4126 = vunpack.c.h.b16 %v2122
        %v4127 = vunpack.c.l.b16 %v2123
        %v4128 = vunpack.c.h.b16 %v2123
        %v4129 = vunpack.c.l.b16 %v2124
        %v4130 = vunpack.c.h.b16 %v2124
        %v4131 = vunpack.c.l.b16 %v2125
        %v4132 = vunpack.c.h.b16 %v2125
        %v4133 = vunpack.c.l.b16 %v2126
        %v4134 = vunpack.c.h.b16 %v2126
        %v4135 = vunpack.c.l.b16 %v2127
        %v4136 = vunpack.c.h.b16 %v2127
        %v4137 = vunpack.c.l.b16 %v2128
        %v4138 = vunpack.c.h.b16 %v2128
        %v4139 = vunpack.c.l.b16 %v2129
        %v4140 = vunpack.c.h.b16 %v2129
        %v4141 = vunpack.c.l.b16 %v2130
        %v4142 = vunpack.c.h.b16 %v2130
        %v4143 = vunpack.c.l.b16 %v2131
        %v4144 = vunpack.c.h.b16 %v2131
        %v4145 = vunpack.c.l.b16 %v2132
        %v4146 = vunpack.c.h.b16 %v2132
        %v4147 = vunpack.c.l.b16 %v2133
        %v4148 = vunpack.c.h.b16 %v2133
        %v4149 = vunpack.c.l.b16 %v2134
        %v4150 = vunpack.c.h.b16 %v2134
        %v4151 = vunpack.c.l.b16 %v2135
        %v4152 = vunpack.c.h.b16 %v2135
        %v4153 = vunpack.c.l.b16 %v2136
        %v4154 = vunpack.c.h.b16 %v2136
        %v4155 = vunpack.c.l.b16 %v2137
        %v4156 = vunpack.c.h.b16 %v2137
        %v4157 = vunpack.c.l.b16 %v2138
        %v4158 = vunpack.c.h.b16 %v2138
        %v4159 = vunpack.c.l.b16 %v2139
        %v4160 = vunpack.c.h.b16 %v2139
        %v4161 = vunpack.c.l.b16 %v2140
        %v4162 = vunpack.c.h.b16 %v2140
        %v4163 = vunpack.c.l.b16 %v2141
        %v4164 = vunpack.c.h.b16 %v2141
        %v4165 = vunpack.c.l.b16 %v2142
        %v4166 = vunpack.c.h.b16 %v2142
        %v4167 = vunpack.c.l.b16 %v2143
        %v4168 = vunpack.c.h.b16 %v2143
        %v4169 = vunpack.c.l.b16 %v2144
        %v4170 = vunpack.c.h.b16 %v2144
        %v4171 = vunpack.c.l.b16 %v2145
        %v4172 = vunpack.c.h.b16 %v2145
        %v4173 = vunpack.c.l.b16 %v2146
        %v4174 = vunpack.c.h.b16 %v2146
        %v4175 = vunpack.c.l.b16 %v2147
        %v4176 = vunpack.c.h.b16 %v2147
        %v4177 = vunpack.c.l.b16 %v2148
        %v4178 = vunpack.c.h.b16 %v2148
        %v4179 = vunpack.c.l.b16 %v2149
        %v4180 = vunpack.c.h.b16 %v2149
        %v4181 = vunpack.c.l.b16 %v2150
        %v4182 = vunpack.c.h.b16 %v2150
        %v4183 = vunpack.c.l.b16 %v2151
        %v4184 = vunpack.c.h.b16 %v2151
        %v4185 = vunpack.c.l.b16 %v2152
        %v4186 = vunpack.c.h.b16 %v2152
        %v4187 = vunpack.c.l.b16 %v2153
        %v4188 = vunpack.c.h.b16 %v2153
        %v4189 = vunpack.c.l.b16 %v2154
        %v4190 = vunpack.c.h.b16 %v2154
        %v4191 = vunpack.c.l.b16 %v2155
        %v4192 = vunpack.c.h.b16 %v2155
        %v4193 = vunpack.c.l.b16 %v2156
        %v4194 = vunpack.c.h.b16 %v2156
        %v4195 = vunpack.c.l.b16 %v2157
        %v4196 = vunpack.c.h.b16 %v2157
        %v4197 = vunpack.c.l.b16 %v2158
        %v4198 = vunpack.c.h.b16 %v2158
        %v4199 = vunpack.c.l.b16 %v2159
        %v4200 = vunpack.c.h.b16 %v2159
        %v4201 = vunpack.c.l.b16 %v2160
        %v4202 = vunpack.c.h.b16 %v2160
        %v4203 = vunpack.c.l.b16 %v2161
        %v4204 = vunpack.c.h.b16 %v2161
        %v4205 = vunpack.c.l.b16 %v2162
        %v4206 = vunpack.c.h.b16 %v2162
        %v4207 = vunpack.c.l.b16 %v2163
        %v4208 = vunpack.c.h.b16 %v2163
        %v4209 = vunpack.c.l.b16 %v2164
        %v4210 = vunpack.c.h.b16 %v2164
        %v4211 = vunpack.c.l.b16 %v2165
        %v4212 = vunpack.c.h.b16 %v2165
        %v4213 = vunpack.c.l.b16 %v2166
        %v4214 = vunpack.c.h.b16 %v2166
        %v4215 = vunpack.c.l.b16 %v2167
        %v4216 = vunpack.c.h.b16 %v2167
        %v4217 = vunpack.c.l.b16 %v2168
        %v4218 = vunpack.c.h.b16 %v2168
        %v4219 = vunpack.c.l.b16 %v2169
        %v4220 = vunpack.c.h.b16 %v2169
        %v4221 = vunpack.c.l.b16 %v2170
        %v4222 = vunpack.c.h.b16 %v2170
        %v4223 = vunpack.c.l.b16 %v2171
        %v4224 = vunpack.c.h.b16 %v2171
        %v4225 = vunpack.c.l.b16 %v2172
        %v4226 = vunpack.c.h.b16 %v2172
        %v4227 = vunpack.c.l.b16 %v2173
        %v4228 = vunpack.c.h.b16 %v2173
        %v4229 = vunpack.c.l.b16 %v2174
        %v4230 = vunpack.c.h.b16 %v2174
        %v4231 = vunpack.c.l.b16 %v2175
        %v4232 = vunpack.c.h.b16 %v2175
        %v4233 = vunpack.c.l.b16 %v2176
        %v4234 = vunpack.c.h.b16 %v2176
        %v4235 = vunpack.c.l.b16 %v2177
        %v4236 = vunpack.c.h.b16 %v2177
        %v4237 = vunpack.c.l.b16 %v2178
        %v4238 = vunpack.c.h.b16 %v2178
        %v4239 = vunpack.c.l.b16 %v2179
        %v4240 = vunpack.c.h.b16 %v2179
        %v4241 = vunpack.c.l.b16 %v2180
        %v4242 = vunpack.c.h.b16 %v2180
        %v4243 = vunpack.c.l.b16 %v2181
        %v4244 = vunpack.c.h.b16 %v2181
        %v4245 = vunpack.c.l.b16 %v2182
        %v4246 = vunpack.c.h.b16 %v2182
        %v4247 = vunpack.c.l.b16 %v2183
        %v4248 = vunpack.c.h.b16 %v2183
        %v4249 = vunpack.c.l.b16 %v2184
        %v4250 = vunpack.c.h.b16 %v2184
        %v4251 = vunpack.c.l.b16 %v2185
        %v4252 = vunpack.c.h.b16 %v2185
        %v4253 = vunpack.c.l.b16 %v2186
        %v4254 = vunpack.c.h.b16 %v2186
        %v4255 = vunpack.c.l.b16 %v2187
        %v4256 = vunpack.c.h.b16 %v2187
        %v4257 = vunpack.c.l.b16 %v2188
        %v4258 = vunpack.c.h.b16 %v2188
        %v4259 = vunpack.c.l.b16 %v2189
        %v4260 = vunpack.c.h.b16 %v2189
        %v4261 = vunpack.c.l.b16 %v2190
        %v4262 = vunpack.c.h.b16 %v2190
        %v4263 = vunpack.c.l.b16 %v2191
        %v4264 = vunpack.c.h.b16 %v2191
        %v4265 = vunpack.c.l.b16 %v2192
        %v4266 = vunpack.c.h.b16 %v2192
        %v4267 = vunpack.c.l.b16 %v2193
        %v4268 = vunpack.c.h.b16 %v2193
        %v4269 = vunpack.c.l.b16 %v2194
        %v4270 = vunpack.c.h.b16 %v2194
        %v4271 = vunpack.c.l.b16 %v2195
        %v4272 = vunpack.c.h.b16 %v2195
        %v4273 = vunpack.c.l.b16 %v2196
        %v4274 = vunpack.c.h.b16 %v2196
        %v4275 = vunpack.c.l.b16 %v2197
        %v4276 = vunpack.c.h.b16 %v2197
        %v4277 = vunpack.c.l.b16 %v2198
        %v4278 = vunpack.c.h.b16 %v2198
        %v4279 = vunpack.c.l.b16 %v2199
        %v4280 = vunpack.c.h.b16 %v2199
        %v4281 = vunpack.c.l.b16 %v2200
        %v4282 = vunpack.c.h.b16 %v2200
        %v4283 = vunpack.c.l.b16 %v2201
        %v4284 = vunpack.c.h.b16 %v2201
        %v4285 = vunpack.c.l.b16 %v2202
        %v4286 = vunpack.c.h.b16 %v2202
        %v4287 = vunpack.c.l.b16 %v2203
        %v4288 = vunpack.c.h.b16 %v2203
        %v4289 = vunpack.c.l.b16 %v2204
        %v4290 = vunpack.c.h.b16 %v2204
        %v4291 = vunpack.c.l.b16 %v2205
        %v4292 = vunpack.c.h.b16 %v2205
        %v4293 = vunpack.c.l.b16 %v2206
        %v4294 = vunpack.c.h.b16 %v2206
        %v4295 = vunpack.c.l.b16 %v2207
        %v4296 = vunpack.c.h.b16 %v2207
        %v4297 = vunpack.c.l.b16 %v2208
        %v4298 = vunpack.c.h.b16 %v2208
        %v4299 = vunpack.c.l.b16 %v2209
        %v4300 = vunpack.c.h.b16 %v2209
        %v4301 = vunpack.c.l.b16 %v2210
        %v4302 = vunpack.c.h.b16 %v2210
        %v4303 = vunpack.c.l.b16 %v2211
        %v4304 = vunpack.c.h.b16 %v2211
        %v4305 = vunpack.c.l.b16 %v2212
        %v4306 = vunpack.c.h.b16 %v2212
        %v4307 = vunpack.c.l.b16 %v2213
        %v4308 = vunpack.c.h.b16 %v2213
        %v4309 = vunpack.c.l.b16 %v2214
        %v4310 = vunpack.c.h.b16 %v2214
        %v4311 = vunpack.c.l.b16 %v2215
        %v4312 = vunpack.c.h.b16 %v2215
        %v4313 = vunpack.c.l.b16 %v2216
        %v4314 = vunpack.c.h.b16 %v2216
        %v4315 = vunpack.c.l.b16 %v2217
        %v4316 = vunpack.c.h.b16 %v2217
        %v4317 = vunpack.c.l.b16 %v2218
        %v4318 = vunpack.c.h.b16 %v2218
        %v4319 = vunpack.c.l.b16 %v2219
        %v4320 = vunpack.c.h.b16 %v2219
        %v4321 = vunpack.c.l.b16 %v2220
        %v4322 = vunpack.c.h.b16 %v2220
        %v4323 = vunpack.c.l.b16 %v2221
        %v4324 = vunpack.c.h.b16 %v2221
        %v4325 = vunpack.c.l.b16 %v2222
        %v4326 = vunpack.c.h.b16 %v2222
        %v4327 = vunpack.c.l.b16 %v2223
        %v4328 = vunpack.c.h.b16 %v2223
        %v4329 = vunpack.c.l.b16 %v2224
        %v4330 = vunpack.c.h.b16 %v2224
        %v4331 = vunpack.c.l.b16 %v2225
        %v4332 = vunpack.c.h.b16 %v2225
        %v4333 = vunpack.c.l.b16 %v2226
        %v4334 = vunpack.c.h.b16 %v2226
        %v4335 = vunpack.c.l.b16 %v2227
        %v4336 = vunpack.c.h.b16 %v2227
        %v4337 = vunpack.c.l.b16 %v2228
        %v4338 = vunpack.c.h.b16 %v2228
        %v4339 = vunpack.c.l.b16 %v2229
        %v4340 = vunpack.c.h.b16 %v2229
        %v4341 = vunpack.c.l.b16 %v2230
        %v4342 = vunpack.c.h.b16 %v2230
        %v4343 = vunpack.c.l.b16 %v2231
        %v4344 = vunpack.c.h.b16 %v2231
        %v4345 = vunpack.c.l.b16 %v2232
        %v4346 = vunpack.c.h.b16 %v2232
        %v4347 = vunpack.c.l.b16 %v2233
        %v4348 = vunpack.c.h.b16 %v2233
        %v4349 = vunpack.c.l.b16 %v2234
        %v4350 = vunpack.c.h.b16 %v2234
        %v4351 = vunpack.c.l.b16 %v2235
        %v4352 = vunpack.c.h.b16 %v2235
        %v4353 = vunpack.c.l.b16 %v2236
        %v4354 = vunpack.c.h.b16 %v2236
        %v4355 = vunpack.c.l.b16 %v2237
        %v4356 = vunpack.c.h.b16 %v2237
        %v4357 = vunpack.c.l.b16 %v2238
        %v4358 = vunpack.c.h.b16 %v2238
        %v4359 = vunpack.c.l.b16 %v2239
        %v4360 = vunpack.c.h.b16 %v2239
        %v4361 = vunpack.c.l.b16 %v2240
        %v4362 = vunpack.c.h.b16 %v2240
        %v4363 = vunpack.c.l.b16 %v2241
        %v4364 = vunpack.c.h.b16 %v2241
        %v4365 = vunpack.c.l.b16 %v2242
        %v4366 = vunpack.c.h.b16 %v2242
        %v4367 = vunpack.c.l.b16 %v2243
        %v4368 = vunpack.c.h.b16 %v2243
        %v4369 = vunpack.c.l.b16 %v2244
        %v4370 = vunpack.c.h.b16 %v2244
        %v4371 = vunpack.c.l.b16 %v2245
        %v4372 = vunpack.c.h.b16 %v2245
        %v4373 = vunpack.c.l.b16 %v2246
        %v4374 = vunpack.c.h.b16 %v2246
        %v4375 = vunpack.c.l.b16 %v2247
        %v4376 = vunpack.c.h.b16 %v2247
        %v4377 = vunpack.c.l.b16 %v2248
        %v4378 = vunpack.c.h.b16 %v2248
        %v4379 = vunpack.c.l.b16 %v2249
        %v4380 = vunpack.c.h.b16 %v2249
        %v4381 = vunpack.c.l.b16 %v2250
        %v4382 = vunpack.c.h.b16 %v2250
        %v4383 = vunpack.c.l.b16 %v2251
        %v4384 = vunpack.c.h.b16 %v2251
        %v4385 = vunpack.c.l.b16 %v2252
        %v4386 = vunpack.c.h.b16 %v2252
        %v4387 = vunpack.c.l.b16 %v2253
        %v4388 = vunpack.c.h.b16 %v2253
        %v4389 = vunpack.c.l.b16 %v2254
        %v4390 = vunpack.c.h.b16 %v2254
        %v4391 = vunpack.c.l.b16 %v2255
        %v4392 = vunpack.c.h.b16 %v2255
        %v4393 = vunpack.c.l.b16 %v2256
        %v4394 = vunpack.c.h.b16 %v2256
        %v4395 = vunpack.c.l.b16 %v2257
        %v4396 = vunpack.c.h.b16 %v2257
        %v4397 = vunpack.c.l.b16 %v2258
        %v4398 = vunpack.c.h.b16 %v2258
        %v4399 = vunpack.c.l.b16 %v2259
        %v4400 = vunpack.c.h.b16 %v2259
        %v4401 = vunpack.c.l.b16 %v2260
        %v4402 = vunpack.c.h.b16 %v2260
        %v4403 = vunpack.c.l.b16 %v2261
        %v4404 = vunpack.c.h.b16 %v2261
        %v4405 = vunpack.c.l.b16 %v2262
        %v4406 = vunpack.c.h.b16 %v2262
        %v4407 = vunpack.c.l.b16 %v2263
        %v4408 = vunpack.c.h.b16 %v2263
        %v4409 = vunpack.c.l.b16 %v2264
        %v4410 = vunpack.c.h.b16 %v2264
        %v4411 = vunpack.c.l.b16 %v2265
        %v4412 = vunpack.c.h.b16 %v2265
        %v4413 = vunpack.c.l.b16 %v2266
        %v4414 = vunpack.c.h.b16 %v2266
        %v4415 = vunpack.c.l.b16 %v2267
        %v4416 = vunpack.c.h.b16 %v2267
        %v4417 = vunpack.c.l.b16 %v2268
        %v4418 = vunpack.c.h.b16 %v2268
        %v4419 = vunpack.c.l.b16 %v2269
        %v4420 = vunpack.c.h.b16 %v2269
        %v4421 = vunpack.c.l.b16 %v2270
        %v4422 = vunpack.c.h.b16 %v2270
        %v4423 = vunpack.c.l.b16 %v2271
        %v4424 = vunpack.c.h.b16 %v2271
        %v4425 = vunpack.c.l.b16 %v2272
        %v4426 = vunpack.c.h.b16 %v2272
        %v4427 = vunpack.c.l.b16 %v2273
        %v4428 = vunpack.c.h.b16 %v2273
        %v4429 = vunpack.c.l.b16 %v2274
        %v4430 = vunpack.c.h.b16 %v2274
        %v4431 = vunpack.c.l.b16 %v2275
        %v4432 = vunpack.c.h.b16 %v2275
        %v4433 = vunpack.c.l.b16 %v2276
        %v4434 = vunpack.c.h.b16 %v2276
        %v4435 = vunpack.c.l.b16 %v2277
        %v4436 = vunpack.c.h.b16 %v2277
        %v4437 = vunpack.c.l.b16 %v2278
        %v4438 = vunpack.c.h.b16 %v2278
        %v4439 = vunpack.c.l.b16 %v2279
        %v4440 = vunpack.c.h.b16 %v2279
        %v4441 = vunpack.c.l.b16 %v2280
        %v4442 = vunpack.c.h.b16 %v2280
        %v4443 = vunpack.c.l.b16 %v2281
        %v4444 = vunpack.c.h.b16 %v2281
        %v4445 = vunpack.c.l.b16 %v2282
        %v4446 = vunpack.c.h.b16 %v2282
        %v4447 = vunpack.c.l.b16 %v2283
        %v4448 = vunpack.c.h.b16 %v2283
        %v4449 = vunpack.c.l.b16 %v2284
        %v4450 = vunpack.c.h.b16 %v2284
        %v4451 = vunpack.c.l.b16 %v2285
        %v4452 = vunpack.c.h.b16 %v2285
        %v4453 = vunpack.c.l.b16 %v2286
        %v4454 = vunpack.c.h.b16 %v2286
        %v4455 = vunpack.c.l.b16 %v2287
        %v4456 = vunpack.c.h.b16 %v2287
        %v4457 = vunpack.c.l.b16 %v2288
        %v4458 = vunpack.c.h.b16 %v2288
        %v4459 = vunpack.c.l.b16 %v2289
        %v4460 = vunpack.c.h.b16 %v2289
        %v4461 = vunpack.c.l.b16 %v2290
        %v4462 = vunpack.c.h.b16 %v2290
        %v4463 = vunpack.c.l.b16 %v2291
        %v4464 = vunpack.c.h.b16 %v2291
        %v4465 = vunpack.c.l.b16 %v2292
        %v4466 = vunpack.c.h.b16 %v2292
        %v4467 = vunpack.c.l.b16 %v2293
        %v4468 = vunpack.c.h.b16 %v2293
        %v4469 = vunpack.c.l.b16 %v2294
        %v4470 = vunpack.c.h.b16 %v2294
        %v4471 = vunpack.c.l.b16 %v2295
        %v4472 = vunpack.c.h.b16 %v2295
        %v4473 = vunpack.c.l.b16 %v2296
        %v4474 = vunpack.c.h.b16 %v2296
        %v4475 = vunpack.c.l.b16 %v2297
        %v4476 = vunpack.c.h.b16 %v2297
        %v4477 = vunpack.c.l.b16 %v2298
        %v4478 = vunpack.c.h.b16 %v2298
        %v4479 = vunpack.c.l.b16 %v2299
        %v4480 = vunpack.c.h.b16 %v2299
        %v4481 = vunpack.c.l.b16 %v2300
        %v4482 = vunpack.c.h.b16 %v2300
        %v4483 = vunpack.c.l.b16 %v2301
        %v4484 = vunpack.c.h.b16 %v2301
        %v4485 = vunpack.c.l.b16 %v2302
        %v4486 = vunpack.c.h.b16 %v2302
        %v4487 = vunpack.c.l.b16 %v2303
        %v4488 = vunpack.c.h.b16 %v2303
        %v4489 = vunpack.c.l.b16 %v2304
        %v4490 = vunpack.c.h.b16 %v2304
        %v4491 = vunpack.c.l.b16 %v2305
        %v4492 = vunpack.c.h.b16 %v2305
        %v4493 = vunpack.c.l.b16 %v2306
        %v4494 = vunpack.c.h.b16 %v2306
        %v4495 = vunpack.c.l.b16 %v2307
        %v4496 = vunpack.c.h.b16 %v2307
        %v4497 = vunpack.c.l.b16 %v2308
        %v4498 = vunpack.c.h.b16 %v2308
        %v4499 = vunpack.c.l.b16 %v2309
        %v4500 = vunpack.c.h.b16 %v2309
        %v4501 = vunpack.c.l.b16 %v2310
        %v4502 = vunpack.c.h.b16 %v2310
        %v4503 = vunpack.c.l.b16 %v2311
        %v4504 = vunpack.c.h.b16 %v2311
        %v4505 = vunpack.c.l.b16 %v2312
        %v4506 = vunpack.c.h.b16 %v2312
        %v4507 = vunpack.c.l.b16 %v2313
        %v4508 = vunpack.c.h.b16 %v2313
        %v4509 = vunpack.c.l.b16 %v2314
        %v4510 = vunpack.c.h.b16 %v2314
        %v4511 = vunpack.c.l.b16 %v2315
        %v4512 = vunpack.c.h.b16 %v2315
        %v4513 = vunpack.c.l.b16 %v2316
        %v4514 = vunpack.c.h.b16 %v2316
        %v4515 = vunpack.c.l.b16 %v2317
        %v4516 = vunpack.c.h.b16 %v2317
        %v4517 = vunpack.c.l.b16 %v2318
        %v4518 = vunpack.c.h.b16 %v2318
        %v4519 = vunpack.c.l.b16 %v2319
        %v4520 = vunpack.c.h.b16 %v2319
        %v4521 = vunpack.c.l.b16 %v2320
        %v4522 = vunpack.c.h.b16 %v2320
        %v4523 = vunpack.c.l.b16 %v2321
        %v4524 = vunpack.c.h.b16 %v2321
        %v4525 = vunpack.c.l.b16 %v2322
        %v4526 = vunpack.c.h.b16 %v2322
        %v4527 = vunpack.c.l.b16 %v2323
        %v4528 = vunpack.c.h.b16 %v2323
        %v4529 = vunpack.c.l.b16 %v2324
        %v4530 = vunpack.c.h.b16 %v2324
        %v4531 = vunpack.c.l.b16 %v2325
        %v4532 = vunpack.c.h.b16 %v2325
        %v4533 = vunpack.c.l.b16 %v2326
        %v4534 = vunpack.c.h.b16 %v2326
        %v4535 = vunpack.c.l.b16 %v2327
        %v4536 = vunpack.c.h.b16 %v2327
        %v4537 = vunpack.c.l.b16 %v2328
        %v4538 = vunpack.c.h.b16 %v2328
        %v4539 = vunpack.c.l.b16 %v2329
        %v4540 = vunpack.c.h.b16 %v2329
        %v4541 = vunpack.c.l.b16 %v2330
        %v4542 = vunpack.c.h.b16 %v2330
        %v4543 = vunpack.c.l.b16 %v2331
        %v4544 = vunpack.c.h.b16 %v2331
        %v4545 = vunpack.c.l.b16 %v2332
        %v4546 = vunpack.c.h.b16 %v2332
        %v4547 = vunpack.c.l.b16 %v2333
        %v4548 = vunpack.c.h.b16 %v2333
        %v4549 = vunpack.c.l.b16 %v2334
        %v4550 = vunpack.c.h.b16 %v2334
        %v4551 = vunpack.c.l.b16 %v2335
        %v4552 = vunpack.c.h.b16 %v2335
        %v4553 = vunpack.c.l.b16 %v2336
        %v4554 = vunpack.c.h.b16 %v2336
        %v4555 = vunpack.c.l.b16 %v2337
        %v4556 = vunpack.c.h.b16 %v2337
        %v4557 = vunpack.c.l.b16 %v2338
        %v4558 = vunpack.c.h.b16 %v2338
        %v4559 = vunpack.c.l.b16 %v2339
        %v4560 = vunpack.c.h.b16 %v2339
        %v4561 = vunpack.c.l.b16 %v2340
        %v4562 = vunpack.c.h.b16 %v2340
        %v4563 = vunpack.c.l.b16 %v2341
        %v4564 = vunpack.c.h.b16 %v2341
        %v4565 = vunpack.c.l.b16 %v2342
        %v4566 = vunpack.c.h.b16 %v2342
        %v4567 = vunpack.c.l.b16 %v2343
        %v4568 = vunpack.c.h.b16 %v2343
        %v4569 = vunpack.c.l.b16 %v2344
        %v4570 = vunpack.c.h.b16 %v2344
        %v4571 = vunpack.c.l.b16 %v2345
        %v4572 = vunpack.c.h.b16 %v2345
        %v4573 = vunpack.c.l.b16 %v2346
        %v4574 = vunpack.c.h.b16 %v2346
        %v4575 = vunpack.c.l.b16 %v2347
        %v4576 = vunpack.c.h.b16 %v2347
        %v4577 = vunpack.c.l.b16 %v2348
        %v4578 = vunpack.c.h.b16 %v2348
        %v4579 = vunpack.c.l.b16 %v2349
        %v4580 = vunpack.c.h.b16 %v2349
        %v4581 = vunpack.c.l.b16 %v2350
        %v4582 = vunpack.c.h.b16 %v2350
        %v4583 = vunpack.c.l.b16 %v2351
        %v4584 = vunpack.c.h.b16 %v2351
        %v4585 = vunpack.c.l.b16 %v2352
        %v4586 = vunpack.c.h.b16 %v2352
        %v4587 = vunpack.c.l.b16 %v2353
        %v4588 = vunpack.c.h.b16 %v2353
        %v4589 = vunpack.c.l.b16 %v2354
        %v4590 = vunpack.c.h.b16 %v2354
        %v4591 = vunpack.c.l.b16 %v2355
        %v4592 = vunpack.c.h.b16 %v2355
        %v4593 = vunpack.c.l.b16 %v2356
        %v4594 = vunpack.c.h.b16 %v2356
        %v4595 = vunpack.c.l.b16 %v2357
        %v4596 = vunpack.c.h.b16 %v2357
        %v4597 = vunpack.c.l.b16 %v2358
        %v4598 = vunpack.c.h.b16 %v2358
        %v4599 = vunpack.c.l.b16 %v2359
        %v4600 = vunpack.c.h.b16 %v2359
        %v4601 = vunpack.c.l.b16 %v2360
        %v4602 = vunpack.c.h.b16 %v2360
        %v4603 = vunpack.c.l.b16 %v2361
        %v4604 = vunpack.c.h.b16 %v2361
        %v4605 = vunpack.c.l.b16 %v2362
        %v4606 = vunpack.c.h.b16 %v2362
        %v4607 = vunpack.c.l.b16 %v2363
        %v4608 = vunpack.c.h.b16 %v2363
        %v4609 = vunpack.c.l.b16 %v2364
        %v4610 = vunpack.c.h.b16 %v2364
        %v4611 = vunpack.c.l.b16 %v2365
        %v4612 = vunpack.c.h.b16 %v2365
        %v4613 = vunpack.c.l.b16 %v2366
        %v4614 = vunpack.c.h.b16 %v2366
        %v4615 = vunpack.c.l.b16 %v2367
        %v4616 = vunpack.c.h.b16 %v2367
        %v4617 = vunpack.c.l.b16 %v2368
        %v4618 = vunpack.c.h.b16 %v2368
        %v4619 = vunpack.c.l.b16 %v2369
        %v4620 = vunpack.c.h.b16 %v2369
        %v4621 = vunpack.c.l.b16 %v2370
        %v4622 = vunpack.c.h.b16 %v2370
        %v4623 = vunpack.c.l.b16 %v2371
        %v4624 = vunpack.c.h.b16 %v2371
        %v4625 = vunpack.c.l.b16 %v2372
        %v4626 = vunpack.c.h.b16 %v2372
        %v4627 = vunpack.c.l.b16 %v2373
        %v4628 = vunpack.c.h.b16 %v2373
        %v4629 = vunpack.c.l.b16 %v2374
        %v4630 = vunpack.c.h.b16 %v2374
        %v4631 = vunpack.c.l.b16 %v2375
        %v4632 = vunpack.c.h.b16 %v2375
        %v4633 = vunpack.c.l.b16 %v2376
        %v4634 = vunpack.c.h.b16 %v2376
        %v4635 = vunpack.c.l.b16 %v2377
        %v4636 = vunpack.c.h.b16 %v2377
        %v4637 = vunpack.c.l.b16 %v2378
        %v4638 = vunpack.c.h.b16 %v2378
        %v4639 = vunpack.c.l.b16 %v2379
        %v4640 = vunpack.c.h.b16 %v2379
        %v4641 = vunpack.c.l.b16 %v2380
        %v4642 = vunpack.c.h.b16 %v2380
        %v4643 = vunpack.c.l.b16 %v2381
        %v4644 = vunpack.c.h.b16 %v2381
        %v4645 = vunpack.c.l.b16 %v2382
        %v4646 = vunpack.c.h.b16 %v2382
        %v4647 = vunpack.c.l.b16 %v2383
        %v4648 = vunpack.c.h.b16 %v2383
        %v4649 = vunpack.c.l.b16 %v2384
        %v4650 = vunpack.c.h.b16 %v2384
        %v4651 = vunpack.c.l.b16 %v2385
        %v4652 = vunpack.c.h.b16 %v2385
        %v4653 = vunpack.c.l.b16 %v2386
        %v4654 = vunpack.c.h.b16 %v2386
        %v4655 = vunpack.c.l.b16 %v2387
        %v4656 = vunpack.c.h.b16 %v2387
        %v4657 = vunpack.c.l.b16 %v2388
        %v4658 = vunpack.c.h.b16 %v2388
        %v4659 = vunpack.c.l.b16 %v2389
        %v4660 = vunpack.c.h.b16 %v2389
        %v4661 = vunpack.c.l.b16 %v2390
        %v4662 = vunpack.c.h.b16 %v2390
        %v4663 = vunpack.c.l.b16 %v2391
        %v4664 = vunpack.c.h.b16 %v2391
        %v4665 = vunpack.c.l.b16 %v2392
        %v4666 = vunpack.c.h.b16 %v2392
        %v4667 = vunpack.c.l.b16 %v2393
        %v4668 = vunpack.c.h.b16 %v2393
        %v4669 = vunpack.c.l.b16 %v2394
        %v4670 = vunpack.c.h.b16 %v2394
        %v4671 = vunpack.c.l.b16 %v2395
        %v4672 = vunpack.c.h.b16 %v2395
        %v4673 = vunpack.c.l.b16 %v2396
        %v4674 = vunpack.c.h.b16 %v2396
        %v4675 = vunpack.c.l.b16 %v2397
        %v4676 = vunpack.c.h.b16 %v2397
        %v4677 = vunpack.c.l.b16 %v2398
        %v4678 = vunpack.c.h.b16 %v2398
        %v4679 = vunpack.c.l.b16 %v2399
        %v4680 = vunpack.c.h.b16 %v2399
        %v4681 = vunpack.c.l.b16 %v2400
        %v4682 = vunpack.c.h.b16 %v2400
        %v4683 = vunpack.c.l.b16 %v2401
        %v4684 = vunpack.c.h.b16 %v2401
        %v4685 = vunpack.c.l.b16 %v2402
        %v4686 = vunpack.c.h.b16 %v2402
        %v4687 = vunpack.c.l.b16 %v2403
        %v4688 = vunpack.c.h.b16 %v2403
        %v4689 = vunpack.c.l.b16 %v2404
        %v4690 = vunpack.c.h.b16 %v2404
        %v4691 = vunpack.c.l.b16 %v2405
        %v4692 = vunpack.c.h.b16 %v2405
        %v4693 = vunpack.c.l.b16 %v2406
        %v4694 = vunpack.c.h.b16 %v2406
        %v4695 = vunpack.c.l.b16 %v2407
        %v4696 = vunpack.c.h.b16 %v2407
        %v4697 = vunpack.c.l.b16 %v2408
        %v4698 = vunpack.c.h.b16 %v2408
        %v4699 = vunpack.c.l.b16 %v2409
        %v4700 = vunpack.c.h.b16 %v2409
        %v4701 = vunpack.c.l.b16 %v2410
        %v4702 = vunpack.c.h.b16 %v2410
        %v4703 = vunpack.c.l.b16 %v2411
        %v4704 = vunpack.c.h.b16 %v2411
        %v4705 = vunpack.c.l.b16 %v2412
        %v4706 = vunpack.c.h.b16 %v2412
        %v4707 = vunpack.c.l.b16 %v2413
        %v4708 = vunpack.c.h.b16 %v2413
        %v4709 = vunpack.c.l.b16 %v2414
        %v4710 = vunpack.c.h.b16 %v2414
        %v4711 = vunpack.c.l.b16 %v2415
        %v4712 = vunpack.c.h.b16 %v2415
        %v4713 = vunpack.c.l.b16 %v2416
        %v4714 = vunpack.c.h.b16 %v2416
        %v4715 = vunpack.c.l.b16 %v2417
        %v4716 = vunpack.c.h.b16 %v2417
        %v4717 = vunpack.c.l.b16 %v2418
        %v4718 = vunpack.c.h.b16 %v2418
        %v4719 = vunpack.c.l.b16 %v2419
        %v4720 = vunpack.c.h.b16 %v2419
        %v4721 = vunpack.c.l.b16 %v2420
        %v4722 = vunpack.c.h.b16 %v2420
        %v4723 = vunpack.c.l.b16 %v2421
        %v4724 = vunpack.c.h.b16 %v2421
        %v4725 = vunpack.c.l.b16 %v2422
        %v4726 = vunpack.c.h.b16 %v2422
        %v4727 = vunpack.c.l.b16 %v2423
        %v4728 = vunpack.c.h.b16 %v2423
        %v4729 = vunpack.c.l.b16 %v2424
        %v4730 = vunpack.c.h.b16 %v2424
        %v4731 = vunpack.c.l.b16 %v2425
        %v4732 = vunpack.c.h.b16 %v2425
        %v4733 = vunpack.c.l.b16 %v2426
        %v4734 = vunpack.c.h.b16 %v2426
        %v4735 = vunpack.c.l.b16 %v2427
        %v4736 = vunpack.c.h.b16 %v2427
        %v4737 = vunpack.c.l.b16 %v2428
        %v4738 = vunpack.c.h.b16 %v2428
        %v4739 = vunpack.c.l.b16 %v2429
        %v4740 = vunpack.c.h.b16 %v2429
        %v4741 = vunpack.c.l.b16 %v2430
        %v4742 = vunpack.c.h.b16 %v2430
        %v4743 = vunpack.c.l.b16 %v2431
        %v4744 = vunpack.c.h.b16 %v2431
        %v4745 = vunpack.c.l.b16 %v2432
        %v4746 = vunpack.c.h.b16 %v2432
        %v4747 = vunpack.c.l.b16 %v2433
        %v4748 = vunpack.c.h.b16 %v2433
        %v4749 = vunpack.c.l.b16 %v2434
        %v4750 = vunpack.c.h.b16 %v2434
        %v4751 = vunpack.c.l.b16 %v2435
        %v4752 = vunpack.c.h.b16 %v2435
        %v4753 = vunpack.c.l.b16 %v2436
        %v4754 = vunpack.c.h.b16 %v2436
        %v4755 = vunpack.c.l.b16 %v2437
        %v4756 = vunpack.c.h.b16 %v2437
        %v4757 = vunpack.c.l.b16 %v2438
        %v4758 = vunpack.c.h.b16 %v2438
        %v4759 = vunpack.c.l.b16 %v2439
        %v4760 = vunpack.c.h.b16 %v2439
        %v4761 = vunpack.c.l.b16 %v2440
        %v4762 = vunpack.c.h.b16 %v2440
        %v4763 = vunpack.c.l.b16 %v2441
        %v4764 = vunpack.c.h.b16 %v2441
        %v4765 = vunpack.c.l.b16 %v2442
        %v4766 = vunpack.c.h.b16 %v2442
        %v4767 = vunpack.c.l.b16 %v2443
        %v4768 = vunpack.c.h.b16 %v2443
        %v4769 = vunpack.c.l.b16 %v2444
        %v4770 = vunpack.c.h.b16 %v2444
        %v4771 = vunpack.c.l.b16 %v2445
        %v4772 = vunpack.c.h.b16 %v2445
        %v4773 = vunpack.c.l.b16 %v2446
        %v4774 = vunpack.c.h.b16 %v2446
        %v4775 = vunpack.c.l.b16 %v2447
        %v4776 = vunpack.c.h.b16 %v2447
        %v4777 = vunpack.c.l.b16 %v2448
        %v4778 = vunpack.c.h.b16 %v2448
        %v4779 = vunpack.c.l.b16 %v2449
        %v4780 = vunpack.c.h.b16 %v2449
        %v4781 = vunpack.c.l.b16 %v2450
        %v4782 = vunpack.c.h.b16 %v2450
        %v4783 = vunpack.c.l.b16 %v2451
        %v4784 = vunpack.c.h.b16 %v2451
        %v4785 = vunpack.c.l.b16 %v2452
        %v4786 = vunpack.c.h.b16 %v2452
        %v4787 = vunpack.c.l.b16 %v2453
        %v4788 = vunpack.c.h.b16 %v2453
        %v4789 = vunpack.c.l.b16 %v2454
        %v4790 = vunpack.c.h.b16 %v2454
        %v4791 = vunpack.c.l.b16 %v2455
        %v4792 = vunpack.c.h.b16 %v2455
        %v4793 = vunpack.c.l.b16 %v2456
        %v4794 = vunpack.c.h.b16 %v2456
        %v4795 = vunpack.c.l.b16 %v2457
        %v4796 = vunpack.c.h.b16 %v2457
        %v4797 = vunpack.c.l.b16 %v2458
        %v4798 = vunpack.c.h.b16 %v2458
        %v4799 = vunpack.c.l.b16 %v2459
        %v4800 = vunpack.c.h.b16 %v2459
        %v4801 = vunpack.c.l.b16 %v2460
        %v4802 = vunpack.c.h.b16 %v2460
        %v4803 = vunpack.c.l.b16 %v2461
        %v4804 = vunpack.c.h.b16 %v2461
        %v4805 = vunpack.c.l.b16 %v2462
        %v4806 = vunpack.c.h.b16 %v2462
        %v4807 = vunpack.c.l.b16 %v2463
        %v4808 = vunpack.c.h.b16 %v2463
        %v4809 = vunpack.c.l.b16 %v2464
        %v4810 = vunpack.c.h.b16 %v2464
        %v4811 = vunpack.c.l.b16 %v2465
        %v4812 = vunpack.c.h.b16 %v2465
        %v4813 = vunpack.c.l.b16 %v2466
        %v4814 = vunpack.c.h.b16 %v2466
        %v4815 = vunpack.c.l.b16 %v2467
        %v4816 = vunpack.c.h.b16 %v2467
        %v4817 = vunpack.c.l.b16 %v2468
        %v4818 = vunpack.c.h.b16 %v2468
        %v4819 = vunpack.c.l.b16 %v2469
        %v4820 = vunpack.c.h.b16 %v2469
        %v4821 = vunpack.c.l.b16 %v2470
        %v4822 = vunpack.c.h.b16 %v2470
        %v4823 = vunpack.c.l.b16 %v2471
        %v4824 = vunpack.c.h.b16 %v2471
        %v4825 = vunpack.c.l.b16 %v2472
        %v4826 = vunpack.c.h.b16 %v2472
        %v4827 = vunpack.c.l.b16 %v2473
        %v4828 = vunpack.c.h.b16 %v2473
        %v4829 = vunpack.c.l.b16 %v2474
        %v4830 = vunpack.c.h.b16 %v2474
        %v4831 = vunpack.c.l.b16 %v2475
        %v4832 = vunpack.c.h.b16 %v2475
        %v4833 = vunpack.c.l.b16 %v2476
        %v4834 = vunpack.c.h.b16 %v2476
        %v4835 = vunpack.c.l.b16 %v2477
        %v4836 = vunpack.c.h.b16 %v2477
        %v4837 = vunpack.c.l.b16 %v2478
        %v4838 = vunpack.c.h.b16 %v2478
        %v4839 = vunpack.c.l.b16 %v2479
        %v4840 = vunpack.c.h.b16 %v2479
        %v4841 = vunpack.c.l.b16 %v2480
        %v4842 = vunpack.c.h.b16 %v2480
        %v4843 = vunpack.c.l.b16 %v2481
        %v4844 = vunpack.c.h.b16 %v2481
        %v4845 = vunpack.c.l.b16 %v2482
        %v4846 = vunpack.c.h.b16 %v2482
        %v4847 = vunpack.c.l.b16 %v2483
        %v4848 = vunpack.c.h.b16 %v2483
        %v4849 = vunpack.c.l.b16 %v2484
        %v4850 = vunpack.c.h.b16 %v2484
        %v4851 = vunpack.c.l.b16 %v2485
        %v4852 = vunpack.c.h.b16 %v2485
        %v4853 = vunpack.c.l.b16 %v2486
        %v4854 = vunpack.c.h.b16 %v2486
        %v4855 = vunpack.c.l.b16 %v2487
        %v4856 = vunpack.c.h.b16 %v2487
        %v4857 = vunpack.c.l.b16 %v2488
        %v4858 = vunpack.c.h.b16 %v2488
        %v4859 = vunpack.c.l.b16 %v2489
        %v4860 = vunpack.c.h.b16 %v2489
        %v4861 = vunpack.c.l.b16 %v2490
        %v4862 = vunpack.c.h.b16 %v2490
        %v4863 = vunpack.c.l.b16 %v2491
        %v4864 = vunpack.c.h.b16 %v2491
        %v4865 = vunpack.c.l.b16 %v2492
        %v4866 = vunpack.c.h.b16 %v2492
        %v4867 = vunpack.c.l.b16 %v2493
        %v4868 = vunpack.c.h.b16 %v2493
        %v4869 = vunpack.c.l.b16 %v2494
        %v4870 = vunpack.c.h.b16 %v2494
        %v4871 = vunpack.c.l.b16 %v2495
        %v4872 = vunpack.c.h.b16 %v2495
        %v4873 = vunpack.c.l.b16 %v2496
        %v4874 = vunpack.c.h.b16 %v2496
        %v4875 = vunpack.c.l.b16 %v2497
        %v4876 = vunpack.c.h.b16 %v2497
        %v4877 = vunpack.c.l.b16 %v2498
        %v4878 = vunpack.c.h.b16 %v2498
        %v4879 = vunpack.c.l.b16 %v2499
        %v4880 = vunpack.c.h.b16 %v2499
        %v4881 = vunpack.c.l.b16 %v2500
        %v4882 = vunpack.c.h.b16 %v2500
        %v4883 = vunpack.c.l.b16 %v2501
        %v4884 = vunpack.c.h.b16 %v2501
        %v4885 = vunpack.c.l.b16 %v2502
        %v4886 = vunpack.c.h.b16 %v2502
        %v4887 = vunpack.c.l.b16 %v2503
        %v4888 = vunpack.c.h.b16 %v2503
        %v4889 = vunpack.c.l.b16 %v2504
        %v4890 = vunpack.c.h.b16 %v2504
        %v4891 = vunpack.c.l.b16 %v2505
        %v4892 = vunpack.c.h.b16 %v2505
        %v4893 = vunpack.c.l.b16 %v2506
        %v4894 = vunpack.c.h.b16 %v2506
        %v4895 = vunpack.c.l.b16 %v2507
        %v4896 = vunpack.c.h.b16 %v2507
        %v4897 = vunpack.c.l.b16 %v2508
        %v4898 = vunpack.c.h.b16 %v2508
        %v4899 = vunpack.c.l.b16 %v2509
        %v4900 = vunpack.c.h.b16 %v2509
        %v4901 = vunpack.c.l.b16 %v2510
        %v4902 = vunpack.c.h.b16 %v2510
        %v4903 = vunpack.c.l.b16 %v2511
        %v4904 = vunpack.c.h.b16 %v2511
        %v4905 = vunpack.c.l.b16 %v2512
        %v4906 = vunpack.c.h.b16 %v2512
        %v4907 = vunpack.c.l.b16 %v2513
        %v4908 = vunpack.c.h.b16 %v2513
        %v4909 = vunpack.c.l.b16 %v2514
        %v4910 = vunpack.c.h.b16 %v2514
        %v4911 = vunpack.c.l.b16 %v2515
        %v4912 = vunpack.c.h.b16 %v2515
        %v4913 = vunpack.c.l.b16 %v2516
        %v4914 = vunpack.c.h.b16 %v2516
        %v4915 = vunpack.c.l.b16 %v2517
        %v4916 = vunpack.c.h.b16 %v2517
        %v4917 = vunpack.c.l.b16 %v2518
        %v4918 = vunpack.c.h.b16 %v2518
        %v4919 = vunpack.c.l.b16 %v2519
        %v4920 = vunpack.c.h.b16 %v2519
        %v4921 = vunpack.c.l.b16 %v2520
        %v4922 = vunpack.c.h.b16 %v2520
        %v4923 = vunpack.c.l.b16 %v2521
        %v4924 = vunpack.c.h.b16 %v2521
        %v4925 = vunpack.c.l.b16 %v2522
        %v4926 = vunpack.c.h.b16 %v2522
        %v4927 = vunpack.c.l.b16 %v2523
        %v4928 = vunpack.c.h.b16 %v2523
        %v4929 = vunpack.c.l.b16 %v2524
        %v4930 = vunpack.c.h.b16 %v2524
        %v4931 = vunpack.c.l.b16 %v2525
        %v4932 = vunpack.c.h.b16 %v2525
        %v4933 = vunpack.c.l.b16 %v2526
        %v4934 = vunpack.c.h.b16 %v2526
        %v4935 = vunpack.c.l.b16 %v2527
        %v4936 = vunpack.c.h.b16 %v2527
        %v4937 = vunpack.c.l.b16 %v2528
        %v4938 = vunpack.c.h.b16 %v2528
        %v4939 = vunpack.c.l.b16 %v2529
        %v4940 = vunpack.c.h.b16 %v2529
        %v4941 = vunpack.c.l.b16 %v2530
        %v4942 = vunpack.c.h.b16 %v2530
        %v4943 = vunpack.c.l.b16 %v2531
        %v4944 = vunpack.c.h.b16 %v2531
        %v4945 = vunpack.c.l.b16 %v2532
        %v4946 = vunpack.c.h.b16 %v2532
        %v4947 = vunpack.c.l.b16 %v2533
        %v4948 = vunpack.c.h.b16 %v2533
        %v4949 = vunpack.c.l.b16 %v2534
        %v4950 = vunpack.c.h.b16 %v2534
        %v4951 = vunpack.c.l.b16 %v2535
        %v4952 = vunpack.c.h.b16 %v2535
        %v4953 = vunpack.c.l.b16 %v2536
        %v4954 = vunpack.c.h.b16 %v2536
        %v4955 = vunpack.c.l.b16 %v2537
        %v4956 = vunpack.c.h.b16 %v2537
        %v4957 = vunpack.c.l.b16 %v2538
        %v4958 = vunpack.c.h.b16 %v2538
        %v4959 = vunpack.c.l.b16 %v2539
        %v4960 = vunpack.c.h.b16 %v2539
        %v4961 = vunpack.c.l.b16 %v2540
        %v4962 = vunpack.c.h.b16 %v2540
        %v4963 = vunpack.c.l.b16 %v2541
        %v4964 = vunpack.c.h.b16 %v2541
        %v4965 = vunpack.c.l.b16 %v2542
        %v4966 = vunpack.c.h.b16 %v2542
        %v4967 = vunpack.c.l.b16 %v2543
        %v4968 = vunpack.c.h.b16 %v2543
        %v4969 = vunpack.c.l.b16 %v2544
        %v4970 = vunpack.c.h.b16 %v2544
        %v4971 = vunpack.c.l.b16 %v2545
        %v4972 = vunpack.c.h.b16 %v2545
        %v4973 = vunpack.c.l.b16 %v2546
        %v4974 = vunpack.c.h.b16 %v2546
        %v4975 = vunpack.c.l.b16 %v2547
        %v4976 = vunpack.c.h.b16 %v2547
        %v4977 = vunpack.c.l.b16 %v2548
        %v4978 = vunpack.c.h.b16 %v2548
        %v4979 = vunpack.c.l.b16 %v2549
        %v4980 = vunpack.c.h.b16 %v2549
        %v4981 = vunpack.c.l.b16 %v2550
        %v4982 = vunpack.c.h.b16 %v2550
        %v4983 = vunpack.c.l.b16 %v2551
        %v4984 = vunpack.c.h.b16 %v2551
        %v4985 = vunpack.c.l.b16 %v2552
        %v4986 = vunpack.c.h.b16 %v2552
        %v4987 = vunpack.c.l.b16 %v2553
        %v4988 = vunpack.c.h.b16 %v2553
        %v4989 = vunpack.c.l.b16 %v2554
        %v4990 = vunpack.c.h.b16 %v2554
        %v4991 = vunpack.c.l.b16 %v2555
        %v4992 = vunpack.c.h.b16 %v2555
        %v4993 = vunpack.c.l.b16 %v2556
        %v4994 = vunpack.c.h.b16 %v2556
        %v4995 = vunpack.c.l.b16 %v2557
        %v4996 = vunpack.c.h.b16 %v2557
        %v4997 = vunpack.c.l.b16 %v2558
        %v4998 = vunpack.c.h.b16 %v2558
        %v4999 = vunpack.c.l.b16 %v2559
        %v5000 = vunpack.c.h.b16 %v2559
        %v5001 = vunpack.c.l.b16 %v2560
        %v5002 = vunpack.c.h.b16 %v2560
        %v5003 = vunpack.c.l.b16 %v2561
        %v5004 = vunpack.c.h.b16 %v2561
        %v5005 = vunpack.c.l.b16 %v2562
        %v5006 = vunpack.c.h.b16 %v2562
        %v5007 = vunpack.c.l.b16 %v2563
        %v5008 = vunpack.c.h.b16 %v2563
        %v5009 = vunpack.c.l.b16 %v2564
        %v5010 = vunpack.c.h.b16 %v2564
        %v5011 = vunpack.c.l.b16 %v2565
        %v5012 = vunpack.c.h.b16 %v2565
        %v5013 = vunpack.c.l.b16 %v2566
        %v5014 = vunpack.c.h.b16 %v2566
        %v5015 = vunpack.c.l.b16 %v2567
        %v5016 = vunpack.c.h.b16 %v2567
        %v5017 = vunpack.c.l.b16 %v2568
        %v5018 = vunpack.c.h.b16 %v2568
        %v5019 = vunpack.c.l.b16 %v2569
        %v5020 = vunpack.c.h.b16 %v2569
        %v5021 = vunpack.c.l.b16 %v2570
        %v5022 = vunpack.c.h.b16 %v2570
        %v5023 = vunpack.c.l.b16 %v2571
        %v5024 = vunpack.c.h.b16 %v2571
        %v5025 = vunpack.c.l.b16 %v2572
        %v5026 = vunpack.c.h.b16 %v2572
        %v5027 = vunpack.c.l.b16 %v2573
        %v5028 = vunpack.c.h.b16 %v2573
        %v5029 = vunpack.c.l.b16 %v2574
        %v5030 = vunpack.c.h.b16 %v2574
        %v5031 = vunpack.c.l.b16 %v2575
        %v5032 = vunpack.c.h.b16 %v2575
        %v5033 = vunpack.c.l.b16 %v2576
        %v5034 = vunpack.c.h.b16 %v2576
        %v5035 = vunpack.c.l.b16 %v2577
        %v5036 = vunpack.c.h.b16 %v2577
        %v5037 = vunpack.c.l.b16 %v2578
        %v5038 = vunpack.c.h.b16 %v2578
        %v5039 = vunpack.c.l.b16 %v2579
        %v5040 = vunpack.c.h.b16 %v2579
        %v5041 = vunpack.c.l.b16 %v2580
        %v5042 = vunpack.c.h.b16 %v2580
        %v5043 = vunpack.c.l.b16 %v2581
        %v5044 = vunpack.c.h.b16 %v2581
        %v5045 = vunpack.c.l.b16 %v2582
        %v5046 = vunpack.c.h.b16 %v2582
        %v5047 = vunpack.c.l.b16 %v2583
        %v5048 = vunpack.c.h.b16 %v2583
        %v5049 = vunpack.c.l.b16 %v2584
        %v5050 = vunpack.c.h.b16 %v2584
        %v5051 = vunpack.c.l.b16 %v2585
        %v5052 = vunpack.c.h.b16 %v2585
        %v5053 = vunpack.c.l.b16 %v2586
        %v5054 = vunpack.c.h.b16 %v2586
        %v5055 = vunpack.c.l.b16 %v2587
        %v5056 = vunpack.c.h.b16 %v2587
        %v5057 = vunpack.c.l.b16 %v2588
        %v5058 = vunpack.c.h.b16 %v2588
        %v5059 = vunpack.c.l.b16 %v2589
        %v5060 = vunpack.c.h.b16 %v2589
        %v5061 = vunpack.c.l.b16 %v2590
        %v5062 = vunpack.c.h.b16 %v2590
        %v5063 = vunpack.c.l.b16 %v2591
        %v5064 = vunpack.c.h.b16 %v2591
        %v5065 = vunpack.c.l.b16 %v2592
        %v5066 = vunpack.c.h.b16 %v2592
        %v5067 = vunpack.c.l.b16 %v2593
        %v5068 = vunpack.c.h.b16 %v2593
        %v5069 = vunpack.c.l.b16 %v2594
        %v5070 = vunpack.c.h.b16 %v2594
        %v5071 = vunpack.c.l.b16 %v2595
        %v5072 = vunpack.c.h.b16 %v2595
        %v5073 = vunpack.c.l.b16 %v2596
        %v5074 = vunpack.c.h.b16 %v2596
        %v5075 = vunpack.c.l.b16 %v2597
        %v5076 = vunpack.c.h.b16 %v2597
        %v5077 = vunpack.c.l.b16 %v2598
        %v5078 = vunpack.c.h.b16 %v2598
        %v5079 = vunpack.c.l.b16 %v2599
        %v5080 = vunpack.c.h.b16 %v2599
        %v5081 = vunpack.c.l.b16 %v2600
        %v5082 = vunpack.c.h.b16 %v2600
        %v5083 = vunpack.c.l.b16 %v2601
        %v5084 = vunpack.c.h.b16 %v2601
        %v5085 = vunpack.c.l.b16 %v2602
        %v5086 = vunpack.c.h.b16 %v2602
        %v5087 = vunpack.c.l.b16 %v2603
        %v5088 = vunpack.c.h.b16 %v2603
        %v5089 = vunpack.c.l.b16 %v2604
        %v5090 = vunpack.c.h.b16 %v2604
        %v5091 = vunpack.c.l.b16 %v2605
        %v5092 = vunpack.c.h.b16 %v2605
        %v5093 = vunpack.c.l.b16 %v2606
        %v5094 = vunpack.c.h.b16 %v2606
        %v5095 = vunpack.c.l.b16 %v2607
        %v5096 = vunpack.c.h.b16 %v2607
        %v5097 = vunpack.c.l.b16 %v2608
        %v5098 = vunpack.c.h.b16 %v2608
        %v5099 = vunpack.c.l.b16 %v2609
        %v5100 = vunpack.c.h.b16 %v2609
        %v5101 = vunpack.c.l.b16 %v2610
        %v5102 = vunpack.c.h.b16 %v2610
        %v5103 = vunpack.c.l.b16 %v2611
        %v5104 = vunpack.c.h.b16 %v2611
        %v5105 = vunpack.c.l.b16 %v2612
        %v5106 = vunpack.c.h.b16 %v2612
        %v5107 = vunpack.c.l.b16 %v2613
        %v5108 = vunpack.c.h.b16 %v2613
        %v5109 = vunpack.c.l.b16 %v2614
        %v5110 = vunpack.c.h.b16 %v2614
        %v5111 = vunpack.c.l.b16 %v2615
        %v5112 = vunpack.c.h.b16 %v2615
        %v5113 = vunpack.c.l.b16 %v2616
        %v5114 = vunpack.c.h.b16 %v2616
        %v5115 = vunpack.c.l.b16 %v2617
        %v5116 = vunpack.c.h.b16 %v2617
        %v5117 = vunpack.c.l.b16 %v2618
        %v5118 = vunpack.c.h.b16 %v2618
        %v5119 = vunpack.c.l.b16 %v2619
        %v5120 = vunpack.c.h.b16 %v2619
        %v5121 = vunpack.c.l.b16 %v2620
        %v5122 = vunpack.c.h.b16 %v2620
        %v5123 = vunpack.c.l.b16 %v2621
        %v5124 = vunpack.c.h.b16 %v2621
        %v5125 = vunpack.c.l.b16 %v2622
        %v5126 = vunpack.c.h.b16 %v2622
        %v5127 = vunpack.c.l.b16 %v2623
        %v5128 = vunpack.c.h.b16 %v2623
        %v5129 = vunpack.c.l.b16 %v2624
        %v5130 = vunpack.c.h.b16 %v2624
        %v5131 = vunpack.c.l.b16 %v2625
        %v5132 = vunpack.c.h.b16 %v2625
        %v5133 = vunpack.c.l.b16 %v2626
        %v5134 = vunpack.c.h.b16 %v2626
        %v5135 = vunpack.c.l.b16 %v2627
        %v5136 = vunpack.c.h.b16 %v2627
        %v5137 = vunpack.c.l.b16 %v2628
        %v5138 = vunpack.c.h.b16 %v2628
        %v5139 = vunpack.c.l.b16 %v2629
        %v5140 = vunpack.c.h.b16 %v2629
        %v5141 = vunpack.c.l.b16 %v2630
        %v5142 = vunpack.c.h.b16 %v2630
        %v5143 = vunpack.c.l.b16 %v2631
        %v5144 = vunpack.c.h.b16 %v2631
        %v5145 = vunpack.c.l.b16 %v2632
        %v5146 = vunpack.c.h.b16 %v2632
        %v5147 = vunpack.c.l.b16 %v2633
        %v5148 = vunpack.c.h.b16 %v2633
        %v5149 = vunpack.c.l.b16 %v2634
        %v5150 = vunpack.c.h.b16 %v2634
        %v5151 = vunpack.c.l.b16 %v2635
        %v5152 = vunpack.c.h.b16 %v2635
        %v5153 = vunpack.c.l.b16 %v2636
        %v5154 = vunpack.c.h.b16 %v2636
        %v5155 = vunpack.c.l.b16 %v2637
        %v5156 = vunpack.c.h.b16 %v2637
        %v5157 = vunpack.c.l.b16 %v2638
        %v5158 = vunpack.c.h.b16 %v2638
        %v5159 = vunpack.c.l.b16 %v2639
        %v5160 = vunpack.c.h.b16 %v2639
        %v5161 = vunpack.c.l.b16 %v2640
        %v5162 = vunpack.c.h.b16 %v2640
        %v5163 = vunpack.c.l.b16 %v2641
        %v5164 = vunpack.c.h.b16 %v2641
        %v5165 = vunpack.c.l.b16 %v2642
        %v5166 = vunpack.c.h.b16 %v2642
        %v5167 = vunpack.c.l.b16 %v2643
        %v5168 = vunpack.c.h.b16 %v2643
        %v5169 = vunpack.c.l.b16 %v2644
        %v5170 = vunpack.c.h.b16 %v2644
        %v5171 = vunpack.c.l.b16 %v2645
        %v5172 = vunpack.c.h.b16 %v2645
        %v5173 = vunpack.c.l.b16 %v2646
        %v5174 = vunpack.c.h.b16 %v2646
        %v5175 = vunpack.c.l.b16 %v2647
        %v5176 = vunpack.c.h.b16 %v2647
        %v5177 = vunpack.c.l.b16 %v2648
        %v5178 = vunpack.c.h.b16 %v2648
        %v5179 = vunpack.c.l.b16 %v2649
        %v5180 = vunpack.c.h.b16 %v2649
        %v5181 = vunpack.c.l.b16 %v2650
        %v5182 = vunpack.c.h.b16 %v2650
        %v5183 = vunpack.c.l.b16 %v2651
        %v5184 = vunpack.c.h.b16 %v2651
        %v5185 = vunpack.c.l.b16 %v2652
        %v5186 = vunpack.c.h.b16 %v2652
        %v5187 = vunpack.c.l.b16 %v2653
        %v5188 = vunpack.c.h.b16 %v2653
        %v5189 = vunpack.c.l.b16 %v2654
        %v5190 = vunpack.c.h.b16 %v2654
        %v5191 = vunpack.c.l.b16 %v2655
        %v5192 = vunpack.c.h.b16 %v2655
        %v5193 = vunpack.c.l.b16 %v2656
        %v5194 = vunpack.c.h.b16 %v2656
        %v5195 = vunpack.c.l.b16 %v2657
        %v5196 = vunpack.c.h.b16 %v2657
        %v5197 = vunpack.c.l.b16 %v2658
        %v5198 = vunpack.c.h.b16 %v2658
        %v5199 = vunpack.c.l.b16 %v2659
        %v5200 = vunpack.c.h.b16 %v2659
        %v5201 = vunpack.c.l.b16 %v2660
        %v5202 = vunpack.c.h.b16 %v2660
        %v5203 = vunpack.c.l.b16 %v2661
        %v5204 = vunpack.c.h.b16 %v2661
        %v5205 = vunpack.c.l.b16 %v2662
        %v5206 = vunpack.c.h.b16 %v2662
        %v5207 = vunpack.c.l.b16 %v2663
        %v5208 = vunpack.c.h.b16 %v2663
        %v5209 = vunpack.c.l.b16 %v2664
        %v5210 = vunpack.c.h.b16 %v2664
        %v5211 = vunpack.c.l.b16 %v2665
        %v5212 = vunpack.c.h.b16 %v2665
        %v5213 = vunpack.c.l.b16 %v2666
        %v5214 = vunpack.c.h.b16 %v2666
        %v5215 = vunpack.c.l.b16 %v2667
        %v5216 = vunpack.c.h.b16 %v2667
        %v5217 = vunpack.c.l.b16 %v2668
        %v5218 = vunpack.c.h.b16 %v2668
        %v5219 = vunpack.c.l.b16 %v2669
        %v5220 = vunpack.c.h.b16 %v2669
        %v5221 = vunpack.c.l.b16 %v2670
        %v5222 = vunpack.c.h.b16 %v2670
        %v5223 = vunpack.c.l.b16 %v2671
        %v5224 = vunpack.c.h.b16 %v2671
        %v5225 = vunpack.c.l.b16 %v2672
        %v5226 = vunpack.c.h.b16 %v2672
        %v5227 = vunpack.c.l.b16 %v2673
        %v5228 = vunpack.c.h.b16 %v2673
        %v5229 = vunpack.c.l.b16 %v2674
        %v5230 = vunpack.c.h.b16 %v2674
        %v5231 = vunpack.c.l.b16 %v2675
        %v5232 = vunpack.c.h.b16 %v2675
        %v5233 = vunpack.c.l.b16 %v2676
        %v5234 = vunpack.c.h.b16 %v2676
        %v5235 = vunpack.c.l.b16 %v2677
        %v5236 = vunpack.c.h.b16 %v2677
        %v5237 = vunpack.c.l.b16 %v2678
        %v5238 = vunpack.c.h.b16 %v2678
        %v5239 = vunpack.c.l.b16 %v2679
        %v5240 = vunpack.c.h.b16 %v2679
        %v5241 = vunpack.c.l.b16 %v2680
        %v5242 = vunpack.c.h.b16 %v2680
        %v5243 = vunpack.c.l.b16 %v2681
        %v5244 = vunpack.c.h.b16 %v2681
        %v5245 = vunpack.c.l.b16 %v2682
        %v5246 = vunpack.c.h.b16 %v2682
        %v5247 = vunpack.c.l.b16 %v2683
        %v5248 = vunpack.c.h.b16 %v2683
        %v5249 = vunpack.c.l.b16 %v2684
        %v5250 = vunpack.c.h.b16 %v2684
        %v5251 = vunpack.c.l.b16 %v2685
        %v5252 = vunpack.c.h.b16 %v2685
        %v5253 = vunpack.c.l.b16 %v2686
        %v5254 = vunpack.c.h.b16 %v2686
        %v5255 = vunpack.c.l.b16 %v2687
        %v5256 = vunpack.c.h.b16 %v2687
        %v5257 = vunpack.c.l.b16 %v2688
        %v5258 = vunpack.c.h.b16 %v2688
        %v5259 = vunpack.c.l.b16 %v2689
        %v5260 = vunpack.c.h.b16 %v2689
        %v5261 = vunpack.c.l.b16 %v2690
        %v5262 = vunpack.c.h.b16 %v2690
        %v5263 = vunpack.c.l.b16 %v2691
        %v5264 = vunpack.c.h.b16 %v2691
        %v5265 = vunpack.c.l.b16 %v2692
        %v5266 = vunpack.c.h.b16 %v2692
        %v5267 = vunpack.c.l.b16 %v2693
        %v5268 = vunpack.c.h.b16 %v2693
        %v5269 = vunpack.c.l.b16 %v2694
        %v5270 = vunpack.c.h.b16 %v2694
        %v5271 = vunpack.c.l.b16 %v2695
        %v5272 = vunpack.c.h.b16 %v2695
        %v5273 = vunpack.c.l.b16 %v2696
        %v5274 = vunpack.c.h.b16 %v2696
        %v5275 = vunpack.c.l.b16 %v2697
        %v5276 = vunpack.c.h.b16 %v2697
        %v5277 = vunpack.c.l.b16 %v2698
        %v5278 = vunpack.c.h.b16 %v2698
        %v5279 = vunpack.c.l.b16 %v2699
        %v5280 = vunpack.c.h.b16 %v2699
        %v5281 = vunpack.c.l.b16 %v2700
        %v5282 = vunpack.c.h.b16 %v2700
        %v5283 = vunpack.c.l.b16 %v2701
        %v5284 = vunpack.c.h.b16 %v2701
        %v5285 = vunpack.c.l.b16 %v2702
        %v5286 = vunpack.c.h.b16 %v2702
        %v5287 = vunpack.c.l.b16 %v2703
        %v5288 = vunpack.c.h.b16 %v2703
        %v5289 = vunpack.c.l.b16 %v2704
        %v5290 = vunpack.c.h.b16 %v2704
        %v5291 = vunpack.c.l.b16 %v2705
        %v5292 = vunpack.c.h.b16 %v2705
        %v5293 = vunpack.c.l.b16 %v2706
        %v5294 = vunpack.c.h.b16 %v2706
        %v5295 = vunpack.c.l.b16 %v2707
        %v5296 = vunpack.c.h.b16 %v2707
        %v5297 = vunpack.c.l.b16 %v2708
        %v5298 = vunpack.c.h.b16 %v2708
        %v5299 = vunpack.c.l.b16 %v2709
        %v5300 = vunpack.c.h.b16 %v2709
        %v5301 = vunpack.c.l.b16 %v2710
        %v5302 = vunpack.c.h.b16 %v2710
        %v5303 = vunpack.c.l.b16 %v2711
        %v5304 = vunpack.c.h.b16 %v2711
        %v5305 = vunpack.c.l.b16 %v2712
        %v5306 = vunpack.c.h.b16 %v2712
        %v5307 = vunpack.c.l.b16 %v2713
        %v5308 = vunpack.c.h.b16 %v2713
        %v5309 = vunpack.c.l.b16 %v2714
        %v5310 = vunpack.c.h.b16 %v2714
        %v5311 = vunpack.c.l.b16 %v2715
        %v5312 = vunpack.c.h.b16 %v2715
        %v5313 = vunpack.c.l.b16 %v2716
        %v5314 = vunpack.c.h.b16 %v2716
        %v5315 = vunpack.c.l.b16 %v2717
        %v5316 = vunpack.c.h.b16 %v2717
        %v5317 = vunpack.c.l.b16 %v2718
        %v5318 = vunpack.c.h.b16 %v2718
        %v5319 = vunpack.c.l.b16 %v2719
        %v5320 = vunpack.c.h.b16 %v2719
        %v5321 = vunpack.c.l.b16 %v2720
        %v5322 = vunpack.c.h.b16 %v2720
        %v5323 = vunpack.c.l.b16 %v2721
        %v5324 = vunpack.c.h.b16 %v2721
        %v5325 = vunpack.c.l.b16 %v2722
        %v5326 = vunpack.c.h.b16 %v2722
        %v5327 = vunpack.c.l.b16 %v2723
        %v5328 = vunpack.c.h.b16 %v2723
        %v5329 = vunpack.c.l.b16 %v2724
        %v5330 = vunpack.c.h.b16 %v2724
        %v5331 = vunpack.c.l.b16 %v2725
        %v5332 = vunpack.c.h.b16 %v2725
        %v5333 = vunpack.c.l.b16 %v2726
        %v5334 = vunpack.c.h.b16 %v2726
        %v5335 = vunpack.c.l.b16 %v2727
        %v5336 = vunpack.c.h.b16 %v2727
        %v5337 = vunpack.c.l.b16 %v2728
        %v5338 = vunpack.c.h.b16 %v2728
        %v5339 = vunpack.c.l.b16 %v2729
        %v5340 = vunpack.c.h.b16 %v2729
        %v5341 = vunpack.c.l.b16 %v2730
        %v5342 = vunpack.c.h.b16 %v2730
        %v5343 = vunpack.c.l.b16 %v2731
        %v5344 = vunpack.c.h.b16 %v2731
        %v5345 = vunpack.c.l.b16 %v2732
        %v5346 = vunpack.c.h.b16 %v2732
        %v5347 = vunpack.c.l.b16 %v2733
        %v5348 = vunpack.c.h.b16 %v2733
        %v5349 = vunpack.c.l.b16 %v2734
        %v5350 = vunpack.c.h.b16 %v2734
        %v5351 = vunpack.c.l.b16 %v2735
        %v5352 = vunpack.c.h.b16 %v2735
        %v5353 = vunpack.c.l.b16 %v2736
        %v5354 = vunpack.c.h.b16 %v2736
        %v5355 = vunpack.c.l.b16 %v2737
        %v5356 = vunpack.c.h.b16 %v2737
        %v5357 = vunpack.c.l.b16 %v2738
        %v5358 = vunpack.c.h.b16 %v2738
        %v5359 = vunpack.c.l.b16 %v2739
        %v5360 = vunpack.c.h.b16 %v2739
        %v5361 = vunpack.c.l.b16 %v2740
        %v5362 = vunpack.c.h.b16 %v2740
        %v5363 = vunpack.c.l.b16 %v2741
        %v5364 = vunpack.c.h.b16 %v2741
        %v5365 = vunpack.c.l.b16 %v2742
        %v5366 = vunpack.c.h.b16 %v2742
        %v5367 = vunpack.c.l.b16 %v2743
        %v5368 = vunpack.c.h.b16 %v2743
        %v5369 = vunpack.c.l.b16 %v2744
        %v5370 = vunpack.c.h.b16 %v2744
        %v5371 = vunpack.c.l.b16 %v2745
        %v5372 = vunpack.c.h.b16 %v2745
        %v5373 = vunpack.c.l.b16 %v2746
        %v5374 = vunpack.c.h.b16 %v2746
        %v5375 = vunpack.c.l.b16 %v2747
        %v5376 = vunpack.c.h.b16 %v2747
        %v5377 = vunpack.c.l.b16 %v2748
        %v5378 = vunpack.c.h.b16 %v2748
        %v5379 = vunpack.c.l.b16 %v2749
        %v5380 = vunpack.c.h.b16 %v2749
        %v5381 = vunpack.c.l.b16 %v2750
        %v5382 = vunpack.c.h.b16 %v2750
        %v5383 = vunpack.c.l.b16 %v2751
        %v5384 = vunpack.c.h.b16 %v2751
        %v5385 = vunpack.c.l.b16 %v2752
        %v5386 = vunpack.c.h.b16 %v2752
        %v5387 = vunpack.c.l.b16 %v2753
        %v5388 = vunpack.c.h.b16 %v2753
        %v5389 = vunpack.c.l.b16 %v2754
        %v5390 = vunpack.c.h.b16 %v2754
        %v5391 = vunpack.c.l.b16 %v2755
        %v5392 = vunpack.c.h.b16 %v2755
        %v5393 = vunpack.c.l.b16 %v2756
        %v5394 = vunpack.c.h.b16 %v2756
        %v5395 = vunpack.c.l.b16 %v2757
        %v5396 = vunpack.c.h.b16 %v2757
        %v5397 = vunpack.c.l.b16 %v2758
        %v5398 = vunpack.c.h.b16 %v2758
        %v5399 = vunpack.c.l.b16 %v2759
        %v5400 = vunpack.c.h.b16 %v2759
        %v5401 = vunpack.c.l.b16 %v2760
        %v5402 = vunpack.c.h.b16 %v2760
        %v5403 = vunpack.c.l.b16 %v2761
        %v5404 = vunpack.c.h.b16 %v2761
        %v5405 = vunpack.c.l.b16 %v2762
        %v5406 = vunpack.c.h.b16 %v2762
        %v5407 = vunpack.c.l.b16 %v2763
        %v5408 = vunpack.c.h.b16 %v2763
        %v5409 = vunpack.c.l.b16 %v2764
        %v5410 = vunpack.c.h.b16 %v2764
        %v5411 = vunpack.c.l.b16 %v2765
        %v5412 = vunpack.c.h.b16 %v2765
        %v5413 = vunpack.c.l.b16 %v2766
        %v5414 = vunpack.c.h.b16 %v2766
        %v5415 = vunpack.c.l.b16 %v2767
        %v5416 = vunpack.c.h.b16 %v2767
        %v5417 = vunpack.c.l.b16 %v2768
        %v5418 = vunpack.c.h.b16 %v2768
        %v5419 = vunpack.c.l.b16 %v2769
        %v5420 = vunpack.c.h.b16 %v2769
        %v5421 = vunpack.c.l.b16 %v2770
        %v5422 = vunpack.c.h.b16 %v2770
        %v5423 = vunpack.c.l.b16 %v2771
        %v5424 = vunpack.c.h.b16 %v2771
        %v5425 = vunpack.c.l.b16 %v2772
        %v5426 = vunpack.c.h.b16 %v2772
        %v5427 = vunpack.c.l.b16 %v2773
        %v5428 = vunpack.c.h.b16 %v2773
        %v5429 = vunpack.c.l.b16 %v2774
        %v5430 = vunpack.c.h.b16 %v2774
        %v5431 = vunpack.c.l.b16 %v2775
        %v5432 = vunpack.c.h.b16 %v2775
        %v5433 = vunpack.c.l.b16 %v2776
        %v5434 = vunpack.c.h.b16 %v2776
        %v5435 = vunpack.c.l.b16 %v2777
        %v5436 = vunpack.c.h.b16 %v2777
        %v5437 = vunpack.c.l.b16 %v2778
        %v5438 = vunpack.c.h.b16 %v2778
        %v5439 = vunpack.c.l.b16 %v2779
        %v5440 = vunpack.c.h.b16 %v2779
        %v5441 = vpack.c.b16 %v3729, %v3721
        %v5442 = vpack.c.b16 %v3730, %v3722
        %v5443 = vpack.c.b16 %v3731, %v3723
        %v5444 = vpack.c.b16 %v3732, %v3724
        %v5445 = vpack.c.b16 %v3733, %v3725
        %v5446 = vpack.c.b16 %v3734, %v3726
        %v5447 = vpack.c.b16 %v3735, %v3727
        %v5448 = vpack.c.b16 %v3736, %v3728
        %v5449 = vpack.c.b16 %v3745, %v3737
        %v5450 = vpack.c.b16 %v3746, %v3738
        %v5451 = vpack.c.b16 %v3747, %v3739
        %v5452 = vpack.c.b16 %v3748, %v3740
        %v5453 = vpack.c.b16 %v3749, %v3741
        %v5454 = vpack.c.b16 %v3750, %v3742
        %v5455 = vpack.c.b16 %v3751, %v3743
        %v5456 = vpack.c.b16 %v3752, %v3744
        %v5457 = vpack.c.b16 %v3761, %v3753
        %v5458 = vpack.c.b16 %v3762, %v3754
        %v5459 = vpack.c.b16 %v3763, %v3755
        %v5460 = vpack.c.b16 %v3764, %v3756
        %v5461 = vpack.c.b16 %v3765, %v3757
        %v5462 = vpack.c.b16 %v3766, %v3758
        %v5463 = vpack.c.b16 %v3767, %v3759
        %v5464 = vpack.c.b16 %v3768, %v3760
        %v5465 = vpack.c.b16 %v3777, %v3769
        %v5466 = vpack.c.b16 %v3778, %v3770
        %v5467 = vpack.c.b16 %v3779, %v3771
        %v5468 = vpack.c.b16 %v3780, %v3772
        %v5469 = vpack.c.b16 %v3781, %v3773
        %v5470 = vpack.c.b16 %v3782, %v3774
        %v5471 = vpack.c.b16 %v3783, %v3775
        %v5472 = vpack.c.b16 %v3784, %v3776
        %v5473 = vpack.c.b16 %v3793, %v3785
        %v5474 = vpack.c.b16 %v3794, %v3786
        %v5475 = vpack.c.b16 %v3795, %v3787
        %v5476 = vpack.c.b16 %v3796, %v3788
        %v5477 = vpack.c.b16 %v3797, %v3789
        %v5478 = vpack.c.b16 %v3798, %v3790
        %v5479 = vpack.c.b16 %v3799, %v3791
        %v5480 = vpack.c.b16 %v3800, %v3792
        %v5481 = vpack.c.b16 %v3809, %v3801
        %v5482 = vpack.c.b16 %v3810, %v3802
        %v5483 = vpack.c.b16 %v3811, %v3803
        %v5484 = vpack.c.b16 %v3812, %v3804
        %v5485 = vpack.c.b16 %v3813, %v3805
        %v5486 = vpack.c.b16 %v3814, %v3806
        %v5487 = vpack.c.b16 %v3815, %v3807
        %v5488 = vpack.c.b16 %v3816, %v3808
        %v5489 = vpack.c.b16 %v3825, %v3817
        %v5490 = vpack.c.b16 %v3826, %v3818
        %v5491 = vpack.c.b16 %v3827, %v3819
        %v5492 = vpack.c.b16 %v3828, %v3820
        %v5493 = vpack.c.b16 %v3829, %v3821
        %v5494 = vpack.c.b16 %v3830, %v3822
        %v5495 = vpack.c.b16 %v3831, %v3823
        %v5496 = vpack.c.b16 %v3832, %v3824
        %v5497 = vpack.c.b16 %v3841, %v3833
        %v5498 = vpack.c.b16 %v3842, %v3834
        %v5499 = vpack.c.b16 %v3843, %v3835
        %v5500 = vpack.c.b16 %v3844, %v3836
        %v5501 = vpack.c.b16 %v3845, %v3837
        %v5502 = vpack.c.b16 %v3846, %v3838
        %v5503 = vpack.c.b16 %v3847, %v3839
        %v5504 = vpack.c.b16 %v3848, %v3840
        %v5505 = vpack.c.b16 %v3857, %v3849
        %v5506 = vpack.c.b16 %v3858, %v3850
        %v5507 = vpack.c.b16 %v3859, %v3851
        %v5508 = vpack.c.b16 %v3860, %v3852
        %v5509 = vpack.c.b16 %v3861, %v3853
        %v5510 = vpack.c.b16 %v3862, %v3854
        %v5511 = vpack.c.b16 %v3863, %v3855
        %v5512 = vpack.c.b16 %v3864, %v3856
        %v5513 = vpack.c.b16 %v3873, %v3865
        %v5514 = vpack.c.b16 %v3874, %v3866
        %v5515 = vpack.c.b16 %v3875, %v3867
        %v5516 = vpack.c.b16 %v3876, %v3868
        %v5517 = vpack.c.b16 %v3877, %v3869
        %v5518 = vpack.c.b16 %v3878, %v3870
        %v5519 = vpack.c.b16 %v3879, %v3871
        %v5520 = vpack.c.b16 %v3880, %v3872
        %v5521 = vpack.c.b16 %v3889, %v3881
        %v5522 = vpack.c.b16 %v3890, %v3882
        %v5523 = vpack.c.b16 %v3891, %v3883
        %v5524 = vpack.c.b16 %v3892, %v3884
        %v5525 = vpack.c.b16 %v3893, %v3885
        %v5526 = vpack.c.b16 %v3894, %v3886
        %v5527 = vpack.c.b16 %v3895, %v3887
        %v5528 = vpack.c.b16 %v3896, %v3888
        %v5529 = vpack.c.b16 %v3905, %v3897
        %v5530 = vpack.c.b16 %v3906, %v3898
        %v5531 = vpack.c.b16 %v3907, %v3899
        %v5532 = vpack.c.b16 %v3908, %v3900
        %v5533 = vpack.c.b16 %v3909, %v3901
        %v5534 = vpack.c.b16 %v3910, %v3902
        %v5535 = vpack.c.b16 %v3911, %v3903
        %v5536 = vpack.c.b16 %v3912, %v3904
        %v5537 = vpack.c.b16 %v3921, %v3913
        %v5538 = vpack.c.b16 %v3922, %v3914
        %v5539 = vpack.c.b16 %v3923, %v3915
        %v5540 = vpack.c.b16 %v3924, %v3916
        %v5541 = vpack.c.b16 %v3925, %v3917
        %v5542 = vpack.c.b16 %v3926, %v3918
        %v5543 = vpack.c.b16 %v3927, %v3919
        %v5544 = vpack.c.b16 %v3928, %v3920
        %v5545 = vpack.c.b16 %v3937, %v3929
        %v5546 = vpack.c.b16 %v3938, %v3930
        %v5547 = vpack.c.b16 %v3939, %v3931
        %v5548 = vpack.c.b16 %v3940, %v3932
        %v5549 = vpack.c.b16 %v3941, %v3933
        %v5550 = vpack.c.b16 %v3942, %v3934
        %v5551 = vpack.c.b16 %v3943, %v3935
        %v5552 = vpack.c.b16 %v3944, %v3936
        %v5553 = vpack.c.b16 %v3953, %v3945
        %v5554 = vpack.c.b16 %v3954, %v3946
        %v5555 = vpack.c.b16 %v3955, %v3947
        %v5556 = vpack.c.b16 %v3956, %v3948
        %v5557 = vpack.c.b16 %v3957, %v3949
        %v5558 = vpack.c.b16 %v3958, %v3950
        %v5559 = vpack.c.b16 %v3959, %v3951
        %v5560 = vpack.c.b16 %v3960, %v3952
        %v5561 = vpack.c.b16 %v3969, %v3961
        %v5562 = vpack.c.b16 %v3970, %v3962
        %v5563 = vpack.c.b16 %v3971, %v3963
        %v5564 = vpack.c.b16 %v3972, %v3964
        %v5565 = vpack.c.b16 %v3973, %v3965
        %v5566 = vpack.c.b16 %v3974, %v3966
        %v5567 = vpack.c.b16 %v3975, %v3967
        %v5568 = vpack.c.b16 %v3976, %v3968
        %v5569 = vpack.c.b16 %v3985, %v3977
        %v5570 = vpack.c.b16 %v3986, %v3978
        %v5571 = vpack.c.b16 %v3987, %v3979
        %v5572 = vpack.c.b16 %v3988, %v3980
        %v5573 = vpack.c.b16 %v3989, %v3981
        %v5574 = vpack.c.b16 %v3990, %v3982
        %v5575 = vpack.c.b16 %v3991, %v3983
        %v5576 = vpack.c.b16 %v3992, %v3984
        %v5577 = vpack.c.b16 %v4001, %v3993
        %v5578 = vpack.c.b16 %v4002, %v3994
        %v5579 = vpack.c.b16 %v4003, %v3995
        %v5580 = vpack.c.b16 %v4004, %v3996
        %v5581 = vpack.c.b16 %v4005, %v3997
        %v5582 = vpack.c.b16 %v4006, %v3998
        %v5583 = vpack.c.b16 %v4007, %v3999
        %v5584 = vpack.c.b16 %v4008, %v4000
        %v5585 = vpack.c.b16 %v4017, %v4009
        %v5586 = vpack.c.b16 %v4018, %v4010
        %v5587 = vpack.c.b16 %v4019, %v4011
        %v5588 = vpack.c.b16 %v4020, %v4012
        %v5589 = vpack.c.b16 %v4021, %v4013
        %v5590 = vpack.c.b16 %v4022, %v4014
        %v5591 = vpack.c.b16 %v4023, %v4015
        %v5592 = vpack.c.b16 %v4024, %v4016
        %v5593 = vpack.c.b16 %v4033, %v4025
        %v5594 = vpack.c.b16 %v4034, %v4026
        %v5595 = vpack.c.b16 %v4035, %v4027
        %v5596 = vpack.c.b16 %v4036, %v4028
        %v5597 = vpack.c.b16 %v4037, %v4029
        %v5598 = vpack.c.b16 %v4038, %v4030
        %v5599 = vpack.c.b16 %v4039, %v4031
        %v5600 = vpack.c.b16 %v4040, %v4032
        %v5601 = vpack.c.b16 %v4049, %v4041
        %v5602 = vpack.c.b16 %v4050, %v4042
        %v5603 = vpack.c.b16 %v4051, %v4043
        %v5604 = vpack.c.b16 %v4052, %v4044
        %v5605 = vpack.c.b16 %v4053, %v4045
        %v5606 = vpack.c.b16 %v4054, %v4046
        %v5607 = vpack.c.b16 %v4055, %v4047
        %v5608 = vpack.c.b16 %v4056, %v4048
        %v5609 = vpack.c.b16 %v4065, %v4057
        %v5610 = vpack.c.b16 %v4066, %v4058
        %v5611 = vpack.c.b16 %v4067, %v4059
        %v5612 = vpack.c.b16 %v4068, %v4060
        %v5613 = vpack.c.b16 %v4069, %v4061
        %v5614 = vpack.c.b16 %v4070, %v4062
        %v5615 = vpack.c.b16 %v4071, %v4063
        %v5616 = vpack.c.b16 %v4072, %v4064
        %v5617 = vpack.c.b16 %v4081, %v4073
        %v5618 = vpack.c.b16 %v4082, %v4074
        %v5619 = vpack.c.b16 %v4083, %v4075
        %v5620 = vpack.c.b16 %v4084, %v4076
        %v5621 = vpack.c.b16 %v4085, %v4077
        %v5622 = vpack.c.b16 %v4086, %v4078
        %v5623 = vpack.c.b16 %v4087, %v4079
        %v5624 = vpack.c.b16 %v4088, %v4080
        %v5625 = vpack.c.b16 %v4097, %v4089
        %v5626 = vpack.c.b16 %v4098, %v4090
        %v5627 = vpack.c.b16 %v4099, %v4091
        %v5628 = vpack.c.b16 %v4100, %v4092
        %v5629 = vpack.c.b16 %v4101, %v4093
        %v5630 = vpack.c.b16 %v4102, %v4094
        %v5631 = vpack.c.b16 %v4103, %v4095
        %v5632 = vpack.c.b16 %v4104, %v4096
        %v5633 = vpack.c.b16 %v4113, %v4105
        %v5634 = vpack.c.b16 %v4114, %v4106
        %v5635 = vpack.c.b16 %v4115, %v4107
        %v5636 = vpack.c.b16 %v4116, %v4108
        %v5637 = vpack.c.b16 %v4117, %v4109
        %v5638 = vpack.c.b16 %v4118, %v4110
        %v5639 = vpack.c.b16 %v4119, %v4111
        %v5640 = vpack.c.b16 %v4120, %v4112
        %v5641 = vpack.c.b16 %v4129, %v4121
        %v5642 = vpack.c.b16 %v4130, %v4122
        %v5643 = vpack.c.b16 %v4131, %v4123
        %v5644 = vpack.c.b16 %v4132, %v4124
        %v5645 = vpack.c.b16 %v4133, %v4125
        %v5646 = vpack.c.b16 %v4134, %v4126
        %v5647 = vpack.c.b16 %v4135, %v4127
        %v5648 = vpack.c.b16 %v4136, %v4128
        %v5649 = vpack.c.b16 %v4145, %v4137
        %v5650 = vpack.c.b16 %v4146, %v4138
        %v5651 = vpack.c.b16 %v4147, %v4139
        %v5652 = vpack.c.b16 %v4148, %v4140
        %v5653 = vpack.c.b16 %v4149, %v4141
        %v5654 = vpack.c.b16 %v4150, %v4142
        %v5655 = vpack.c.b16 %v4151, %v4143
        %v5656 = vpack.c.b16 %v4152, %v4144
        %v5657 = vpack.c.b16 %v4161, %v4153
        %v5658 = vpack.c.b16 %v4162, %v4154
        %v5659 = vpack.c.b16 %v4163, %v4155
        %v5660 = vpack.c.b16 %v4164, %v4156
        %v5661 = vpack.c.b16 %v4165, %v4157
        %v5662 = vpack.c.b16 %v4166, %v4158
        %v5663 = vpack.c.b16 %v4167, %v4159
        %v5664 = vpack.c.b16 %v4168, %v4160
        %v5665 = vpack.c.b16 %v4177, %v4169
        %v5666 = vpack.c.b16 %v4178, %v4170
        %v5667 = vpack.c.b16 %v4179, %v4171
        %v5668 = vpack.c.b16 %v4180, %v4172
        %v5669 = vpack.c.b16 %v4181, %v4173
        %v5670 = vpack.c.b16 %v4182, %v4174
        %v5671 = vpack.c.b16 %v4183, %v4175
        %v5672 = vpack.c.b16 %v4184, %v4176
        %v5673 = vpack.c.b16 %v4193, %v4185
        %v5674 = vpack.c.b16 %v4194, %v4186
        %v5675 = vpack.c.b16 %v4195, %v4187
        %v5676 = vpack.c.b16 %v4196, %v4188
        %v5677 = vpack.c.b16 %v4197, %v4189
        %v5678 = vpack.c.b16 %v4198, %v4190
        %v5679 = vpack.c.b16 %v4199, %v4191
        %v5680 = vpack.c.b16 %v4200, %v4192
        %v5681 = vpack.c.b16 %v4209, %v4201
        %v5682 = vpack.c.b16 %v4210, %v4202
        %v5683 = vpack.c.b16 %v4211, %v4203
        %v5684 = vpack.c.b16 %v4212, %v4204
        %v5685 = vpack.c.b16 %v4213, %v4205
        %v5686 = vpack.c.b16 %v4214, %v4206
        %v5687 = vpack.c.b16 %v4215, %v4207
        %v5688 = vpack.c.b16 %v4216, %v4208
        %v5689 = vpack.c.b16 %v4225, %v4217
        %v5690 = vpack.c.b16 %v4226, %v4218
        %v5691 = vpack.c.b16 %v4227, %v4219
        %v5692 = vpack.c.b16 %v4228, %v4220
        %v5693 = vpack.c.b16 %v4229, %v4221
        %v5694 = vpack.c.b16 %v4230, %v4222
        %v5695 = vpack.c.b16 %v4231, %v4223
        %v5696 = vpack.c.b16 %v4232, %v4224
        %v5697 = vpack.c.b16 %v4241, %v4233
        %v5698 = vpack.c.b16 %v4242, %v4234
        %v5699 = vpack.c.b16 %v4243, %v4235
        %v5700 = vpack.c.b16 %v4244, %v4236
        %v5701 = vpack.c.b16 %v4245, %v4237
        %v5702 = vpack.c.b16 %v4246, %v4238
        %v5703 = vpack.c.b16 %v4247, %v4239
        %v5704 = vpack.c.b16 %v4248, %v4240
        %v5705 = vpack.c.b16 %v4257, %v4249
        %v5706 = vpack.c.b16 %v4258, %v4250
        %v5707 = vpack.c.b16 %v4259, %v4251
        %v5708 = vpack.c.b16 %v4260, %v4252
        %v5709 = vpack.c.b16 %v4261, %v4253
        %v5710 = vpack.c.b16 %v4262, %v4254
        %v5711 = vpack.c.b16 %v4263, %v4255
        %v5712 = vpack.c.b16 %v4264, %v4256
        %v5713 = vpack.c.b16 %v4273, %v4265
        %v5714 = vpack.c.b16 %v4274, %v4266
        %v5715 = vpack.c.b16 %v4275, %v4267
        %v5716 = vpack.c.b16 %v4276, %v4268
        %v5717 = vpack.c.b16 %v4277, %v4269
        %v5718 = vpack.c.b16 %v4278, %v4270
        %v5719 = vpack.c.b16 %v4279, %v4271
        %v5720 = vpack.c.b16 %v4280, %v4272
        %v5721 = vpack.c.b16 %v4289, %v4281
        %v5722 = vpack.c.b16 %v4290, %v4282
        %v5723 = vpack.c.b16 %v4291, %v4283
        %v5724 = vpack.c.b16 %v4292, %v4284
        %v5725 = vpack.c.b16 %v4293, %v4285
        %v5726 = vpack.c.b16 %v4294, %v4286
        %v5727 = vpack.c.b16 %v4295, %v4287
        %v5728 = vpack.c.b16 %v4296, %v4288
        %v5729 = vpack.c.b16 %v4305, %v4297
        %v5730 = vpack.c.b16 %v4306, %v4298
        %v5731 = vpack.c.b16 %v4307, %v4299
        %v5732 = vpack.c.b16 %v4308, %v4300
        %v5733 = vpack.c.b16 %v4309, %v4301
        %v5734 = vpack.c.b16 %v4310, %v4302
        %v5735 = vpack.c.b16 %v4311, %v4303
        %v5736 = vpack.c.b16 %v4312, %v4304
        %v5737 = vpack.c.b16 %v4321, %v4313
        %v5738 = vpack.c.b16 %v4322, %v4314
        %v5739 = vpack.c.b16 %v4323, %v4315
        %v5740 = vpack.c.b16 %v4324, %v4316
        %v5741 = vpack.c.b16 %v4325, %v4317
        %v5742 = vpack.c.b16 %v4326, %v4318
        %v5743 = vpack.c.b16 %v4327, %v4319
        %v5744 = vpack.c.b16 %v4328, %v4320
        %v5745 = vpack.c.b16 %v4337, %v4329
        %v5746 = vpack.c.b16 %v4338, %v4330
        %v5747 = vpack.c.b16 %v4339, %v4331
        %v5748 = vpack.c.b16 %v4340, %v4332
        %v5749 = vpack.c.b16 %v4341, %v4333
        %v5750 = vpack.c.b16 %v4342, %v4334
        %v5751 = vpack.c.b16 %v4343, %v4335
        %v5752 = vpack.c.b16 %v4344, %v4336
        %v5753 = vpack.c.b16 %v4353, %v4345
        %v5754 = vpack.c.b16 %v4354, %v4346
        %v5755 = vpack.c.b16 %v4355, %v4347
        %v5756 = vpack.c.b16 %v4356, %v4348
        %v5757 = vpack.c.b16 %v4357, %v4349
        %v5758 = vpack.c.b16 %v4358, %v4350
        %v5759 = vpack.c.b16 %v4359, %v4351
        %v5760 = vpack.c.b16 %v4360, %v4352
        %v5761 = vpack.c.b16 %v4369, %v4361
        %v5762 = vpack.c.b16 %v4370, %v4362
        %v5763 = vpack.c.b16 %v4371, %v4363
        %v5764 = vpack.c.b16 %v4372, %v4364
        %v5765 = vpack.c.b16 %v4373, %v4365
        %v5766 = vpack.c.b16 %v4374, %v4366
        %v5767 = vpack.c.b16 %v4375, %v4367
        %v5768 = vpack.c.b16 %v4376, %v4368
        %v5769 = vpack.c.b16 %v4385, %v4377
        %v5770 = vpack.c.b16 %v4386, %v4378
        %v5771 = vpack.c.b16 %v4387, %v4379
        %v5772 = vpack.c.b16 %v4388, %v4380
        %v5773 = vpack.c.b16 %v4389, %v4381
        %v5774 = vpack.c.b16 %v4390, %v4382
        %v5775 = vpack.c.b16 %v4391, %v4383
        %v5776 = vpack.c.b16 %v4392, %v4384
        %v5777 = vpack.c.b16 %v4401, %v4393
        %v5778 = vpack.c.b16 %v4402, %v4394
        %v5779 = vpack.c.b16 %v4403, %v4395
        %v5780 = vpack.c.b16 %v4404, %v4396
        %v5781 = vpack.c.b16 %v4405, %v4397
        %v5782 = vpack.c.b16 %v4406, %v4398
        %v5783 = vpack.c.b16 %v4407, %v4399
        %v5784 = vpack.c.b16 %v4408, %v4400
        %v5785 = vpack.c.b16 %v4417, %v4409
        %v5786 = vpack.c.b16 %v4418, %v4410
        %v5787 = vpack.c.b16 %v4419, %v4411
        %v5788 = vpack.c.b16 %v4420, %v4412
        %v5789 = vpack.c.b16 %v4421, %v4413
        %v5790 = vpack.c.b16 %v4422, %v4414
        %v5791 = vpack.c.b16 %v4423, %v4415
        %v5792 = vpack.c.b16 %v4424, %v4416
        %v5793 = vpack.c.b16 %v4433, %v4425
        %v5794 = vpack.c.b16 %v4434, %v4426
        %v5795 = vpack.c.b16 %v4435, %v4427
        %v5796 = vpack.c.b16 %v4436, %v4428
        %v5797 = vpack.c.b16 %v4437, %v4429
        %v5798 = vpack.c.b16 %v4438, %v4430
        %v5799 = vpack.c.b16 %v4439, %v4431
        %v5800 = vpack.c.b16 %v4440, %v4432
        %v5801 = vpack.c.b16 %v4449, %v4441
        %v5802 = vpack.c.b16 %v4450, %v4442
        %v5803 = vpack.c.b16 %v4451, %v4443
        %v5804 = vpack.c.b16 %v4452, %v4444
        %v5805 = vpack.c.b16 %v4453, %v4445
        %v5806 = vpack.c.b16 %v4454, %v4446
        %v5807 = vpack.c.b16 %v4455, %v4447
        %v5808 = vpack.c.b16 %v4456, %v4448
        %v5809 = vpack.c.b16 %v4465, %v4457
        %v5810 = vpack.c.b16 %v4466, %v4458
        %v5811 = vpack.c.b16 %v4467, %v4459
        %v5812 = vpack.c.b16 %v4468, %v4460
        %v5813 = vpack.c.b16 %v4469, %v4461
        %v5814 = vpack.c.b16 %v4470, %v4462
        %v5815 = vpack.c.b16 %v4471, %v4463
        %v5816 = vpack.c.b16 %v4472, %v4464
        %v5817 = vpack.c.b16 %v4481, %v4473
        %v5818 = vpack.c.b16 %v4482, %v4474
        %v5819 = vpack.c.b16 %v4483, %v4475
        %v5820 = vpack.c.b16 %v4484, %v4476
        %v5821 = vpack.c.b16 %v4485, %v4477
        %v5822 = vpack.c.b16 %v4486, %v4478
        %v5823 = vpack.c.b16 %v4487, %v4479
        %v5824 = vpack.c.b16 %v4488, %v4480
        %v5825 = vpack.c.b16 %v4497, %v4489
        %v5826 = vpack.c.b16 %v4498, %v4490
        %v5827 = vpack.c.b16 %v4499, %v4491
        %v5828 = vpack.c.b16 %v4500, %v4492
        %v5829 = vpack.c.b16 %v4501, %v4493
        %v5830 = vpack.c.b16 %v4502, %v4494
        %v5831 = vpack.c.b16 %v4503, %v4495
        %v5832 = vpack.c.b16 %v4504, %v4496
        %v5833 = vpack.c.b16 %v4513, %v4505
        %v5834 = vpack.c.b16 %v4514, %v4506
        %v5835 = vpack.c.b16 %v4515, %v4507
        %v5836 = vpack.c.b16 %v4516, %v4508
        %v5837 = vpack.c.b16 %v4517, %v4509
        %v5838 = vpack.c.b16 %v4518, %v4510
        %v5839 = vpack.c.b16 %v4519, %v4511
        %v5840 = vpack.c.b16 %v4520, %v4512
        %v5841 = vpack.c.b16 %v4529, %v4521
        %v5842 = vpack.c.b16 %v4530, %v4522
        %v5843 = vpack.c.b16 %v4531, %v4523
        %v5844 = vpack.c.b16 %v4532, %v4524
        %v5845 = vpack.c.b16 %v4533, %v4525
        %v5846 = vpack.c.b16 %v4534, %v4526
        %v5847 = vpack.c.b16 %v4535, %v4527
        %v5848 = vpack.c.b16 %v4536, %v4528
        %v5849 = vpack.c.b16 %v4545, %v4537
        %v5850 = vpack.c.b16 %v4546, %v4538
        %v5851 = vpack.c.b16 %v4547, %v4539
        %v5852 = vpack.c.b16 %v4548, %v4540
        %v5853 = vpack.c.b16 %v4549, %v4541
        %v5854 = vpack.c.b16 %v4550, %v4542
        %v5855 = vpack.c.b16 %v4551, %v4543
        %v5856 = vpack.c.b16 %v4552, %v4544
        %v5857 = vpack.c.b16 %v4561, %v4553
        %v5858 = vpack.c.b16 %v4562, %v4554
        %v5859 = vpack.c.b16 %v4563, %v4555
        %v5860 = vpack.c.b16 %v4564, %v4556
        %v5861 = vpack.c.b16 %v4565, %v4557
        %v5862 = vpack.c.b16 %v4566, %v4558
        %v5863 = vpack.c.b16 %v4567, %v4559
        %v5864 = vpack.c.b16 %v4568, %v4560
        %v5865 = vpack.c.b16 %v4577, %v4569
        %v5866 = vpack.c.b16 %v4578, %v4570
        %v5867 = vpack.c.b16 %v4579, %v4571
        %v5868 = vpack.c.b16 %v4580, %v4572
        %v5869 = vpack.c.b16 %v4581, %v4573
        %v5870 = vpack.c.b16 %v4582, %v4574
        %v5871 = vpack.c.b16 %v4583, %v4575
        %v5872 = vpack.c.b16 %v4584, %v4576
        %v5873 = vpack.c.b16 %v4593, %v4585
        %v5874 = vpack.c.b16 %v4594, %v4586
        %v5875 = vpack.c.b16 %v4595, %v4587
        %v5876 = vpack.c.b16 %v4596, %v4588
        %v5877 = vpack.c.b16 %v4597, %v4589
        %v5878 = vpack.c.b16 %v4598, %v4590
        %v5879 = vpack.c.b16 %v4599, %v4591
        %v5880 = vpack.c.b16 %v4600, %v4592
        %v5881 = vpack.c.b16 %v4609, %v4601
        %v5882 = vpack.c.b16 %v4610, %v4602
        %v5883 = vpack.c.b16 %v4611, %v4603
        %v5884 = vpack.c.b16 %v4612, %v4604
        %v5885 = vpack.c.b16 %v4613, %v4605
        %v5886 = vpack.c.b16 %v4614, %v4606
        %v5887 = vpack.c.b16 %v4615, %v4607
        %v5888 = vpack.c.b16 %v4616, %v4608
        %v5889 = vpack.c.b16 %v4625, %v4617
        %v5890 = vpack.c.b16 %v4626, %v4618
        %v5891 = vpack.c.b16 %v4627, %v4619
        %v5892 = vpack.c.b16 %v4628, %v4620
        %v5893 = vpack.c.b16 %v4629, %v4621
        %v5894 = vpack.c.b16 %v4630, %v4622
        %v5895 = vpack.c.b16 %v4631, %v4623
        %v5896 = vpack.c.b16 %v4632, %v4624
        %v5897 = vpack.c.b16 %v4641, %v4633
        %v5898 = vpack.c.b16 %v4642, %v4634
        %v5899 = vpack.c.b16 %v4643, %v4635
        %v5900 = vpack.c.b16 %v4644, %v4636
        %v5901 = vpack.c.b16 %v4645, %v4637
        %v5902 = vpack.c.b16 %v4646, %v4638
        %v5903 = vpack.c.b16 %v4647, %v4639
        %v5904 = vpack.c.b16 %v4648, %v4640
        %v5905 = vpack.c.b16 %v4657, %v4649
        %v5906 = vpack.c.b16 %v4658, %v4650
        %v5907 = vpack.c.b16 %v4659, %v4651
        %v5908 = vpack.c.b16 %v4660, %v4652
        %v5909 = vpack.c.b16 %v4661, %v4653
        %v5910 = vpack.c.b16 %v4662, %v4654
        %v5911 = vpack.c.b16 %v4663, %v4655
        %v5912 = vpack.c.b16 %v4664, %v4656
        %v5913 = vpack.c.b16 %v4673, %v4665
        %v5914 = vpack.c.b16 %v4674, %v4666
        %v5915 = vpack.c.b16 %v4675, %v4667
        %v5916 = vpack.c.b16 %v4676, %v4668
        %v5917 = vpack.c.b16 %v4677, %v4669
        %v5918 = vpack.c.b16 %v4678, %v4670
        %v5919 = vpack.c.b16 %v4679, %v4671
        %v5920 = vpack.c.b16 %v4680, %v4672
        %v5921 = vpack.c.b16 %v4689, %v4681
        %v5922 = vpack.c.b16 %v4690, %v4682
        %v5923 = vpack.c.b16 %v4691, %v4683
        %v5924 = vpack.c.b16 %v4692, %v4684
        %v5925 = vpack.c.b16 %v4693, %v4685
        %v5926 = vpack.c.b16 %v4694, %v4686
        %v5927 = vpack.c.b16 %v4695, %v4687
        %v5928 = vpack.c.b16 %v4696, %v4688
        %v5929 = vpack.c.b16 %v4705, %v4697
        %v5930 = vpack.c.b16 %v4706, %v4698
        %v5931 = vpack.c.b16 %v4707, %v4699
        %v5932 = vpack.c.b16 %v4708, %v4700
        %v5933 = vpack.c.b16 %v4709, %v4701
        %v5934 = vpack.c.b16 %v4710, %v4702
        %v5935 = vpack.c.b16 %v4711, %v4703
        %v5936 = vpack.c.b16 %v4712, %v4704
        %v5937 = vpack.c.b16 %v4721, %v4713
        %v5938 = vpack.c.b16 %v4722, %v4714
        %v5939 = vpack.c.b16 %v4723, %v4715
        %v5940 = vpack.c.b16 %v4724, %v4716
        %v5941 = vpack.c.b16 %v4725, %v4717
        %v5942 = vpack.c.b16 %v4726, %v4718
        %v5943 = vpack.c.b16 %v4727, %v4719
        %v5944 = vpack.c.b16 %v4728, %v4720
        %v5945 = vpack.c.b16 %v4737, %v4729
        %v5946 = vpack.c.b16 %v4738, %v4730
        %v5947 = vpack.c.b16 %v4739, %v4731
        %v5948 = vpack.c.b16 %v4740, %v4732
        %v5949 = vpack.c.b16 %v4741, %v4733
        %v5950 = vpack.c.b16 %v4742, %v4734
        %v5951 = vpack.c.b16 %v4743, %v4735
        %v5952 = vpack.c.b16 %v4744, %v4736
        %v5953 = vpack.c.b16 %v4753, %v4745
        %v5954 = vpack.c.b16 %v4754, %v4746
        %v5955 = vpack.c.b16 %v4755, %v4747
        %v5956 = vpack.c.b16 %v4756, %v4748
        %v5957 = vpack.c.b16 %v4757, %v4749
        %v5958 = vpack.c.b16 %v4758, %v4750
        %v5959 = vpack.c.b16 %v4759, %v4751
        %v5960 = vpack.c.b16 %v4760, %v4752
        %v5961 = vpack.c.b16 %v4769, %v4761
        %v5962 = vpack.c.b16 %v4770, %v4762
        %v5963 = vpack.c.b16 %v4771, %v4763
        %v5964 = vpack.c.b16 %v4772, %v4764
        %v5965 = vpack.c.b16 %v4773, %v4765
        %v5966 = vpack.c.b16 %v4774, %v4766
        %v5967 = vpack.c.b16 %v4775, %v4767
        %v5968 = vpack.c.b16 %v4776, %v4768
        %v5969 = vpack.c.b16 %v4785, %v4777
        %v5970 = vpack.c.b16 %v4786, %v4778
        %v5971 = vpack.c.b16 %v4787, %v4779
        %v5972 = vpack.c.b16 %v4788, %v4780
        %v5973 = vpack.c.b16 %v4789, %v4781
        %v5974 = vpack.c.b16 %v4790, %v4782
        %v5975 = vpack.c.b16 %v4791, %v4783
        %v5976 = vpack.c.b16 %v4792, %v4784
        %v5977 = vpack.c.b16 %v4801, %v4793
        %v5978 = vpack.c.b16 %v4802, %v4794
        %v5979 = vpack.c.b16 %v4803, %v4795
        %v5980 = vpack.c.b16 %v4804, %v4796
        %v5981 = vpack.c.b16 %v4805, %v4797
        %v5982 = vpack.c.b16 %v4806, %v4798
        %v5983 = vpack.c.b16 %v4807, %v4799
        %v5984 = vpack.c.b16 %v4808, %v4800
        %v5985 = vpack.c.b16 %v4817, %v4809
        %v5986 = vpack.c.b16 %v4818, %v4810
        %v5987 = vpack.c.b16 %v4819, %v4811
        %v5988 = vpack.c.b16 %v4820, %v4812
        %v5989 = vpack.c.b16 %v4821, %v4813
        %v5990 = vpack.c.b16 %v4822, %v4814
        %v5991 = vpack.c.b16 %v4823, %v4815
        %v5992 = vpack.c.b16 %v4824, %v4816
        %v5993 = vpack.c.b16 %v4833, %v4825
        %v5994 = vpack.c.b16 %v4834, %v4826
        %v5995 = vpack.c.b16 %v4835, %v4827
        %v5996 = vpack.c.b16 %v4836, %v4828
        %v5997 = vpack.c.b16 %v4837, %v4829
        %v5998 = vpack.c.b16 %v4838, %v4830
        %v5999 = vpack.c.b16 %v4839, %v4831
        %v6000 = vpack.c.b16 %v4840, %v4832
        %v6001 = vpack.c.b16 %v4849, %v4841
        %v6002 = vpack.c.b16 %v4850, %v4842
        %v6003 = vpack.c.b16 %v4851, %v4843
        %v6004 = vpack.c.b16 %v4852, %v4844
        %v6005 = vpack.c.b16 %v4853, %v4845
        %v6006 = vpack.c.b16 %v4854, %v4846
        %v6007 = vpack.c.b16 %v4855, %v4847
        %v6008 = vpack.c.b16 %v4856, %v4848
        %v6009 = vpack.c.b16 %v4865, %v4857
        %v6010 = vpack.c.b16 %v4866, %v4858
        %v6011 = vpack.c.b16 %v4867, %v4859
        %v6012 = vpack.c.b16 %v4868, %v4860
        %v6013 = vpack.c.b16 %v4869, %v4861
        %v6014 = vpack.c.b16 %v4870, %v4862
        %v6015 = vpack.c.b16 %v4871, %v4863
        %v6016 = vpack.c.b16 %v4872, %v4864
        %v6017 = vpack.c.b16 %v4881, %v4873
        %v6018 = vpack.c.b16 %v4882, %v4874
        %v6019 = vpack.c.b16 %v4883, %v4875
        %v6020 = vpack.c.b16 %v4884, %v4876
        %v6021 = vpack.c.b16 %v4885, %v4877
        %v6022 = vpack.c.b16 %v4886, %v4878
        %v6023 = vpack.c.b16 %v4887, %v4879
        %v6024 = vpack.c.b16 %v4888, %v4880
        %v6025 = vpack.c.b16 %v4897, %v4889
        %v6026 = vpack.c.b16 %v4898, %v4890
        %v6027 = vpack.c.b16 %v4899, %v4891
        %v6028 = vpack.c.b16 %v4900, %v4892
        %v6029 = vpack.c.b16 %v4901, %v4893
        %v6030 = vpack.c.b16 %v4902, %v4894
        %v6031 = vpack.c.b16 %v4903, %v4895
        %v6032 = vpack.c.b16 %v4904, %v4896
        %v6033 = vpack.c.b16 %v4913, %v4905
        %v6034 = vpack.c.b16 %v4914, %v4906
        %v6035 = vpack.c.b16 %v4915, %v4907
        %v6036 = vpack.c.b16 %v4916, %v4908
        %v6037 = vpack.c.b16 %v4917, %v4909
        %v6038 = vpack.c.b16 %v4918, %v4910
        %v6039 = vpack.c.b16 %v4919, %v4911
        %v6040 = vpack.c.b16 %v4920, %v4912
        %v6041 = vpack.c.b16 %v4929, %v4921
        %v6042 = vpack.c.b16 %v4930, %v4922
        %v6043 = vpack.c.b16 %v4931, %v4923
        %v6044 = vpack.c.b16 %v4932, %v4924
        %v6045 = vpack.c.b16 %v4933, %v4925
        %v6046 = vpack.c.b16 %v4934, %v4926
        %v6047 = vpack.c.b16 %v4935, %v4927
        %v6048 = vpack.c.b16 %v4936, %v4928
        %v6049 = vpack.c.b16 %v4945, %v4937
        %v6050 = vpack.c.b16 %v4946, %v4938
        %v6051 = vpack.c.b16 %v4947, %v4939
        %v6052 = vpack.c.b16 %v4948, %v4940
        %v6053 = vpack.c.b16 %v4949, %v4941
        %v6054 = vpack.c.b16 %v4950, %v4942
        %v6055 = vpack.c.b16 %v4951, %v4943
        %v6056 = vpack.c.b16 %v4952, %v4944
        %v6057 = vpack.c.b16 %v4961, %v4953
        %v6058 = vpack.c.b16 %v4962, %v4954
        %v6059 = vpack.c.b16 %v4963, %v4955
        %v6060 = vpack.c.b16 %v4964, %v4956
        %v6061 = vpack.c.b16 %v4965, %v4957
        %v6062 = vpack.c.b16 %v4966, %v4958
        %v6063 = vpack.c.b16 %v4967, %v4959
        %v6064 = vpack.c.b16 %v4968, %v4960
        %v6065 = vpack.c.b16 %v4977, %v4969
        %v6066 = vpack.c.b16 %v4978, %v4970
        %v6067 = vpack.c.b16 %v4979, %v4971
        %v6068 = vpack.c.b16 %v4980, %v4972
        %v6069 = vpack.c.b16 %v4981, %v4973
        %v6070 = vpack.c.b16 %v4982, %v4974
        %v6071 = vpack.c.b16 %v4983, %v4975
        %v6072 = vpack.c.b16 %v4984, %v4976
        %v6073 = vpack.c.b16 %v4993, %v4985
        %v6074 = vpack.c.b16 %v4994, %v4986
        %v6075 = vpack.c.b16 %v4995, %v4987
        %v6076 = vpack.c.b16 %v4996, %v4988
        %v6077 = vpack.c.b16 %v4997, %v4989
        %v6078 = vpack.c.b16 %v4998, %v4990
        %v6079 = vpack.c.b16 %v4999, %v4991
        %v6080 = vpack.c.b16 %v5000, %v4992
        %v6081 = vpack.c.b16 %v5009, %v5001
        %v6082 = vpack.c.b16 %v5010, %v5002
        %v6083 = vpack.c.b16 %v5011, %v5003
        %v6084 = vpack.c.b16 %v5012, %v5004
        %v6085 = vpack.c.b16 %v5013, %v5005
        %v6086 = vpack.c.b16 %v5014, %v5006
        %v6087 = vpack.c.b16 %v5015, %v5007
        %v6088 = vpack.c.b16 %v5016, %v5008
        %v6089 = vpack.c.b16 %v5025, %v5017
        %v6090 = vpack.c.b16 %v5026, %v5018
        %v6091 = vpack.c.b16 %v5027, %v5019
        %v6092 = vpack.c.b16 %v5028, %v5020
        %v6093 = vpack.c.b16 %v5029, %v5021
        %v6094 = vpack.c.b16 %v5030, %v5022
        %v6095 = vpack.c.b16 %v5031, %v5023
        %v6096 = vpack.c.b16 %v5032, %v5024
        %v6097 = vpack.c.b16 %v5041, %v5033
        %v6098 = vpack.c.b16 %v5042, %v5034
        %v6099 = vpack.c.b16 %v5043, %v5035
        %v6100 = vpack.c.b16 %v5044, %v5036
        %v6101 = vpack.c.b16 %v5045, %v5037
        %v6102 = vpack.c.b16 %v5046, %v5038
        %v6103 = vpack.c.b16 %v5047, %v5039
        %v6104 = vpack.c.b16 %v5048, %v5040
        %v6105 = vpack.c.b16 %v5057, %v5049
        %v6106 = vpack.c.b16 %v5058, %v5050
        %v6107 = vpack.c.b16 %v5059, %v5051
        %v6108 = vpack.c.b16 %v5060, %v5052
        %v6109 = vpack.c.b16 %v5061, %v5053
        %v6110 = vpack.c.b16 %v5062, %v5054
        %v6111 = vpack.c.b16 %v5063, %v5055
        %v6112 = vpack.c.b16 %v5064, %v5056
        %v6113 = vpack.c.b16 %v5073, %v5065
        %v6114 = vpack.c.b16 %v5074, %v5066
        %v6115 = vpack.c.b16 %v5075, %v5067
        %v6116 = vpack.c.b16 %v5076, %v5068
        %v6117 = vpack.c.b16 %v5077, %v5069
        %v6118 = vpack.c.b16 %v5078, %v5070
        %v6119 = vpack.c.b16 %v5079, %v5071
        %v6120 = vpack.c.b16 %v5080, %v5072
        %v6121 = vpack.c.b16 %v5089, %v5081
        %v6122 = vpack.c.b16 %v5090, %v5082
        %v6123 = vpack.c.b16 %v5091, %v5083
        %v6124 = vpack.c.b16 %v5092, %v5084
        %v6125 = vpack.c.b16 %v5093, %v5085
        %v6126 = vpack.c.b16 %v5094, %v5086
        %v6127 = vpack.c.b16 %v5095, %v5087
        %v6128 = vpack.c.b16 %v5096, %v5088
        %v6129 = vpack.c.b16 %v5105, %v5097
        %v6130 = vpack.c.b16 %v5106, %v5098
        %v6131 = vpack.c.b16 %v5107, %v5099
        %v6132 = vpack.c.b16 %v5108, %v5100
        %v6133 = vpack.c.b16 %v5109, %v5101
        %v6134 = vpack.c.b16 %v5110, %v5102
        %v6135 = vpack.c.b16 %v5111, %v5103
        %v6136 = vpack.c.b16 %v5112, %v5104
        %v6137 = vpack.c.b16 %v5121, %v5113
        %v6138 = vpack.c.b16 %v5122, %v5114
        %v6139 = vpack.c.b16 %v5123, %v5115
        %v6140 = vpack.c.b16 %v5124, %v5116
        %v6141 = vpack.c.b16 %v5125, %v5117
        %v6142 = vpack.c.b16 %v5126, %v5118
        %v6143 = vpack.c.b16 %v5127, %v5119
        %v6144 = vpack.c.b16 %v5128, %v5120
        %v6145 = vpack.c.b16 %v5137, %v5129
        %v6146 = vpack.c.b16 %v5138, %v5130
        %v6147 = vpack.c.b16 %v5139, %v5131
        %v6148 = vpack.c.b16 %v5140, %v5132
        %v6149 = vpack.c.b16 %v5141, %v5133
        %v6150 = vpack.c.b16 %v5142, %v5134
        %v6151 = vpack.c.b16 %v5143, %v5135
        %v6152 = vpack.c.b16 %v5144, %v5136
        %v6153 = vpack.c.b16 %v5153, %v5145
        %v6154 = vpack.c.b16 %v5154, %v5146
        %v6155 = vpack.c.b16 %v5155, %v5147
        %v6156 = vpack.c.b16 %v5156, %v5148
        %v6157 = vpack.c.b16 %v5157, %v5149
        %v6158 = vpack.c.b16 %v5158, %v5150
        %v6159 = vpack.c.b16 %v5159, %v5151
        %v6160 = vpack.c.b16 %v5160, %v5152
        %v6161 = vpack.c.b16 %v5169, %v5161
        %v6162 = vpack.c.b16 %v5170, %v5162
        %v6163 = vpack.c.b16 %v5171, %v5163
        %v6164 = vpack.c.b16 %v5172, %v5164
        %v6165 = vpack.c.b16 %v5173, %v5165
        %v6166 = vpack.c.b16 %v5174, %v5166
        %v6167 = vpack.c.b16 %v5175, %v5167
        %v6168 = vpack.c.b16 %v5176, %v5168
        %v6169 = vpack.c.b16 %v5185, %v5177
        %v6170 = vpack.c.b16 %v5186, %v5178
        %v6171 = vpack.c.b16 %v5187, %v5179
        %v6172 = vpack.c.b16 %v5188, %v5180
        %v6173 = vpack.c.b16 %v5189, %v5181
        %v6174 = vpack.c.b16 %v5190, %v5182
        %v6175 = vpack.c.b16 %v5191, %v5183
        %v6176 = vpack.c.b16 %v5192, %v5184
        %v6177 = vpack.c.b16 %v5201, %v5193
        %v6178 = vpack.c.b16 %v5202, %v5194
        %v6179 = vpack.c.b16 %v5203, %v5195
        %v6180 = vpack.c.b16 %v5204, %v5196
        %v6181 = vpack.c.b16 %v5205, %v5197
        %v6182 = vpack.c.b16 %v5206, %v5198
        %v6183 = vpack.c.b16 %v5207, %v5199
        %v6184 = vpack.c.b16 %v5208, %v5200
        %v6185 = vpack.c.b16 %v5217, %v5209
        %v6186 = vpack.c.b16 %v5218, %v5210
        %v6187 = vpack.c.b16 %v5219, %v5211
        %v6188 = vpack.c.b16 %v5220, %v5212
        %v6189 = vpack.c.b16 %v5221, %v5213
        %v6190 = vpack.c.b16 %v5222, %v5214
        %v6191 = vpack.c.b16 %v5223, %v5215
        %v6192 = vpack.c.b16 %v5224, %v5216
        %v6193 = vpack.c.b16 %v5233, %v5225
        %v6194 = vpack.c.b16 %v5234, %v5226
        %v6195 = vpack.c.b16 %v5235, %v5227
        %v6196 = vpack.c.b16 %v5236, %v5228
        %v6197 = vpack.c.b16 %v5237, %v5229
        %v6198 = vpack.c.b16 %v5238, %v5230
        %v6199 = vpack.c.b16 %v5239, %v5231
        %v6200 = vpack.c.b16 %v5240, %v5232
        %v6201 = vpack.c.b16 %v5249, %v5241
        %v6202 = vpack.c.b16 %v5250, %v5242
        %v6203 = vpack.c.b16 %v5251, %v5243
        %v6204 = vpack.c.b16 %v5252, %v5244
        %v6205 = vpack.c.b16 %v5253, %v5245
        %v6206 = vpack.c.b16 %v5254, %v5246
        %v6207 = vpack.c.b16 %v5255, %v5247
        %v6208 = vpack.c.b16 %v5256, %v5248
        %v6209 = vpack.c.b16 %v5265, %v5257
        %v6210 = vpack.c.b16 %v5266, %v5258
        %v6211 = vpack.c.b16 %v5267, %v5259
        %v6212 = vpack.c.b16 %v5268, %v5260
        %v6213 = vpack.c.b16 %v5269, %v5261
        %v6214 = vpack.c.b16 %v5270, %v5262
        %v6215 = vpack.c.b16 %v5271, %v5263
        %v6216 = vpack.c.b16 %v5272, %v5264
        %v6217 = vpack.c.b16 %v5281, %v5273
        %v6218 = vpack.c.b16 %v5282, %v5274
        %v6219 = vpack.c.b16 %v5283, %v5275
        %v6220 = vpack.c.b16 %v5284, %v5276
        %v6221 = vpack.c.b16 %v5285, %v5277
        %v6222 = vpack.c.b16 %v5286, %v5278
        %v6223 = vpack.c.b16 %v5287, %v5279
        %v6224 = vpack.c.b16 %v5288, %v5280
        %v6225 = vpack.c.b16 %v5297, %v5289
        %v6226 = vpack.c.b16 %v5298, %v5290
        %v6227 = vpack.c.b16 %v5299, %v5291
        %v6228 = vpack.c.b16 %v5300, %v5292
        %v6229 = vpack.c.b16 %v5301, %v5293
        %v6230 = vpack.c.b16 %v5302, %v5294
        %v6231 = vpack.c.b16 %v5303, %v5295
        %v6232 = vpack.c.b16 %v5304, %v5296
        %v6233 = vpack.c.b16 %v5313, %v5305
        %v6234 = vpack.c.b16 %v5314, %v5306
        %v6235 = vpack.c.b16 %v5315, %v5307
        %v6236 = vpack.c.b16 %v5316, %v5308
        %v6237 = vpack.c.b16 %v5317, %v5309
        %v6238 = vpack.c.b16 %v5318, %v5310
        %v6239 = vpack.c.b16 %v5319, %v5311
        %v6240 = vpack.c.b16 %v5320, %v5312
        %v6241 = vpack.c.b16 %v5329, %v5321
        %v6242 = vpack.c.b16 %v5330, %v5322
        %v6243 = vpack.c.b16 %v5331, %v5323
        %v6244 = vpack.c.b16 %v5332, %v5324
        %v6245 = vpack.c.b16 %v5333, %v5325
        %v6246 = vpack.c.b16 %v5334, %v5326
        %v6247 = vpack.c.b16 %v5335, %v5327
        %v6248 = vpack.c.b16 %v5336, %v5328
        %v6249 = vpack.c.b16 %v5345, %v5337
        %v6250 = vpack.c.b16 %v5346, %v5338
        %v6251 = vpack.c.b16 %v5347, %v5339
        %v6252 = vpack.c.b16 %v5348, %v5340
        %v6253 = vpack.c.b16 %v5349, %v5341
        %v6254 = vpack.c.b16 %v5350, %v5342
        %v6255 = vpack.c.b16 %v5351, %v5343
        %v6256 = vpack.c.b16 %v5352, %v5344
        %v6257 = vpack.c.b16 %v5361, %v5353
        %v6258 = vpack.c.b16 %v5362, %v5354
        %v6259 = vpack.c.b16 %v5363, %v5355
        %v6260 = vpack.c.b16 %v5364, %v5356
        %v6261 = vpack.c.b16 %v5365, %v5357
        %v6262 = vpack.c.b16 %v5366, %v5358
        %v6263 = vpack.c.b16 %v5367, %v5359
        %v6264 = vpack.c.b16 %v5368, %v5360
        %v6265 = vpack.c.b16 %v5377, %v5369
        %v6266 = vpack.c.b16 %v5378, %v5370
        %v6267 = vpack.c.b16 %v5379, %v5371
        %v6268 = vpack.c.b16 %v5380, %v5372
        %v6269 = vpack.c.b16 %v5381, %v5373
        %v6270 = vpack.c.b16 %v5382, %v5374
        %v6271 = vpack.c.b16 %v5383, %v5375
        %v6272 = vpack.c.b16 %v5384, %v5376
        %v6273 = vpack.c.b16 %v5393, %v5385
        %v6274 = vpack.c.b16 %v5394, %v5386
        %v6275 = vpack.c.b16 %v5395, %v5387
        %v6276 = vpack.c.b16 %v5396, %v5388
        %v6277 = vpack.c.b16 %v5397, %v5389
        %v6278 = vpack.c.b16 %v5398, %v5390
        %v6279 = vpack.c.b16 %v5399, %v5391
        %v6280 = vpack.c.b16 %v5400, %v5392
        %v6281 = vpack.c.b16 %v5409, %v5401
        %v6282 = vpack.c.b16 %v5410, %v5402
        %v6283 = vpack.c.b16 %v5411, %v5403
        %v6284 = vpack.c.b16 %v5412, %v5404
        %v6285 = vpack.c.b16 %v5413, %v5405
        %v6286 = vpack.c.b16 %v5414, %v5406
        %v6287 = vpack.c.b16 %v5415, %v5407
        %v6288 = vpack.c.b16 %v5416, %v5408
        %v6289 = vpack.c.b16 %v5425, %v5417
        %v6290 = vpack.c.b16 %v5426, %v5418
        %v6291 = vpack.c.b16 %v5427, %v5419
        %v6292 = vpack.c.b16 %v5428, %v5420
        %v6293 = vpack.c.b16 %v5429, %v5421
        %v6294 = vpack.c.b16 %v5430, %v5422
        %v6295 = vpack.c.b16 %v5431, %v5423
        %v6296 = vpack.c.b16 %v5432, %v5424
        %v6297 = vpack.c.b16 %v5433, %v5433
        %v6298 = vpack.c.b16 %v5434, %v5434
        %v6299 = vpack.c.b16 %v5435, %v5435
        %v6300 = vpack.c.b16 %v5436, %v5436
        %v6301 = vpack.c.b16 %v5437, %v5437
        %v6302 = vpack.c.b16 %v5438, %v5438
        %v6303 = vpack.c.b16 %v5439, %v5439
        %v6304 = vpack.c.b16 %v5440, %v5440
        %vm7161 = vcmask 416768
        %v7163 = vsel %vm7161, %v2847, 0
        %vm7165 = vcmask 1040384
        %vm7166 = vcmask 1041408
        %v7167 = vsel %vm7165, 4294967295, 65535
        %v7168 = vsel %vm7166, %v7167, 0
        %v7170 = vand.u32 %v6297, %v7168
        %v7173 = vand.u32 %v6298, %v7168
        %v7176 = vand.u32 %v6299, %v7168
        %v7179 = vand.u32 %v6300, %v7168
        %v7182 = vand.u32 %v6301, %v7168
        %v7185 = vand.u32 %v6302, %v7168
        %v7188 = vand.u32 %v6303, %v7168
        %v7191 = vand.u32 %v6304, %v7168
        %7193 = vmatpush.bf16.msra.mxu0 %v5497
        %7194 = vmatpush.bf16.msra.mxu0 %v5489
        %7195 = vmatpush.bf16.msra.mxu0 %v5481
        %7196 = vmatpush.bf16.msra.mxu0 %v5473
        %7197 = vmatpush.bf16.msra.mxu0 %v5465
        %7198 = vmatpush.bf16.msra.mxu0 %v5457
        %7199 = vmatpush.bf16.msra.mxu0 %v5449
        %7200 = vmatpush.bf16.msra.mxu0 %v5441
        %7201 = vmatmul.bf16.gmra.mxu0 %v2834
        %v7202 = vpop.f32.mrf.mxu0
        %v7203 = vadd.f32 %v2785, %v7202
        %v7204 = vpop.f32.mrf.mxu0
        %v7205 = vadd.f32 %v2790, %v7204
        %7206 = vdwg.mxu0
        %7207 = vmatpush.bf16.msra.mxu0 %v5561
        %7208 = vmatpush.bf16.msra.mxu0 %v5553
        %7209 = vmatpush.bf16.msra.mxu0 %v5545
        %7210 = vmatpush.bf16.msra.mxu0 %v5537
        %7211 = vmatpush.bf16.msra.mxu0 %v5529
        %7212 = vmatpush.bf16.msra.mxu0 %v5521
        %7213 = vmatpush.bf16.msra.mxu0 %v5513
        %7214 = vmatpush.bf16.msra.mxu0 %v5505
        %7215 = vmatmul.bf16.gmra.mxu0 %v2835
        %v7216 = vpop.f32.mrf.mxu0
        %v7217 = vadd.f32 %v7203, %v7216
        %v7218 = vpop.f32.mrf.mxu0
        %v7219 = vadd.f32 %v7205, %v7218
        %7220 = vdwg.mxu0
        %7221 = vmatpush.bf16.msra.mxu0 %v5625
        %7222 = vmatpush.bf16.msra.mxu0 %v5617
        %7223 = vmatpush.bf16.msra.mxu0 %v5609
        %7224 = vmatpush.bf16.msra.mxu0 %v5601
        %7225 = vmatpush.bf16.msra.mxu0 %v5593
        %7226 = vmatpush.bf16.msra.mxu0 %v5585
        %7227 = vmatpush.bf16.msra.mxu0 %v5577
        %7228 = vmatpush.bf16.msra.mxu0 %v5569
        %7229 = vmatmul.bf16.gmra.mxu0 %v2836
        %v7230 = vpop.f32.mrf.mxu0
        %v7231 = vadd.f32 %v7217, %v7230
        %v7232 = vpop.f32.mrf.mxu0
        %v7233 = vadd.f32 %v7219, %v7232
        %7234 = vdwg.mxu0
        %7235 = vmatpush.bf16.msra.mxu0 %v5689
        %7236 = vmatpush.bf16.msra.mxu0 %v5681
        %7237 = vmatpush.bf16.msra.mxu0 %v5673
        %7238 = vmatpush.bf16.msra.mxu0 %v5665
        %7239 = vmatpush.bf16.msra.mxu0 %v5657
        %7240 = vmatpush.bf16.msra.mxu0 %v5649
        %7241 = vmatpush.bf16.msra.mxu0 %v5641
        %7242 = vmatpush.bf16.msra.mxu0 %v5633
        %7243 = vmatmul.bf16.gmra.mxu0 %v2837
        %v7244 = vpop.f32.mrf.mxu0
        %v7245 = vadd.f32 %v7231, %v7244
        %v7246 = vpop.f32.mrf.mxu0
        %v7247 = vadd.f32 %v7233, %v7246
        %7248 = vdwg.mxu0
        %7249 = vmatpush.bf16.msra.mxu0 %v5753
        %7250 = vmatpush.bf16.msra.mxu0 %v5745
        %7251 = vmatpush.bf16.msra.mxu0 %v5737
        %7252 = vmatpush.bf16.msra.mxu0 %v5729
        %7253 = vmatpush.bf16.msra.mxu0 %v5721
        %7254 = vmatpush.bf16.msra.mxu0 %v5713
        %7255 = vmatpush.bf16.msra.mxu0 %v5705
        %7256 = vmatpush.bf16.msra.mxu0 %v5697
        %7257 = vmatmul.bf16.gmra.mxu0 %v2838
        %v7258 = vpop.f32.mrf.mxu0
        %v7259 = vadd.f32 %v7245, %v7258
        %v7260 = vpop.f32.mrf.mxu0
        %v7261 = vadd.f32 %v7247, %v7260
        %7262 = vdwg.mxu0
        %7263 = vmatpush.bf16.msra.mxu0 %v5817
        %7264 = vmatpush.bf16.msra.mxu0 %v5809
        %7265 = vmatpush.bf16.msra.mxu0 %v5801
        %7266 = vmatpush.bf16.msra.mxu0 %v5793
        %7267 = vmatpush.bf16.msra.mxu0 %v5785
        %7268 = vmatpush.bf16.msra.mxu0 %v5777
        %7269 = vmatpush.bf16.msra.mxu0 %v5769
        %7270 = vmatpush.bf16.msra.mxu0 %v5761
        %7271 = vmatmul.bf16.gmra.mxu0 %v2839
        %v7272 = vpop.f32.mrf.mxu0
        %v7273 = vadd.f32 %v7259, %v7272
        %v7274 = vpop.f32.mrf.mxu0
        %v7275 = vadd.f32 %v7261, %v7274
        %7276 = vdwg.mxu0
        %7277 = vmatpush.bf16.msra.mxu0 %v5881
        %7278 = vmatpush.bf16.msra.mxu0 %v5873
        %7279 = vmatpush.bf16.msra.mxu0 %v5865
        %7280 = vmatpush.bf16.msra.mxu0 %v5857
        %7281 = vmatpush.bf16.msra.mxu0 %v5849
        %7282 = vmatpush.bf16.msra.mxu0 %v5841
        %7283 = vmatpush.bf16.msra.mxu0 %v5833
        %7284 = vmatpush.bf16.msra.mxu0 %v5825
        %7285 = vmatmul.bf16.gmra.mxu0 %v2840
        %v7286 = vpop.f32.mrf.mxu0
        %v7287 = vadd.f32 %v7273, %v7286
        %v7288 = vpop.f32.mrf.mxu0
        %v7289 = vadd.f32 %v7275, %v7288
        %7290 = vdwg.mxu0
        %7291 = vmatpush.bf16.msra.mxu0 %v5945
        %7292 = vmatpush.bf16.msra.mxu0 %v5937
        %7293 = vmatpush.bf16.msra.mxu0 %v5929
        %7294 = vmatpush.bf16.msra.mxu0 %v5921
        %7295 = vmatpush.bf16.msra.mxu0 %v5913
        %7296 = vmatpush.bf16.msra.mxu0 %v5905
        %7297 = vmatpush.bf16.msra.mxu0 %v5897
        %7298 = vmatpush.bf16.msra.mxu0 %v5889
        %7299 = vmatmul.bf16.gmra.mxu0 %v2841
        %v7300 = vpop.f32.mrf.mxu0
        %v7301 = vadd.f32 %v7287, %v7300
        %v7302 = vpop.f32.mrf.mxu0
        %v7303 = vadd.f32 %v7289, %v7302
        %7304 = vdwg.mxu0
        %7305 = vmatpush.bf16.msra.mxu0 %v6009
        %7306 = vmatpush.bf16.msra.mxu0 %v6001
        %7307 = vmatpush.bf16.msra.mxu0 %v5993
        %7308 = vmatpush.bf16.msra.mxu0 %v5985
        %7309 = vmatpush.bf16.msra.mxu0 %v5977
        %7310 = vmatpush.bf16.msra.mxu0 %v5969
        %7311 = vmatpush.bf16.msra.mxu0 %v5961
        %7312 = vmatpush.bf16.msra.mxu0 %v5953
        %7313 = vmatmul.bf16.gmra.mxu0 %v2842
        %v7314 = vpop.f32.mrf.mxu0
        %v7315 = vadd.f32 %v7301, %v7314
        %v7316 = vpop.f32.mrf.mxu0
        %v7317 = vadd.f32 %v7303, %v7316
        %7318 = vdwg.mxu0
        %7319 = vmatpush.bf16.msra.mxu0 %v6073
        %7320 = vmatpush.bf16.msra.mxu0 %v6065
        %7321 = vmatpush.bf16.msra.mxu0 %v6057
        %7322 = vmatpush.bf16.msra.mxu0 %v6049
        %7323 = vmatpush.bf16.msra.mxu0 %v6041
        %7324 = vmatpush.bf16.msra.mxu0 %v6033
        %7325 = vmatpush.bf16.msra.mxu0 %v6025
        %7326 = vmatpush.bf16.msra.mxu0 %v6017
        %7327 = vmatmul.bf16.gmra.mxu0 %v2843
        %v7328 = vpop.f32.mrf.mxu0
        %v7329 = vadd.f32 %v7315, %v7328
        %v7330 = vpop.f32.mrf.mxu0
        %v7331 = vadd.f32 %v7317, %v7330
        %7332 = vdwg.mxu0
        %7333 = vmatpush.bf16.msra.mxu0 %v6137
        %7334 = vmatpush.bf16.msra.mxu0 %v6129
        %7335 = vmatpush.bf16.msra.mxu0 %v6121
        %7336 = vmatpush.bf16.msra.mxu0 %v6113
        %7337 = vmatpush.bf16.msra.mxu0 %v6105
        %7338 = vmatpush.bf16.msra.mxu0 %v6097
        %7339 = vmatpush.bf16.msra.mxu0 %v6089
        %7340 = vmatpush.bf16.msra.mxu0 %v6081
        %7341 = vmatmul.bf16.gmra.mxu0 %v2844
        %v7342 = vpop.f32.mrf.mxu0
        %v7343 = vadd.f32 %v7329, %v7342
        %v7344 = vpop.f32.mrf.mxu0
        %v7345 = vadd.f32 %v7331, %v7344
        %7346 = vdwg.mxu0
        %7347 = vmatpush.bf16.msra.mxu0 %v6201
        %7348 = vmatpush.bf16.msra.mxu0 %v6193
        %7349 = vmatpush.bf16.msra.mxu0 %v6185
        %7350 = vmatpush.bf16.msra.mxu0 %v6177
        %7351 = vmatpush.bf16.msra.mxu0 %v6169
        %7352 = vmatpush.bf16.msra.mxu0 %v6161
        %7353 = vmatpush.bf16.msra.mxu0 %v6153
        %7354 = vmatpush.bf16.msra.mxu0 %v6145
        %7355 = vmatmul.bf16.gmra.mxu0 %v2845
        %v7356 = vpop.f32.mrf.mxu0
        %v7357 = vadd.f32 %v7343, %v7356
        %v7358 = vpop.f32.mrf.mxu0
        %v7359 = vadd.f32 %v7345, %v7358
        %7360 = vdwg.mxu0
        %7361 = vmatpush.bf16.msra.mxu0 %v6265
        %7362 = vmatpush.bf16.msra.mxu0 %v6257
        %7363 = vmatpush.bf16.msra.mxu0 %v6249
        %7364 = vmatpush.bf16.msra.mxu0 %v6241
        %7365 = vmatpush.bf16.msra.mxu0 %v6233
        %7366 = vmatpush.bf16.msra.mxu0 %v6225
        %7367 = vmatpush.bf16.msra.mxu0 %v6217
        %7368 = vmatpush.bf16.msra.mxu0 %v6209
        %7369 = vmatmul.bf16.gmra.mxu0 %v2846
        %v7370 = vpop.f32.mrf.mxu0
        %v7371 = vadd.f32 %v7357, %v7370
        %v7372 = vpop.f32.mrf.mxu0
        %v7373 = vadd.f32 %v7359, %v7372
        %7374 = vdwg.mxu0
        %7375 = vmatpush.bf16.msra.mxu0 0
        %7376 = vmatpush.bf16.msra.mxu0 0
        %7377 = vmatpush.bf16.msra.mxu0 0
        %7378 = vmatpush.bf16.msra.mxu0 0
        %7379 = vmatpush.bf16.msra.mxu0 %v7170
        %7380 = vmatpush.bf16.msra.mxu0 %v6289
        %7381 = vmatpush.bf16.msra.mxu0 %v6281
        %7382 = vmatpush.bf16.msra.mxu0 %v6273
        %7383 = vmatmul.bf16.gmra.mxu0 %v7163
        %v7384 = vpop.f32.mrf.mxu0
        %v7385 = vadd.f32 %v7371, %v7384
        %v7386 = vpop.f32.mrf.mxu0
        %v7387 = vadd.f32 %v7373, %v7386
        %7388 = vdwg.mxu0
        %7389 = vmatpush.bf16.msra.mxu0 %v5498
        %7390 = vmatpush.bf16.msra.mxu0 %v5490
        %7391 = vmatpush.bf16.msra.mxu0 %v5482
        %7392 = vmatpush.bf16.msra.mxu0 %v5474
        %7393 = vmatpush.bf16.msra.mxu0 %v5466
        %7394 = vmatpush.bf16.msra.mxu0 %v5458
        %7395 = vmatpush.bf16.msra.mxu0 %v5450
        %7396 = vmatpush.bf16.msra.mxu0 %v5442
        %7397 = vmatmul.bf16.gmra.mxu0 %v2834
        %v7398 = vpop.f32.mrf.mxu0
        %v7399 = vadd.f32 %v2785, %v7398
        %v7400 = vpop.f32.mrf.mxu0
        %v7401 = vadd.f32 %v2790, %v7400
        %7402 = vdwg.mxu0
        %7403 = vmatpush.bf16.msra.mxu0 %v5562
        %7404 = vmatpush.bf16.msra.mxu0 %v5554
        %7405 = vmatpush.bf16.msra.mxu0 %v5546
        %7406 = vmatpush.bf16.msra.mxu0 %v5538
        %7407 = vmatpush.bf16.msra.mxu0 %v5530
        %7408 = vmatpush.bf16.msra.mxu0 %v5522
        %7409 = vmatpush.bf16.msra.mxu0 %v5514
        %7410 = vmatpush.bf16.msra.mxu0 %v5506
        %7411 = vmatmul.bf16.gmra.mxu0 %v2835
        %v7412 = vpop.f32.mrf.mxu0
        %v7413 = vadd.f32 %v7399, %v7412
        %v7414 = vpop.f32.mrf.mxu0
        %v7415 = vadd.f32 %v7401, %v7414
        %7416 = vdwg.mxu0
        %7417 = vmatpush.bf16.msra.mxu0 %v5626
        %7418 = vmatpush.bf16.msra.mxu0 %v5618
        %7419 = vmatpush.bf16.msra.mxu0 %v5610
        %7420 = vmatpush.bf16.msra.mxu0 %v5602
        %7421 = vmatpush.bf16.msra.mxu0 %v5594
        %7422 = vmatpush.bf16.msra.mxu0 %v5586
        %7423 = vmatpush.bf16.msra.mxu0 %v5578
        %7424 = vmatpush.bf16.msra.mxu0 %v5570
        %7425 = vmatmul.bf16.gmra.mxu0 %v2836
        %v7426 = vpop.f32.mrf.mxu0
        %v7427 = vadd.f32 %v7413, %v7426
        %v7428 = vpop.f32.mrf.mxu0
        %v7429 = vadd.f32 %v7415, %v7428
        %7430 = vdwg.mxu0
        %7431 = vmatpush.bf16.msra.mxu0 %v5690
        %7432 = vmatpush.bf16.msra.mxu0 %v5682
        %7433 = vmatpush.bf16.msra.mxu0 %v5674
        %7434 = vmatpush.bf16.msra.mxu0 %v5666
        %7435 = vmatpush.bf16.msra.mxu0 %v5658
        %7436 = vmatpush.bf16.msra.mxu0 %v5650
        %7437 = vmatpush.bf16.msra.mxu0 %v5642
        %7438 = vmatpush.bf16.msra.mxu0 %v5634
        %7439 = vmatmul.bf16.gmra.mxu0 %v2837
        %v7440 = vpop.f32.mrf.mxu0
        %v7441 = vadd.f32 %v7427, %v7440
        %v7442 = vpop.f32.mrf.mxu0
        %v7443 = vadd.f32 %v7429, %v7442
        %7444 = vdwg.mxu0
        %7445 = vmatpush.bf16.msra.mxu0 %v5754
        %7446 = vmatpush.bf16.msra.mxu0 %v5746
        %7447 = vmatpush.bf16.msra.mxu0 %v5738
        %7448 = vmatpush.bf16.msra.mxu0 %v5730
        %7449 = vmatpush.bf16.msra.mxu0 %v5722
        %7450 = vmatpush.bf16.msra.mxu0 %v5714
        %7451 = vmatpush.bf16.msra.mxu0 %v5706
        %7452 = vmatpush.bf16.msra.mxu0 %v5698
        %7453 = vmatmul.bf16.gmra.mxu0 %v2838
        %v7454 = vpop.f32.mrf.mxu0
        %v7455 = vadd.f32 %v7441, %v7454
        %v7456 = vpop.f32.mrf.mxu0
        %v7457 = vadd.f32 %v7443, %v7456
        %7458 = vdwg.mxu0
        %7459 = vmatpush.bf16.msra.mxu0 %v5818
        %7460 = vmatpush.bf16.msra.mxu0 %v5810
        %7461 = vmatpush.bf16.msra.mxu0 %v5802
        %7462 = vmatpush.bf16.msra.mxu0 %v5794
        %7463 = vmatpush.bf16.msra.mxu0 %v5786
        %7464 = vmatpush.bf16.msra.mxu0 %v5778
        %7465 = vmatpush.bf16.msra.mxu0 %v5770
        %7466 = vmatpush.bf16.msra.mxu0 %v5762
        %7467 = vmatmul.bf16.gmra.mxu0 %v2839
        %v7468 = vpop.f32.mrf.mxu0
        %v7469 = vadd.f32 %v7455, %v7468
        %v7470 = vpop.f32.mrf.mxu0
        %v7471 = vadd.f32 %v7457, %v7470
        %7472 = vdwg.mxu0
        %7473 = vmatpush.bf16.msra.mxu0 %v5882
        %7474 = vmatpush.bf16.msra.mxu0 %v5874
        %7475 = vmatpush.bf16.msra.mxu0 %v5866
        %7476 = vmatpush.bf16.msra.mxu0 %v5858
        %7477 = vmatpush.bf16.msra.mxu0 %v5850
        %7478 = vmatpush.bf16.msra.mxu0 %v5842
        %7479 = vmatpush.bf16.msra.mxu0 %v5834
        %7480 = vmatpush.bf16.msra.mxu0 %v5826
        %7481 = vmatmul.bf16.gmra.mxu0 %v2840
        %v7482 = vpop.f32.mrf.mxu0
        %v7483 = vadd.f32 %v7469, %v7482
        %v7484 = vpop.f32.mrf.mxu0
        %v7485 = vadd.f32 %v7471, %v7484
        %7486 = vdwg.mxu0
        %7487 = vmatpush.bf16.msra.mxu0 %v5946
        %7488 = vmatpush.bf16.msra.mxu0 %v5938
        %7489 = vmatpush.bf16.msra.mxu0 %v5930
        %7490 = vmatpush.bf16.msra.mxu0 %v5922
        %7491 = vmatpush.bf16.msra.mxu0 %v5914
        %7492 = vmatpush.bf16.msra.mxu0 %v5906
        %7493 = vmatpush.bf16.msra.mxu0 %v5898
        %7494 = vmatpush.bf16.msra.mxu0 %v5890
        %7495 = vmatmul.bf16.gmra.mxu0 %v2841
        %v7496 = vpop.f32.mrf.mxu0
        %v7497 = vadd.f32 %v7483, %v7496
        %v7498 = vpop.f32.mrf.mxu0
        %v7499 = vadd.f32 %v7485, %v7498
        %7500 = vdwg.mxu0
        %7501 = vmatpush.bf16.msra.mxu0 %v6010
        %7502 = vmatpush.bf16.msra.mxu0 %v6002
        %7503 = vmatpush.bf16.msra.mxu0 %v5994
        %7504 = vmatpush.bf16.msra.mxu0 %v5986
        %7505 = vmatpush.bf16.msra.mxu0 %v5978
        %7506 = vmatpush.bf16.msra.mxu0 %v5970
        %7507 = vmatpush.bf16.msra.mxu0 %v5962
        %7508 = vmatpush.bf16.msra.mxu0 %v5954
        %7509 = vmatmul.bf16.gmra.mxu0 %v2842
        %v7510 = vpop.f32.mrf.mxu0
        %v7511 = vadd.f32 %v7497, %v7510
        %v7512 = vpop.f32.mrf.mxu0
        %v7513 = vadd.f32 %v7499, %v7512
        %7514 = vdwg.mxu0
        %7515 = vmatpush.bf16.msra.mxu0 %v6074
        %7516 = vmatpush.bf16.msra.mxu0 %v6066
        %7517 = vmatpush.bf16.msra.mxu0 %v6058
        %7518 = vmatpush.bf16.msra.mxu0 %v6050
        %7519 = vmatpush.bf16.msra.mxu0 %v6042
        %7520 = vmatpush.bf16.msra.mxu0 %v6034
        %7521 = vmatpush.bf16.msra.mxu0 %v6026
        %7522 = vmatpush.bf16.msra.mxu0 %v6018
        %7523 = vmatmul.bf16.gmra.mxu0 %v2843
        %v7524 = vpop.f32.mrf.mxu0
        %v7525 = vadd.f32 %v7511, %v7524
        %v7526 = vpop.f32.mrf.mxu0
        %v7527 = vadd.f32 %v7513, %v7526
        %7528 = vdwg.mxu0
        %7529 = vmatpush.bf16.msra.mxu0 %v6138
        %7530 = vmatpush.bf16.msra.mxu0 %v6130
        %7531 = vmatpush.bf16.msra.mxu0 %v6122
        %7532 = vmatpush.bf16.msra.mxu0 %v6114
        %7533 = vmatpush.bf16.msra.mxu0 %v6106
        %7534 = vmatpush.bf16.msra.mxu0 %v6098
        %7535 = vmatpush.bf16.msra.mxu0 %v6090
        %7536 = vmatpush.bf16.msra.mxu0 %v6082
        %7537 = vmatmul.bf16.gmra.mxu0 %v2844
        %v7538 = vpop.f32.mrf.mxu0
        %v7539 = vadd.f32 %v7525, %v7538
        %v7540 = vpop.f32.mrf.mxu0
        %v7541 = vadd.f32 %v7527, %v7540
        %7542 = vdwg.mxu0
        %7543 = vmatpush.bf16.msra.mxu0 %v6202
        %7544 = vmatpush.bf16.msra.mxu0 %v6194
        %7545 = vmatpush.bf16.msra.mxu0 %v6186
        %7546 = vmatpush.bf16.msra.mxu0 %v6178
        %7547 = vmatpush.bf16.msra.mxu0 %v6170
        %7548 = vmatpush.bf16.msra.mxu0 %v6162
        %7549 = vmatpush.bf16.msra.mxu0 %v6154
        %7550 = vmatpush.bf16.msra.mxu0 %v6146
        %7551 = vmatmul.bf16.gmra.mxu0 %v2845
        %v7552 = vpop.f32.mrf.mxu0
        %v7553 = vadd.f32 %v7539, %v7552
        %v7554 = vpop.f32.mrf.mxu0
        %v7555 = vadd.f32 %v7541, %v7554
        %7556 = vdwg.mxu0
        %7557 = vmatpush.bf16.msra.mxu0 %v6266
        %7558 = vmatpush.bf16.msra.mxu0 %v6258
        %7559 = vmatpush.bf16.msra.mxu0 %v6250
        %7560 = vmatpush.bf16.msra.mxu0 %v6242
        %7561 = vmatpush.bf16.msra.mxu0 %v6234
        %7562 = vmatpush.bf16.msra.mxu0 %v6226
        %7563 = vmatpush.bf16.msra.mxu0 %v6218
        %7564 = vmatpush.bf16.msra.mxu0 %v6210
        %7565 = vmatmul.bf16.gmra.mxu0 %v2846
        %v7566 = vpop.f32.mrf.mxu0
        %v7567 = vadd.f32 %v7553, %v7566
        %v7568 = vpop.f32.mrf.mxu0
        %v7569 = vadd.f32 %v7555, %v7568
        %7570 = vdwg.mxu0
        %7571 = vmatpush.bf16.msra.mxu0 0
        %7572 = vmatpush.bf16.msra.mxu0 0
        %7573 = vmatpush.bf16.msra.mxu0 0
        %7574 = vmatpush.bf16.msra.mxu0 0
        %7575 = vmatpush.bf16.msra.mxu0 %v7173
        %7576 = vmatpush.bf16.msra.mxu0 %v6290
        %7577 = vmatpush.bf16.msra.mxu0 %v6282
        %7578 = vmatpush.bf16.msra.mxu0 %v6274
        %7579 = vmatmul.bf16.gmra.mxu0 %v7163
        %v7580 = vpop.f32.mrf.mxu0
        %v7581 = vadd.f32 %v7567, %v7580
        %v7582 = vpop.f32.mrf.mxu0
        %v7583 = vadd.f32 %v7569, %v7582
        %7584 = vdwg.mxu0
        %7585 = vmatpush.bf16.msra.mxu0 %v5499
        %7586 = vmatpush.bf16.msra.mxu0 %v5491
        %7587 = vmatpush.bf16.msra.mxu0 %v5483
        %7588 = vmatpush.bf16.msra.mxu0 %v5475
        %7589 = vmatpush.bf16.msra.mxu0 %v5467
        %7590 = vmatpush.bf16.msra.mxu0 %v5459
        %7591 = vmatpush.bf16.msra.mxu0 %v5451
        %7592 = vmatpush.bf16.msra.mxu0 %v5443
        %7593 = vmatmul.bf16.gmra.mxu0 %v2834
        %v7594 = vpop.f32.mrf.mxu0
        %v7595 = vadd.f32 %v2785, %v7594
        %v7596 = vpop.f32.mrf.mxu0
        %v7597 = vadd.f32 %v2790, %v7596
        %7598 = vdwg.mxu0
        %7599 = vmatpush.bf16.msra.mxu0 %v5563
        %7600 = vmatpush.bf16.msra.mxu0 %v5555
        %7601 = vmatpush.bf16.msra.mxu0 %v5547
        %7602 = vmatpush.bf16.msra.mxu0 %v5539
        %7603 = vmatpush.bf16.msra.mxu0 %v5531
        %7604 = vmatpush.bf16.msra.mxu0 %v5523
        %7605 = vmatpush.bf16.msra.mxu0 %v5515
        %7606 = vmatpush.bf16.msra.mxu0 %v5507
        %7607 = vmatmul.bf16.gmra.mxu0 %v2835
        %v7608 = vpop.f32.mrf.mxu0
        %v7609 = vadd.f32 %v7595, %v7608
        %v7610 = vpop.f32.mrf.mxu0
        %v7611 = vadd.f32 %v7597, %v7610
        %7612 = vdwg.mxu0
        %7613 = vmatpush.bf16.msra.mxu0 %v5627
        %7614 = vmatpush.bf16.msra.mxu0 %v5619
        %7615 = vmatpush.bf16.msra.mxu0 %v5611
        %7616 = vmatpush.bf16.msra.mxu0 %v5603
        %7617 = vmatpush.bf16.msra.mxu0 %v5595
        %7618 = vmatpush.bf16.msra.mxu0 %v5587
        %7619 = vmatpush.bf16.msra.mxu0 %v5579
        %7620 = vmatpush.bf16.msra.mxu0 %v5571
        %7621 = vmatmul.bf16.gmra.mxu0 %v2836
        %v7622 = vpop.f32.mrf.mxu0
        %v7623 = vadd.f32 %v7609, %v7622
        %v7624 = vpop.f32.mrf.mxu0
        %v7625 = vadd.f32 %v7611, %v7624
        %7626 = vdwg.mxu0
        %7627 = vmatpush.bf16.msra.mxu0 %v5691
        %7628 = vmatpush.bf16.msra.mxu0 %v5683
        %7629 = vmatpush.bf16.msra.mxu0 %v5675
        %7630 = vmatpush.bf16.msra.mxu0 %v5667
        %7631 = vmatpush.bf16.msra.mxu0 %v5659
        %7632 = vmatpush.bf16.msra.mxu0 %v5651
        %7633 = vmatpush.bf16.msra.mxu0 %v5643
        %7634 = vmatpush.bf16.msra.mxu0 %v5635
        %7635 = vmatmul.bf16.gmra.mxu0 %v2837
        %v7636 = vpop.f32.mrf.mxu0
        %v7637 = vadd.f32 %v7623, %v7636
        %v7638 = vpop.f32.mrf.mxu0
        %v7639 = vadd.f32 %v7625, %v7638
        %7640 = vdwg.mxu0
        %7641 = vmatpush.bf16.msra.mxu0 %v5755
        %7642 = vmatpush.bf16.msra.mxu0 %v5747
        %7643 = vmatpush.bf16.msra.mxu0 %v5739
        %7644 = vmatpush.bf16.msra.mxu0 %v5731
        %7645 = vmatpush.bf16.msra.mxu0 %v5723
        %7646 = vmatpush.bf16.msra.mxu0 %v5715
        %7647 = vmatpush.bf16.msra.mxu0 %v5707
        %7648 = vmatpush.bf16.msra.mxu0 %v5699
        %7649 = vmatmul.bf16.gmra.mxu0 %v2838
        %v7650 = vpop.f32.mrf.mxu0
        %v7651 = vadd.f32 %v7637, %v7650
        %v7652 = vpop.f32.mrf.mxu0
        %v7653 = vadd.f32 %v7639, %v7652
        %7654 = vdwg.mxu0
        %7655 = vmatpush.bf16.msra.mxu0 %v5819
        %7656 = vmatpush.bf16.msra.mxu0 %v5811
        %7657 = vmatpush.bf16.msra.mxu0 %v5803
        %7658 = vmatpush.bf16.msra.mxu0 %v5795
        %7659 = vmatpush.bf16.msra.mxu0 %v5787
        %7660 = vmatpush.bf16.msra.mxu0 %v5779
        %7661 = vmatpush.bf16.msra.mxu0 %v5771
        %7662 = vmatpush.bf16.msra.mxu0 %v5763
        %7663 = vmatmul.bf16.gmra.mxu0 %v2839
        %v7664 = vpop.f32.mrf.mxu0
        %v7665 = vadd.f32 %v7651, %v7664
        %v7666 = vpop.f32.mrf.mxu0
        %v7667 = vadd.f32 %v7653, %v7666
        %7668 = vdwg.mxu0
        %7669 = vmatpush.bf16.msra.mxu0 %v5883
        %7670 = vmatpush.bf16.msra.mxu0 %v5875
        %7671 = vmatpush.bf16.msra.mxu0 %v5867
        %7672 = vmatpush.bf16.msra.mxu0 %v5859
        %7673 = vmatpush.bf16.msra.mxu0 %v5851
        %7674 = vmatpush.bf16.msra.mxu0 %v5843
        %7675 = vmatpush.bf16.msra.mxu0 %v5835
        %7676 = vmatpush.bf16.msra.mxu0 %v5827
        %7677 = vmatmul.bf16.gmra.mxu0 %v2840
        %v7678 = vpop.f32.mrf.mxu0
        %v7679 = vadd.f32 %v7665, %v7678
        %v7680 = vpop.f32.mrf.mxu0
        %v7681 = vadd.f32 %v7667, %v7680
        %7682 = vdwg.mxu0
        %7683 = vmatpush.bf16.msra.mxu0 %v5947
        %7684 = vmatpush.bf16.msra.mxu0 %v5939
        %7685 = vmatpush.bf16.msra.mxu0 %v5931
        %7686 = vmatpush.bf16.msra.mxu0 %v5923
        %7687 = vmatpush.bf16.msra.mxu0 %v5915
        %7688 = vmatpush.bf16.msra.mxu0 %v5907
        %7689 = vmatpush.bf16.msra.mxu0 %v5899
        %7690 = vmatpush.bf16.msra.mxu0 %v5891
        %7691 = vmatmul.bf16.gmra.mxu0 %v2841
        %v7692 = vpop.f32.mrf.mxu0
        %v7693 = vadd.f32 %v7679, %v7692
        %v7694 = vpop.f32.mrf.mxu0
        %v7695 = vadd.f32 %v7681, %v7694
        %7696 = vdwg.mxu0
        %7697 = vmatpush.bf16.msra.mxu0 %v6011
        %7698 = vmatpush.bf16.msra.mxu0 %v6003
        %7699 = vmatpush.bf16.msra.mxu0 %v5995
        %7700 = vmatpush.bf16.msra.mxu0 %v5987
        %7701 = vmatpush.bf16.msra.mxu0 %v5979
        %7702 = vmatpush.bf16.msra.mxu0 %v5971
        %7703 = vmatpush.bf16.msra.mxu0 %v5963
        %7704 = vmatpush.bf16.msra.mxu0 %v5955
        %7705 = vmatmul.bf16.gmra.mxu0 %v2842
        %v7706 = vpop.f32.mrf.mxu0
        %v7707 = vadd.f32 %v7693, %v7706
        %v7708 = vpop.f32.mrf.mxu0
        %v7709 = vadd.f32 %v7695, %v7708
        %7710 = vdwg.mxu0
        %7711 = vmatpush.bf16.msra.mxu0 %v6075
        %7712 = vmatpush.bf16.msra.mxu0 %v6067
        %7713 = vmatpush.bf16.msra.mxu0 %v6059
        %7714 = vmatpush.bf16.msra.mxu0 %v6051
        %7715 = vmatpush.bf16.msra.mxu0 %v6043
        %7716 = vmatpush.bf16.msra.mxu0 %v6035
        %7717 = vmatpush.bf16.msra.mxu0 %v6027
        %7718 = vmatpush.bf16.msra.mxu0 %v6019
        %7719 = vmatmul.bf16.gmra.mxu0 %v2843
        %v7720 = vpop.f32.mrf.mxu0
        %v7721 = vadd.f32 %v7707, %v7720
        %v7722 = vpop.f32.mrf.mxu0
        %v7723 = vadd.f32 %v7709, %v7722
        %7724 = vdwg.mxu0
        %7725 = vmatpush.bf16.msra.mxu0 %v6139
        %7726 = vmatpush.bf16.msra.mxu0 %v6131
        %7727 = vmatpush.bf16.msra.mxu0 %v6123
        %7728 = vmatpush.bf16.msra.mxu0 %v6115
        %7729 = vmatpush.bf16.msra.mxu0 %v6107
        %7730 = vmatpush.bf16.msra.mxu0 %v6099
        %7731 = vmatpush.bf16.msra.mxu0 %v6091
        %7732 = vmatpush.bf16.msra.mxu0 %v6083
        %7733 = vmatmul.bf16.gmra.mxu0 %v2844
        %v7734 = vpop.f32.mrf.mxu0
        %v7735 = vadd.f32 %v7721, %v7734
        %v7736 = vpop.f32.mrf.mxu0
        %v7737 = vadd.f32 %v7723, %v7736
        %7738 = vdwg.mxu0
        %7739 = vmatpush.bf16.msra.mxu0 %v6203
        %7740 = vmatpush.bf16.msra.mxu0 %v6195
        %7741 = vmatpush.bf16.msra.mxu0 %v6187
        %7742 = vmatpush.bf16.msra.mxu0 %v6179
        %7743 = vmatpush.bf16.msra.mxu0 %v6171
        %7744 = vmatpush.bf16.msra.mxu0 %v6163
        %7745 = vmatpush.bf16.msra.mxu0 %v6155
        %7746 = vmatpush.bf16.msra.mxu0 %v6147
        %7747 = vmatmul.bf16.gmra.mxu0 %v2845
        %v7748 = vpop.f32.mrf.mxu0
        %v7749 = vadd.f32 %v7735, %v7748
        %v7750 = vpop.f32.mrf.mxu0
        %v7751 = vadd.f32 %v7737, %v7750
        %7752 = vdwg.mxu0
        %7753 = vmatpush.bf16.msra.mxu0 %v6267
        %7754 = vmatpush.bf16.msra.mxu0 %v6259
        %7755 = vmatpush.bf16.msra.mxu0 %v6251
        %7756 = vmatpush.bf16.msra.mxu0 %v6243
        %7757 = vmatpush.bf16.msra.mxu0 %v6235
        %7758 = vmatpush.bf16.msra.mxu0 %v6227
        %7759 = vmatpush.bf16.msra.mxu0 %v6219
        %7760 = vmatpush.bf16.msra.mxu0 %v6211
        %7761 = vmatmul.bf16.gmra.mxu0 %v2846
        %v7762 = vpop.f32.mrf.mxu0
        %v7763 = vadd.f32 %v7749, %v7762
        %v7764 = vpop.f32.mrf.mxu0
        %v7765 = vadd.f32 %v7751, %v7764
        %7766 = vdwg.mxu0
        %7767 = vmatpush.bf16.msra.mxu0 0
        %7768 = vmatpush.bf16.msra.mxu0 0
        %7769 = vmatpush.bf16.msra.mxu0 0
        %7770 = vmatpush.bf16.msra.mxu0 0
        %7771 = vmatpush.bf16.msra.mxu0 %v7176
        %7772 = vmatpush.bf16.msra.mxu0 %v6291
        %7773 = vmatpush.bf16.msra.mxu0 %v6283
        %7774 = vmatpush.bf16.msra.mxu0 %v6275
        %7775 = vmatmul.bf16.gmra.mxu0 %v7163
        %v7776 = vpop.f32.mrf.mxu0
        %v7777 = vadd.f32 %v7763, %v7776
        %v7778 = vpop.f32.mrf.mxu0
        %v7779 = vadd.f32 %v7765, %v7778
        %7780 = vdwg.mxu0
        %7781 = vmatpush.bf16.msra.mxu0 %v5500
        %7782 = vmatpush.bf16.msra.mxu0 %v5492
        %7783 = vmatpush.bf16.msra.mxu0 %v5484
        %7784 = vmatpush.bf16.msra.mxu0 %v5476
        %7785 = vmatpush.bf16.msra.mxu0 %v5468
        %7786 = vmatpush.bf16.msra.mxu0 %v5460
        %7787 = vmatpush.bf16.msra.mxu0 %v5452
        %7788 = vmatpush.bf16.msra.mxu0 %v5444
        %7789 = vmatmul.bf16.gmra.mxu0 %v2834
        %v7790 = vpop.f32.mrf.mxu0
        %v7791 = vadd.f32 %v2785, %v7790
        %v7792 = vpop.f32.mrf.mxu0
        %v7793 = vadd.f32 %v2790, %v7792
        %7794 = vdwg.mxu0
        %7795 = vmatpush.bf16.msra.mxu0 %v5564
        %7796 = vmatpush.bf16.msra.mxu0 %v5556
        %7797 = vmatpush.bf16.msra.mxu0 %v5548
        %7798 = vmatpush.bf16.msra.mxu0 %v5540
        %7799 = vmatpush.bf16.msra.mxu0 %v5532
        %7800 = vmatpush.bf16.msra.mxu0 %v5524
        %7801 = vmatpush.bf16.msra.mxu0 %v5516
        %7802 = vmatpush.bf16.msra.mxu0 %v5508
        %7803 = vmatmul.bf16.gmra.mxu0 %v2835
        %v7804 = vpop.f32.mrf.mxu0
        %v7805 = vadd.f32 %v7791, %v7804
        %v7806 = vpop.f32.mrf.mxu0
        %v7807 = vadd.f32 %v7793, %v7806
        %7808 = vdwg.mxu0
        %7809 = vmatpush.bf16.msra.mxu0 %v5628
        %7810 = vmatpush.bf16.msra.mxu0 %v5620
        %7811 = vmatpush.bf16.msra.mxu0 %v5612
        %7812 = vmatpush.bf16.msra.mxu0 %v5604
        %7813 = vmatpush.bf16.msra.mxu0 %v5596
        %7814 = vmatpush.bf16.msra.mxu0 %v5588
        %7815 = vmatpush.bf16.msra.mxu0 %v5580
        %7816 = vmatpush.bf16.msra.mxu0 %v5572
        %7817 = vmatmul.bf16.gmra.mxu0 %v2836
        %v7818 = vpop.f32.mrf.mxu0
        %v7819 = vadd.f32 %v7805, %v7818
        %v7820 = vpop.f32.mrf.mxu0
        %v7821 = vadd.f32 %v7807, %v7820
        %7822 = vdwg.mxu0
        %7823 = vmatpush.bf16.msra.mxu0 %v5692
        %7824 = vmatpush.bf16.msra.mxu0 %v5684
        %7825 = vmatpush.bf16.msra.mxu0 %v5676
        %7826 = vmatpush.bf16.msra.mxu0 %v5668
        %7827 = vmatpush.bf16.msra.mxu0 %v5660
        %7828 = vmatpush.bf16.msra.mxu0 %v5652
        %7829 = vmatpush.bf16.msra.mxu0 %v5644
        %7830 = vmatpush.bf16.msra.mxu0 %v5636
        %7831 = vmatmul.bf16.gmra.mxu0 %v2837
        %v7832 = vpop.f32.mrf.mxu0
        %v7833 = vadd.f32 %v7819, %v7832
        %v7834 = vpop.f32.mrf.mxu0
        %v7835 = vadd.f32 %v7821, %v7834
        %7836 = vdwg.mxu0
        %7837 = vmatpush.bf16.msra.mxu0 %v5756
        %7838 = vmatpush.bf16.msra.mxu0 %v5748
        %7839 = vmatpush.bf16.msra.mxu0 %v5740
        %7840 = vmatpush.bf16.msra.mxu0 %v5732
        %7841 = vmatpush.bf16.msra.mxu0 %v5724
        %7842 = vmatpush.bf16.msra.mxu0 %v5716
        %7843 = vmatpush.bf16.msra.mxu0 %v5708
        %7844 = vmatpush.bf16.msra.mxu0 %v5700
        %7845 = vmatmul.bf16.gmra.mxu0 %v2838
        %v7846 = vpop.f32.mrf.mxu0
        %v7847 = vadd.f32 %v7833, %v7846
        %v7848 = vpop.f32.mrf.mxu0
        %v7849 = vadd.f32 %v7835, %v7848
        %7850 = vdwg.mxu0
        %7851 = vmatpush.bf16.msra.mxu0 %v5820
        %7852 = vmatpush.bf16.msra.mxu0 %v5812
        %7853 = vmatpush.bf16.msra.mxu0 %v5804
        %7854 = vmatpush.bf16.msra.mxu0 %v5796
        %7855 = vmatpush.bf16.msra.mxu0 %v5788
        %7856 = vmatpush.bf16.msra.mxu0 %v5780
        %7857 = vmatpush.bf16.msra.mxu0 %v5772
        %7858 = vmatpush.bf16.msra.mxu0 %v5764
        %7859 = vmatmul.bf16.gmra.mxu0 %v2839
        %v7860 = vpop.f32.mrf.mxu0
        %v7861 = vadd.f32 %v7847, %v7860
        %v7862 = vpop.f32.mrf.mxu0
        %v7863 = vadd.f32 %v7849, %v7862
        %7864 = vdwg.mxu0
        %7865 = vmatpush.bf16.msra.mxu0 %v5884
        %7866 = vmatpush.bf16.msra.mxu0 %v5876
        %7867 = vmatpush.bf16.msra.mxu0 %v5868
        %7868 = vmatpush.bf16.msra.mxu0 %v5860
        %7869 = vmatpush.bf16.msra.mxu0 %v5852
        %7870 = vmatpush.bf16.msra.mxu0 %v5844
        %7871 = vmatpush.bf16.msra.mxu0 %v5836
        %7872 = vmatpush.bf16.msra.mxu0 %v5828
        %7873 = vmatmul.bf16.gmra.mxu0 %v2840
        %v7874 = vpop.f32.mrf.mxu0
        %v7875 = vadd.f32 %v7861, %v7874
        %v7876 = vpop.f32.mrf.mxu0
        %v7877 = vadd.f32 %v7863, %v7876
        %7878 = vdwg.mxu0
        %7879 = vmatpush.bf16.msra.mxu0 %v5948
        %7880 = vmatpush.bf16.msra.mxu0 %v5940
        %7881 = vmatpush.bf16.msra.mxu0 %v5932
        %7882 = vmatpush.bf16.msra.mxu0 %v5924
        %7883 = vmatpush.bf16.msra.mxu0 %v5916
        %7884 = vmatpush.bf16.msra.mxu0 %v5908
        %7885 = vmatpush.bf16.msra.mxu0 %v5900
        %7886 = vmatpush.bf16.msra.mxu0 %v5892
        %7887 = vmatmul.bf16.gmra.mxu0 %v2841
        %v7888 = vpop.f32.mrf.mxu0
        %v7889 = vadd.f32 %v7875, %v7888
        %v7890 = vpop.f32.mrf.mxu0
        %v7891 = vadd.f32 %v7877, %v7890
        %7892 = vdwg.mxu0
        %7893 = vmatpush.bf16.msra.mxu0 %v6012
        %7894 = vmatpush.bf16.msra.mxu0 %v6004
        %7895 = vmatpush.bf16.msra.mxu0 %v5996
        %7896 = vmatpush.bf16.msra.mxu0 %v5988
        %7897 = vmatpush.bf16.msra.mxu0 %v5980
        %7898 = vmatpush.bf16.msra.mxu0 %v5972
        %7899 = vmatpush.bf16.msra.mxu0 %v5964
        %7900 = vmatpush.bf16.msra.mxu0 %v5956
        %7901 = vmatmul.bf16.gmra.mxu0 %v2842
        %v7902 = vpop.f32.mrf.mxu0
        %v7903 = vadd.f32 %v7889, %v7902
        %v7904 = vpop.f32.mrf.mxu0
        %v7905 = vadd.f32 %v7891, %v7904
        %7906 = vdwg.mxu0
        %7907 = vmatpush.bf16.msra.mxu0 %v6076
        %7908 = vmatpush.bf16.msra.mxu0 %v6068
        %7909 = vmatpush.bf16.msra.mxu0 %v6060
        %7910 = vmatpush.bf16.msra.mxu0 %v6052
        %7911 = vmatpush.bf16.msra.mxu0 %v6044
        %7912 = vmatpush.bf16.msra.mxu0 %v6036
        %7913 = vmatpush.bf16.msra.mxu0 %v6028
        %7914 = vmatpush.bf16.msra.mxu0 %v6020
        %7915 = vmatmul.bf16.gmra.mxu0 %v2843
        %v7916 = vpop.f32.mrf.mxu0
        %v7917 = vadd.f32 %v7903, %v7916
        %v7918 = vpop.f32.mrf.mxu0
        %v7919 = vadd.f32 %v7905, %v7918
        %7920 = vdwg.mxu0
        %7921 = vmatpush.bf16.msra.mxu0 %v6140
        %7922 = vmatpush.bf16.msra.mxu0 %v6132
        %7923 = vmatpush.bf16.msra.mxu0 %v6124
        %7924 = vmatpush.bf16.msra.mxu0 %v6116
        %7925 = vmatpush.bf16.msra.mxu0 %v6108
        %7926 = vmatpush.bf16.msra.mxu0 %v6100
        %7927 = vmatpush.bf16.msra.mxu0 %v6092
        %7928 = vmatpush.bf16.msra.mxu0 %v6084
        %7929 = vmatmul.bf16.gmra.mxu0 %v2844
        %v7930 = vpop.f32.mrf.mxu0
        %v7931 = vadd.f32 %v7917, %v7930
        %v7932 = vpop.f32.mrf.mxu0
        %v7933 = vadd.f32 %v7919, %v7932
        %7934 = vdwg.mxu0
        %7935 = vmatpush.bf16.msra.mxu0 %v6204
        %7936 = vmatpush.bf16.msra.mxu0 %v6196
        %7937 = vmatpush.bf16.msra.mxu0 %v6188
        %7938 = vmatpush.bf16.msra.mxu0 %v6180
        %7939 = vmatpush.bf16.msra.mxu0 %v6172
        %7940 = vmatpush.bf16.msra.mxu0 %v6164
        %7941 = vmatpush.bf16.msra.mxu0 %v6156
        %7942 = vmatpush.bf16.msra.mxu0 %v6148
        %7943 = vmatmul.bf16.gmra.mxu0 %v2845
        %v7944 = vpop.f32.mrf.mxu0
        %v7945 = vadd.f32 %v7931, %v7944
        %v7946 = vpop.f32.mrf.mxu0
        %v7947 = vadd.f32 %v7933, %v7946
        %7948 = vdwg.mxu0
        %7949 = vmatpush.bf16.msra.mxu0 %v6268
        %7950 = vmatpush.bf16.msra.mxu0 %v6260
        %7951 = vmatpush.bf16.msra.mxu0 %v6252
        %7952 = vmatpush.bf16.msra.mxu0 %v6244
        %7953 = vmatpush.bf16.msra.mxu0 %v6236
        %7954 = vmatpush.bf16.msra.mxu0 %v6228
        %7955 = vmatpush.bf16.msra.mxu0 %v6220
        %7956 = vmatpush.bf16.msra.mxu0 %v6212
        %7957 = vmatmul.bf16.gmra.mxu0 %v2846
        %v7958 = vpop.f32.mrf.mxu0
        %v7959 = vadd.f32 %v7945, %v7958
        %v7960 = vpop.f32.mrf.mxu0
        %v7961 = vadd.f32 %v7947, %v7960
        %7962 = vdwg.mxu0
        %7963 = vmatpush.bf16.msra.mxu0 0
        %7964 = vmatpush.bf16.msra.mxu0 0
        %7965 = vmatpush.bf16.msra.mxu0 0
        %7966 = vmatpush.bf16.msra.mxu0 0
        %7967 = vmatpush.bf16.msra.mxu0 %v7179
        %7968 = vmatpush.bf16.msra.mxu0 %v6292
        %7969 = vmatpush.bf16.msra.mxu0 %v6284
        %7970 = vmatpush.bf16.msra.mxu0 %v6276
        %7971 = vmatmul.bf16.gmra.mxu0 %v7163
        %v7972 = vpop.f32.mrf.mxu0
        %v7973 = vadd.f32 %v7959, %v7972
        %v7974 = vpop.f32.mrf.mxu0
        %v7975 = vadd.f32 %v7961, %v7974
        %7976 = vdwg.mxu0
        %7977 = vmatpush.bf16.msra.mxu0 %v5501
        %7978 = vmatpush.bf16.msra.mxu0 %v5493
        %7979 = vmatpush.bf16.msra.mxu0 %v5485
        %7980 = vmatpush.bf16.msra.mxu0 %v5477
        %7981 = vmatpush.bf16.msra.mxu0 %v5469
        %7982 = vmatpush.bf16.msra.mxu0 %v5461
        %7983 = vmatpush.bf16.msra.mxu0 %v5453
        %7984 = vmatpush.bf16.msra.mxu0 %v5445
        %7985 = vmatmul.bf16.gmra.mxu0 %v2834
        %v7986 = vpop.f32.mrf.mxu0
        %v7987 = vadd.f32 %v2785, %v7986
        %v7988 = vpop.f32.mrf.mxu0
        %v7989 = vadd.f32 %v2790, %v7988
        %7990 = vdwg.mxu0
        %7991 = vmatpush.bf16.msra.mxu0 %v5565
        %7992 = vmatpush.bf16.msra.mxu0 %v5557
        %7993 = vmatpush.bf16.msra.mxu0 %v5549
        %7994 = vmatpush.bf16.msra.mxu0 %v5541
        %7995 = vmatpush.bf16.msra.mxu0 %v5533
        %7996 = vmatpush.bf16.msra.mxu0 %v5525
        %7997 = vmatpush.bf16.msra.mxu0 %v5517
        %7998 = vmatpush.bf16.msra.mxu0 %v5509
        %7999 = vmatmul.bf16.gmra.mxu0 %v2835
        %v8000 = vpop.f32.mrf.mxu0
        %v8001 = vadd.f32 %v7987, %v8000
        %v8002 = vpop.f32.mrf.mxu0
        %v8003 = vadd.f32 %v7989, %v8002
        %8004 = vdwg.mxu0
        %8005 = vmatpush.bf16.msra.mxu0 %v5629
        %8006 = vmatpush.bf16.msra.mxu0 %v5621
        %8007 = vmatpush.bf16.msra.mxu0 %v5613
        %8008 = vmatpush.bf16.msra.mxu0 %v5605
        %8009 = vmatpush.bf16.msra.mxu0 %v5597
        %8010 = vmatpush.bf16.msra.mxu0 %v5589
        %8011 = vmatpush.bf16.msra.mxu0 %v5581
        %8012 = vmatpush.bf16.msra.mxu0 %v5573
        %8013 = vmatmul.bf16.gmra.mxu0 %v2836
        %v8014 = vpop.f32.mrf.mxu0
        %v8015 = vadd.f32 %v8001, %v8014
        %v8016 = vpop.f32.mrf.mxu0
        %v8017 = vadd.f32 %v8003, %v8016
        %8018 = vdwg.mxu0
        %8019 = vmatpush.bf16.msra.mxu0 %v5693
        %8020 = vmatpush.bf16.msra.mxu0 %v5685
        %8021 = vmatpush.bf16.msra.mxu0 %v5677
        %8022 = vmatpush.bf16.msra.mxu0 %v5669
        %8023 = vmatpush.bf16.msra.mxu0 %v5661
        %8024 = vmatpush.bf16.msra.mxu0 %v5653
        %8025 = vmatpush.bf16.msra.mxu0 %v5645
        %8026 = vmatpush.bf16.msra.mxu0 %v5637
        %8027 = vmatmul.bf16.gmra.mxu0 %v2837
        %v8028 = vpop.f32.mrf.mxu0
        %v8029 = vadd.f32 %v8015, %v8028
        %v8030 = vpop.f32.mrf.mxu0
        %v8031 = vadd.f32 %v8017, %v8030
        %8032 = vdwg.mxu0
        %8033 = vmatpush.bf16.msra.mxu0 %v5757
        %8034 = vmatpush.bf16.msra.mxu0 %v5749
        %8035 = vmatpush.bf16.msra.mxu0 %v5741
        %8036 = vmatpush.bf16.msra.mxu0 %v5733
        %8037 = vmatpush.bf16.msra.mxu0 %v5725
        %8038 = vmatpush.bf16.msra.mxu0 %v5717
        %8039 = vmatpush.bf16.msra.mxu0 %v5709
        %8040 = vmatpush.bf16.msra.mxu0 %v5701
        %8041 = vmatmul.bf16.gmra.mxu0 %v2838
        %v8042 = vpop.f32.mrf.mxu0
        %v8043 = vadd.f32 %v8029, %v8042
        %v8044 = vpop.f32.mrf.mxu0
        %v8045 = vadd.f32 %v8031, %v8044
        %8046 = vdwg.mxu0
        %8047 = vmatpush.bf16.msra.mxu0 %v5821
        %8048 = vmatpush.bf16.msra.mxu0 %v5813
        %8049 = vmatpush.bf16.msra.mxu0 %v5805
        %8050 = vmatpush.bf16.msra.mxu0 %v5797
        %8051 = vmatpush.bf16.msra.mxu0 %v5789
        %8052 = vmatpush.bf16.msra.mxu0 %v5781
        %8053 = vmatpush.bf16.msra.mxu0 %v5773
        %8054 = vmatpush.bf16.msra.mxu0 %v5765
        %8055 = vmatmul.bf16.gmra.mxu0 %v2839
        %v8056 = vpop.f32.mrf.mxu0
        %v8057 = vadd.f32 %v8043, %v8056
        %v8058 = vpop.f32.mrf.mxu0
        %v8059 = vadd.f32 %v8045, %v8058
        %8060 = vdwg.mxu0
        %8061 = vmatpush.bf16.msra.mxu0 %v5885
        %8062 = vmatpush.bf16.msra.mxu0 %v5877
        %8063 = vmatpush.bf16.msra.mxu0 %v5869
        %8064 = vmatpush.bf16.msra.mxu0 %v5861
        %8065 = vmatpush.bf16.msra.mxu0 %v5853
        %8066 = vmatpush.bf16.msra.mxu0 %v5845
        %8067 = vmatpush.bf16.msra.mxu0 %v5837
        %8068 = vmatpush.bf16.msra.mxu0 %v5829
        %8069 = vmatmul.bf16.gmra.mxu0 %v2840
        %v8070 = vpop.f32.mrf.mxu0
        %v8071 = vadd.f32 %v8057, %v8070
        %v8072 = vpop.f32.mrf.mxu0
        %v8073 = vadd.f32 %v8059, %v8072
        %8074 = vdwg.mxu0
        %8075 = vmatpush.bf16.msra.mxu0 %v5949
        %8076 = vmatpush.bf16.msra.mxu0 %v5941
        %8077 = vmatpush.bf16.msra.mxu0 %v5933
        %8078 = vmatpush.bf16.msra.mxu0 %v5925
        %8079 = vmatpush.bf16.msra.mxu0 %v5917
        %8080 = vmatpush.bf16.msra.mxu0 %v5909
        %8081 = vmatpush.bf16.msra.mxu0 %v5901
        %8082 = vmatpush.bf16.msra.mxu0 %v5893
        %8083 = vmatmul.bf16.gmra.mxu0 %v2841
        %v8084 = vpop.f32.mrf.mxu0
        %v8085 = vadd.f32 %v8071, %v8084
        %v8086 = vpop.f32.mrf.mxu0
        %v8087 = vadd.f32 %v8073, %v8086
        %8088 = vdwg.mxu0
        %8089 = vmatpush.bf16.msra.mxu0 %v6013
        %8090 = vmatpush.bf16.msra.mxu0 %v6005
        %8091 = vmatpush.bf16.msra.mxu0 %v5997
        %8092 = vmatpush.bf16.msra.mxu0 %v5989
        %8093 = vmatpush.bf16.msra.mxu0 %v5981
        %8094 = vmatpush.bf16.msra.mxu0 %v5973
        %8095 = vmatpush.bf16.msra.mxu0 %v5965
        %8096 = vmatpush.bf16.msra.mxu0 %v5957
        %8097 = vmatmul.bf16.gmra.mxu0 %v2842
        %v8098 = vpop.f32.mrf.mxu0
        %v8099 = vadd.f32 %v8085, %v8098
        %v8100 = vpop.f32.mrf.mxu0
        %v8101 = vadd.f32 %v8087, %v8100
        %8102 = vdwg.mxu0
        %8103 = vmatpush.bf16.msra.mxu0 %v6077
        %8104 = vmatpush.bf16.msra.mxu0 %v6069
        %8105 = vmatpush.bf16.msra.mxu0 %v6061
        %8106 = vmatpush.bf16.msra.mxu0 %v6053
        %8107 = vmatpush.bf16.msra.mxu0 %v6045
        %8108 = vmatpush.bf16.msra.mxu0 %v6037
        %8109 = vmatpush.bf16.msra.mxu0 %v6029
        %8110 = vmatpush.bf16.msra.mxu0 %v6021
        %8111 = vmatmul.bf16.gmra.mxu0 %v2843
        %v8112 = vpop.f32.mrf.mxu0
        %v8113 = vadd.f32 %v8099, %v8112
        %v8114 = vpop.f32.mrf.mxu0
        %v8115 = vadd.f32 %v8101, %v8114
        %8116 = vdwg.mxu0
        %8117 = vmatpush.bf16.msra.mxu0 %v6141
        %8118 = vmatpush.bf16.msra.mxu0 %v6133
        %8119 = vmatpush.bf16.msra.mxu0 %v6125
        %8120 = vmatpush.bf16.msra.mxu0 %v6117
        %8121 = vmatpush.bf16.msra.mxu0 %v6109
        %8122 = vmatpush.bf16.msra.mxu0 %v6101
        %8123 = vmatpush.bf16.msra.mxu0 %v6093
        %8124 = vmatpush.bf16.msra.mxu0 %v6085
        %8125 = vmatmul.bf16.gmra.mxu0 %v2844
        %v8126 = vpop.f32.mrf.mxu0
        %v8127 = vadd.f32 %v8113, %v8126
        %v8128 = vpop.f32.mrf.mxu0
        %v8129 = vadd.f32 %v8115, %v8128
        %8130 = vdwg.mxu0
        %8131 = vmatpush.bf16.msra.mxu0 %v6205
        %8132 = vmatpush.bf16.msra.mxu0 %v6197
        %8133 = vmatpush.bf16.msra.mxu0 %v6189
        %8134 = vmatpush.bf16.msra.mxu0 %v6181
        %8135 = vmatpush.bf16.msra.mxu0 %v6173
        %8136 = vmatpush.bf16.msra.mxu0 %v6165
        %8137 = vmatpush.bf16.msra.mxu0 %v6157
        %8138 = vmatpush.bf16.msra.mxu0 %v6149
        %8139 = vmatmul.bf16.gmra.mxu0 %v2845
        %v8140 = vpop.f32.mrf.mxu0
        %v8141 = vadd.f32 %v8127, %v8140
        %v8142 = vpop.f32.mrf.mxu0
        %v8143 = vadd.f32 %v8129, %v8142
        %8144 = vdwg.mxu0
        %8145 = vmatpush.bf16.msra.mxu0 %v6269
        %8146 = vmatpush.bf16.msra.mxu0 %v6261
        %8147 = vmatpush.bf16.msra.mxu0 %v6253
        %8148 = vmatpush.bf16.msra.mxu0 %v6245
        %8149 = vmatpush.bf16.msra.mxu0 %v6237
        %8150 = vmatpush.bf16.msra.mxu0 %v6229
        %8151 = vmatpush.bf16.msra.mxu0 %v6221
        %8152 = vmatpush.bf16.msra.mxu0 %v6213
        %8153 = vmatmul.bf16.gmra.mxu0 %v2846
        %v8154 = vpop.f32.mrf.mxu0
        %v8155 = vadd.f32 %v8141, %v8154
        %v8156 = vpop.f32.mrf.mxu0
        %v8157 = vadd.f32 %v8143, %v8156
        %8158 = vdwg.mxu0
        %8159 = vmatpush.bf16.msra.mxu0 0
        %8160 = vmatpush.bf16.msra.mxu0 0
        %8161 = vmatpush.bf16.msra.mxu0 0
        %8162 = vmatpush.bf16.msra.mxu0 0
        %8163 = vmatpush.bf16.msra.mxu0 %v7182
        %8164 = vmatpush.bf16.msra.mxu0 %v6293
        %8165 = vmatpush.bf16.msra.mxu0 %v6285
        %8166 = vmatpush.bf16.msra.mxu0 %v6277
        %8167 = vmatmul.bf16.gmra.mxu0 %v7163
        %v8168 = vpop.f32.mrf.mxu0
        %v8169 = vadd.f32 %v8155, %v8168
        %v8170 = vpop.f32.mrf.mxu0
        %v8171 = vadd.f32 %v8157, %v8170
        %8172 = vdwg.mxu0
        %8173 = vmatpush.bf16.msra.mxu0 %v5502
        %8174 = vmatpush.bf16.msra.mxu0 %v5494
        %8175 = vmatpush.bf16.msra.mxu0 %v5486
        %8176 = vmatpush.bf16.msra.mxu0 %v5478
        %8177 = vmatpush.bf16.msra.mxu0 %v5470
        %8178 = vmatpush.bf16.msra.mxu0 %v5462
        %8179 = vmatpush.bf16.msra.mxu0 %v5454
        %8180 = vmatpush.bf16.msra.mxu0 %v5446
        %8181 = vmatmul.bf16.gmra.mxu0 %v2834
        %v8182 = vpop.f32.mrf.mxu0
        %v8183 = vadd.f32 %v2785, %v8182
        %v8184 = vpop.f32.mrf.mxu0
        %v8185 = vadd.f32 %v2790, %v8184
        %8186 = vdwg.mxu0
        %8187 = vmatpush.bf16.msra.mxu0 %v5566
        %8188 = vmatpush.bf16.msra.mxu0 %v5558
        %8189 = vmatpush.bf16.msra.mxu0 %v5550
        %8190 = vmatpush.bf16.msra.mxu0 %v5542
        %8191 = vmatpush.bf16.msra.mxu0 %v5534
        %8192 = vmatpush.bf16.msra.mxu0 %v5526
        %8193 = vmatpush.bf16.msra.mxu0 %v5518
        %8194 = vmatpush.bf16.msra.mxu0 %v5510
        %8195 = vmatmul.bf16.gmra.mxu0 %v2835
        %v8196 = vpop.f32.mrf.mxu0
        %v8197 = vadd.f32 %v8183, %v8196
        %v8198 = vpop.f32.mrf.mxu0
        %v8199 = vadd.f32 %v8185, %v8198
        %8200 = vdwg.mxu0
        %8201 = vmatpush.bf16.msra.mxu0 %v5630
        %8202 = vmatpush.bf16.msra.mxu0 %v5622
        %8203 = vmatpush.bf16.msra.mxu0 %v5614
        %8204 = vmatpush.bf16.msra.mxu0 %v5606
        %8205 = vmatpush.bf16.msra.mxu0 %v5598
        %8206 = vmatpush.bf16.msra.mxu0 %v5590
        %8207 = vmatpush.bf16.msra.mxu0 %v5582
        %8208 = vmatpush.bf16.msra.mxu0 %v5574
        %8209 = vmatmul.bf16.gmra.mxu0 %v2836
        %v8210 = vpop.f32.mrf.mxu0
        %v8211 = vadd.f32 %v8197, %v8210
        %v8212 = vpop.f32.mrf.mxu0
        %v8213 = vadd.f32 %v8199, %v8212
        %8214 = vdwg.mxu0
        %8215 = vmatpush.bf16.msra.mxu0 %v5694
        %8216 = vmatpush.bf16.msra.mxu0 %v5686
        %8217 = vmatpush.bf16.msra.mxu0 %v5678
        %8218 = vmatpush.bf16.msra.mxu0 %v5670
        %8219 = vmatpush.bf16.msra.mxu0 %v5662
        %8220 = vmatpush.bf16.msra.mxu0 %v5654
        %8221 = vmatpush.bf16.msra.mxu0 %v5646
        %8222 = vmatpush.bf16.msra.mxu0 %v5638
        %8223 = vmatmul.bf16.gmra.mxu0 %v2837
        %v8224 = vpop.f32.mrf.mxu0
        %v8225 = vadd.f32 %v8211, %v8224
        %v8226 = vpop.f32.mrf.mxu0
        %v8227 = vadd.f32 %v8213, %v8226
        %8228 = vdwg.mxu0
        %8229 = vmatpush.bf16.msra.mxu0 %v5758
        %8230 = vmatpush.bf16.msra.mxu0 %v5750
        %8231 = vmatpush.bf16.msra.mxu0 %v5742
        %8232 = vmatpush.bf16.msra.mxu0 %v5734
        %8233 = vmatpush.bf16.msra.mxu0 %v5726
        %8234 = vmatpush.bf16.msra.mxu0 %v5718
        %8235 = vmatpush.bf16.msra.mxu0 %v5710
        %8236 = vmatpush.bf16.msra.mxu0 %v5702
        %8237 = vmatmul.bf16.gmra.mxu0 %v2838
        %v8238 = vpop.f32.mrf.mxu0
        %v8239 = vadd.f32 %v8225, %v8238
        %v8240 = vpop.f32.mrf.mxu0
        %v8241 = vadd.f32 %v8227, %v8240
        %8242 = vdwg.mxu0
        %8243 = vmatpush.bf16.msra.mxu0 %v5822
        %8244 = vmatpush.bf16.msra.mxu0 %v5814
        %8245 = vmatpush.bf16.msra.mxu0 %v5806
        %8246 = vmatpush.bf16.msra.mxu0 %v5798
        %8247 = vmatpush.bf16.msra.mxu0 %v5790
        %8248 = vmatpush.bf16.msra.mxu0 %v5782
        %8249 = vmatpush.bf16.msra.mxu0 %v5774
        %8250 = vmatpush.bf16.msra.mxu0 %v5766
        %8251 = vmatmul.bf16.gmra.mxu0 %v2839
        %v8252 = vpop.f32.mrf.mxu0
        %v8253 = vadd.f32 %v8239, %v8252
        %v8254 = vpop.f32.mrf.mxu0
        %v8255 = vadd.f32 %v8241, %v8254
        %8256 = vdwg.mxu0
        %8257 = vmatpush.bf16.msra.mxu0 %v5886
        %8258 = vmatpush.bf16.msra.mxu0 %v5878
        %8259 = vmatpush.bf16.msra.mxu0 %v5870
        %8260 = vmatpush.bf16.msra.mxu0 %v5862
        %8261 = vmatpush.bf16.msra.mxu0 %v5854
        %8262 = vmatpush.bf16.msra.mxu0 %v5846
        %8263 = vmatpush.bf16.msra.mxu0 %v5838
        %8264 = vmatpush.bf16.msra.mxu0 %v5830
        %8265 = vmatmul.bf16.gmra.mxu0 %v2840
        %v8266 = vpop.f32.mrf.mxu0
        %v8267 = vadd.f32 %v8253, %v8266
        %v8268 = vpop.f32.mrf.mxu0
        %v8269 = vadd.f32 %v8255, %v8268
        %8270 = vdwg.mxu0
        %8271 = vmatpush.bf16.msra.mxu0 %v5950
        %8272 = vmatpush.bf16.msra.mxu0 %v5942
        %8273 = vmatpush.bf16.msra.mxu0 %v5934
        %8274 = vmatpush.bf16.msra.mxu0 %v5926
        %8275 = vmatpush.bf16.msra.mxu0 %v5918
        %8276 = vmatpush.bf16.msra.mxu0 %v5910
        %8277 = vmatpush.bf16.msra.mxu0 %v5902
        %8278 = vmatpush.bf16.msra.mxu0 %v5894
        %8279 = vmatmul.bf16.gmra.mxu0 %v2841
        %v8280 = vpop.f32.mrf.mxu0
        %v8281 = vadd.f32 %v8267, %v8280
        %v8282 = vpop.f32.mrf.mxu0
        %v8283 = vadd.f32 %v8269, %v8282
        %8284 = vdwg.mxu0
        %8285 = vmatpush.bf16.msra.mxu0 %v6014
        %8286 = vmatpush.bf16.msra.mxu0 %v6006
        %8287 = vmatpush.bf16.msra.mxu0 %v5998
        %8288 = vmatpush.bf16.msra.mxu0 %v5990
        %8289 = vmatpush.bf16.msra.mxu0 %v5982
        %8290 = vmatpush.bf16.msra.mxu0 %v5974
        %8291 = vmatpush.bf16.msra.mxu0 %v5966
        %8292 = vmatpush.bf16.msra.mxu0 %v5958
        %8293 = vmatmul.bf16.gmra.mxu0 %v2842
        %v8294 = vpop.f32.mrf.mxu0
        %v8295 = vadd.f32 %v8281, %v8294
        %v8296 = vpop.f32.mrf.mxu0
        %v8297 = vadd.f32 %v8283, %v8296
        %8298 = vdwg.mxu0
        %8299 = vmatpush.bf16.msra.mxu0 %v6078
        %8300 = vmatpush.bf16.msra.mxu0 %v6070
        %8301 = vmatpush.bf16.msra.mxu0 %v6062
        %8302 = vmatpush.bf16.msra.mxu0 %v6054
        %8303 = vmatpush.bf16.msra.mxu0 %v6046
        %8304 = vmatpush.bf16.msra.mxu0 %v6038
        %8305 = vmatpush.bf16.msra.mxu0 %v6030
        %8306 = vmatpush.bf16.msra.mxu0 %v6022
        %8307 = vmatmul.bf16.gmra.mxu0 %v2843
        %v8308 = vpop.f32.mrf.mxu0
        %v8309 = vadd.f32 %v8295, %v8308
        %v8310 = vpop.f32.mrf.mxu0
        %v8311 = vadd.f32 %v8297, %v8310
        %8312 = vdwg.mxu0
        %8313 = vmatpush.bf16.msra.mxu0 %v6142
        %8314 = vmatpush.bf16.msra.mxu0 %v6134
        %8315 = vmatpush.bf16.msra.mxu0 %v6126
        %8316 = vmatpush.bf16.msra.mxu0 %v6118
        %8317 = vmatpush.bf16.msra.mxu0 %v6110
        %8318 = vmatpush.bf16.msra.mxu0 %v6102
        %8319 = vmatpush.bf16.msra.mxu0 %v6094
        %8320 = vmatpush.bf16.msra.mxu0 %v6086
        %8321 = vmatmul.bf16.gmra.mxu0 %v2844
        %v8322 = vpop.f32.mrf.mxu0
        %v8323 = vadd.f32 %v8309, %v8322
        %v8324 = vpop.f32.mrf.mxu0
        %v8325 = vadd.f32 %v8311, %v8324
        %8326 = vdwg.mxu0
        %8327 = vmatpush.bf16.msra.mxu0 %v6206
        %8328 = vmatpush.bf16.msra.mxu0 %v6198
        %8329 = vmatpush.bf16.msra.mxu0 %v6190
        %8330 = vmatpush.bf16.msra.mxu0 %v6182
        %8331 = vmatpush.bf16.msra.mxu0 %v6174
        %8332 = vmatpush.bf16.msra.mxu0 %v6166
        %8333 = vmatpush.bf16.msra.mxu0 %v6158
        %8334 = vmatpush.bf16.msra.mxu0 %v6150
        %8335 = vmatmul.bf16.gmra.mxu0 %v2845
        %v8336 = vpop.f32.mrf.mxu0
        %v8337 = vadd.f32 %v8323, %v8336
        %v8338 = vpop.f32.mrf.mxu0
        %v8339 = vadd.f32 %v8325, %v8338
        %8340 = vdwg.mxu0
        %8341 = vmatpush.bf16.msra.mxu0 %v6270
        %8342 = vmatpush.bf16.msra.mxu0 %v6262
        %8343 = vmatpush.bf16.msra.mxu0 %v6254
        %8344 = vmatpush.bf16.msra.mxu0 %v6246
        %8345 = vmatpush.bf16.msra.mxu0 %v6238
        %8346 = vmatpush.bf16.msra.mxu0 %v6230
        %8347 = vmatpush.bf16.msra.mxu0 %v6222
        %8348 = vmatpush.bf16.msra.mxu0 %v6214
        %8349 = vmatmul.bf16.gmra.mxu0 %v2846
        %v8350 = vpop.f32.mrf.mxu0
        %v8351 = vadd.f32 %v8337, %v8350
        %v8352 = vpop.f32.mrf.mxu0
        %v8353 = vadd.f32 %v8339, %v8352
        %8354 = vdwg.mxu0
        %8355 = vmatpush.bf16.msra.mxu0 0
        %8356 = vmatpush.bf16.msra.mxu0 0
        %8357 = vmatpush.bf16.msra.mxu0 0
        %8358 = vmatpush.bf16.msra.mxu0 0
        %8359 = vmatpush.bf16.msra.mxu0 %v7185
        %8360 = vmatpush.bf16.msra.mxu0 %v6294
        %8361 = vmatpush.bf16.msra.mxu0 %v6286
        %8362 = vmatpush.bf16.msra.mxu0 %v6278
        %8363 = vmatmul.bf16.gmra.mxu0 %v7163
        %v8364 = vpop.f32.mrf.mxu0
        %v8365 = vadd.f32 %v8351, %v8364
        %v8366 = vpop.f32.mrf.mxu0
        %v8367 = vadd.f32 %v8353, %v8366
        %8368 = vdwg.mxu0
        %8369 = vmatpush.bf16.msra.mxu0 %v5503
        %8370 = vmatpush.bf16.msra.mxu0 %v5495
        %8371 = vmatpush.bf16.msra.mxu0 %v5487
        %8372 = vmatpush.bf16.msra.mxu0 %v5479
        %8373 = vmatpush.bf16.msra.mxu0 %v5471
        %8374 = vmatpush.bf16.msra.mxu0 %v5463
        %8375 = vmatpush.bf16.msra.mxu0 %v5455
        %8376 = vmatpush.bf16.msra.mxu0 %v5447
        %8377 = vmatmul.bf16.gmra.mxu0 %v2834
        %v8378 = vpop.f32.mrf.mxu0
        %v8379 = vadd.f32 %v2785, %v8378
        %v8380 = vpop.f32.mrf.mxu0
        %v8381 = vadd.f32 %v2790, %v8380
        %8382 = vdwg.mxu0
        %8383 = vmatpush.bf16.msra.mxu0 %v5567
        %8384 = vmatpush.bf16.msra.mxu0 %v5559
        %8385 = vmatpush.bf16.msra.mxu0 %v5551
        %8386 = vmatpush.bf16.msra.mxu0 %v5543
        %8387 = vmatpush.bf16.msra.mxu0 %v5535
        %8388 = vmatpush.bf16.msra.mxu0 %v5527
        %8389 = vmatpush.bf16.msra.mxu0 %v5519
        %8390 = vmatpush.bf16.msra.mxu0 %v5511
        %8391 = vmatmul.bf16.gmra.mxu0 %v2835
        %v8392 = vpop.f32.mrf.mxu0
        %v8393 = vadd.f32 %v8379, %v8392
        %v8394 = vpop.f32.mrf.mxu0
        %v8395 = vadd.f32 %v8381, %v8394
        %8396 = vdwg.mxu0
        %8397 = vmatpush.bf16.msra.mxu0 %v5631
        %8398 = vmatpush.bf16.msra.mxu0 %v5623
        %8399 = vmatpush.bf16.msra.mxu0 %v5615
        %8400 = vmatpush.bf16.msra.mxu0 %v5607
        %8401 = vmatpush.bf16.msra.mxu0 %v5599
        %8402 = vmatpush.bf16.msra.mxu0 %v5591
        %8403 = vmatpush.bf16.msra.mxu0 %v5583
        %8404 = vmatpush.bf16.msra.mxu0 %v5575
        %8405 = vmatmul.bf16.gmra.mxu0 %v2836
        %v8406 = vpop.f32.mrf.mxu0
        %v8407 = vadd.f32 %v8393, %v8406
        %v8408 = vpop.f32.mrf.mxu0
        %v8409 = vadd.f32 %v8395, %v8408
        %8410 = vdwg.mxu0
        %8411 = vmatpush.bf16.msra.mxu0 %v5695
        %8412 = vmatpush.bf16.msra.mxu0 %v5687
        %8413 = vmatpush.bf16.msra.mxu0 %v5679
        %8414 = vmatpush.bf16.msra.mxu0 %v5671
        %8415 = vmatpush.bf16.msra.mxu0 %v5663
        %8416 = vmatpush.bf16.msra.mxu0 %v5655
        %8417 = vmatpush.bf16.msra.mxu0 %v5647
        %8418 = vmatpush.bf16.msra.mxu0 %v5639
        %8419 = vmatmul.bf16.gmra.mxu0 %v2837
        %v8420 = vpop.f32.mrf.mxu0
        %v8421 = vadd.f32 %v8407, %v8420
        %v8422 = vpop.f32.mrf.mxu0
        %v8423 = vadd.f32 %v8409, %v8422
        %8424 = vdwg.mxu0
        %8425 = vmatpush.bf16.msra.mxu0 %v5759
        %8426 = vmatpush.bf16.msra.mxu0 %v5751
        %8427 = vmatpush.bf16.msra.mxu0 %v5743
        %8428 = vmatpush.bf16.msra.mxu0 %v5735
        %8429 = vmatpush.bf16.msra.mxu0 %v5727
        %8430 = vmatpush.bf16.msra.mxu0 %v5719
        %8431 = vmatpush.bf16.msra.mxu0 %v5711
        %8432 = vmatpush.bf16.msra.mxu0 %v5703
        %8433 = vmatmul.bf16.gmra.mxu0 %v2838
        %v8434 = vpop.f32.mrf.mxu0
        %v8435 = vadd.f32 %v8421, %v8434
        %v8436 = vpop.f32.mrf.mxu0
        %v8437 = vadd.f32 %v8423, %v8436
        %8438 = vdwg.mxu0
        %8439 = vmatpush.bf16.msra.mxu0 %v5823
        %8440 = vmatpush.bf16.msra.mxu0 %v5815
        %8441 = vmatpush.bf16.msra.mxu0 %v5807
        %8442 = vmatpush.bf16.msra.mxu0 %v5799
        %8443 = vmatpush.bf16.msra.mxu0 %v5791
        %8444 = vmatpush.bf16.msra.mxu0 %v5783
        %8445 = vmatpush.bf16.msra.mxu0 %v5775
        %8446 = vmatpush.bf16.msra.mxu0 %v5767
        %8447 = vmatmul.bf16.gmra.mxu0 %v2839
        %v8448 = vpop.f32.mrf.mxu0
        %v8449 = vadd.f32 %v8435, %v8448
        %v8450 = vpop.f32.mrf.mxu0
        %v8451 = vadd.f32 %v8437, %v8450
        %8452 = vdwg.mxu0
        %8453 = vmatpush.bf16.msra.mxu0 %v5887
        %8454 = vmatpush.bf16.msra.mxu0 %v5879
        %8455 = vmatpush.bf16.msra.mxu0 %v5871
        %8456 = vmatpush.bf16.msra.mxu0 %v5863
        %8457 = vmatpush.bf16.msra.mxu0 %v5855
        %8458 = vmatpush.bf16.msra.mxu0 %v5847
        %8459 = vmatpush.bf16.msra.mxu0 %v5839
        %8460 = vmatpush.bf16.msra.mxu0 %v5831
        %8461 = vmatmul.bf16.gmra.mxu0 %v2840
        %v8462 = vpop.f32.mrf.mxu0
        %v8463 = vadd.f32 %v8449, %v8462
        %v8464 = vpop.f32.mrf.mxu0
        %v8465 = vadd.f32 %v8451, %v8464
        %8466 = vdwg.mxu0
        %8467 = vmatpush.bf16.msra.mxu0 %v5951
        %8468 = vmatpush.bf16.msra.mxu0 %v5943
        %8469 = vmatpush.bf16.msra.mxu0 %v5935
        %8470 = vmatpush.bf16.msra.mxu0 %v5927
        %8471 = vmatpush.bf16.msra.mxu0 %v5919
        %8472 = vmatpush.bf16.msra.mxu0 %v5911
        %8473 = vmatpush.bf16.msra.mxu0 %v5903
        %8474 = vmatpush.bf16.msra.mxu0 %v5895
        %8475 = vmatmul.bf16.gmra.mxu0 %v2841
        %v8476 = vpop.f32.mrf.mxu0
        %v8477 = vadd.f32 %v8463, %v8476
        %v8478 = vpop.f32.mrf.mxu0
        %v8479 = vadd.f32 %v8465, %v8478
        %8480 = vdwg.mxu0
        %8481 = vmatpush.bf16.msra.mxu0 %v6015
        %8482 = vmatpush.bf16.msra.mxu0 %v6007
        %8483 = vmatpush.bf16.msra.mxu0 %v5999
        %8484 = vmatpush.bf16.msra.mxu0 %v5991
        %8485 = vmatpush.bf16.msra.mxu0 %v5983
        %8486 = vmatpush.bf16.msra.mxu0 %v5975
        %8487 = vmatpush.bf16.msra.mxu0 %v5967
        %8488 = vmatpush.bf16.msra.mxu0 %v5959
        %8489 = vmatmul.bf16.gmra.mxu0 %v2842
        %v8490 = vpop.f32.mrf.mxu0
        %v8491 = vadd.f32 %v8477, %v8490
        %v8492 = vpop.f32.mrf.mxu0
        %v8493 = vadd.f32 %v8479, %v8492
        %8494 = vdwg.mxu0
        %8495 = vmatpush.bf16.msra.mxu0 %v6079
        %8496 = vmatpush.bf16.msra.mxu0 %v6071
        %8497 = vmatpush.bf16.msra.mxu0 %v6063
        %8498 = vmatpush.bf16.msra.mxu0 %v6055
        %8499 = vmatpush.bf16.msra.mxu0 %v6047
        %8500 = vmatpush.bf16.msra.mxu0 %v6039
        %8501 = vmatpush.bf16.msra.mxu0 %v6031
        %8502 = vmatpush.bf16.msra.mxu0 %v6023
        %8503 = vmatmul.bf16.gmra.mxu0 %v2843
        %v8504 = vpop.f32.mrf.mxu0
        %v8505 = vadd.f32 %v8491, %v8504
        %v8506 = vpop.f32.mrf.mxu0
        %v8507 = vadd.f32 %v8493, %v8506
        %8508 = vdwg.mxu0
        %8509 = vmatpush.bf16.msra.mxu0 %v6143
        %8510 = vmatpush.bf16.msra.mxu0 %v6135
        %8511 = vmatpush.bf16.msra.mxu0 %v6127
        %8512 = vmatpush.bf16.msra.mxu0 %v6119
        %8513 = vmatpush.bf16.msra.mxu0 %v6111
        %8514 = vmatpush.bf16.msra.mxu0 %v6103
        %8515 = vmatpush.bf16.msra.mxu0 %v6095
        %8516 = vmatpush.bf16.msra.mxu0 %v6087
        %8517 = vmatmul.bf16.gmra.mxu0 %v2844
        %v8518 = vpop.f32.mrf.mxu0
        %v8519 = vadd.f32 %v8505, %v8518
        %v8520 = vpop.f32.mrf.mxu0
        %v8521 = vadd.f32 %v8507, %v8520
        %8522 = vdwg.mxu0
        %8523 = vmatpush.bf16.msra.mxu0 %v6207
        %8524 = vmatpush.bf16.msra.mxu0 %v6199
        %8525 = vmatpush.bf16.msra.mxu0 %v6191
        %8526 = vmatpush.bf16.msra.mxu0 %v6183
        %8527 = vmatpush.bf16.msra.mxu0 %v6175
        %8528 = vmatpush.bf16.msra.mxu0 %v6167
        %8529 = vmatpush.bf16.msra.mxu0 %v6159
        %8530 = vmatpush.bf16.msra.mxu0 %v6151
        %8531 = vmatmul.bf16.gmra.mxu0 %v2845
        %v8532 = vpop.f32.mrf.mxu0
        %v8533 = vadd.f32 %v8519, %v8532
        %v8534 = vpop.f32.mrf.mxu0
        %v8535 = vadd.f32 %v8521, %v8534
        %8536 = vdwg.mxu0
        %8537 = vmatpush.bf16.msra.mxu0 %v6271
        %8538 = vmatpush.bf16.msra.mxu0 %v6263
        %8539 = vmatpush.bf16.msra.mxu0 %v6255
        %8540 = vmatpush.bf16.msra.mxu0 %v6247
        %8541 = vmatpush.bf16.msra.mxu0 %v6239
        %8542 = vmatpush.bf16.msra.mxu0 %v6231
        %8543 = vmatpush.bf16.msra.mxu0 %v6223
        %8544 = vmatpush.bf16.msra.mxu0 %v6215
        %8545 = vmatmul.bf16.gmra.mxu0 %v2846
        %v8546 = vpop.f32.mrf.mxu0
        %v8547 = vadd.f32 %v8533, %v8546
        %v8548 = vpop.f32.mrf.mxu0
        %v8549 = vadd.f32 %v8535, %v8548
        %8550 = vdwg.mxu0
        %8551 = vmatpush.bf16.msra.mxu0 0
        %8552 = vmatpush.bf16.msra.mxu0 0
        %8553 = vmatpush.bf16.msra.mxu0 0
        %8554 = vmatpush.bf16.msra.mxu0 0
        %8555 = vmatpush.bf16.msra.mxu0 %v7188
        %8556 = vmatpush.bf16.msra.mxu0 %v6295
        %8557 = vmatpush.bf16.msra.mxu0 %v6287
        %8558 = vmatpush.bf16.msra.mxu0 %v6279
        %8559 = vmatmul.bf16.gmra.mxu0 %v7163
        %v8560 = vpop.f32.mrf.mxu0
        %v8561 = vadd.f32 %v8547, %v8560
        %v8562 = vpop.f32.mrf.mxu0
        %v8563 = vadd.f32 %v8549, %v8562
        %8564 = vdwg.mxu0
        %8565 = vmatpush.bf16.msra.mxu0 %v5504
        %8566 = vmatpush.bf16.msra.mxu0 %v5496
        %8567 = vmatpush.bf16.msra.mxu0 %v5488
        %8568 = vmatpush.bf16.msra.mxu0 %v5480
        %8569 = vmatpush.bf16.msra.mxu0 %v5472
        %8570 = vmatpush.bf16.msra.mxu0 %v5464
        %8571 = vmatpush.bf16.msra.mxu0 %v5456
        %8572 = vmatpush.bf16.msra.mxu0 %v5448
        %8573 = vmatmul.bf16.gmra.mxu0 %v2834
        %v8574 = vpop.f32.mrf.mxu0
        %v8575 = vadd.f32 %v2785, %v8574
        %v8576 = vpop.f32.mrf.mxu0
        %v8577 = vadd.f32 %v2790, %v8576
        %8578 = vdwg.mxu0
        %8579 = vmatpush.bf16.msra.mxu0 %v5568
        %8580 = vmatpush.bf16.msra.mxu0 %v5560
        %8581 = vmatpush.bf16.msra.mxu0 %v5552
        %8582 = vmatpush.bf16.msra.mxu0 %v5544
        %8583 = vmatpush.bf16.msra.mxu0 %v5536
        %8584 = vmatpush.bf16.msra.mxu0 %v5528
        %8585 = vmatpush.bf16.msra.mxu0 %v5520
        %8586 = vmatpush.bf16.msra.mxu0 %v5512
        %8587 = vmatmul.bf16.gmra.mxu0 %v2835
        %v8588 = vpop.f32.mrf.mxu0
        %v8589 = vadd.f32 %v8575, %v8588
        %v8590 = vpop.f32.mrf.mxu0
        %v8591 = vadd.f32 %v8577, %v8590
        %8592 = vdwg.mxu0
        %8593 = vmatpush.bf16.msra.mxu0 %v5632
        %8594 = vmatpush.bf16.msra.mxu0 %v5624
        %8595 = vmatpush.bf16.msra.mxu0 %v5616
        %8596 = vmatpush.bf16.msra.mxu0 %v5608
        %8597 = vmatpush.bf16.msra.mxu0 %v5600
        %8598 = vmatpush.bf16.msra.mxu0 %v5592
        %8599 = vmatpush.bf16.msra.mxu0 %v5584
        %8600 = vmatpush.bf16.msra.mxu0 %v5576
        %8601 = vmatmul.bf16.gmra.mxu0 %v2836
        %v8602 = vpop.f32.mrf.mxu0
        %v8603 = vadd.f32 %v8589, %v8602
        %v8604 = vpop.f32.mrf.mxu0
        %v8605 = vadd.f32 %v8591, %v8604
        %8606 = vdwg.mxu0
        %8607 = vmatpush.bf16.msra.mxu0 %v5696
        %8608 = vmatpush.bf16.msra.mxu0 %v5688
        %8609 = vmatpush.bf16.msra.mxu0 %v5680
        %8610 = vmatpush.bf16.msra.mxu0 %v5672
        %8611 = vmatpush.bf16.msra.mxu0 %v5664
        %8612 = vmatpush.bf16.msra.mxu0 %v5656
        %8613 = vmatpush.bf16.msra.mxu0 %v5648
        %8614 = vmatpush.bf16.msra.mxu0 %v5640
        %8615 = vmatmul.bf16.gmra.mxu0 %v2837
        %v8616 = vpop.f32.mrf.mxu0
        %v8617 = vadd.f32 %v8603, %v8616
        %v8618 = vpop.f32.mrf.mxu0
        %v8619 = vadd.f32 %v8605, %v8618
        %8620 = vdwg.mxu0
        %8621 = vmatpush.bf16.msra.mxu0 %v5760
        %8622 = vmatpush.bf16.msra.mxu0 %v5752
        %8623 = vmatpush.bf16.msra.mxu0 %v5744
        %8624 = vmatpush.bf16.msra.mxu0 %v5736
        %8625 = vmatpush.bf16.msra.mxu0 %v5728
        %8626 = vmatpush.bf16.msra.mxu0 %v5720
        %8627 = vmatpush.bf16.msra.mxu0 %v5712
        %8628 = vmatpush.bf16.msra.mxu0 %v5704
        %8629 = vmatmul.bf16.gmra.mxu0 %v2838
        %v8630 = vpop.f32.mrf.mxu0
        %v8631 = vadd.f32 %v8617, %v8630
        %v8632 = vpop.f32.mrf.mxu0
        %v8633 = vadd.f32 %v8619, %v8632
        %8634 = vdwg.mxu0
        %8635 = vmatpush.bf16.msra.mxu0 %v5824
        %8636 = vmatpush.bf16.msra.mxu0 %v5816
        %8637 = vmatpush.bf16.msra.mxu0 %v5808
        %8638 = vmatpush.bf16.msra.mxu0 %v5800
        %8639 = vmatpush.bf16.msra.mxu0 %v5792
        %8640 = vmatpush.bf16.msra.mxu0 %v5784
        %8641 = vmatpush.bf16.msra.mxu0 %v5776
        %8642 = vmatpush.bf16.msra.mxu0 %v5768
        %8643 = vmatmul.bf16.gmra.mxu0 %v2839
        %v8644 = vpop.f32.mrf.mxu0
        %v8645 = vadd.f32 %v8631, %v8644
        %v8646 = vpop.f32.mrf.mxu0
        %v8647 = vadd.f32 %v8633, %v8646
        %8648 = vdwg.mxu0
        %8649 = vmatpush.bf16.msra.mxu0 %v5888
        %8650 = vmatpush.bf16.msra.mxu0 %v5880
        %8651 = vmatpush.bf16.msra.mxu0 %v5872
        %8652 = vmatpush.bf16.msra.mxu0 %v5864
        %8653 = vmatpush.bf16.msra.mxu0 %v5856
        %8654 = vmatpush.bf16.msra.mxu0 %v5848
        %8655 = vmatpush.bf16.msra.mxu0 %v5840
        %8656 = vmatpush.bf16.msra.mxu0 %v5832
        %8657 = vmatmul.bf16.gmra.mxu0 %v2840
        %v8658 = vpop.f32.mrf.mxu0
        %v8659 = vadd.f32 %v8645, %v8658
        %v8660 = vpop.f32.mrf.mxu0
        %v8661 = vadd.f32 %v8647, %v8660
        %8662 = vdwg.mxu0
        %8663 = vmatpush.bf16.msra.mxu0 %v5952
        %8664 = vmatpush.bf16.msra.mxu0 %v5944
        %8665 = vmatpush.bf16.msra.mxu0 %v5936
        %8666 = vmatpush.bf16.msra.mxu0 %v5928
        %8667 = vmatpush.bf16.msra.mxu0 %v5920
        %8668 = vmatpush.bf16.msra.mxu0 %v5912
        %8669 = vmatpush.bf16.msra.mxu0 %v5904
        %8670 = vmatpush.bf16.msra.mxu0 %v5896
        %8671 = vmatmul.bf16.gmra.mxu0 %v2841
        %v8672 = vpop.f32.mrf.mxu0
        %v8673 = vadd.f32 %v8659, %v8672
        %v8674 = vpop.f32.mrf.mxu0
        %v8675 = vadd.f32 %v8661, %v8674
        %8676 = vdwg.mxu0
        %8677 = vmatpush.bf16.msra.mxu0 %v6016
        %8678 = vmatpush.bf16.msra.mxu0 %v6008
        %8679 = vmatpush.bf16.msra.mxu0 %v6000
        %8680 = vmatpush.bf16.msra.mxu0 %v5992
        %8681 = vmatpush.bf16.msra.mxu0 %v5984
        %8682 = vmatpush.bf16.msra.mxu0 %v5976
        %8683 = vmatpush.bf16.msra.mxu0 %v5968
        %8684 = vmatpush.bf16.msra.mxu0 %v5960
        %8685 = vmatmul.bf16.gmra.mxu0 %v2842
        %v8686 = vpop.f32.mrf.mxu0
        %v8687 = vadd.f32 %v8673, %v8686
        %v8688 = vpop.f32.mrf.mxu0
        %v8689 = vadd.f32 %v8675, %v8688
        %8690 = vdwg.mxu0
        %8691 = vmatpush.bf16.msra.mxu0 %v6080
        %8692 = vmatpush.bf16.msra.mxu0 %v6072
        %8693 = vmatpush.bf16.msra.mxu0 %v6064
        %8694 = vmatpush.bf16.msra.mxu0 %v6056
        %8695 = vmatpush.bf16.msra.mxu0 %v6048
        %8696 = vmatpush.bf16.msra.mxu0 %v6040
        %8697 = vmatpush.bf16.msra.mxu0 %v6032
        %8698 = vmatpush.bf16.msra.mxu0 %v6024
        %8699 = vmatmul.bf16.gmra.mxu0 %v2843
        %v8700 = vpop.f32.mrf.mxu0
        %v8701 = vadd.f32 %v8687, %v8700
        %v8702 = vpop.f32.mrf.mxu0
        %v8703 = vadd.f32 %v8689, %v8702
        %8704 = vdwg.mxu0
        %8705 = vmatpush.bf16.msra.mxu0 %v6144
        %8706 = vmatpush.bf16.msra.mxu0 %v6136
        %8707 = vmatpush.bf16.msra.mxu0 %v6128
        %8708 = vmatpush.bf16.msra.mxu0 %v6120
        %8709 = vmatpush.bf16.msra.mxu0 %v6112
        %8710 = vmatpush.bf16.msra.mxu0 %v6104
        %8711 = vmatpush.bf16.msra.mxu0 %v6096
        %8712 = vmatpush.bf16.msra.mxu0 %v6088
        %8713 = vmatmul.bf16.gmra.mxu0 %v2844
        %v8714 = vpop.f32.mrf.mxu0
        %v8715 = vadd.f32 %v8701, %v8714
        %v8716 = vpop.f32.mrf.mxu0
        %v8717 = vadd.f32 %v8703, %v8716
        %8718 = vdwg.mxu0
        %8719 = vmatpush.bf16.msra.mxu0 %v6208
        %8720 = vmatpush.bf16.msra.mxu0 %v6200
        %8721 = vmatpush.bf16.msra.mxu0 %v6192
        %8722 = vmatpush.bf16.msra.mxu0 %v6184
        %8723 = vmatpush.bf16.msra.mxu0 %v6176
        %8724 = vmatpush.bf16.msra.mxu0 %v6168
        %8725 = vmatpush.bf16.msra.mxu0 %v6160
        %8726 = vmatpush.bf16.msra.mxu0 %v6152
        %8727 = vmatmul.bf16.gmra.mxu0 %v2845
        %v8728 = vpop.f32.mrf.mxu0
        %v8729 = vadd.f32 %v8715, %v8728
        %v8730 = vpop.f32.mrf.mxu0
        %v8731 = vadd.f32 %v8717, %v8730
        %8732 = vdwg.mxu0
        %8733 = vmatpush.bf16.msra.mxu0 %v6272
        %8734 = vmatpush.bf16.msra.mxu0 %v6264
        %8735 = vmatpush.bf16.msra.mxu0 %v6256
        %8736 = vmatpush.bf16.msra.mxu0 %v6248
        %8737 = vmatpush.bf16.msra.mxu0 %v6240
        %8738 = vmatpush.bf16.msra.mxu0 %v6232
        %8739 = vmatpush.bf16.msra.mxu0 %v6224
        %8740 = vmatpush.bf16.msra.mxu0 %v6216
        %8741 = vmatmul.bf16.gmra.mxu0 %v2846
        %v8742 = vpop.f32.mrf.mxu0
        %v8743 = vadd.f32 %v8729, %v8742
        %v8744 = vpop.f32.mrf.mxu0
        %v8745 = vadd.f32 %v8731, %v8744
        %8746 = vdwg.mxu0
        %8747 = vmatpush.bf16.msra.mxu0 0
        %8748 = vmatpush.bf16.msra.mxu0 0
        %8749 = vmatpush.bf16.msra.mxu0 0
        %8750 = vmatpush.bf16.msra.mxu0 0
        %8751 = vmatpush.bf16.msra.mxu0 %v7191
        %8752 = vmatpush.bf16.msra.mxu0 %v6296
        %8753 = vmatpush.bf16.msra.mxu0 %v6288
        %8754 = vmatpush.bf16.msra.mxu0 %v6280
        %8755 = vmatmul.bf16.gmra.mxu0 %v7163
        %v8756 = vpop.f32.mrf.mxu0
        %v8757 = vadd.f32 %v8743, %v8756
        %v8758 = vpop.f32.mrf.mxu0
        %v8759 = vadd.f32 %v8745, %v8758
        %8760 = vdwg.mxu0
        %v8761 = vtanh.pop %v7385
        %v8762 = vtanh.pop %v7581
        %v8763 = vtanh.pop %v7777
        %v8764 = vtanh.pop %v7973
        %v8765 = vtanh.pop %v8169
        %v8766 = vtanh.pop %v8365
        %v8767 = vtanh.pop %v8561
        %v8768 = vtanh.pop %v8757
        %v8769 = vtanh.pop %v7387
        %v8770 = vtanh.pop %v7583
        %v8771 = vtanh.pop %v7779
        %v8772 = vtanh.pop %v7975
        %v8773 = vtanh.pop %v8171
        %v8774 = vtanh.pop %v8367
        %v8775 = vtanh.pop %v8563
        %v8776 = vtanh.pop %v8759
        %v8777 = vpack.c.bf16 %v8762, %v8761
        %v8778 = vpack.c.bf16 %v8764, %v8763
        %v8779 = vpack.c.bf16 %v8766, %v8765
        %v8780 = vpack.c.bf16 %v8768, %v8767
        %v8781 = vpack.c.bf16 %v8770, %v8769
        %v8782 = vpack.c.bf16 %v8772, %v8771
        %v8783 = vpack.c.bf16 %v8774, %v8773
        %v8784 = vpack.c.bf16 %v8776, %v8775
        %8785 = vst [vmem:[%s1902] sm:$0xff] %v8777
        %8786 = vst [vmem:[%s1902 + $0x8] sm:$0xff] %v8778
        %8787 = vst [vmem:[%s1902 + $0x10] sm:$0xff] %v8779
        %8788 = vst [vmem:[%s1902 + $0x18] sm:$0xff] %v8780
        %8789 = vst [vmem:[%s1902 + $0x20] sm:$0xff] %v8781
        %8790 = vst [vmem:[%s1902 + $0x28] sm:$0xff] %v8782
        %8791 = vst [vmem:[%s1902 + $0x30] sm:$0xff] %v8783
        %8792 = vst [vmem:[%s1902 + $0x38] sm:$0xff] %v8784
        %s8793 = sand.u32 %s90, 1
        %s8794 = sand.u32 %s90, 1
        %s8795 = smul.addr %s8794, 64
        %s8796 = scalar_lea.vmem [#allocation3], %s8795
        // Predicated region
        $region56: #{fmri_cnn_forward.3} parent=50 // pred_check
          %p8797 = pneg %p100
        $region57: #{fmri_cnn_forward.3} parent=50 // pred_check_branch
          %8799 = sbr.rel (%p8797) target = $region59
        $region58: #{fmri_cnn_forward.3} parent=50 // pred_region
          %s8800 = smul.u32 8, %s14
          %s8801 = smul.addr %s8800, 4
          %s8802 = scalar_lea.vmem %s3, %s8801
          // Predicated region
          $region60: #{fmri_cnn_forward.3} parent=58 // pred_check
            _
          $region61: #{fmri_cnn_forward.3} parent=58 // pred_check_branch
            %8804 = sbr.rel (0) target = $region63
          $region62: #{fmri_cnn_forward.3} parent=58 // pred_region
            // Predicated region
            $region64: #{fmri_cnn_forward.3} parent=62 // pred_check
              _
            $region65: #{fmri_cnn_forward.3} parent=62 // pred_check_branch
              %8806 = sbr.rel (0) target = $region67
            $region66: #{fmri_cnn_forward.3} parent=62 // pred_region
              loop: start=0, step=1, limit=1
              $region68: #{fmri_cnn_forward.3} parent=66 // loop_pre_header
                _
              $region69: #{fmri_cnn_forward.3} parent=66 // loop_header
                %s8808 = sphi 0, %s8812
                %p8809 = scmp.ge.s32.totalorder %s8808, 1
                %s8813 = sphi %s8796, %s8796
                %s8814 = sphi %s8802, %s8802
              $region70: #{fmri_cnn_forward.3} parent=66 // loop_header_branch
                %8811 = sbr.rel (%p8809) target = $region74
              $region71: #{fmri_cnn_forward.3} parent=66 // loop_body
                %v8815 = vld [vmem:[%s8813] sm:$0xff]
                %8816 = vst [vmem:[%s8814] sm:$0xff] %v8815
                %v8817 = vld [vmem:[%s8813 + $0x8] sm:$0xff]
                %8818 = vst [vmem:[%s8814 + $0x8] sm:$0xff] %v8817
                %v8819 = vld [vmem:[%s8813 + $0x10] sm:$0xff]
                %8820 = vst [vmem:[%s8814 + $0x10] sm:$0xff] %v8819
                %v8821 = vld [vmem:[%s8813 + $0x18] sm:$0xff]
                %8822 = vst [vmem:[%s8814 + $0x18] sm:$0xff] %v8821
                %v8823 = vld [vmem:[%s8813 + $0x20] sm:$0xff]
                %8824 = vst [vmem:[%s8814 + $0x40] sm:$0xff] %v8823
                %v8825 = vld [vmem:[%s8813 + $0x28] sm:$0xff]
                %8826 = vst [vmem:[%s8814 + $0x48] sm:$0xff] %v8825
                %v8827 = vld [vmem:[%s8813 + $0x30] sm:$0xff]
                %8828 = vst [vmem:[%s8814 + $0x50] sm:$0xff] %v8827
                %v8829 = vld [vmem:[%s8813 + $0x38] sm:$0xff]
                %8830 = vst [vmem:[%s8814 + $0x58] sm:$0xff] %v8829
              $region72: #{fmri_cnn_forward.3} parent=66 // loop_footer
                %s8812 = sadd.s32 1, %s8808
              $region73: #{fmri_cnn_forward.3} parent=66 // loop_footer_branch
                %8807 = sbr.rel target = $region69
              $region74: #{fmri_cnn_forward.3} parent=66 // loop_exit
                _
            $region67: #{fmri_cnn_forward.3} parent=62 // pred_fallthru
              _
            // Predicated region
            $region75: #{fmri_cnn_forward.3} parent=62 // pred_check
              _
            $region76: #{fmri_cnn_forward.3} parent=62 // pred_check_branch
              %8832 = sbr.rel target = $region78
            $region77: #{fmri_cnn_forward.3} parent=62 // pred_region
              _
            $region78: #{fmri_cnn_forward.3} parent=62 // pred_fallthru
              _
          $region63: #{fmri_cnn_forward.3} parent=58 // pred_fallthru
            _
          %8833 = vnop
        $region59: #{fmri_cnn_forward.3} parent=50 // pred_fallthru
          _
      $region51: #{fmri_cnn_forward.3} parent=5 // pred_fallthru
        _
      %p8834 = scmp.le.s32.totalorder 2, %s9
      // Predicated region
      $region79: #{fmri_cnn_forward.3} parent=5 // pred_check
        %p8835 = pneg %p8834
      $region80: #{fmri_cnn_forward.3} parent=5 // pred_check_branch
        %8837 = sbr.rel (%p8835) target = $region82
      $region81: #{fmri_cnn_forward.3} parent=5 // pred_region
        %s8838 = ssub.s32 %s9, 2
        // Predicated region
        $region83: #{fmri_cnn_forward.3} parent=81 // pred_check
          %p8839 = pneg %p106
        $region84: #{fmri_cnn_forward.3} parent=81 // pred_check_branch
          %8841 = sbr.rel (%p8839) target = $region86
        $region85: #{fmri_cnn_forward.3} parent=81 // pred_region
          %s8842 = sand.u32 %s91, 1
          %s8843 = sand.u32 %s91, 1
          %s8844 = smul.addr %s8843, 64
          %s8845 = scalar_lea.vmem [#allocation3], %s8844
        $region86: #{fmri_cnn_forward.3} parent=81 // pred_fallthru
          _
      $region82: #{fmri_cnn_forward.3} parent=5 // pred_fallthru
        _
    $region6: #{fmri_cnn_forward.3} parent=1 // loop_footer
      %s13 = sadd.s32 1, %s9
    $region7: #{fmri_cnn_forward.3} parent=1 // loop_footer_branch
      %8 = sbr.rel target = $region3
    $region8: #{fmri_cnn_forward.3} parent=1 // loop_exit
      _

// kernel: fmri_cnn_forward.4
$region0: #{fmri_cnn_forward.4}
  #allocation0 [shape = 'u32[]', space=smem, size = 0x4, offset = 0x4, fixed_abs, tag = 'smem constant byte address 0x4 - core index']
  #allocation1 [shape = 'u32[72,128]{1,0:T(1,128)}', space=vmem, size = 0x9000, scoped, tag = 'internal scratch']
  %s0 = inlined_call_operand.vmem [shape: bf16[32,2000], index: 0, kind: input, shape index: {}]
  %s1 = inlined_call_operand.vmem [shape: bf16[2000,128], index: 1, kind: input, shape index: {}]
  %s2 = inlined_call_operand.vmem [shape: f32[32,1], index: 2, kind: input, shape index: {}]
  %s3 = inlined_call_operand.vmem [shape: bf16[32,128], index: 3, kind: output, shape index: {}]
  %s4 = sld [smem:[#allocation0]]
  $region22: #{fmri_cnn_forward.4} parent=0
    _
  %s6 = ssub.s32 1, %s4
  %s7 = scalar_select 0, %s6, %s4
  // Predicated region
  $region2: #{fmri_cnn_forward.4} parent=0 // pred_check
    _
  $region3: #{fmri_cnn_forward.4} parent=0 // pred_check_branch
    %9 = sbr.rel (0) target = $region5
  $region4: #{fmri_cnn_forward.4} parent=0 // pred_region
    _
  $region5: #{fmri_cnn_forward.4} parent=0 // pred_fallthru
    _
  // Predicated region
  $region6: #{fmri_cnn_forward.4} parent=0 // pred_check
    _
  $region7: #{fmri_cnn_forward.4} parent=0 // pred_check_branch
    %11 = sbr.rel (0) target = $region9
  $region8: #{fmri_cnn_forward.4} parent=0 // pred_region
    _
  $region9: #{fmri_cnn_forward.4} parent=0 // pred_fallthru
    _
  // Predicated region
  $region10: #{fmri_cnn_forward.4} parent=0 // pred_check
    _
  $region11: #{fmri_cnn_forward.4} parent=0 // pred_check_branch
    %13 = sbr.rel (0) target = $region13
  $region12: #{fmri_cnn_forward.4} parent=0 // pred_region
    _
  $region13: #{fmri_cnn_forward.4} parent=0 // pred_fallthru
    _
  %v15 = vld [vmem:[%s0] sm:$0xff]
  %v16 = vld [vmem:[%s0 + $0x8] sm:$0xff]
  %v17 = vld [vmem:[%s0 + $0x10] sm:$0xff]
  %v18 = vld [vmem:[%s0 + $0x18] sm:$0xff]
  %v19 = vld [vmem:[%s0 + $0x20] sm:$0xff]
  %v20 = vld [vmem:[%s0 + $0x28] sm:$0xff]
  %v21 = vld [vmem:[%s0 + $0x30] sm:$0xff]
  %v22 = vld [vmem:[%s0 + $0x38] sm:$0xff]
  %v23 = vld [vmem:[%s0 + $0x40] sm:$0xff]
  %v24 = vld [vmem:[%s0 + $0x48] sm:$0xff]
  %v25 = vld [vmem:[%s0 + $0x50] sm:$0xff]
  %v26 = vld [vmem:[%s0 + $0x58] sm:$0xff]
  %v27 = vld [vmem:[%s0 + $0x60] sm:$0xff]
  %v28 = vld [vmem:[%s0 + $0x68] sm:$0xff]
  %v29 = vld [vmem:[%s0 + $0x70] sm:$0xff]
  %v30 = vld [vmem:[%s0 + $0x78] sm:$0xff]
  %v31 = vld [vmem:[%s0 + $0x80] sm:$0xff]
  %v32 = vld [vmem:[%s0 + $0x88] sm:$0xff]
  %v33 = vld [vmem:[%s0 + $0x90] sm:$0xff]
  %v34 = vld [vmem:[%s0 + $0x98] sm:$0xff]
  %v35 = vld [vmem:[%s0 + $0xa0] sm:$0xff]
  %v36 = vld [vmem:[%s0 + $0xa8] sm:$0xff]
  %v37 = vld [vmem:[%s0 + $0xb0] sm:$0xff]
  %v38 = vld [vmem:[%s0 + $0xb8] sm:$0xff]
  %v39 = vld [vmem:[%s0 + $0xc0] sm:$0xff]
  %v40 = vld [vmem:[%s0 + $0xc8] sm:$0xff]
  %v41 = vld [vmem:[%s0 + $0xd0] sm:$0xff]
  %v42 = vld [vmem:[%s0 + $0xd8] sm:$0xff]
  %v43 = vld [vmem:[%s0 + $0xe0] sm:$0xff]
  %v44 = vld [vmem:[%s0 + $0xe8] sm:$0xff]
  %v45 = vld [vmem:[%s0 + $0xf0] sm:$0xff]
  %v46 = vld [vmem:[%s0 + $0xf8] sm:$0xff]
  %v47 = vld [vmem:[%s1] sm:$0xf]
  %v48 = vld [vmem:[%s1 + $0x4] sm:$0xf]
  %v49 = vld [vmem:[%s1 + $0x8] sm:$0xf]
  %v50 = vld [vmem:[%s1 + $0xc] sm:$0xf]
  %v51 = vld [vmem:[%s1 + $0x10] sm:$0xf]
  %v52 = vld [vmem:[%s1 + $0x14] sm:$0xf]
  %v53 = vld [vmem:[%s1 + $0x18] sm:$0xf]
  %v54 = vld [vmem:[%s1 + $0x1c] sm:$0xf]
  %v55 = vld [vmem:[%s1 + $0x20] sm:$0xf]
  %v56 = vld [vmem:[%s1 + $0x24] sm:$0xf]
  %v57 = vld [vmem:[%s1 + $0x28] sm:$0xf]
  %v58 = vld [vmem:[%s1 + $0x2c] sm:$0xf]
  %v59 = vld [vmem:[%s1 + $0x30] sm:$0xf]
  %v60 = vld [vmem:[%s1 + $0x34] sm:$0xf]
  %v61 = vld [vmem:[%s1 + $0x38] sm:$0xf]
  %v62 = vld [vmem:[%s1 + $0x3c] sm:$0xf]
  %v63 = vld [vmem:[%s1 + $0x40] sm:$0xf]
  %v64 = vld [vmem:[%s1 + $0x44] sm:$0xf]
  %v65 = vld [vmem:[%s1 + $0x48] sm:$0xf]
  %v66 = vld [vmem:[%s1 + $0x4c] sm:$0xf]
  %v67 = vld [vmem:[%s1 + $0x50] sm:$0xf]
  %v68 = vld [vmem:[%s1 + $0x54] sm:$0xf]
  %v69 = vld [vmem:[%s1 + $0x58] sm:$0xf]
  %v70 = vld [vmem:[%s1 + $0x5c] sm:$0xf]
  %v71 = vld [vmem:[%s1 + $0x60] sm:$0xf]
  %v72 = vld [vmem:[%s1 + $0x64] sm:$0xf]
  %v73 = vld [vmem:[%s1 + $0x68] sm:$0xf]
  %v74 = vld [vmem:[%s1 + $0x6c] sm:$0xf]
  %v75 = vld [vmem:[%s1 + $0x70] sm:$0xf]
  %v76 = vld [vmem:[%s1 + $0x74] sm:$0xf]
  %v77 = vld [vmem:[%s1 + $0x78] sm:$0xf]
  %v78 = vld [vmem:[%s1 + $0x7c] sm:$0xf]
  %v79 = vld [vmem:[%s1 + $0x80] sm:$0xf]
  %v80 = vld [vmem:[%s1 + $0x84] sm:$0xf]
  %v81 = vld [vmem:[%s1 + $0x88] sm:$0xf]
  %v82 = vld [vmem:[%s1 + $0x8c] sm:$0xf]
  %v83 = vld [vmem:[%s1 + $0x90] sm:$0xf]
  %v84 = vld [vmem:[%s1 + $0x94] sm:$0xf]
  %v85 = vld [vmem:[%s1 + $0x98] sm:$0xf]
  %v86 = vld [vmem:[%s1 + $0x9c] sm:$0xf]
  %v87 = vld [vmem:[%s1 + $0xa0] sm:$0xf]
  %v88 = vld [vmem:[%s1 + $0xa4] sm:$0xf]
  %v89 = vld [vmem:[%s1 + $0xa8] sm:$0xf]
  %v90 = vld [vmem:[%s1 + $0xac] sm:$0xf]
  %v91 = vld [vmem:[%s1 + $0xb0] sm:$0xf]
  %v92 = vld [vmem:[%s1 + $0xb4] sm:$0xf]
  %v93 = vld [vmem:[%s1 + $0xb8] sm:$0xf]
  %v94 = vld [vmem:[%s1 + $0xbc] sm:$0xf]
  %v95 = vld [vmem:[%s1 + $0xc0] sm:$0xf]
  %v96 = vld [vmem:[%s1 + $0xc4] sm:$0xf]
  %v97 = vld [vmem:[%s1 + $0xc8] sm:$0xf]
  %v98 = vld [vmem:[%s1 + $0xcc] sm:$0xf]
  %v99 = vld [vmem:[%s1 + $0xd0] sm:$0xf]
  %v100 = vld [vmem:[%s1 + $0xd4] sm:$0xf]
  %v101 = vld [vmem:[%s1 + $0xd8] sm:$0xf]
  %v102 = vld [vmem:[%s1 + $0xdc] sm:$0xf]
  %v103 = vld [vmem:[%s1 + $0xe0] sm:$0xf]
  %v104 = vld [vmem:[%s1 + $0xe4] sm:$0xf]
  %v105 = vld [vmem:[%s1 + $0xe8] sm:$0xf]
  %v106 = vld [vmem:[%s1 + $0xec] sm:$0xf]
  %v107 = vld [vmem:[%s1 + $0xf0] sm:$0xf]
  %v108 = vld [vmem:[%s1 + $0xf4] sm:$0xf]
  %v109 = vld [vmem:[%s1 + $0xf8] sm:$0xf]
  %v110 = vld [vmem:[%s1 + $0xfc] sm:$0xf]
  %v111 = vld [vmem:[%s1 + $0x100] sm:$0xf]
  %v112 = vld [vmem:[%s1 + $0x104] sm:$0xf]
  %v113 = vld [vmem:[%s1 + $0x108] sm:$0xf]
  %v114 = vld [vmem:[%s1 + $0x10c] sm:$0xf]
  %v115 = vld [vmem:[%s1 + $0x110] sm:$0xf]
  %v116 = vld [vmem:[%s1 + $0x114] sm:$0xf]
  %v117 = vld [vmem:[%s1 + $0x118] sm:$0xf]
  %v118 = vld [vmem:[%s1 + $0x11c] sm:$0xf]
  %v119 = vld [vmem:[%s1 + $0x120] sm:$0xf]
  %v120 = vld [vmem:[%s1 + $0x124] sm:$0xf]
  %v121 = vld [vmem:[%s1 + $0x128] sm:$0xf]
  %v122 = vld [vmem:[%s1 + $0x12c] sm:$0xf]
  %v123 = vld [vmem:[%s1 + $0x130] sm:$0xf]
  %v124 = vld [vmem:[%s1 + $0x134] sm:$0xf]
  %v125 = vld [vmem:[%s1 + $0x138] sm:$0xf]
  %v126 = vld [vmem:[%s1 + $0x13c] sm:$0xf]
  %v127 = vld [vmem:[%s1 + $0x140] sm:$0xf]
  %v128 = vld [vmem:[%s1 + $0x144] sm:$0xf]
  %v129 = vld [vmem:[%s1 + $0x148] sm:$0xf]
  %v130 = vld [vmem:[%s1 + $0x14c] sm:$0xf]
  %v131 = vld [vmem:[%s1 + $0x150] sm:$0xf]
  %v132 = vld [vmem:[%s1 + $0x154] sm:$0xf]
  %v133 = vld [vmem:[%s1 + $0x158] sm:$0xf]
  %v134 = vld [vmem:[%s1 + $0x15c] sm:$0xf]
  %v135 = vld [vmem:[%s1 + $0x160] sm:$0xf]
  %v136 = vld [vmem:[%s1 + $0x164] sm:$0xf]
  %v137 = vld [vmem:[%s1 + $0x168] sm:$0xf]
  %v138 = vld [vmem:[%s1 + $0x16c] sm:$0xf]
  %v139 = vld [vmem:[%s1 + $0x170] sm:$0xf]
  %v140 = vld [vmem:[%s1 + $0x174] sm:$0xf]
  %v141 = vld [vmem:[%s1 + $0x178] sm:$0xf]
  %v142 = vld [vmem:[%s1 + $0x17c] sm:$0xf]
  %v143 = vld [vmem:[%s1 + $0x180] sm:$0xf]
  %v144 = vld [vmem:[%s1 + $0x184] sm:$0xf]
  %v145 = vld [vmem:[%s1 + $0x188] sm:$0xf]
  %v146 = vld [vmem:[%s1 + $0x18c] sm:$0xf]
  %v147 = vld [vmem:[%s1 + $0x190] sm:$0xf]
  %v148 = vld [vmem:[%s1 + $0x194] sm:$0xf]
  %v149 = vld [vmem:[%s1 + $0x198] sm:$0xf]
  %v150 = vld [vmem:[%s1 + $0x19c] sm:$0xf]
  %v151 = vld [vmem:[%s1 + $0x1a0] sm:$0xf]
  %v152 = vld [vmem:[%s1 + $0x1a4] sm:$0xf]
  %v153 = vld [vmem:[%s1 + $0x1a8] sm:$0xf]
  %v154 = vld [vmem:[%s1 + $0x1ac] sm:$0xf]
  %v155 = vld [vmem:[%s1 + $0x1b0] sm:$0xf]
  %v156 = vld [vmem:[%s1 + $0x1b4] sm:$0xf]
  %v157 = vld [vmem:[%s1 + $0x1b8] sm:$0xf]
  %v158 = vld [vmem:[%s1 + $0x1bc] sm:$0xf]
  %v159 = vld [vmem:[%s1 + $0x1c0] sm:$0xf]
  %v160 = vld [vmem:[%s1 + $0x1c4] sm:$0xf]
  %v161 = vld [vmem:[%s1 + $0x1c8] sm:$0xf]
  %v162 = vld [vmem:[%s1 + $0x1cc] sm:$0xf]
  %v163 = vld [vmem:[%s1 + $0x1d0] sm:$0xf]
  %v164 = vld [vmem:[%s1 + $0x1d4] sm:$0xf]
  %v165 = vld [vmem:[%s1 + $0x1d8] sm:$0xf]
  %v166 = vld [vmem:[%s1 + $0x1dc] sm:$0xf]
  %v167 = vld [vmem:[%s1 + $0x1e0] sm:$0xf]
  %v168 = vld [vmem:[%s1 + $0x1e4] sm:$0xf]
  %v169 = vld [vmem:[%s1 + $0x1e8] sm:$0xf]
  %v170 = vld [vmem:[%s1 + $0x1ec] sm:$0xf]
  %v171 = vld [vmem:[%s1 + $0x1f0] sm:$0xf]
  %v172 = vld [vmem:[%s1 + $0x1f4] sm:$0xf]
  %v173 = vld [vmem:[%s1 + $0x1f8] sm:$0xf]
  %v174 = vld [vmem:[%s1 + $0x1fc] sm:$0xf]
  %v175 = vld [vmem:[%s1 + $0x200] sm:$0xf]
  %v176 = vld [vmem:[%s1 + $0x204] sm:$0xf]
  %v177 = vld [vmem:[%s1 + $0x208] sm:$0xf]
  %v178 = vld [vmem:[%s1 + $0x20c] sm:$0xf]
  %v179 = vld [vmem:[%s1 + $0x210] sm:$0xf]
  %v180 = vld [vmem:[%s1 + $0x214] sm:$0xf]
  %v181 = vld [vmem:[%s1 + $0x218] sm:$0xf]
  %v182 = vld [vmem:[%s1 + $0x21c] sm:$0xf]
  %v183 = vld [vmem:[%s1 + $0x220] sm:$0xf]
  %v184 = vld [vmem:[%s1 + $0x224] sm:$0xf]
  %v185 = vld [vmem:[%s1 + $0x228] sm:$0xf]
  %v186 = vld [vmem:[%s1 + $0x22c] sm:$0xf]
  %v187 = vld [vmem:[%s1 + $0x230] sm:$0xf]
  %v188 = vld [vmem:[%s1 + $0x234] sm:$0xf]
  %v189 = vld [vmem:[%s1 + $0x238] sm:$0xf]
  %v190 = vld [vmem:[%s1 + $0x23c] sm:$0xf]
  %v191 = vld [vmem:[%s1 + $0x240] sm:$0xf]
  %v192 = vld [vmem:[%s1 + $0x244] sm:$0xf]
  %v193 = vld [vmem:[%s1 + $0x248] sm:$0xf]
  %v194 = vld [vmem:[%s1 + $0x24c] sm:$0xf]
  %v195 = vld [vmem:[%s1 + $0x250] sm:$0xf]
  %v196 = vld [vmem:[%s1 + $0x254] sm:$0xf]
  %v197 = vld [vmem:[%s1 + $0x258] sm:$0xf]
  %v198 = vld [vmem:[%s1 + $0x25c] sm:$0xf]
  %v199 = vld [vmem:[%s1 + $0x260] sm:$0xf]
  %v200 = vld [vmem:[%s1 + $0x264] sm:$0xf]
  %v201 = vld [vmem:[%s1 + $0x268] sm:$0xf]
  %v202 = vld [vmem:[%s1 + $0x26c] sm:$0xf]
  %v203 = vld [vmem:[%s1 + $0x270] sm:$0xf]
  %v204 = vld [vmem:[%s1 + $0x274] sm:$0xf]
  %v205 = vld [vmem:[%s1 + $0x278] sm:$0xf]
  %v206 = vld [vmem:[%s1 + $0x27c] sm:$0xf]
  %v207 = vld [vmem:[%s1 + $0x280] sm:$0xf]
  %v208 = vld [vmem:[%s1 + $0x284] sm:$0xf]
  %v209 = vld [vmem:[%s1 + $0x288] sm:$0xf]
  %v210 = vld [vmem:[%s1 + $0x28c] sm:$0xf]
  %v211 = vld [vmem:[%s1 + $0x290] sm:$0xf]
  %v212 = vld [vmem:[%s1 + $0x294] sm:$0xf]
  %v213 = vld [vmem:[%s1 + $0x298] sm:$0xf]
  %v214 = vld [vmem:[%s1 + $0x29c] sm:$0xf]
  %v215 = vld [vmem:[%s1 + $0x2a0] sm:$0xf]
  %v216 = vld [vmem:[%s1 + $0x2a4] sm:$0xf]
  %v217 = vld [vmem:[%s1 + $0x2a8] sm:$0xf]
  %v218 = vld [vmem:[%s1 + $0x2ac] sm:$0xf]
  %v219 = vld [vmem:[%s1 + $0x2b0] sm:$0xf]
  %v220 = vld [vmem:[%s1 + $0x2b4] sm:$0xf]
  %v221 = vld [vmem:[%s1 + $0x2b8] sm:$0xf]
  %v222 = vld [vmem:[%s1 + $0x2bc] sm:$0xf]
  %v223 = vld [vmem:[%s1 + $0x2c0] sm:$0xf]
  %v224 = vld [vmem:[%s1 + $0x2c4] sm:$0xf]
  %v225 = vld [vmem:[%s1 + $0x2c8] sm:$0xf]
  %v226 = vld [vmem:[%s1 + $0x2cc] sm:$0xf]
  %v227 = vld [vmem:[%s1 + $0x2d0] sm:$0xf]
  %v228 = vld [vmem:[%s1 + $0x2d4] sm:$0xf]
  %v229 = vld [vmem:[%s1 + $0x2d8] sm:$0xf]
  %v230 = vld [vmem:[%s1 + $0x2dc] sm:$0xf]
  %v231 = vld [vmem:[%s1 + $0x2e0] sm:$0xf]
  %v232 = vld [vmem:[%s1 + $0x2e4] sm:$0xf]
  %v233 = vld [vmem:[%s1 + $0x2e8] sm:$0xf]
  %v234 = vld [vmem:[%s1 + $0x2ec] sm:$0xf]
  %v235 = vld [vmem:[%s1 + $0x2f0] sm:$0xf]
  %v236 = vld [vmem:[%s1 + $0x2f4] sm:$0xf]
  %v237 = vld [vmem:[%s1 + $0x2f8] sm:$0xf]
  %v238 = vld [vmem:[%s1 + $0x2fc] sm:$0xf]
  %v239 = vld [vmem:[%s1 + $0x300] sm:$0xf]
  %v240 = vld [vmem:[%s1 + $0x304] sm:$0xf]
  %v241 = vld [vmem:[%s1 + $0x308] sm:$0xf]
  %v242 = vld [vmem:[%s1 + $0x30c] sm:$0xf]
  %v243 = vld [vmem:[%s1 + $0x310] sm:$0xf]
  %v244 = vld [vmem:[%s1 + $0x314] sm:$0xf]
  %v245 = vld [vmem:[%s1 + $0x318] sm:$0xf]
  %v246 = vld [vmem:[%s1 + $0x31c] sm:$0xf]
  %v247 = vld [vmem:[%s1 + $0x320] sm:$0xf]
  %v248 = vld [vmem:[%s1 + $0x324] sm:$0xf]
  %v249 = vld [vmem:[%s1 + $0x328] sm:$0xf]
  %v250 = vld [vmem:[%s1 + $0x32c] sm:$0xf]
  %v251 = vld [vmem:[%s1 + $0x330] sm:$0xf]
  %v252 = vld [vmem:[%s1 + $0x334] sm:$0xf]
  %v253 = vld [vmem:[%s1 + $0x338] sm:$0xf]
  %v254 = vld [vmem:[%s1 + $0x33c] sm:$0xf]
  %v255 = vld [vmem:[%s1 + $0x340] sm:$0xf]
  %v256 = vld [vmem:[%s1 + $0x344] sm:$0xf]
  %v257 = vld [vmem:[%s1 + $0x348] sm:$0xf]
  %v258 = vld [vmem:[%s1 + $0x34c] sm:$0xf]
  %v259 = vld [vmem:[%s1 + $0x350] sm:$0xf]
  %v260 = vld [vmem:[%s1 + $0x354] sm:$0xf]
  %v261 = vld [vmem:[%s1 + $0x358] sm:$0xf]
  %v262 = vld [vmem:[%s1 + $0x35c] sm:$0xf]
  %v263 = vld [vmem:[%s1 + $0x360] sm:$0xf]
  %v264 = vld [vmem:[%s1 + $0x364] sm:$0xf]
  %v265 = vld [vmem:[%s1 + $0x368] sm:$0xf]
  %v266 = vld [vmem:[%s1 + $0x36c] sm:$0xf]
  %v267 = vld [vmem:[%s1 + $0x370] sm:$0xf]
  %v268 = vld [vmem:[%s1 + $0x374] sm:$0xf]
  %v269 = vld [vmem:[%s1 + $0x378] sm:$0xf]
  %v270 = vld [vmem:[%s1 + $0x37c] sm:$0xf]
  %v271 = vld [vmem:[%s1 + $0x380] sm:$0xf]
  %v272 = vld [vmem:[%s1 + $0x384] sm:$0xf]
  %v273 = vld [vmem:[%s1 + $0x388] sm:$0xf]
  %v274 = vld [vmem:[%s1 + $0x38c] sm:$0xf]
  %v275 = vld [vmem:[%s1 + $0x390] sm:$0xf]
  %v276 = vld [vmem:[%s1 + $0x394] sm:$0xf]
  %v277 = vld [vmem:[%s1 + $0x398] sm:$0xf]
  %v278 = vld [vmem:[%s1 + $0x39c] sm:$0xf]
  %v279 = vld [vmem:[%s1 + $0x3a0] sm:$0xf]
  %v280 = vld [vmem:[%s1 + $0x3a4] sm:$0xf]
  %v281 = vld [vmem:[%s1 + $0x3a8] sm:$0xf]
  %v282 = vld [vmem:[%s1 + $0x3ac] sm:$0xf]
  %v283 = vld [vmem:[%s1 + $0x3b0] sm:$0xf]
  %v284 = vld [vmem:[%s1 + $0x3b4] sm:$0xf]
  %v285 = vld [vmem:[%s1 + $0x3b8] sm:$0xf]
  %v286 = vld [vmem:[%s1 + $0x3bc] sm:$0xf]
  %v287 = vld [vmem:[%s1 + $0x3c0] sm:$0xf]
  %v288 = vld [vmem:[%s1 + $0x3c4] sm:$0xf]
  %v289 = vld [vmem:[%s1 + $0x3c8] sm:$0xf]
  %v290 = vld [vmem:[%s1 + $0x3cc] sm:$0xf]
  %v291 = vld [vmem:[%s1 + $0x3d0] sm:$0xf]
  %v292 = vld [vmem:[%s1 + $0x3d4] sm:$0xf]
  %v293 = vld [vmem:[%s1 + $0x3d8] sm:$0xf]
  %v294 = vld [vmem:[%s1 + $0x3dc] sm:$0xf]
  %v295 = vld [vmem:[%s1 + $0x3e0] sm:$0xf]
  %v296 = vld [vmem:[%s1 + $0x3e4] sm:$0xf]
  %v297 = vld [vmem:[%s2] sm:$0xff]
  %v298 = vld [vmem:[%s2 + $0x8] sm:$0xff]
  %v299 = vld [vmem:[%s2 + $0x10] sm:$0xff]
  %v300 = vld [vmem:[%s2 + $0x18] sm:$0xff]
  %302 = vset.pattern.permute.xlu0 0
  %303 = vperm.xlu0 %302, %v297
  %v304 = vpop.permute.xlu0 %303
  %307 = vset.pattern.permute.xlu0 0
  %308 = vperm.xlu0 %307, %v298
  %v309 = vpop.permute.xlu0 %308
  %312 = vset.pattern.permute.xlu0 0
  %313 = vperm.xlu0 %312, %v299
  %v314 = vpop.permute.xlu0 %313
  %317 = vset.pattern.permute.xlu0 0
  %318 = vperm.xlu0 %317, %v300
  %v319 = vpop.permute.xlu0 %318
  %v353 = vunpack.c.l.b16 %v15
  %v354 = vunpack.c.h.b16 %v15
  %v355 = vunpack.c.l.b16 %v16
  %v356 = vunpack.c.h.b16 %v16
  %v357 = vunpack.c.l.b16 %v17
  %v358 = vunpack.c.h.b16 %v17
  %v359 = vunpack.c.l.b16 %v18
  %v360 = vunpack.c.h.b16 %v18
  %v361 = vunpack.c.l.b16 %v19
  %v362 = vunpack.c.h.b16 %v19
  %v363 = vunpack.c.l.b16 %v20
  %v364 = vunpack.c.h.b16 %v20
  %v365 = vunpack.c.l.b16 %v21
  %v366 = vunpack.c.h.b16 %v21
  %v367 = vunpack.c.l.b16 %v22
  %v368 = vunpack.c.h.b16 %v22
  %v369 = vunpack.c.l.b16 %v23
  %v370 = vunpack.c.h.b16 %v23
  %v371 = vunpack.c.l.b16 %v24
  %v372 = vunpack.c.h.b16 %v24
  %v373 = vunpack.c.l.b16 %v25
  %v374 = vunpack.c.h.b16 %v25
  %v375 = vunpack.c.l.b16 %v26
  %v376 = vunpack.c.h.b16 %v26
  %v377 = vunpack.c.l.b16 %v27
  %v378 = vunpack.c.h.b16 %v27
  %v379 = vunpack.c.l.b16 %v28
  %v380 = vunpack.c.h.b16 %v28
  %v381 = vunpack.c.l.b16 %v29
  %v382 = vunpack.c.h.b16 %v29
  %v383 = vunpack.c.l.b16 %v30
  %v384 = vunpack.c.h.b16 %v30
  %v385 = vunpack.c.l.b16 %v31
  %v386 = vunpack.c.h.b16 %v31
  %v387 = vunpack.c.l.b16 %v32
  %v388 = vunpack.c.h.b16 %v32
  %v389 = vunpack.c.l.b16 %v33
  %v390 = vunpack.c.h.b16 %v33
  %v391 = vunpack.c.l.b16 %v34
  %v392 = vunpack.c.h.b16 %v34
  %v393 = vunpack.c.l.b16 %v35
  %v394 = vunpack.c.h.b16 %v35
  %v395 = vunpack.c.l.b16 %v36
  %v396 = vunpack.c.h.b16 %v36
  %v397 = vunpack.c.l.b16 %v37
  %v398 = vunpack.c.h.b16 %v37
  %v399 = vunpack.c.l.b16 %v38
  %v400 = vunpack.c.h.b16 %v38
  %v401 = vunpack.c.l.b16 %v39
  %v402 = vunpack.c.h.b16 %v39
  %v403 = vunpack.c.l.b16 %v40
  %v404 = vunpack.c.h.b16 %v40
  %v405 = vunpack.c.l.b16 %v41
  %v406 = vunpack.c.h.b16 %v41
  %v407 = vunpack.c.l.b16 %v42
  %v408 = vunpack.c.h.b16 %v42
  %v409 = vunpack.c.l.b16 %v43
  %v410 = vunpack.c.h.b16 %v43
  %v411 = vunpack.c.l.b16 %v44
  %v412 = vunpack.c.h.b16 %v44
  %v413 = vunpack.c.l.b16 %v45
  %v414 = vunpack.c.h.b16 %v45
  %v415 = vunpack.c.l.b16 %v46
  %v416 = vunpack.c.h.b16 %v46
  %v417 = vpack.c.b16 %v369, %v353
  %v418 = vpack.c.b16 %v370, %v354
  %v419 = vpack.c.b16 %v371, %v355
  %v420 = vpack.c.b16 %v372, %v356
  %v421 = vpack.c.b16 %v373, %v357
  %v422 = vpack.c.b16 %v374, %v358
  %v423 = vpack.c.b16 %v375, %v359
  %v424 = vpack.c.b16 %v376, %v360
  %v425 = vpack.c.b16 %v377, %v361
  %v426 = vpack.c.b16 %v378, %v362
  %v427 = vpack.c.b16 %v379, %v363
  %v428 = vpack.c.b16 %v380, %v364
  %v429 = vpack.c.b16 %v381, %v365
  %v430 = vpack.c.b16 %v382, %v366
  %v431 = vpack.c.b16 %v383, %v367
  %v432 = vpack.c.b16 %v384, %v368
  %v433 = vpack.c.b16 %v401, %v385
  %v434 = vpack.c.b16 %v402, %v386
  %v435 = vpack.c.b16 %v403, %v387
  %v436 = vpack.c.b16 %v404, %v388
  %v437 = vpack.c.b16 %v405, %v389
  %v438 = vpack.c.b16 %v406, %v390
  %v439 = vpack.c.b16 %v407, %v391
  %v440 = vpack.c.b16 %v408, %v392
  %v441 = vpack.c.b16 %v409, %v393
  %v442 = vpack.c.b16 %v410, %v394
  %v443 = vpack.c.b16 %v411, %v395
  %v444 = vpack.c.b16 %v412, %v396
  %v445 = vpack.c.b16 %v413, %v397
  %v446 = vpack.c.b16 %v414, %v398
  %v447 = vpack.c.b16 %v415, %v399
  %v448 = vpack.c.b16 %v416, %v400
  %v729 = vunpack.c.l.b16 %v47
  %v730 = vunpack.c.l.b16 %v48
  %v731 = vunpack.c.l.b16 %v49
  %v732 = vunpack.c.l.b16 %v50
  %v733 = vunpack.c.l.b16 %v51
  %v734 = vunpack.c.l.b16 %v52
  %v735 = vunpack.c.l.b16 %v53
  %v736 = vunpack.c.l.b16 %v54
  %v737 = vunpack.c.l.b16 %v55
  %v738 = vunpack.c.l.b16 %v56
  %v739 = vunpack.c.l.b16 %v57
  %v740 = vunpack.c.l.b16 %v58
  %v741 = vunpack.c.l.b16 %v59
  %v742 = vunpack.c.l.b16 %v60
  %v743 = vunpack.c.l.b16 %v61
  %v744 = vunpack.c.l.b16 %v62
  %v745 = vunpack.c.l.b16 %v63
  %v746 = vunpack.c.l.b16 %v64
  %v747 = vunpack.c.l.b16 %v65
  %v748 = vunpack.c.l.b16 %v66
  %v749 = vunpack.c.l.b16 %v67
  %v750 = vunpack.c.l.b16 %v68
  %v751 = vunpack.c.l.b16 %v69
  %v752 = vunpack.c.l.b16 %v70
  %v753 = vunpack.c.l.b16 %v71
  %v754 = vunpack.c.l.b16 %v72
  %v755 = vunpack.c.l.b16 %v73
  %v756 = vunpack.c.l.b16 %v74
  %v757 = vunpack.c.l.b16 %v75
  %v758 = vunpack.c.l.b16 %v76
  %v759 = vunpack.c.l.b16 %v77
  %v760 = vunpack.c.l.b16 %v78
  %v761 = vunpack.c.l.b16 %v79
  %v762 = vunpack.c.l.b16 %v80
  %v763 = vunpack.c.l.b16 %v81
  %v764 = vunpack.c.l.b16 %v82
  %v765 = vunpack.c.l.b16 %v83
  %v766 = vunpack.c.l.b16 %v84
  %v767 = vunpack.c.l.b16 %v85
  %v768 = vunpack.c.l.b16 %v86
  %v769 = vunpack.c.l.b16 %v87
  %v770 = vunpack.c.l.b16 %v88
  %v771 = vunpack.c.l.b16 %v89
  %v772 = vunpack.c.l.b16 %v90
  %v773 = vunpack.c.l.b16 %v91
  %v774 = vunpack.c.l.b16 %v92
  %v775 = vunpack.c.l.b16 %v93
  %v776 = vunpack.c.l.b16 %v94
  %v777 = vunpack.c.l.b16 %v95
  %v778 = vunpack.c.l.b16 %v96
  %v779 = vunpack.c.l.b16 %v97
  %v780 = vunpack.c.l.b16 %v98
  %v781 = vunpack.c.l.b16 %v99
  %v782 = vunpack.c.l.b16 %v100
  %v783 = vunpack.c.l.b16 %v101
  %v784 = vunpack.c.l.b16 %v102
  %v785 = vunpack.c.l.b16 %v103
  %v786 = vunpack.c.l.b16 %v104
  %v787 = vunpack.c.l.b16 %v105
  %v788 = vunpack.c.l.b16 %v106
  %v789 = vunpack.c.l.b16 %v107
  %v790 = vunpack.c.l.b16 %v108
  %v791 = vunpack.c.l.b16 %v109
  %v792 = vunpack.c.l.b16 %v110
  %v793 = vunpack.c.l.b16 %v111
  %v794 = vunpack.c.l.b16 %v112
  %v795 = vunpack.c.l.b16 %v113
  %v796 = vunpack.c.l.b16 %v114
  %v797 = vunpack.c.l.b16 %v115
  %v798 = vunpack.c.l.b16 %v116
  %v799 = vunpack.c.l.b16 %v117
  %v800 = vunpack.c.l.b16 %v118
  %v801 = vunpack.c.l.b16 %v119
  %v802 = vunpack.c.l.b16 %v120
  %v803 = vunpack.c.l.b16 %v121
  %v804 = vunpack.c.l.b16 %v122
  %v805 = vunpack.c.l.b16 %v123
  %v806 = vunpack.c.l.b16 %v124
  %v807 = vunpack.c.l.b16 %v125
  %v808 = vunpack.c.l.b16 %v126
  %v809 = vunpack.c.l.b16 %v127
  %v810 = vunpack.c.l.b16 %v128
  %v811 = vunpack.c.l.b16 %v129
  %v812 = vunpack.c.l.b16 %v130
  %v813 = vunpack.c.l.b16 %v131
  %v814 = vunpack.c.l.b16 %v132
  %v815 = vunpack.c.l.b16 %v133
  %v816 = vunpack.c.l.b16 %v134
  %v817 = vunpack.c.l.b16 %v135
  %v818 = vunpack.c.l.b16 %v136
  %v819 = vunpack.c.l.b16 %v137
  %v820 = vunpack.c.l.b16 %v138
  %v821 = vunpack.c.l.b16 %v139
  %v822 = vunpack.c.l.b16 %v140
  %v823 = vunpack.c.l.b16 %v141
  %v824 = vunpack.c.l.b16 %v142
  %v825 = vunpack.c.l.b16 %v143
  %v826 = vunpack.c.l.b16 %v144
  %v827 = vunpack.c.l.b16 %v145
  %v828 = vunpack.c.l.b16 %v146
  %v829 = vunpack.c.l.b16 %v147
  %v830 = vunpack.c.l.b16 %v148
  %v831 = vunpack.c.l.b16 %v149
  %v832 = vunpack.c.l.b16 %v150
  %v833 = vunpack.c.l.b16 %v151
  %v834 = vunpack.c.l.b16 %v152
  %v835 = vunpack.c.l.b16 %v153
  %v836 = vunpack.c.l.b16 %v154
  %v837 = vunpack.c.l.b16 %v155
  %v838 = vunpack.c.l.b16 %v156
  %v839 = vunpack.c.l.b16 %v157
  %v840 = vunpack.c.l.b16 %v158
  %v841 = vunpack.c.l.b16 %v159
  %v842 = vunpack.c.l.b16 %v160
  %v843 = vunpack.c.l.b16 %v161
  %v844 = vunpack.c.l.b16 %v162
  %v845 = vunpack.c.l.b16 %v163
  %v846 = vunpack.c.l.b16 %v164
  %v847 = vunpack.c.l.b16 %v165
  %v848 = vunpack.c.l.b16 %v166
  %v849 = vunpack.c.l.b16 %v167
  %v850 = vunpack.c.l.b16 %v168
  %v851 = vunpack.c.l.b16 %v169
  %v852 = vunpack.c.l.b16 %v170
  %v853 = vunpack.c.l.b16 %v171
  %v854 = vunpack.c.l.b16 %v172
  %v855 = vunpack.c.l.b16 %v173
  %v856 = vunpack.c.l.b16 %v174
  %v857 = vunpack.c.l.b16 %v175
  %v858 = vunpack.c.l.b16 %v176
  %v859 = vunpack.c.l.b16 %v177
  %v860 = vunpack.c.l.b16 %v178
  %v861 = vunpack.c.l.b16 %v179
  %v862 = vunpack.c.l.b16 %v180
  %v863 = vunpack.c.l.b16 %v181
  %v864 = vunpack.c.l.b16 %v182
  %v865 = vunpack.c.l.b16 %v183
  %v866 = vunpack.c.l.b16 %v184
  %v867 = vunpack.c.l.b16 %v185
  %v868 = vunpack.c.l.b16 %v186
  %v869 = vunpack.c.l.b16 %v187
  %v870 = vunpack.c.l.b16 %v188
  %v871 = vunpack.c.l.b16 %v189
  %v872 = vunpack.c.l.b16 %v190
  %v873 = vunpack.c.l.b16 %v191
  %v874 = vunpack.c.l.b16 %v192
  %v875 = vunpack.c.l.b16 %v193
  %v876 = vunpack.c.l.b16 %v194
  %v877 = vunpack.c.l.b16 %v195
  %v878 = vunpack.c.l.b16 %v196
  %v879 = vunpack.c.l.b16 %v197
  %v880 = vunpack.c.l.b16 %v198
  %v881 = vunpack.c.l.b16 %v199
  %v882 = vunpack.c.l.b16 %v200
  %v883 = vunpack.c.l.b16 %v201
  %v884 = vunpack.c.l.b16 %v202
  %v885 = vunpack.c.l.b16 %v203
  %v886 = vunpack.c.l.b16 %v204
  %v887 = vunpack.c.l.b16 %v205
  %v888 = vunpack.c.l.b16 %v206
  %v889 = vunpack.c.l.b16 %v207
  %v890 = vunpack.c.l.b16 %v208
  %v891 = vunpack.c.l.b16 %v209
  %v892 = vunpack.c.l.b16 %v210
  %v893 = vunpack.c.l.b16 %v211
  %v894 = vunpack.c.l.b16 %v212
  %v895 = vunpack.c.l.b16 %v213
  %v896 = vunpack.c.l.b16 %v214
  %v897 = vunpack.c.l.b16 %v215
  %v898 = vunpack.c.l.b16 %v216
  %v899 = vunpack.c.l.b16 %v217
  %v900 = vunpack.c.l.b16 %v218
  %v901 = vunpack.c.l.b16 %v219
  %v902 = vunpack.c.l.b16 %v220
  %v903 = vunpack.c.l.b16 %v221
  %v904 = vunpack.c.l.b16 %v222
  %v905 = vunpack.c.l.b16 %v223
  %v906 = vunpack.c.l.b16 %v224
  %v907 = vunpack.c.l.b16 %v225
  %v908 = vunpack.c.l.b16 %v226
  %v909 = vunpack.c.l.b16 %v227
  %v910 = vunpack.c.l.b16 %v228
  %v911 = vunpack.c.l.b16 %v229
  %v912 = vunpack.c.l.b16 %v230
  %v913 = vunpack.c.l.b16 %v231
  %v914 = vunpack.c.l.b16 %v232
  %v915 = vunpack.c.l.b16 %v233
  %v916 = vunpack.c.l.b16 %v234
  %v917 = vunpack.c.l.b16 %v235
  %v918 = vunpack.c.l.b16 %v236
  %v919 = vunpack.c.l.b16 %v237
  %v920 = vunpack.c.l.b16 %v238
  %v921 = vunpack.c.l.b16 %v239
  %v922 = vunpack.c.l.b16 %v240
  %v923 = vunpack.c.l.b16 %v241
  %v924 = vunpack.c.l.b16 %v242
  %v925 = vunpack.c.l.b16 %v243
  %v926 = vunpack.c.l.b16 %v244
  %v927 = vunpack.c.l.b16 %v245
  %v928 = vunpack.c.l.b16 %v246
  %v929 = vunpack.c.l.b16 %v247
  %v930 = vunpack.c.l.b16 %v248
  %v931 = vunpack.c.l.b16 %v249
  %v932 = vunpack.c.l.b16 %v250
  %v933 = vunpack.c.l.b16 %v251
  %v934 = vunpack.c.l.b16 %v252
  %v935 = vunpack.c.l.b16 %v253
  %v936 = vunpack.c.l.b16 %v254
  %v937 = vunpack.c.l.b16 %v255
  %v938 = vunpack.c.l.b16 %v256
  %v939 = vunpack.c.l.b16 %v257
  %v940 = vunpack.c.l.b16 %v258
  %v941 = vunpack.c.l.b16 %v259
  %v942 = vunpack.c.l.b16 %v260
  %v943 = vunpack.c.l.b16 %v261
  %v944 = vunpack.c.l.b16 %v262
  %v945 = vunpack.c.l.b16 %v263
  %v946 = vunpack.c.l.b16 %v264
  %v947 = vunpack.c.l.b16 %v265
  %v948 = vunpack.c.l.b16 %v266
  %v949 = vunpack.c.l.b16 %v267
  %v950 = vunpack.c.l.b16 %v268
  %v951 = vunpack.c.l.b16 %v269
  %v952 = vunpack.c.l.b16 %v270
  %v953 = vunpack.c.l.b16 %v271
  %v954 = vunpack.c.l.b16 %v272
  %v955 = vunpack.c.l.b16 %v273
  %v956 = vunpack.c.l.b16 %v274
  %v957 = vunpack.c.l.b16 %v275
  %v958 = vunpack.c.l.b16 %v276
  %v959 = vunpack.c.l.b16 %v277
  %v960 = vunpack.c.l.b16 %v278
  %v961 = vunpack.c.l.b16 %v279
  %v962 = vunpack.c.l.b16 %v280
  %v963 = vunpack.c.l.b16 %v281
  %v964 = vunpack.c.l.b16 %v282
  %v965 = vunpack.c.l.b16 %v283
  %v966 = vunpack.c.l.b16 %v284
  %v967 = vunpack.c.l.b16 %v285
  %v968 = vunpack.c.l.b16 %v286
  %v969 = vunpack.c.l.b16 %v287
  %v970 = vunpack.c.l.b16 %v288
  %v971 = vunpack.c.l.b16 %v289
  %v972 = vunpack.c.l.b16 %v290
  %v973 = vunpack.c.l.b16 %v291
  %v974 = vunpack.c.l.b16 %v292
  %v975 = vunpack.c.l.b16 %v293
  %v976 = vunpack.c.l.b16 %v294
  %v977 = vunpack.c.l.b16 %v295
  %v978 = vunpack.c.l.b16 %v296
  %v979 = vpack.c.b16 %v730, %v729
  %v980 = vpack.c.b16 %v732, %v731
  %v981 = vpack.c.b16 %v734, %v733
  %v982 = vpack.c.b16 %v736, %v735
  %v983 = vpack.c.b16 %v738, %v737
  %v984 = vpack.c.b16 %v740, %v739
  %v985 = vpack.c.b16 %v742, %v741
  %v986 = vpack.c.b16 %v744, %v743
  %v987 = vpack.c.b16 %v746, %v745
  %v988 = vpack.c.b16 %v748, %v747
  %v989 = vpack.c.b16 %v750, %v749
  %v990 = vpack.c.b16 %v752, %v751
  %v991 = vpack.c.b16 %v754, %v753
  %v992 = vpack.c.b16 %v756, %v755
  %v993 = vpack.c.b16 %v758, %v757
  %v994 = vpack.c.b16 %v760, %v759
  %v995 = vpack.c.b16 %v762, %v761
  %v996 = vpack.c.b16 %v764, %v763
  %v997 = vpack.c.b16 %v766, %v765
  %v998 = vpack.c.b16 %v768, %v767
  %v999 = vpack.c.b16 %v770, %v769
  %v1000 = vpack.c.b16 %v772, %v771
  %v1001 = vpack.c.b16 %v774, %v773
  %v1002 = vpack.c.b16 %v776, %v775
  %v1003 = vpack.c.b16 %v778, %v777
  %v1004 = vpack.c.b16 %v780, %v779
  %v1005 = vpack.c.b16 %v782, %v781
  %v1006 = vpack.c.b16 %v784, %v783
  %v1007 = vpack.c.b16 %v786, %v785
  %v1008 = vpack.c.b16 %v788, %v787
  %v1009 = vpack.c.b16 %v790, %v789
  %v1010 = vpack.c.b16 %v792, %v791
  %v1011 = vpack.c.b16 %v794, %v793
  %v1012 = vpack.c.b16 %v796, %v795
  %v1013 = vpack.c.b16 %v798, %v797
  %v1014 = vpack.c.b16 %v800, %v799
  %v1015 = vpack.c.b16 %v802, %v801
  %v1016 = vpack.c.b16 %v804, %v803
  %v1017 = vpack.c.b16 %v806, %v805
  %v1018 = vpack.c.b16 %v808, %v807
  %v1019 = vpack.c.b16 %v810, %v809
  %v1020 = vpack.c.b16 %v812, %v811
  %v1021 = vpack.c.b16 %v814, %v813
  %v1022 = vpack.c.b16 %v816, %v815
  %v1023 = vpack.c.b16 %v818, %v817
  %v1024 = vpack.c.b16 %v820, %v819
  %v1025 = vpack.c.b16 %v822, %v821
  %v1026 = vpack.c.b16 %v824, %v823
  %v1027 = vpack.c.b16 %v826, %v825
  %v1028 = vpack.c.b16 %v828, %v827
  %v1029 = vpack.c.b16 %v830, %v829
  %v1030 = vpack.c.b16 %v832, %v831
  %v1031 = vpack.c.b16 %v834, %v833
  %v1032 = vpack.c.b16 %v836, %v835
  %v1033 = vpack.c.b16 %v838, %v837
  %v1034 = vpack.c.b16 %v840, %v839
  %v1035 = vpack.c.b16 %v842, %v841
  %v1036 = vpack.c.b16 %v844, %v843
  %v1037 = vpack.c.b16 %v846, %v845
  %v1038 = vpack.c.b16 %v848, %v847
  %v1039 = vpack.c.b16 %v850, %v849
  %v1040 = vpack.c.b16 %v852, %v851
  %v1041 = vpack.c.b16 %v854, %v853
  %v1042 = vpack.c.b16 %v856, %v855
  %v1043 = vpack.c.b16 %v858, %v857
  %v1044 = vpack.c.b16 %v860, %v859
  %v1045 = vpack.c.b16 %v862, %v861
  %v1046 = vpack.c.b16 %v864, %v863
  %v1047 = vpack.c.b16 %v866, %v865
  %v1048 = vpack.c.b16 %v868, %v867
  %v1049 = vpack.c.b16 %v870, %v869
  %v1050 = vpack.c.b16 %v872, %v871
  %v1051 = vpack.c.b16 %v874, %v873
  %v1052 = vpack.c.b16 %v876, %v875
  %v1053 = vpack.c.b16 %v878, %v877
  %v1054 = vpack.c.b16 %v880, %v879
  %v1055 = vpack.c.b16 %v882, %v881
  %v1056 = vpack.c.b16 %v884, %v883
  %v1057 = vpack.c.b16 %v886, %v885
  %v1058 = vpack.c.b16 %v888, %v887
  %v1059 = vpack.c.b16 %v890, %v889
  %v1060 = vpack.c.b16 %v892, %v891
  %v1061 = vpack.c.b16 %v894, %v893
  %v1062 = vpack.c.b16 %v896, %v895
  %v1063 = vpack.c.b16 %v898, %v897
  %v1064 = vpack.c.b16 %v900, %v899
  %v1065 = vpack.c.b16 %v902, %v901
  %v1066 = vpack.c.b16 %v904, %v903
  %v1067 = vpack.c.b16 %v906, %v905
  %v1068 = vpack.c.b16 %v908, %v907
  %v1069 = vpack.c.b16 %v910, %v909
  %v1070 = vpack.c.b16 %v912, %v911
  %v1071 = vpack.c.b16 %v914, %v913
  %v1072 = vpack.c.b16 %v916, %v915
  %v1073 = vpack.c.b16 %v918, %v917
  %v1074 = vpack.c.b16 %v920, %v919
  %v1075 = vpack.c.b16 %v922, %v921
  %v1076 = vpack.c.b16 %v924, %v923
  %v1077 = vpack.c.b16 %v926, %v925
  %v1078 = vpack.c.b16 %v928, %v927
  %v1079 = vpack.c.b16 %v930, %v929
  %v1080 = vpack.c.b16 %v932, %v931
  %v1081 = vpack.c.b16 %v934, %v933
  %v1082 = vpack.c.b16 %v936, %v935
  %v1083 = vpack.c.b16 %v938, %v937
  %v1084 = vpack.c.b16 %v940, %v939
  %v1085 = vpack.c.b16 %v942, %v941
  %v1086 = vpack.c.b16 %v944, %v943
  %v1087 = vpack.c.b16 %v946, %v945
  %v1088 = vpack.c.b16 %v948, %v947
  %v1089 = vpack.c.b16 %v950, %v949
  %v1090 = vpack.c.b16 %v952, %v951
  %v1091 = vpack.c.b16 %v954, %v953
  %v1092 = vpack.c.b16 %v956, %v955
  %v1093 = vpack.c.b16 %v958, %v957
  %v1094 = vpack.c.b16 %v960, %v959
  %v1095 = vpack.c.b16 %v962, %v961
  %v1096 = vpack.c.b16 %v964, %v963
  %v1097 = vpack.c.b16 %v966, %v965
  %v1098 = vpack.c.b16 %v968, %v967
  %v1099 = vpack.c.b16 %v970, %v969
  %v1100 = vpack.c.b16 %v972, %v971
  %v1101 = vpack.c.b16 %v974, %v973
  %v1102 = vpack.c.b16 %v976, %v975
  %v1103 = vpack.c.b16 %v978, %v977
  %vm1229 = vcmask 654336
  %v1231 = vsel %vm1229, %v432, 0
  %v1234 = vsel %vm1229, %v448, 0
  %1236 = vmatpush.bf16.msra.mxu0 %v986
  %1237 = vmatpush.bf16.msra.mxu0 %v985
  %1238 = vmatpush.bf16.msra.mxu0 %v984
  %1239 = vmatpush.bf16.msra.mxu0 %v983
  %1240 = vmatpush.bf16.msra.mxu0 %v982
  %1241 = vmatpush.bf16.msra.mxu0 %v981
  %1242 = vmatpush.bf16.msra.mxu0 %v980
  %1243 = vmatpush.bf16.msra.mxu0 %v979
  %1244 = vmatmul.bf16.gmra.mxu0 %v417
  %v1245 = vpop.f32.mrf.mxu0
  %v1246 = vadd.f32 %v304, %v1245
  %v1247 = vpop.f32.mrf.mxu0
  %v1248 = vadd.f32 %v309, %v1247
  %1249 = vmatmul.bf16.gmra.mxu0 %v433
  %v1250 = vpop.f32.mrf.mxu0
  %v1251 = vadd.f32 %v314, %v1250
  %v1252 = vpop.f32.mrf.mxu0
  %v1253 = vadd.f32 %v319, %v1252
  %1254 = vdwg.mxu0
  %1255 = vmatpush.bf16.msra.mxu0 %v994
  %1256 = vmatpush.bf16.msra.mxu0 %v993
  %1257 = vmatpush.bf16.msra.mxu0 %v992
  %1258 = vmatpush.bf16.msra.mxu0 %v991
  %1259 = vmatpush.bf16.msra.mxu0 %v990
  %1260 = vmatpush.bf16.msra.mxu0 %v989
  %1261 = vmatpush.bf16.msra.mxu0 %v988
  %1262 = vmatpush.bf16.msra.mxu0 %v987
  %1263 = vmatmul.bf16.gmra.mxu0 %v418
  %v1264 = vpop.f32.mrf.mxu0
  %v1265 = vadd.f32 %v1246, %v1264
  %v1266 = vpop.f32.mrf.mxu0
  %v1267 = vadd.f32 %v1248, %v1266
  %1268 = vmatmul.bf16.gmra.mxu0 %v434
  %v1269 = vpop.f32.mrf.mxu0
  %v1270 = vadd.f32 %v1251, %v1269
  %v1271 = vpop.f32.mrf.mxu0
  %v1272 = vadd.f32 %v1253, %v1271
  %1273 = vdwg.mxu0
  %1274 = vmatpush.bf16.msra.mxu0 %v1002
  %1275 = vmatpush.bf16.msra.mxu0 %v1001
  %1276 = vmatpush.bf16.msra.mxu0 %v1000
  %1277 = vmatpush.bf16.msra.mxu0 %v999
  %1278 = vmatpush.bf16.msra.mxu0 %v998
  %1279 = vmatpush.bf16.msra.mxu0 %v997
  %1280 = vmatpush.bf16.msra.mxu0 %v996
  %1281 = vmatpush.bf16.msra.mxu0 %v995
  %1282 = vmatmul.bf16.gmra.mxu0 %v419
  %v1283 = vpop.f32.mrf.mxu0
  %v1284 = vadd.f32 %v1265, %v1283
  %v1285 = vpop.f32.mrf.mxu0
  %v1286 = vadd.f32 %v1267, %v1285
  %1287 = vmatmul.bf16.gmra.mxu0 %v435
  %v1288 = vpop.f32.mrf.mxu0
  %v1289 = vadd.f32 %v1270, %v1288
  %v1290 = vpop.f32.mrf.mxu0
  %v1291 = vadd.f32 %v1272, %v1290
  %1292 = vdwg.mxu0
  %1293 = vmatpush.bf16.msra.mxu0 %v1010
  %1294 = vmatpush.bf16.msra.mxu0 %v1009
  %1295 = vmatpush.bf16.msra.mxu0 %v1008
  %1296 = vmatpush.bf16.msra.mxu0 %v1007
  %1297 = vmatpush.bf16.msra.mxu0 %v1006
  %1298 = vmatpush.bf16.msra.mxu0 %v1005
  %1299 = vmatpush.bf16.msra.mxu0 %v1004
  %1300 = vmatpush.bf16.msra.mxu0 %v1003
  %1301 = vmatmul.bf16.gmra.mxu0 %v420
  %v1302 = vpop.f32.mrf.mxu0
  %v1303 = vadd.f32 %v1284, %v1302
  %v1304 = vpop.f32.mrf.mxu0
  %v1305 = vadd.f32 %v1286, %v1304
  %1306 = vmatmul.bf16.gmra.mxu0 %v436
  %v1307 = vpop.f32.mrf.mxu0
  %v1308 = vadd.f32 %v1289, %v1307
  %v1309 = vpop.f32.mrf.mxu0
  %v1310 = vadd.f32 %v1291, %v1309
  %1311 = vdwg.mxu0
  %1312 = vmatpush.bf16.msra.mxu0 %v1018
  %1313 = vmatpush.bf16.msra.mxu0 %v1017
  %1314 = vmatpush.bf16.msra.mxu0 %v1016
  %1315 = vmatpush.bf16.msra.mxu0 %v1015
  %1316 = vmatpush.bf16.msra.mxu0 %v1014
  %1317 = vmatpush.bf16.msra.mxu0 %v1013
  %1318 = vmatpush.bf16.msra.mxu0 %v1012
  %1319 = vmatpush.bf16.msra.mxu0 %v1011
  %1320 = vmatmul.bf16.gmra.mxu0 %v421
  %v1321 = vpop.f32.mrf.mxu0
  %v1322 = vadd.f32 %v1303, %v1321
  %v1323 = vpop.f32.mrf.mxu0
  %v1324 = vadd.f32 %v1305, %v1323
  %1325 = vmatmul.bf16.gmra.mxu0 %v437
  %v1326 = vpop.f32.mrf.mxu0
  %v1327 = vadd.f32 %v1308, %v1326
  %v1328 = vpop.f32.mrf.mxu0
  %v1329 = vadd.f32 %v1310, %v1328
  %1330 = vdwg.mxu0
  %1331 = vmatpush.bf16.msra.mxu0 %v1026
  %1332 = vmatpush.bf16.msra.mxu0 %v1025
  %1333 = vmatpush.bf16.msra.mxu0 %v1024
  %1334 = vmatpush.bf16.msra.mxu0 %v1023
  %1335 = vmatpush.bf16.msra.mxu0 %v1022
  %1336 = vmatpush.bf16.msra.mxu0 %v1021
  %1337 = vmatpush.bf16.msra.mxu0 %v1020
  %1338 = vmatpush.bf16.msra.mxu0 %v1019
  %1339 = vmatmul.bf16.gmra.mxu0 %v422
  %v1340 = vpop.f32.mrf.mxu0
  %v1341 = vadd.f32 %v1322, %v1340
  %v1342 = vpop.f32.mrf.mxu0
  %v1343 = vadd.f32 %v1324, %v1342
  %1344 = vmatmul.bf16.gmra.mxu0 %v438
  %v1345 = vpop.f32.mrf.mxu0
  %v1346 = vadd.f32 %v1327, %v1345
  %v1347 = vpop.f32.mrf.mxu0
  %v1348 = vadd.f32 %v1329, %v1347
  %1349 = vdwg.mxu0
  %1350 = vmatpush.bf16.msra.mxu0 %v1034
  %1351 = vmatpush.bf16.msra.mxu0 %v1033
  %1352 = vmatpush.bf16.msra.mxu0 %v1032
  %1353 = vmatpush.bf16.msra.mxu0 %v1031
  %1354 = vmatpush.bf16.msra.mxu0 %v1030
  %1355 = vmatpush.bf16.msra.mxu0 %v1029
  %1356 = vmatpush.bf16.msra.mxu0 %v1028
  %1357 = vmatpush.bf16.msra.mxu0 %v1027
  %1358 = vmatmul.bf16.gmra.mxu0 %v423
  %v1359 = vpop.f32.mrf.mxu0
  %v1360 = vadd.f32 %v1341, %v1359
  %v1361 = vpop.f32.mrf.mxu0
  %v1362 = vadd.f32 %v1343, %v1361
  %1363 = vmatmul.bf16.gmra.mxu0 %v439
  %v1364 = vpop.f32.mrf.mxu0
  %v1365 = vadd.f32 %v1346, %v1364
  %v1366 = vpop.f32.mrf.mxu0
  %v1367 = vadd.f32 %v1348, %v1366
  %1368 = vdwg.mxu0
  %1369 = vmatpush.bf16.msra.mxu0 %v1042
  %1370 = vmatpush.bf16.msra.mxu0 %v1041
  %1371 = vmatpush.bf16.msra.mxu0 %v1040
  %1372 = vmatpush.bf16.msra.mxu0 %v1039
  %1373 = vmatpush.bf16.msra.mxu0 %v1038
  %1374 = vmatpush.bf16.msra.mxu0 %v1037
  %1375 = vmatpush.bf16.msra.mxu0 %v1036
  %1376 = vmatpush.bf16.msra.mxu0 %v1035
  %1377 = vmatmul.bf16.gmra.mxu0 %v424
  %v1378 = vpop.f32.mrf.mxu0
  %v1379 = vadd.f32 %v1360, %v1378
  %v1380 = vpop.f32.mrf.mxu0
  %v1381 = vadd.f32 %v1362, %v1380
  %1382 = vmatmul.bf16.gmra.mxu0 %v440
  %v1383 = vpop.f32.mrf.mxu0
  %v1384 = vadd.f32 %v1365, %v1383
  %v1385 = vpop.f32.mrf.mxu0
  %v1386 = vadd.f32 %v1367, %v1385
  %1387 = vdwg.mxu0
  %1388 = vmatpush.bf16.msra.mxu0 %v1050
  %1389 = vmatpush.bf16.msra.mxu0 %v1049
  %1390 = vmatpush.bf16.msra.mxu0 %v1048
  %1391 = vmatpush.bf16.msra.mxu0 %v1047
  %1392 = vmatpush.bf16.msra.mxu0 %v1046
  %1393 = vmatpush.bf16.msra.mxu0 %v1045
  %1394 = vmatpush.bf16.msra.mxu0 %v1044
  %1395 = vmatpush.bf16.msra.mxu0 %v1043
  %1396 = vmatmul.bf16.gmra.mxu0 %v425
  %v1397 = vpop.f32.mrf.mxu0
  %v1398 = vadd.f32 %v1379, %v1397
  %v1399 = vpop.f32.mrf.mxu0
  %v1400 = vadd.f32 %v1381, %v1399
  %1401 = vmatmul.bf16.gmra.mxu0 %v441
  %v1402 = vpop.f32.mrf.mxu0
  %v1403 = vadd.f32 %v1384, %v1402
  %v1404 = vpop.f32.mrf.mxu0
  %v1405 = vadd.f32 %v1386, %v1404
  %1406 = vdwg.mxu0
  %1407 = vmatpush.bf16.msra.mxu0 %v1058
  %1408 = vmatpush.bf16.msra.mxu0 %v1057
  %1409 = vmatpush.bf16.msra.mxu0 %v1056
  %1410 = vmatpush.bf16.msra.mxu0 %v1055
  %1411 = vmatpush.bf16.msra.mxu0 %v1054
  %1412 = vmatpush.bf16.msra.mxu0 %v1053
  %1413 = vmatpush.bf16.msra.mxu0 %v1052
  %1414 = vmatpush.bf16.msra.mxu0 %v1051
  %1415 = vmatmul.bf16.gmra.mxu0 %v426
  %v1416 = vpop.f32.mrf.mxu0
  %v1417 = vadd.f32 %v1398, %v1416
  %v1418 = vpop.f32.mrf.mxu0
  %v1419 = vadd.f32 %v1400, %v1418
  %1420 = vmatmul.bf16.gmra.mxu0 %v442
  %v1421 = vpop.f32.mrf.mxu0
  %v1422 = vadd.f32 %v1403, %v1421
  %v1423 = vpop.f32.mrf.mxu0
  %v1424 = vadd.f32 %v1405, %v1423
  %1425 = vdwg.mxu0
  %1426 = vmatpush.bf16.msra.mxu0 %v1066
  %1427 = vmatpush.bf16.msra.mxu0 %v1065
  %1428 = vmatpush.bf16.msra.mxu0 %v1064
  %1429 = vmatpush.bf16.msra.mxu0 %v1063
  %1430 = vmatpush.bf16.msra.mxu0 %v1062
  %1431 = vmatpush.bf16.msra.mxu0 %v1061
  %1432 = vmatpush.bf16.msra.mxu0 %v1060
  %1433 = vmatpush.bf16.msra.mxu0 %v1059
  %1434 = vmatmul.bf16.gmra.mxu0 %v427
  %v1435 = vpop.f32.mrf.mxu0
  %v1436 = vadd.f32 %v1417, %v1435
  %v1437 = vpop.f32.mrf.mxu0
  %v1438 = vadd.f32 %v1419, %v1437
  %1439 = vmatmul.bf16.gmra.mxu0 %v443
  %v1440 = vpop.f32.mrf.mxu0
  %v1441 = vadd.f32 %v1422, %v1440
  %v1442 = vpop.f32.mrf.mxu0
  %v1443 = vadd.f32 %v1424, %v1442
  %1444 = vdwg.mxu0
  %1445 = vmatpush.bf16.msra.mxu0 %v1074
  %1446 = vmatpush.bf16.msra.mxu0 %v1073
  %1447 = vmatpush.bf16.msra.mxu0 %v1072
  %1448 = vmatpush.bf16.msra.mxu0 %v1071
  %1449 = vmatpush.bf16.msra.mxu0 %v1070
  %1450 = vmatpush.bf16.msra.mxu0 %v1069
  %1451 = vmatpush.bf16.msra.mxu0 %v1068
  %1452 = vmatpush.bf16.msra.mxu0 %v1067
  %1453 = vmatmul.bf16.gmra.mxu0 %v428
  %v1454 = vpop.f32.mrf.mxu0
  %v1455 = vadd.f32 %v1436, %v1454
  %v1456 = vpop.f32.mrf.mxu0
  %v1457 = vadd.f32 %v1438, %v1456
  %1458 = vmatmul.bf16.gmra.mxu0 %v444
  %v1459 = vpop.f32.mrf.mxu0
  %v1460 = vadd.f32 %v1441, %v1459
  %v1461 = vpop.f32.mrf.mxu0
  %v1462 = vadd.f32 %v1443, %v1461
  %1463 = vdwg.mxu0
  %1464 = vmatpush.bf16.msra.mxu0 %v1082
  %1465 = vmatpush.bf16.msra.mxu0 %v1081
  %1466 = vmatpush.bf16.msra.mxu0 %v1080
  %1467 = vmatpush.bf16.msra.mxu0 %v1079
  %1468 = vmatpush.bf16.msra.mxu0 %v1078
  %1469 = vmatpush.bf16.msra.mxu0 %v1077
  %1470 = vmatpush.bf16.msra.mxu0 %v1076
  %1471 = vmatpush.bf16.msra.mxu0 %v1075
  %1472 = vmatmul.bf16.gmra.mxu0 %v429
  %v1473 = vpop.f32.mrf.mxu0
  %v1474 = vadd.f32 %v1455, %v1473
  %v1475 = vpop.f32.mrf.mxu0
  %v1476 = vadd.f32 %v1457, %v1475
  %1477 = vmatmul.bf16.gmra.mxu0 %v445
  %v1478 = vpop.f32.mrf.mxu0
  %v1479 = vadd.f32 %v1460, %v1478
  %v1480 = vpop.f32.mrf.mxu0
  %v1481 = vadd.f32 %v1462, %v1480
  %1482 = vdwg.mxu0
  %1483 = vmatpush.bf16.msra.mxu0 %v1090
  %1484 = vmatpush.bf16.msra.mxu0 %v1089
  %1485 = vmatpush.bf16.msra.mxu0 %v1088
  %1486 = vmatpush.bf16.msra.mxu0 %v1087
  %1487 = vmatpush.bf16.msra.mxu0 %v1086
  %1488 = vmatpush.bf16.msra.mxu0 %v1085
  %1489 = vmatpush.bf16.msra.mxu0 %v1084
  %1490 = vmatpush.bf16.msra.mxu0 %v1083
  %1491 = vmatmul.bf16.gmra.mxu0 %v430
  %v1492 = vpop.f32.mrf.mxu0
  %v1493 = vadd.f32 %v1474, %v1492
  %v1494 = vpop.f32.mrf.mxu0
  %v1495 = vadd.f32 %v1476, %v1494
  %1496 = vmatmul.bf16.gmra.mxu0 %v446
  %v1497 = vpop.f32.mrf.mxu0
  %v1498 = vadd.f32 %v1479, %v1497
  %v1499 = vpop.f32.mrf.mxu0
  %v1500 = vadd.f32 %v1481, %v1499
  %1501 = vdwg.mxu0
  %1502 = vmatpush.bf16.msra.mxu0 %v1098
  %1503 = vmatpush.bf16.msra.mxu0 %v1097
  %1504 = vmatpush.bf16.msra.mxu0 %v1096
  %1505 = vmatpush.bf16.msra.mxu0 %v1095
  %1506 = vmatpush.bf16.msra.mxu0 %v1094
  %1507 = vmatpush.bf16.msra.mxu0 %v1093
  %1508 = vmatpush.bf16.msra.mxu0 %v1092
  %1509 = vmatpush.bf16.msra.mxu0 %v1091
  %1510 = vmatmul.bf16.gmra.mxu0 %v431
  %v1511 = vpop.f32.mrf.mxu0
  %v1512 = vadd.f32 %v1493, %v1511
  %v1513 = vpop.f32.mrf.mxu0
  %v1514 = vadd.f32 %v1495, %v1513
  %1515 = vmatmul.bf16.gmra.mxu0 %v447
  %v1516 = vpop.f32.mrf.mxu0
  %v1517 = vadd.f32 %v1498, %v1516
  %v1518 = vpop.f32.mrf.mxu0
  %v1519 = vadd.f32 %v1500, %v1518
  %1520 = vdwg.mxu0
  %1521 = vmatpush.bf16.msra.mxu0 0
  %1522 = vmatpush.bf16.msra.mxu0 0
  %1523 = vmatpush.bf16.msra.mxu0 0
  %1524 = vmatpush.bf16.msra.mxu0 %v1103
  %1525 = vmatpush.bf16.msra.mxu0 %v1102
  %1526 = vmatpush.bf16.msra.mxu0 %v1101
  %1527 = vmatpush.bf16.msra.mxu0 %v1100
  %1528 = vmatpush.bf16.msra.mxu0 %v1099
  %1529 = vmatmul.bf16.gmra.mxu0 %v1231
  %v1530 = vpop.f32.mrf.mxu0
  %v1531 = vadd.f32 %v1512, %v1530
  %v1532 = vpop.f32.mrf.mxu0
  %v1533 = vadd.f32 %v1514, %v1532
  %1534 = vmatmul.bf16.gmra.mxu0 %v1234
  %v1535 = vpop.f32.mrf.mxu0
  %v1536 = vadd.f32 %v1517, %v1535
  %v1537 = vpop.f32.mrf.mxu0
  %v1538 = vadd.f32 %v1519, %v1537
  %1539 = vdwg.mxu0
  %v1540 = vtanh.pop %v1531
  %v1541 = vtanh.pop %v1533
  %v1542 = vtanh.pop %v1536
  %v1543 = vtanh.pop %v1538
  %v1544 = vpack.c.bf16 %v1540, %v1540
  %v1545 = vpack.c.bf16 %v1541, %v1541
  %v1546 = vpack.c.bf16 %v1542, %v1542
  %v1547 = vpack.c.bf16 %v1543, %v1543
  %1548 = vst [vmem:[%s3] sm:$0xf] %v1544
  %1549 = vst [vmem:[%s3 + $0x4] sm:$0xf] %v1545
  %1550 = vst [vmem:[%s3 + $0x8] sm:$0xf] %v1546
  %1551 = vst [vmem:[%s3 + $0xc] sm:$0xf] %v1547
  // Predicated region
  $region14: #{fmri_cnn_forward.4} parent=0 // pred_check
    _
  $region15: #{fmri_cnn_forward.4} parent=0 // pred_check_branch
    %1553 = sbr.rel (0) target = $region17
  $region16: #{fmri_cnn_forward.4} parent=0 // pred_region
    _
  $region17: #{fmri_cnn_forward.4} parent=0 // pred_fallthru
    _
  // Predicated region
  $region18: #{fmri_cnn_forward.4} parent=0 // pred_check
    _
  $region19: #{fmri_cnn_forward.4} parent=0 // pred_check_branch
    %1555 = sbr.rel (0) target = $region21
  $region20: #{fmri_cnn_forward.4} parent=0 // pred_region
    _
  $region21: #{fmri_cnn_forward.4} parent=0 // pred_fallthru
    _

// kernel: fmri_cnn_forward.5
$region0: #{fmri_cnn_forward.5}
  #allocation0 [shape = 'u32[]', space=smem, size = 0x4, offset = 0x4, fixed_abs, tag = 'smem constant byte address 0x4 - core index']
  #allocation1 [shape = 'u32[72,128]{1,0:T(1,128)}', space=vmem, size = 0x9000, scoped, tag = 'internal scratch']
  %s0 = inlined_call_operand.vmem [shape: bf16[64,864], index: 0, kind: input, shape index: {}]
  %s1 = inlined_call_operand.vmem [shape: bf16[864,128], index: 1, kind: input, shape index: {}]
  %s2 = inlined_call_operand.vmem [shape: f32[64,1], index: 2, kind: input, shape index: {}]
  %s3 = inlined_call_operand.vmem [shape: f32[10,64], index: 3, kind: input, shape index: {}]
  %s4 = inlined_call_operand.vmem [shape: f32[10,1], index: 4, kind: input, shape index: {}]
  %s5 = inlined_call_operand.vmem [shape: f32[10,128], index: 5, kind: output, shape index: {}]
  %s6 = sld [smem:[#allocation0]]
  $region30: #{fmri_cnn_forward.5} parent=0
    _
  %s8 = ssub.s32 1, %s6
  %s9 = scalar_select 0, %s8, %s6
  // Predicated region
  $region2: #{fmri_cnn_forward.5} parent=0 // pred_check
    _
  $region3: #{fmri_cnn_forward.5} parent=0 // pred_check_branch
    %11 = sbr.rel (0) target = $region5
  $region4: #{fmri_cnn_forward.5} parent=0 // pred_region
    _
  $region5: #{fmri_cnn_forward.5} parent=0 // pred_fallthru
    _
  // Predicated region
  $region6: #{fmri_cnn_forward.5} parent=0 // pred_check
    _
  $region7: #{fmri_cnn_forward.5} parent=0 // pred_check_branch
    %13 = sbr.rel (0) target = $region9
  $region8: #{fmri_cnn_forward.5} parent=0 // pred_region
    _
  $region9: #{fmri_cnn_forward.5} parent=0 // pred_fallthru
    _
  // Predicated region
  $region10: #{fmri_cnn_forward.5} parent=0 // pred_check
    _
  $region11: #{fmri_cnn_forward.5} parent=0 // pred_check_branch
    %15 = sbr.rel (0) target = $region13
  $region12: #{fmri_cnn_forward.5} parent=0 // pred_region
    _
  $region13: #{fmri_cnn_forward.5} parent=0 // pred_fallthru
    _
  // Predicated region
  $region14: #{fmri_cnn_forward.5} parent=0 // pred_check
    _
  $region15: #{fmri_cnn_forward.5} parent=0 // pred_check_branch
    %17 = sbr.rel (0) target = $region17
  $region16: #{fmri_cnn_forward.5} parent=0 // pred_region
    _
  $region17: #{fmri_cnn_forward.5} parent=0 // pred_fallthru
    _
  // Predicated region
  $region18: #{fmri_cnn_forward.5} parent=0 // pred_check
    _
  $region19: #{fmri_cnn_forward.5} parent=0 // pred_check_branch
    %19 = sbr.rel (0) target = $region21
  $region20: #{fmri_cnn_forward.5} parent=0 // pred_region
    _
  $region21: #{fmri_cnn_forward.5} parent=0 // pred_fallthru
    _
  %v21 = vld [vmem:[%s0] sm:$0xff]
  %v22 = vld [vmem:[%s0 + $0x8] sm:$0xff]
  %v23 = vld [vmem:[%s0 + $0x10] sm:$0xff]
  %v24 = vld [vmem:[%s0 + $0x18] sm:$0xf]
  %v25 = vld [vmem:[%s0 + $0x1c] sm:$0xff]
  %v26 = vld [vmem:[%s0 + $0x24] sm:$0xff]
  %v27 = vld [vmem:[%s0 + $0x2c] sm:$0xff]
  %v28 = vld [vmem:[%s0 + $0x34] sm:$0xf]
  %v29 = vld [vmem:[%s0 + $0x38] sm:$0xff]
  %v30 = vld [vmem:[%s0 + $0x40] sm:$0xff]
  %v31 = vld [vmem:[%s0 + $0x48] sm:$0xff]
  %v32 = vld [vmem:[%s0 + $0x50] sm:$0xf]
  %v33 = vld [vmem:[%s0 + $0x54] sm:$0xff]
  %v34 = vld [vmem:[%s0 + $0x5c] sm:$0xff]
  %v35 = vld [vmem:[%s0 + $0x64] sm:$0xff]
  %v36 = vld [vmem:[%s0 + $0x6c] sm:$0xf]
  %v37 = vld [vmem:[%s0 + $0x70] sm:$0xff]
  %v38 = vld [vmem:[%s0 + $0x78] sm:$0xff]
  %v39 = vld [vmem:[%s0 + $0x80] sm:$0xff]
  %v40 = vld [vmem:[%s0 + $0x88] sm:$0xf]
  %v41 = vld [vmem:[%s0 + $0x8c] sm:$0xff]
  %v42 = vld [vmem:[%s0 + $0x94] sm:$0xff]
  %v43 = vld [vmem:[%s0 + $0x9c] sm:$0xff]
  %v44 = vld [vmem:[%s0 + $0xa4] sm:$0xf]
  %v45 = vld [vmem:[%s0 + $0xa8] sm:$0xff]
  %v46 = vld [vmem:[%s0 + $0xb0] sm:$0xff]
  %v47 = vld [vmem:[%s0 + $0xb8] sm:$0xff]
  %v48 = vld [vmem:[%s0 + $0xc0] sm:$0xf]
  %v49 = vld [vmem:[%s0 + $0xc4] sm:$0xff]
  %v50 = vld [vmem:[%s0 + $0xcc] sm:$0xff]
  %v51 = vld [vmem:[%s0 + $0xd4] sm:$0xff]
  %v52 = vld [vmem:[%s0 + $0xdc] sm:$0xf]
  %v53 = vld [vmem:[%s1] sm:$0xf]
  %v54 = vld [vmem:[%s1 + $0x4] sm:$0xf]
  %v55 = vld [vmem:[%s1 + $0x8] sm:$0xf]
  %v56 = vld [vmem:[%s1 + $0xc] sm:$0xf]
  %v57 = vld [vmem:[%s1 + $0x10] sm:$0xf]
  %v58 = vld [vmem:[%s1 + $0x14] sm:$0xf]
  %v59 = vld [vmem:[%s1 + $0x18] sm:$0xf]
  %v60 = vld [vmem:[%s1 + $0x1c] sm:$0xf]
  %v61 = vld [vmem:[%s1 + $0x20] sm:$0xf]
  %v62 = vld [vmem:[%s1 + $0x24] sm:$0xf]
  %v63 = vld [vmem:[%s1 + $0x28] sm:$0xf]
  %v64 = vld [vmem:[%s1 + $0x2c] sm:$0xf]
  %v65 = vld [vmem:[%s1 + $0x30] sm:$0xf]
  %v66 = vld [vmem:[%s1 + $0x34] sm:$0xf]
  %v67 = vld [vmem:[%s1 + $0x38] sm:$0xf]
  %v68 = vld [vmem:[%s1 + $0x3c] sm:$0xf]
  %v69 = vld [vmem:[%s1 + $0x40] sm:$0xf]
  %v70 = vld [vmem:[%s1 + $0x44] sm:$0xf]
  %v71 = vld [vmem:[%s1 + $0x48] sm:$0xf]
  %v72 = vld [vmem:[%s1 + $0x4c] sm:$0xf]
  %v73 = vld [vmem:[%s1 + $0x50] sm:$0xf]
  %v74 = vld [vmem:[%s1 + $0x54] sm:$0xf]
  %v75 = vld [vmem:[%s1 + $0x58] sm:$0xf]
  %v76 = vld [vmem:[%s1 + $0x5c] sm:$0xf]
  %v77 = vld [vmem:[%s1 + $0x60] sm:$0xf]
  %v78 = vld [vmem:[%s1 + $0x64] sm:$0xf]
  %v79 = vld [vmem:[%s1 + $0x68] sm:$0xf]
  %v80 = vld [vmem:[%s1 + $0x6c] sm:$0xf]
  %v81 = vld [vmem:[%s1 + $0x70] sm:$0xf]
  %v82 = vld [vmem:[%s1 + $0x74] sm:$0xf]
  %v83 = vld [vmem:[%s1 + $0x78] sm:$0xf]
  %v84 = vld [vmem:[%s1 + $0x7c] sm:$0xf]
  %v85 = vld [vmem:[%s1 + $0x80] sm:$0xf]
  %v86 = vld [vmem:[%s1 + $0x84] sm:$0xf]
  %v87 = vld [vmem:[%s1 + $0x88] sm:$0xf]
  %v88 = vld [vmem:[%s1 + $0x8c] sm:$0xf]
  %v89 = vld [vmem:[%s1 + $0x90] sm:$0xf]
  %v90 = vld [vmem:[%s1 + $0x94] sm:$0xf]
  %v91 = vld [vmem:[%s1 + $0x98] sm:$0xf]
  %v92 = vld [vmem:[%s1 + $0x9c] sm:$0xf]
  %v93 = vld [vmem:[%s1 + $0xa0] sm:$0xf]
  %v94 = vld [vmem:[%s1 + $0xa4] sm:$0xf]
  %v95 = vld [vmem:[%s1 + $0xa8] sm:$0xf]
  %v96 = vld [vmem:[%s1 + $0xac] sm:$0xf]
  %v97 = vld [vmem:[%s1 + $0xb0] sm:$0xf]
  %v98 = vld [vmem:[%s1 + $0xb4] sm:$0xf]
  %v99 = vld [vmem:[%s1 + $0xb8] sm:$0xf]
  %v100 = vld [vmem:[%s1 + $0xbc] sm:$0xf]
  %v101 = vld [vmem:[%s1 + $0xc0] sm:$0xf]
  %v102 = vld [vmem:[%s1 + $0xc4] sm:$0xf]
  %v103 = vld [vmem:[%s1 + $0xc8] sm:$0xf]
  %v104 = vld [vmem:[%s1 + $0xcc] sm:$0xf]
  %v105 = vld [vmem:[%s1 + $0xd0] sm:$0xf]
  %v106 = vld [vmem:[%s1 + $0xd4] sm:$0xf]
  %v107 = vld [vmem:[%s1 + $0xd8] sm:$0xf]
  %v108 = vld [vmem:[%s1 + $0xdc] sm:$0xf]
  %v109 = vld [vmem:[%s1 + $0xe0] sm:$0xf]
  %v110 = vld [vmem:[%s1 + $0xe4] sm:$0xf]
  %v111 = vld [vmem:[%s1 + $0xe8] sm:$0xf]
  %v112 = vld [vmem:[%s1 + $0xec] sm:$0xf]
  %v113 = vld [vmem:[%s1 + $0xf0] sm:$0xf]
  %v114 = vld [vmem:[%s1 + $0xf4] sm:$0xf]
  %v115 = vld [vmem:[%s1 + $0xf8] sm:$0xf]
  %v116 = vld [vmem:[%s1 + $0xfc] sm:$0xf]
  %v117 = vld [vmem:[%s1 + $0x100] sm:$0xf]
  %v118 = vld [vmem:[%s1 + $0x104] sm:$0xf]
  %v119 = vld [vmem:[%s1 + $0x108] sm:$0xf]
  %v120 = vld [vmem:[%s1 + $0x10c] sm:$0xf]
  %v121 = vld [vmem:[%s1 + $0x110] sm:$0xf]
  %v122 = vld [vmem:[%s1 + $0x114] sm:$0xf]
  %v123 = vld [vmem:[%s1 + $0x118] sm:$0xf]
  %v124 = vld [vmem:[%s1 + $0x11c] sm:$0xf]
  %v125 = vld [vmem:[%s1 + $0x120] sm:$0xf]
  %v126 = vld [vmem:[%s1 + $0x124] sm:$0xf]
  %v127 = vld [vmem:[%s1 + $0x128] sm:$0xf]
  %v128 = vld [vmem:[%s1 + $0x12c] sm:$0xf]
  %v129 = vld [vmem:[%s1 + $0x130] sm:$0xf]
  %v130 = vld [vmem:[%s1 + $0x134] sm:$0xf]
  %v131 = vld [vmem:[%s1 + $0x138] sm:$0xf]
  %v132 = vld [vmem:[%s1 + $0x13c] sm:$0xf]
  %v133 = vld [vmem:[%s1 + $0x140] sm:$0xf]
  %v134 = vld [vmem:[%s1 + $0x144] sm:$0xf]
  %v135 = vld [vmem:[%s1 + $0x148] sm:$0xf]
  %v136 = vld [vmem:[%s1 + $0x14c] sm:$0xf]
  %v137 = vld [vmem:[%s1 + $0x150] sm:$0xf]
  %v138 = vld [vmem:[%s1 + $0x154] sm:$0xf]
  %v139 = vld [vmem:[%s1 + $0x158] sm:$0xf]
  %v140 = vld [vmem:[%s1 + $0x15c] sm:$0xf]
  %v141 = vld [vmem:[%s1 + $0x160] sm:$0xf]
  %v142 = vld [vmem:[%s1 + $0x164] sm:$0xf]
  %v143 = vld [vmem:[%s1 + $0x168] sm:$0xf]
  %v144 = vld [vmem:[%s1 + $0x16c] sm:$0xf]
  %v145 = vld [vmem:[%s1 + $0x170] sm:$0xf]
  %v146 = vld [vmem:[%s1 + $0x174] sm:$0xf]
  %v147 = vld [vmem:[%s1 + $0x178] sm:$0xf]
  %v148 = vld [vmem:[%s1 + $0x17c] sm:$0xf]
  %v149 = vld [vmem:[%s1 + $0x180] sm:$0xf]
  %v150 = vld [vmem:[%s1 + $0x184] sm:$0xf]
  %v151 = vld [vmem:[%s1 + $0x188] sm:$0xf]
  %v152 = vld [vmem:[%s1 + $0x18c] sm:$0xf]
  %v153 = vld [vmem:[%s1 + $0x190] sm:$0xf]
  %v154 = vld [vmem:[%s1 + $0x194] sm:$0xf]
  %v155 = vld [vmem:[%s1 + $0x198] sm:$0xf]
  %v156 = vld [vmem:[%s1 + $0x19c] sm:$0xf]
  %v157 = vld [vmem:[%s1 + $0x1a0] sm:$0xf]
  %v158 = vld [vmem:[%s1 + $0x1a4] sm:$0xf]
  %v159 = vld [vmem:[%s1 + $0x1a8] sm:$0xf]
  %v160 = vld [vmem:[%s1 + $0x1ac] sm:$0xf]
  %v161 = vld [vmem:[%s2] sm:$0xff]
  %v162 = vld [vmem:[%s2 + $0x8] sm:$0xff]
  %v163 = vld [vmem:[%s2 + $0x10] sm:$0xff]
  %v164 = vld [vmem:[%s2 + $0x18] sm:$0xff]
  %v165 = vld [vmem:[%s2 + $0x20] sm:$0xff]
  %v166 = vld [vmem:[%s2 + $0x28] sm:$0xff]
  %v167 = vld [vmem:[%s2 + $0x30] sm:$0xff]
  %v168 = vld [vmem:[%s2 + $0x38] sm:$0xff]
  %170 = vset.pattern.permute.xlu0 0
  %171 = vperm.xlu0 %170, %v161
  %v172 = vpop.permute.xlu0 %171
  %175 = vset.pattern.permute.xlu0 0
  %176 = vperm.xlu0 %175, %v162
  %v177 = vpop.permute.xlu0 %176
  %180 = vset.pattern.permute.xlu0 0
  %181 = vperm.xlu0 %180, %v163
  %v182 = vpop.permute.xlu0 %181
  %185 = vset.pattern.permute.xlu0 0
  %186 = vperm.xlu0 %185, %v164
  %v187 = vpop.permute.xlu0 %186
  %190 = vset.pattern.permute.xlu0 0
  %191 = vperm.xlu0 %190, %v165
  %v192 = vpop.permute.xlu0 %191
  %195 = vset.pattern.permute.xlu0 0
  %196 = vperm.xlu0 %195, %v166
  %v197 = vpop.permute.xlu0 %196
  %200 = vset.pattern.permute.xlu0 0
  %201 = vperm.xlu0 %200, %v167
  %v202 = vpop.permute.xlu0 %201
  %205 = vset.pattern.permute.xlu0 0
  %206 = vperm.xlu0 %205, %v168
  %v207 = vpop.permute.xlu0 %206
  %v241 = vunpack.c.l.b16 %v21
  %v242 = vunpack.c.h.b16 %v21
  %v243 = vunpack.c.l.b16 %v22
  %v244 = vunpack.c.h.b16 %v22
  %v245 = vunpack.c.l.b16 %v23
  %v246 = vunpack.c.h.b16 %v23
  %v247 = vunpack.c.l.b16 %v24
  %v248 = vunpack.c.l.b16 %v25
  %v249 = vunpack.c.h.b16 %v25
  %v250 = vunpack.c.l.b16 %v26
  %v251 = vunpack.c.h.b16 %v26
  %v252 = vunpack.c.l.b16 %v27
  %v253 = vunpack.c.h.b16 %v27
  %v254 = vunpack.c.l.b16 %v28
  %v255 = vunpack.c.l.b16 %v29
  %v256 = vunpack.c.h.b16 %v29
  %v257 = vunpack.c.l.b16 %v30
  %v258 = vunpack.c.h.b16 %v30
  %v259 = vunpack.c.l.b16 %v31
  %v260 = vunpack.c.h.b16 %v31
  %v261 = vunpack.c.l.b16 %v32
  %v262 = vunpack.c.l.b16 %v33
  %v263 = vunpack.c.h.b16 %v33
  %v264 = vunpack.c.l.b16 %v34
  %v265 = vunpack.c.h.b16 %v34
  %v266 = vunpack.c.l.b16 %v35
  %v267 = vunpack.c.h.b16 %v35
  %v268 = vunpack.c.l.b16 %v36
  %v269 = vunpack.c.l.b16 %v37
  %v270 = vunpack.c.h.b16 %v37
  %v271 = vunpack.c.l.b16 %v38
  %v272 = vunpack.c.h.b16 %v38
  %v273 = vunpack.c.l.b16 %v39
  %v274 = vunpack.c.h.b16 %v39
  %v275 = vunpack.c.l.b16 %v40
  %v276 = vunpack.c.l.b16 %v41
  %v277 = vunpack.c.h.b16 %v41
  %v278 = vunpack.c.l.b16 %v42
  %v279 = vunpack.c.h.b16 %v42
  %v280 = vunpack.c.l.b16 %v43
  %v281 = vunpack.c.h.b16 %v43
  %v282 = vunpack.c.l.b16 %v44
  %v283 = vunpack.c.l.b16 %v45
  %v284 = vunpack.c.h.b16 %v45
  %v285 = vunpack.c.l.b16 %v46
  %v286 = vunpack.c.h.b16 %v46
  %v287 = vunpack.c.l.b16 %v47
  %v288 = vunpack.c.h.b16 %v47
  %v289 = vunpack.c.l.b16 %v48
  %v290 = vunpack.c.l.b16 %v49
  %v291 = vunpack.c.h.b16 %v49
  %v292 = vunpack.c.l.b16 %v50
  %v293 = vunpack.c.h.b16 %v50
  %v294 = vunpack.c.l.b16 %v51
  %v295 = vunpack.c.h.b16 %v51
  %v296 = vunpack.c.l.b16 %v52
  %v297 = vpack.c.b16 %v248, %v241
  %v298 = vpack.c.b16 %v249, %v242
  %v299 = vpack.c.b16 %v250, %v243
  %v300 = vpack.c.b16 %v251, %v244
  %v301 = vpack.c.b16 %v252, %v245
  %v302 = vpack.c.b16 %v253, %v246
  %v303 = vpack.c.b16 %v254, %v247
  %v304 = vpack.c.b16 %v262, %v255
  %v305 = vpack.c.b16 %v263, %v256
  %v306 = vpack.c.b16 %v264, %v257
  %v307 = vpack.c.b16 %v265, %v258
  %v308 = vpack.c.b16 %v266, %v259
  %v309 = vpack.c.b16 %v267, %v260
  %v310 = vpack.c.b16 %v268, %v261
  %v311 = vpack.c.b16 %v276, %v269
  %v312 = vpack.c.b16 %v277, %v270
  %v313 = vpack.c.b16 %v278, %v271
  %v314 = vpack.c.b16 %v279, %v272
  %v315 = vpack.c.b16 %v280, %v273
  %v316 = vpack.c.b16 %v281, %v274
  %v317 = vpack.c.b16 %v282, %v275
  %v318 = vpack.c.b16 %v290, %v283
  %v319 = vpack.c.b16 %v291, %v284
  %v320 = vpack.c.b16 %v292, %v285
  %v321 = vpack.c.b16 %v293, %v286
  %v322 = vpack.c.b16 %v294, %v287
  %v323 = vpack.c.b16 %v295, %v288
  %v324 = vpack.c.b16 %v296, %v289
  %v457 = vunpack.c.l.b16 %v53
  %v458 = vunpack.c.l.b16 %v54
  %v459 = vunpack.c.l.b16 %v55
  %v460 = vunpack.c.l.b16 %v56
  %v461 = vunpack.c.l.b16 %v57
  %v462 = vunpack.c.l.b16 %v58
  %v463 = vunpack.c.l.b16 %v59
  %v464 = vunpack.c.l.b16 %v60
  %v465 = vunpack.c.l.b16 %v61
  %v466 = vunpack.c.l.b16 %v62
  %v467 = vunpack.c.l.b16 %v63
  %v468 = vunpack.c.l.b16 %v64
  %v469 = vunpack.c.l.b16 %v65
  %v470 = vunpack.c.l.b16 %v66
  %v471 = vunpack.c.l.b16 %v67
  %v472 = vunpack.c.l.b16 %v68
  %v473 = vunpack.c.l.b16 %v69
  %v474 = vunpack.c.l.b16 %v70
  %v475 = vunpack.c.l.b16 %v71
  %v476 = vunpack.c.l.b16 %v72
  %v477 = vunpack.c.l.b16 %v73
  %v478 = vunpack.c.l.b16 %v74
  %v479 = vunpack.c.l.b16 %v75
  %v480 = vunpack.c.l.b16 %v76
  %v481 = vunpack.c.l.b16 %v77
  %v482 = vunpack.c.l.b16 %v78
  %v483 = vunpack.c.l.b16 %v79
  %v484 = vunpack.c.l.b16 %v80
  %v485 = vunpack.c.l.b16 %v81
  %v486 = vunpack.c.l.b16 %v82
  %v487 = vunpack.c.l.b16 %v83
  %v488 = vunpack.c.l.b16 %v84
  %v489 = vunpack.c.l.b16 %v85
  %v490 = vunpack.c.l.b16 %v86
  %v491 = vunpack.c.l.b16 %v87
  %v492 = vunpack.c.l.b16 %v88
  %v493 = vunpack.c.l.b16 %v89
  %v494 = vunpack.c.l.b16 %v90
  %v495 = vunpack.c.l.b16 %v91
  %v496 = vunpack.c.l.b16 %v92
  %v497 = vunpack.c.l.b16 %v93
  %v498 = vunpack.c.l.b16 %v94
  %v499 = vunpack.c.l.b16 %v95
  %v500 = vunpack.c.l.b16 %v96
  %v501 = vunpack.c.l.b16 %v97
  %v502 = vunpack.c.l.b16 %v98
  %v503 = vunpack.c.l.b16 %v99
  %v504 = vunpack.c.l.b16 %v100
  %v505 = vunpack.c.l.b16 %v101
  %v506 = vunpack.c.l.b16 %v102
  %v507 = vunpack.c.l.b16 %v103
  %v508 = vunpack.c.l.b16 %v104
  %v509 = vunpack.c.l.b16 %v105
  %v510 = vunpack.c.l.b16 %v106
  %v511 = vunpack.c.l.b16 %v107
  %v512 = vunpack.c.l.b16 %v108
  %v513 = vunpack.c.l.b16 %v109
  %v514 = vunpack.c.l.b16 %v110
  %v515 = vunpack.c.l.b16 %v111
  %v516 = vunpack.c.l.b16 %v112
  %v517 = vunpack.c.l.b16 %v113
  %v518 = vunpack.c.l.b16 %v114
  %v519 = vunpack.c.l.b16 %v115
  %v520 = vunpack.c.l.b16 %v116
  %v521 = vunpack.c.l.b16 %v117
  %v522 = vunpack.c.l.b16 %v118
  %v523 = vunpack.c.l.b16 %v119
  %v524 = vunpack.c.l.b16 %v120
  %v525 = vunpack.c.l.b16 %v121
  %v526 = vunpack.c.l.b16 %v122
  %v527 = vunpack.c.l.b16 %v123
  %v528 = vunpack.c.l.b16 %v124
  %v529 = vunpack.c.l.b16 %v125
  %v530 = vunpack.c.l.b16 %v126
  %v531 = vunpack.c.l.b16 %v127
  %v532 = vunpack.c.l.b16 %v128
  %v533 = vunpack.c.l.b16 %v129
  %v534 = vunpack.c.l.b16 %v130
  %v535 = vunpack.c.l.b16 %v131
  %v536 = vunpack.c.l.b16 %v132
  %v537 = vunpack.c.l.b16 %v133
  %v538 = vunpack.c.l.b16 %v134
  %v539 = vunpack.c.l.b16 %v135
  %v540 = vunpack.c.l.b16 %v136
  %v541 = vunpack.c.l.b16 %v137
  %v542 = vunpack.c.l.b16 %v138
  %v543 = vunpack.c.l.b16 %v139
  %v544 = vunpack.c.l.b16 %v140
  %v545 = vunpack.c.l.b16 %v141
  %v546 = vunpack.c.l.b16 %v142
  %v547 = vunpack.c.l.b16 %v143
  %v548 = vunpack.c.l.b16 %v144
  %v549 = vunpack.c.l.b16 %v145
  %v550 = vunpack.c.l.b16 %v146
  %v551 = vunpack.c.l.b16 %v147
  %v552 = vunpack.c.l.b16 %v148
  %v553 = vunpack.c.l.b16 %v149
  %v554 = vunpack.c.l.b16 %v150
  %v555 = vunpack.c.l.b16 %v151
  %v556 = vunpack.c.l.b16 %v152
  %v557 = vunpack.c.l.b16 %v153
  %v558 = vunpack.c.l.b16 %v154
  %v559 = vunpack.c.l.b16 %v155
  %v560 = vunpack.c.l.b16 %v156
  %v561 = vunpack.c.l.b16 %v157
  %v562 = vunpack.c.l.b16 %v158
  %v563 = vunpack.c.l.b16 %v159
  %v564 = vunpack.c.l.b16 %v160
  %v565 = vpack.c.b16 %v458, %v457
  %v566 = vpack.c.b16 %v460, %v459
  %v567 = vpack.c.b16 %v462, %v461
  %v568 = vpack.c.b16 %v464, %v463
  %v569 = vpack.c.b16 %v466, %v465
  %v570 = vpack.c.b16 %v468, %v467
  %v571 = vpack.c.b16 %v470, %v469
  %v572 = vpack.c.b16 %v472, %v471
  %v573 = vpack.c.b16 %v474, %v473
  %v574 = vpack.c.b16 %v476, %v475
  %v575 = vpack.c.b16 %v478, %v477
  %v576 = vpack.c.b16 %v480, %v479
  %v577 = vpack.c.b16 %v482, %v481
  %v578 = vpack.c.b16 %v484, %v483
  %v579 = vpack.c.b16 %v486, %v485
  %v580 = vpack.c.b16 %v488, %v487
  %v581 = vpack.c.b16 %v490, %v489
  %v582 = vpack.c.b16 %v492, %v491
  %v583 = vpack.c.b16 %v494, %v493
  %v584 = vpack.c.b16 %v496, %v495
  %v585 = vpack.c.b16 %v498, %v497
  %v586 = vpack.c.b16 %v500, %v499
  %v587 = vpack.c.b16 %v502, %v501
  %v588 = vpack.c.b16 %v504, %v503
  %v589 = vpack.c.b16 %v506, %v505
  %v590 = vpack.c.b16 %v508, %v507
  %v591 = vpack.c.b16 %v510, %v509
  %v592 = vpack.c.b16 %v512, %v511
  %v593 = vpack.c.b16 %v514, %v513
  %v594 = vpack.c.b16 %v516, %v515
  %v595 = vpack.c.b16 %v518, %v517
  %v596 = vpack.c.b16 %v520, %v519
  %v597 = vpack.c.b16 %v522, %v521
  %v598 = vpack.c.b16 %v524, %v523
  %v599 = vpack.c.b16 %v526, %v525
  %v600 = vpack.c.b16 %v528, %v527
  %v601 = vpack.c.b16 %v530, %v529
  %v602 = vpack.c.b16 %v532, %v531
  %v603 = vpack.c.b16 %v534, %v533
  %v604 = vpack.c.b16 %v536, %v535
  %v605 = vpack.c.b16 %v538, %v537
  %v606 = vpack.c.b16 %v540, %v539
  %v607 = vpack.c.b16 %v542, %v541
  %v608 = vpack.c.b16 %v544, %v543
  %v609 = vpack.c.b16 %v546, %v545
  %v610 = vpack.c.b16 %v548, %v547
  %v611 = vpack.c.b16 %v550, %v549
  %v612 = vpack.c.b16 %v552, %v551
  %v613 = vpack.c.b16 %v554, %v553
  %v614 = vpack.c.b16 %v556, %v555
  %v615 = vpack.c.b16 %v558, %v557
  %v616 = vpack.c.b16 %v560, %v559
  %v617 = vpack.c.b16 %v562, %v561
  %v618 = vpack.c.b16 %v564, %v563
  %vm673 = vcmask 785408
  %v675 = vsel %vm673, %v303, 0
  %v678 = vsel %vm673, %v310, 0
  %v681 = vsel %vm673, %v317, 0
  %v684 = vsel %vm673, %v324, 0
  %686 = vmatpush.bf16.msra.mxu0 %v572
  %687 = vmatpush.bf16.msra.mxu0 %v571
  %688 = vmatpush.bf16.msra.mxu0 %v570
  %689 = vmatpush.bf16.msra.mxu0 %v569
  %690 = vmatpush.bf16.msra.mxu0 %v568
  %691 = vmatpush.bf16.msra.mxu0 %v567
  %692 = vmatpush.bf16.msra.mxu0 %v566
  %693 = vmatpush.bf16.msra.mxu0 %v565
  %694 = vmatmul.bf16.gmra.mxu0 %v297
  %v695 = vpop.f32.mrf.mxu0
  %v696 = vadd.f32 %v172, %v695
  %v697 = vpop.f32.mrf.mxu0
  %v698 = vadd.f32 %v177, %v697
  %699 = vmatmul.bf16.gmra.mxu0 %v304
  %v700 = vpop.f32.mrf.mxu0
  %v701 = vadd.f32 %v182, %v700
  %v702 = vpop.f32.mrf.mxu0
  %v703 = vadd.f32 %v187, %v702
  %704 = vmatmul.bf16.gmra.mxu0 %v311
  %v705 = vpop.f32.mrf.mxu0
  %v706 = vadd.f32 %v192, %v705
  %v707 = vpop.f32.mrf.mxu0
  %v708 = vadd.f32 %v197, %v707
  %709 = vmatmul.bf16.gmra.mxu0 %v318
  %v710 = vpop.f32.mrf.mxu0
  %v711 = vadd.f32 %v202, %v710
  %v712 = vpop.f32.mrf.mxu0
  %v713 = vadd.f32 %v207, %v712
  %714 = vdwg.mxu0
  %715 = vmatpush.bf16.msra.mxu0 %v580
  %716 = vmatpush.bf16.msra.mxu0 %v579
  %717 = vmatpush.bf16.msra.mxu0 %v578
  %718 = vmatpush.bf16.msra.mxu0 %v577
  %719 = vmatpush.bf16.msra.mxu0 %v576
  %720 = vmatpush.bf16.msra.mxu0 %v575
  %721 = vmatpush.bf16.msra.mxu0 %v574
  %722 = vmatpush.bf16.msra.mxu0 %v573
  %723 = vmatmul.bf16.gmra.mxu0 %v298
  %v724 = vpop.f32.mrf.mxu0
  %v725 = vadd.f32 %v696, %v724
  %v726 = vpop.f32.mrf.mxu0
  %v727 = vadd.f32 %v698, %v726
  %728 = vmatmul.bf16.gmra.mxu0 %v305
  %v729 = vpop.f32.mrf.mxu0
  %v730 = vadd.f32 %v701, %v729
  %v731 = vpop.f32.mrf.mxu0
  %v732 = vadd.f32 %v703, %v731
  %733 = vmatmul.bf16.gmra.mxu0 %v312
  %v734 = vpop.f32.mrf.mxu0
  %v735 = vadd.f32 %v706, %v734
  %v736 = vpop.f32.mrf.mxu0
  %v737 = vadd.f32 %v708, %v736
  %738 = vmatmul.bf16.gmra.mxu0 %v319
  %v739 = vpop.f32.mrf.mxu0
  %v740 = vadd.f32 %v711, %v739
  %v741 = vpop.f32.mrf.mxu0
  %v742 = vadd.f32 %v713, %v741
  %743 = vdwg.mxu0
  %744 = vmatpush.bf16.msra.mxu0 %v588
  %745 = vmatpush.bf16.msra.mxu0 %v587
  %746 = vmatpush.bf16.msra.mxu0 %v586
  %747 = vmatpush.bf16.msra.mxu0 %v585
  %748 = vmatpush.bf16.msra.mxu0 %v584
  %749 = vmatpush.bf16.msra.mxu0 %v583
  %750 = vmatpush.bf16.msra.mxu0 %v582
  %751 = vmatpush.bf16.msra.mxu0 %v581
  %752 = vmatmul.bf16.gmra.mxu0 %v299
  %v753 = vpop.f32.mrf.mxu0
  %v754 = vadd.f32 %v725, %v753
  %v755 = vpop.f32.mrf.mxu0
  %v756 = vadd.f32 %v727, %v755
  %757 = vmatmul.bf16.gmra.mxu0 %v306
  %v758 = vpop.f32.mrf.mxu0
  %v759 = vadd.f32 %v730, %v758
  %v760 = vpop.f32.mrf.mxu0
  %v761 = vadd.f32 %v732, %v760
  %762 = vmatmul.bf16.gmra.mxu0 %v313
  %v763 = vpop.f32.mrf.mxu0
  %v764 = vadd.f32 %v735, %v763
  %v765 = vpop.f32.mrf.mxu0
  %v766 = vadd.f32 %v737, %v765
  %767 = vmatmul.bf16.gmra.mxu0 %v320
  %v768 = vpop.f32.mrf.mxu0
  %v769 = vadd.f32 %v740, %v768
  %v770 = vpop.f32.mrf.mxu0
  %v771 = vadd.f32 %v742, %v770
  %772 = vdwg.mxu0
  %773 = vmatpush.bf16.msra.mxu0 %v596
  %774 = vmatpush.bf16.msra.mxu0 %v595
  %775 = vmatpush.bf16.msra.mxu0 %v594
  %776 = vmatpush.bf16.msra.mxu0 %v593
  %777 = vmatpush.bf16.msra.mxu0 %v592
  %778 = vmatpush.bf16.msra.mxu0 %v591
  %779 = vmatpush.bf16.msra.mxu0 %v590
  %780 = vmatpush.bf16.msra.mxu0 %v589
  %781 = vmatmul.bf16.gmra.mxu0 %v300
  %v782 = vpop.f32.mrf.mxu0
  %v783 = vadd.f32 %v754, %v782
  %v784 = vpop.f32.mrf.mxu0
  %v785 = vadd.f32 %v756, %v784
  %786 = vmatmul.bf16.gmra.mxu0 %v307
  %v787 = vpop.f32.mrf.mxu0
  %v788 = vadd.f32 %v759, %v787
  %v789 = vpop.f32.mrf.mxu0
  %v790 = vadd.f32 %v761, %v789
  %791 = vmatmul.bf16.gmra.mxu0 %v314
  %v792 = vpop.f32.mrf.mxu0
  %v793 = vadd.f32 %v764, %v792
  %v794 = vpop.f32.mrf.mxu0
  %v795 = vadd.f32 %v766, %v794
  %796 = vmatmul.bf16.gmra.mxu0 %v321
  %v797 = vpop.f32.mrf.mxu0
  %v798 = vadd.f32 %v769, %v797
  %v799 = vpop.f32.mrf.mxu0
  %v800 = vadd.f32 %v771, %v799
  %801 = vdwg.mxu0
  %802 = vmatpush.bf16.msra.mxu0 %v604
  %803 = vmatpush.bf16.msra.mxu0 %v603
  %804 = vmatpush.bf16.msra.mxu0 %v602
  %805 = vmatpush.bf16.msra.mxu0 %v601
  %806 = vmatpush.bf16.msra.mxu0 %v600
  %807 = vmatpush.bf16.msra.mxu0 %v599
  %808 = vmatpush.bf16.msra.mxu0 %v598
  %809 = vmatpush.bf16.msra.mxu0 %v597
  %810 = vmatmul.bf16.gmra.mxu0 %v301
  %v811 = vpop.f32.mrf.mxu0
  %v812 = vadd.f32 %v783, %v811
  %v813 = vpop.f32.mrf.mxu0
  %v814 = vadd.f32 %v785, %v813
  %815 = vmatmul.bf16.gmra.mxu0 %v308
  %v816 = vpop.f32.mrf.mxu0
  %v817 = vadd.f32 %v788, %v816
  %v818 = vpop.f32.mrf.mxu0
  %v819 = vadd.f32 %v790, %v818
  %820 = vmatmul.bf16.gmra.mxu0 %v315
  %v821 = vpop.f32.mrf.mxu0
  %v822 = vadd.f32 %v793, %v821
  %v823 = vpop.f32.mrf.mxu0
  %v824 = vadd.f32 %v795, %v823
  %825 = vmatmul.bf16.gmra.mxu0 %v322
  %v826 = vpop.f32.mrf.mxu0
  %v827 = vadd.f32 %v798, %v826
  %v828 = vpop.f32.mrf.mxu0
  %v829 = vadd.f32 %v800, %v828
  %830 = vdwg.mxu0
  %831 = vmatpush.bf16.msra.mxu0 %v612
  %832 = vmatpush.bf16.msra.mxu0 %v611
  %833 = vmatpush.bf16.msra.mxu0 %v610
  %834 = vmatpush.bf16.msra.mxu0 %v609
  %835 = vmatpush.bf16.msra.mxu0 %v608
  %836 = vmatpush.bf16.msra.mxu0 %v607
  %837 = vmatpush.bf16.msra.mxu0 %v606
  %838 = vmatpush.bf16.msra.mxu0 %v605
  %839 = vmatmul.bf16.gmra.mxu0 %v302
  %v840 = vpop.f32.mrf.mxu0
  %v841 = vadd.f32 %v812, %v840
  %v842 = vpop.f32.mrf.mxu0
  %v843 = vadd.f32 %v814, %v842
  %844 = vmatmul.bf16.gmra.mxu0 %v309
  %v845 = vpop.f32.mrf.mxu0
  %v846 = vadd.f32 %v817, %v845
  %v847 = vpop.f32.mrf.mxu0
  %v848 = vadd.f32 %v819, %v847
  %849 = vmatmul.bf16.gmra.mxu0 %v316
  %v850 = vpop.f32.mrf.mxu0
  %v851 = vadd.f32 %v822, %v850
  %v852 = vpop.f32.mrf.mxu0
  %v853 = vadd.f32 %v824, %v852
  %854 = vmatmul.bf16.gmra.mxu0 %v323
  %v855 = vpop.f32.mrf.mxu0
  %v856 = vadd.f32 %v827, %v855
  %v857 = vpop.f32.mrf.mxu0
  %v858 = vadd.f32 %v829, %v857
  %859 = vdwg.mxu0
  %860 = vmatpush.bf16.msra.mxu0 0
  %861 = vmatpush.bf16.msra.mxu0 0
  %862 = vmatpush.bf16.msra.mxu0 %v618
  %863 = vmatpush.bf16.msra.mxu0 %v617
  %864 = vmatpush.bf16.msra.mxu0 %v616
  %865 = vmatpush.bf16.msra.mxu0 %v615
  %866 = vmatpush.bf16.msra.mxu0 %v614
  %867 = vmatpush.bf16.msra.mxu0 %v613
  %868 = vmatmul.bf16.gmra.mxu0 %v675
  %v869 = vpop.f32.mrf.mxu0
  %v870 = vadd.f32 %v841, %v869
  %v871 = vpop.f32.mrf.mxu0
  %v872 = vadd.f32 %v843, %v871
  %873 = vmatmul.bf16.gmra.mxu0 %v678
  %v874 = vpop.f32.mrf.mxu0
  %v875 = vadd.f32 %v846, %v874
  %v876 = vpop.f32.mrf.mxu0
  %v877 = vadd.f32 %v848, %v876
  %878 = vmatmul.bf16.gmra.mxu0 %v681
  %v879 = vpop.f32.mrf.mxu0
  %v880 = vadd.f32 %v851, %v879
  %v881 = vpop.f32.mrf.mxu0
  %v882 = vadd.f32 %v853, %v881
  %883 = vmatmul.bf16.gmra.mxu0 %v684
  %v884 = vpop.f32.mrf.mxu0
  %v885 = vadd.f32 %v856, %v884
  %v886 = vpop.f32.mrf.mxu0
  %v887 = vadd.f32 %v858, %v886
  %888 = vdwg.mxu0
  %v889 = vtanh.pop %v870
  %v890 = vtanh.pop %v872
  %v891 = vtanh.pop %v875
  %v892 = vtanh.pop %v877
  %v893 = vtanh.pop %v880
  %v894 = vtanh.pop %v882
  %v895 = vtanh.pop %v885
  %v896 = vtanh.pop %v887
  %v897 = vld [vmem:[%s3] sm:$0xff]
  %v898 = vld [vmem:[%s3 + $0x8] sm:$0x3]
  %v899 = vld [vmem:[%s4] sm:$0xff]
  %v900 = vld [vmem:[%s4 + $0x8] sm:$0x3]
  %902 = vset.pattern.permute.xlu0 0
  %903 = vperm.xlu0 %902, %v899
  %v904 = vpop.permute.xlu0 %903
  %907 = vset.pattern.permute.xlu0 0
  %908 = vperm.xlu0 %907, %v900
  %v909 = vpop.permute.xlu0 %908
  %vm911 = vcmask 523264
  %v913 = vsel %vm911, %v897, 0
  %v916 = vsel %vm911, %v898, 0
  %918 = vmatpush.msra.mxu0 0.0
  %919 = vmatpush.msra.mxu0 0.0
  %920 = vmatpush.msra.mxu0 0.0
  %921 = vmatpush.msra.mxu0 0.0
  %922 = vmatpush.msra.mxu0 0.0
  %923 = vmatpush.msra.mxu0 0.0
  %924 = vmatpush.msra.mxu0 0.0
  %925 = vmatpush.msra.mxu0 0.0
  %926 = vmatpush.msra.mxu0 %v896
  %927 = vmatpush.msra.mxu0 %v895
  %928 = vmatpush.msra.mxu0 %v894
  %929 = vmatpush.msra.mxu0 %v893
  %930 = vmatpush.msra.mxu0 %v892
  %931 = vmatpush.msra.mxu0 %v891
  %932 = vmatpush.msra.mxu0 %v890
  %933 = vmatpush.msra.mxu0 %v889
  %934 = vmatmul.f32.gmra.mxu0 %v913
  %v935 = vpop.f32.mrf.mxu0
  %v936 = vadd.f32 %v904, %v935
  %937 = vmatmul.f32.gmra.mxu0 %v916
  %v938 = vpop.f32.mrf.mxu0
  %v939 = vadd.f32 %v909, %v938
  %940 = vdwg.mxu0
  %941 = vst [vmem:[%s5] sm:$0xff] %v936
  %942 = vst [vmem:[%s5 + $0x8] sm:$0x3] %v939
  // Predicated region
  $region22: #{fmri_cnn_forward.5} parent=0 // pred_check
    _
  $region23: #{fmri_cnn_forward.5} parent=0 // pred_check_branch
    %944 = sbr.rel (0) target = $region25
  $region24: #{fmri_cnn_forward.5} parent=0 // pred_region
    _
  $region25: #{fmri_cnn_forward.5} parent=0 // pred_fallthru
    _
  // Predicated region
  $region26: #{fmri_cnn_forward.5} parent=0 // pred_check
    _
  $region27: #{fmri_cnn_forward.5} parent=0 // pred_check_branch
    %946 = sbr.rel (0) target = $region29
  $region28: #{fmri_cnn_forward.5} parent=0 // pred_region
    _
  $region29: #{fmri_cnn_forward.5} parent=0 // pred_fallthru
    _

</llo_original>
